<compile_context>
chip_gen: v7x
topology: tpu7x:2x2x1
jax: 0.10.0
libtpu: 0.0.40
codegen_flags: <defaults>
</compile_context>

<pallas_src>
import functools
import math

import jax
import jax.numpy as jnp
from jax.experimental import pallas as pl
from jax.experimental.pallas import tpu as pltpu

NUM_HEADS = 2          # config.num_attention_heads
NODE_BLOCKS = 2        # node-block grid split (megacore parallelism on v7x)


# ----------------------------------------------------------------- in-kernel helpers
def _layernorm(x, g, b, eps):
    mu = jnp.mean(x, axis=-1, keepdims=True)
    var = jnp.mean(jnp.square(x - mu), axis=-1, keepdims=True)
    return (x - mu) * jax.lax.rsqrt(var + eps) * g + b


def _erf(x):
    # Abramowitz & Stegun 7.1.26 (max abs err ~1.5e-7): exp + polynomial only,
    # guaranteed to lower on the VPU/EUP.  Used for HF-BERT exact-erf GELU.
    a1, a2, a3, a4, a5 = 0.254829592, -0.284496736, 1.421413741, -1.453152027, 1.061405429
    p = 0.3275911
    sign = jnp.where(x >= 0.0, 1.0, -1.0)
    ax = jnp.abs(x)
    t = 1.0 / (1.0 + p * ax)
    poly = ((((a5 * t + a4) * t + a3) * t + a2) * t + a1) * t
    return sign * (1.0 - poly * jnp.exp(-ax * ax))


def _gelu(x):
    return 0.5 * x * (1.0 + _erf(x * (1.0 / math.sqrt(2.0))))


def _elu(x):
    return jnp.where(x > 0.0, x, jnp.exp(jnp.minimum(x, 0.0)) - 1.0)


# ------------------------------------------------------------ fused BERT layer kernel
def _bert_layer_kernel(h_ref, mask_ref,
                       wqkv_ref, bqkv_ref, wo_ref, bo_ref,
                       ln1_g_ref, ln1_b_ref,
                       wi_ref, bi_ref, wo2_ref, bo2_ref,
                       ln2_g_ref, ln2_b_ref,
                       o_ref, *, num_heads, scale):
    B, S, D = h_ref.shape
    dh = D // num_heads
    x = h_ref[...].astype(jnp.float32).reshape(B * S, D)
    mask = mask_ref[...].astype(jnp.float32)                 # (B, 1, S) additive key mask

    # Fused QKV projection: one MXU pass instead of three.
    qkv = jnp.dot(x, wqkv_ref[...], preferred_element_type=jnp.float32) + bqkv_ref[...]

    # Per-head attention via static lane slices (replaces reshape/transpose glue).
    ctx_heads = []
    for hh in range(num_heads):
        qh = qkv[:, hh * dh:(hh + 1) * dh].reshape(B, S, dh)
        kh = qkv[:, D + hh * dh:D + (hh + 1) * dh].reshape(B, S, dh)
        vh = qkv[:, 2 * D + hh * dh:2 * D + (hh + 1) * dh].reshape(B, S, dh)
        s = jnp.einsum("bqd,bkd->bqk", qh, kh, preferred_element_type=jnp.float32) * scale
        s = s + mask                                          # broadcast over query dim
        s = s - jnp.max(s, axis=-1, keepdims=True)
        p = jnp.exp(s)
        p = p / jnp.sum(p, axis=-1, keepdims=True)
        ch = jnp.einsum("bqk,bkd->bqd", p, vh, preferred_element_type=jnp.float32)
        ctx_heads.append(ch.reshape(B * S, dh))
    ctx = jnp.concatenate(ctx_heads, axis=-1)                 # head merge, (B*S, D)

    attn_out = jnp.dot(ctx, wo_ref[...], preferred_element_type=jnp.float32) + bo_ref[...]
    h1 = _layernorm(attn_out + x, ln1_g_ref[...], ln1_b_ref[...], 1e-12)

    inter = jnp.dot(h1, wi_ref[...], preferred_element_type=jnp.float32) + bi_ref[...]
    inter = _gelu(inter)                                      # exact-erf GELU (HF BERT)
    ffn = jnp.dot(inter, wo2_ref[...], preferred_element_type=jnp.float32) + bo2_ref[...]
    h2 = _layernorm(ffn + h1, ln2_g_ref[...], ln2_b_ref[...], 1e-12)

    o_ref[...] = h2.reshape(B, S, D).astype(o_ref.dtype)


def bert_layer(p, h, mask):
    N, S, D = h.shape
    inter_dim = p["wi"].shape[1]
    nb = NODE_BLOCKS if N % NODE_BLOCKS == 0 else 1
    bn = N // nb
    rep2 = lambda i: (0, 0)
    kern = functools.partial(_bert_layer_kernel, num_heads=NUM_HEADS,
                             scale=1.0 / math.sqrt(D // NUM_HEADS))
    return pl.pallas_call(
        kern,
        out_shape=jax.ShapeDtypeStruct((N, S, D), jnp.float32),
        grid=(nb,),
        in_specs=[
            pl.BlockSpec((bn, S, D), lambda i: (i, 0, 0)),       # activations
            pl.BlockSpec((bn, 1, S), lambda i: (i, 0, 0)),       # additive mask
            pl.BlockSpec((D, 3 * D), rep2),                      # fused QKV weight
            pl.BlockSpec((1, 3 * D), rep2),
            pl.BlockSpec((D, D), rep2),                          # wo
            pl.BlockSpec((1, D), rep2),
            pl.BlockSpec((1, D), rep2),                          # ln1 gamma
            pl.BlockSpec((1, D), rep2),                          # ln1 beta
            pl.BlockSpec((D, inter_dim), rep2),                  # wi
            pl.BlockSpec((1, inter_dim), rep2),
            pl.BlockSpec((inter_dim, D), rep2),                  # wo2
            pl.BlockSpec((1, D), rep2),
            pl.BlockSpec((1, D), rep2),                          # ln2 gamma
            pl.BlockSpec((1, D), rep2),                          # ln2 beta
        ],
        out_specs=pl.BlockSpec((bn, S, D), lambda i: (i, 0, 0)),
        compiler_params=pltpu.CompilerParams(dimension_semantics=("parallel",)),
    )(h, mask, p["wqkv"], p["bqkv"], p["wo"], p["bo"],
      p["ln1_g"], p["ln1_b"], p["wi"], p["bi"], p["wo2"], p["bo2"],
      p["ln2_g"], p["ln2_b"])


# ------------------------------------------------------------ fused 2-layer GATv2 stack
def _gat_head(fh, a_row, adj, negative_slope):
    # GATv2 (share_weights=True): e_ij = a . LeakyReLU(f_i + f_j), edge-softmax over src.
    s = fh[:, None, :] + fh[None, :, :]                       # (N_dst, N_src, F)
    s = jnp.where(s >= 0.0, s, negative_slope * s)            # LeakyReLU
    e = jnp.sum(s * a_row[None, :, :], axis=-1)               # (N_dst, N_src)
    has_edge = adj > 0.0
    e = jnp.where(has_edge, e, -1e30)
    e = e - jnp.max(e, axis=-1, keepdims=True)
    w = jnp.exp(e)
    w = jnp.where(has_edge, w, 0.0)
    alpha = w / jnp.maximum(jnp.sum(w, axis=-1, keepdims=True), 1e-30)
    return jnp.dot(alpha, fh, preferred_element_type=jnp.float32)   # (N_dst, F)


def _gat_kernel(x_ref, adj0_ref, adj1_ref,
                w0_ref, a0_ref, w1_ref, a1_ref, resw_ref,
                ln_g_ref, ln_b_ref, o_ref, *, negative_slope):
    x = x_ref[...].astype(jnp.float32)                        # (N, hid) CLS embeddings
    adj0 = adj0_ref[...]
    adj1 = adj1_ref[...]
    a0 = a0_ref[...]                                          # (H0, F)
    a1 = a1_ref[...]                                          # (1, F)
    H0, F = a0.shape

    # ---- GAT layer 0: heads=H0, bias=False, share_weights=True, no residual
    feat0 = jnp.dot(x, w0_ref[...], preferred_element_type=jnp.float32)   # (N, H0*F)
    head_outs = []
    for hh in range(H0):
        fh = feat0[:, hh * F:(hh + 1) * F]
        head_outs.append(_gat_head(fh, a0[hh:hh + 1, :], adj0, negative_slope))
    out0 = jnp.concatenate(head_outs, axis=-1)                # single lane-dense (N, H0*F) slab
    out0 = _elu(out0)                                         # GATv2Conv activation (F.elu)
    h1 = _layernorm(out0, ln_g_ref[...], ln_b_ref[...], 1e-5)
    h1 = jnp.maximum(h1, 0.0)                                 # F.relu between GAT layers

    # ---- GAT layer 1: heads=1, residual via res_fc (in_feats != out_feats), bias=False
    feat1 = jnp.dot(h1, w1_ref[...], preferred_element_type=jnp.float32)  # (N, F)
    out1 = _gat_head(feat1, a1[0:1, :], adj1, negative_slope)
    res = jnp.dot(h1, resw_ref[...], preferred_element_type=jnp.float32)
    out1 = _elu(out1 + res)
    o_ref[...] = out1.astype(o_ref.dtype)


def gat_forward(gp, blocks, x):
    # Single kernel for the full GATv2 stack; needs all-src features per dst node,
    # so it stays grid=(1,) (trivially small problem, one launch total).
    N, hid_in = x.shape
    H0, F = gp["attn0"].shape
    rep2 = lambda i: (0, 0)
    kern = functools.partial(_gat_kernel, negative_slope=0.2)
    return pl.pallas_call(
        kern,
        out_shape=jax.ShapeDtypeStruct((N, F), jnp.float32),
        grid=(1,),
        in_specs=[
            pl.BlockSpec((N, hid_in), rep2),
            pl.BlockSpec((N, N), rep2),
            pl.BlockSpec((N, N), rep2),
            pl.BlockSpec((hid_in, H0 * F), rep2),
            pl.BlockSpec((H0, F), rep2),
            pl.BlockSpec((H0 * F, F), rep2),
            pl.BlockSpec((1, F), rep2),
            pl.BlockSpec((H0 * F, F), rep2),
            pl.BlockSpec((1, H0 * F), rep2),
            pl.BlockSpec((1, H0 * F), rep2),
        ],
        out_specs=pl.BlockSpec((N, F), rep2),
    )(x, blocks[0], blocks[1], gp["W0"], gp["attn0"], gp["W1"], gp["attn1"],
      gp["res_w1"], gp["ln_g"], gp["ln_b"])


# ------------------------------------------------------------------ GraphBertEncoder
def graph_bert_encoder(params, hidden_states, attention_mask, blocks):
    N, S, D = hidden_states.shape
    mask = attention_mask.reshape(N, 1, S).astype(jnp.float32)
    mask0 = mask.at[:, :, 0].set(-10000.0)    # layer 0: mask the not-yet-aggregated station token
    h = hidden_states
    for i, lp in enumerate(params["bert_layers"]):
        if i > 0:
            # gnn step: graph attention over CLS embeddings, written back in place
            cls_emb = h[:, 0, :]
            station_emb = gat_forward(params["gat"], blocks, cls_emb)
            h = h.at[:station_emb.shape[0], 0, :].set(station_emb.astype(h.dtype))
            m = mask
        else:
            m = mask0
        h = bert_layer(lp, h, m)
    return (h,)  # output_hidden_states = output_attentions = False


# ----------------------------------------------------------------------- param init
def init_params(key):
    D, I = 32, 64                 # hidden_size, intermediate_size
    num_bert_layers = 2           # config.num_hidden_layers
    hid = 32                      # arg.hidden_dim
    keys = jax.random.split(key, 64)
    it = iter(keys)

    def nrm(shape):
        return jax.random.normal(next(it), shape, jnp.float32) * 0.02

    bert_layers = []
    for _ in range(num_bert_layers):
        wq, wk, wv = nrm((D, D)), nrm((D, D)), nrm((D, D))
        bert_layers.append(dict(
            wqkv=jnp.concatenate([wq, wk, wv], axis=1),       # pre-fused QKV weight (D, 3D)
            bqkv=jnp.zeros((1, 3 * D), jnp.float32),
            wo=nrm((D, D)), bo=jnp.zeros((1, D), jnp.float32),
            ln1_g=jnp.ones((1, D), jnp.float32), ln1_b=jnp.zeros((1, D), jnp.float32),
            wi=nrm((D, I)), bi=jnp.zeros((1, I), jnp.float32),
            wo2=nrm((I, D)), bo2=jnp.zeros((1, D), jnp.float32),
            ln2_g=jnp.ones((1, D), jnp.float32), ln2_b=jnp.zeros((1, D), jnp.float32),
        ))

    # GATv2: arg.num_layers = 2, heads = [2, 1], hid_size = 32, bias=False, share_weights=True
    gat = dict(
        W0=nrm((hid, 2 * hid)), attn0=nrm((2, hid)),
        W1=nrm((2 * hid, hid)), attn1=nrm((1, hid)),
        res_w1=nrm((2 * hid, hid)),
        ln_g=jnp.ones((1, 2 * hid), jnp.float32),
        ln_b=jnp.zeros((1, 2 * hid), jnp.float32),
    )
    # TODO(synk): GATv2.predictor head is defined in __init__ but never used in forward; omitted.
    return dict(bert_layers=bert_layers, gat=gat)


if __name__ == "__main__":
    key = jax.random.PRNGKey(0)
    k_in, k_par = jax.random.split(key)

    N, S, D = 8, 8, 32   # all_nodes_num, seq_length, emb_dim (= arg.hidden_dim)
    hidden_states = jax.random.normal(k_in, (N, S, D), jnp.float32)
    attention_mask = jnp.zeros((N, 1, 1, S), jnp.float32)       # additive extended mask
    blocks = [jnp.ones((N, N), jnp.float32) for _ in range(2)]  # dense full-graph adjacency per GAT layer

    params = init_params(k_par)
    fwd = jax.jit(graph_bert_encoder)
    outputs = fwd(params, hidden_states, attention_mask, blocks)
    jax.block_until_ready(outputs[0])
    print("KERNEL_OK")
</pallas_src>

<mosaic_0001>
module attributes {stable_mosaic.version = 11 : i64} {
  func.func @_bert_layer_kernel(%arg0: i32, %arg1: memref<4x8x32xf32, #tpu.memory_space<vmem>>, %arg2: memref<4x1x8xf32, #tpu.memory_space<vmem>>, %arg3: memref<32x96xf32, #tpu.memory_space<vmem>>, %arg4: memref<1x96xf32, #tpu.memory_space<vmem>>, %arg5: memref<32x32xf32, #tpu.memory_space<vmem>>, %arg6: memref<1x32xf32, #tpu.memory_space<vmem>>, %arg7: memref<1x32xf32, #tpu.memory_space<vmem>>, %arg8: memref<1x32xf32, #tpu.memory_space<vmem>>, %arg9: memref<32x64xf32, #tpu.memory_space<vmem>>, %arg10: memref<1x64xf32, #tpu.memory_space<vmem>>, %arg11: memref<64x32xf32, #tpu.memory_space<vmem>>, %arg12: memref<1x32xf32, #tpu.memory_space<vmem>>, %arg13: memref<1x32xf32, #tpu.memory_space<vmem>>, %arg14: memref<1x32xf32, #tpu.memory_space<vmem>>, %arg15: memref<4x8x32xf32, #tpu.memory_space<vmem>>) attributes {dimension_semantics = [#tpu.dimension_semantics<parallel>], iteration_bounds = array<i64: 2>, scalar_prefetch = 0 : i64, scratch_operands = 0 : i64, tpu.core_type = #tpu.core_type<tc>, window_params = [{transform_indices = @transform_0, window_bounds = array<i64: 4, 8, 32>}, {transform_indices = @transform_1, window_bounds = array<i64: 4, 1, 8>}, {pipeline_mode = #tpu.pipeline_mode<synchronous>, transform_indices = @transform_2, window_bounds = array<i64: 32, 96>}, {pipeline_mode = #tpu.pipeline_mode<synchronous>, transform_indices = @transform_3, window_bounds = array<i64: 1, 96>}, {pipeline_mode = #tpu.pipeline_mode<synchronous>, transform_indices = @transform_4, window_bounds = array<i64: 32, 32>}, {pipeline_mode = #tpu.pipeline_mode<synchronous>, transform_indices = @transform_5, window_bounds = array<i64: 1, 32>}, {pipeline_mode = #tpu.pipeline_mode<synchronous>, transform_indices = @transform_6, window_bounds = array<i64: 1, 32>}, {pipeline_mode = #tpu.pipeline_mode<synchronous>, transform_indices = @transform_7, window_bounds = array<i64: 1, 32>}, {pipeline_mode = #tpu.pipeline_mode<synchronous>, transform_indices = @transform_8, window_bounds = array<i64: 32, 64>}, {pipeline_mode = #tpu.pipeline_mode<synchronous>, transform_indices = @transform_9, window_bounds = array<i64: 1, 64>}, {pipeline_mode = #tpu.pipeline_mode<synchronous>, transform_indices = @transform_10, window_bounds = array<i64: 64, 32>}, {pipeline_mode = #tpu.pipeline_mode<synchronous>, transform_indices = @transform_11, window_bounds = array<i64: 1, 32>}, {pipeline_mode = #tpu.pipeline_mode<synchronous>, transform_indices = @transform_12, window_bounds = array<i64: 1, 32>}, {pipeline_mode = #tpu.pipeline_mode<synchronous>, transform_indices = @transform_13, window_bounds = array<i64: 1, 32>}, {transform_indices = @transform_14, window_bounds = array<i64: 4, 8, 32>}]} {
    %c0 = arith.constant 0 : index
    %c0_0 = arith.constant 0 : index
    %c0_1 = arith.constant 0 : index
    %0 = vector.load %arg1[%c0, %c0_0, %c0_1] : memref<4x8x32xf32, #tpu.memory_space<vmem>>, vector<4x8x32xf32>
    %1 = vector.shape_cast %0 : vector<4x8x32xf32> to vector<32x32xf32>
    %c0_2 = arith.constant 0 : index
    %c0_3 = arith.constant 0 : index
    %c0_4 = arith.constant 0 : index
    %2 = vector.load %arg2[%c0_2, %c0_3, %c0_4] : memref<4x1x8xf32, #tpu.memory_space<vmem>>, vector<4x1x8xf32>
    %c0_5 = arith.constant 0 : index
    %c0_6 = arith.constant 0 : index
    %3 = vector.load %arg3[%c0_5, %c0_6] : memref<32x96xf32, #tpu.memory_space<vmem>>, vector<32x96xf32>
    %cst = arith.constant dense<0.000000e+00> : vector<32x96xf32>
    %4 = tpu.matmul %1, %3, %cst {dimension_numbers = #tpu.dot_dimension_numbers<[1], [0], [0], [1], [0, 0, 1, 1], [], []>} : vector<32x32xf32>, vector<32x96xf32>, vector<32x96xf32> -> vector<32x96xf32>
    %c0_7 = arith.constant 0 : index
    %c0_8 = arith.constant 0 : index
    %5 = vector.load %arg4[%c0_7, %c0_8] : memref<1x96xf32, #tpu.memory_space<vmem>>, vector<1x96xf32>
    %6 = vector.broadcast %5 : vector<1x96xf32> to vector<32x96xf32>
    %7 = arith.addf %4, %6 : vector<32x96xf32>
    %8 = vector.extract_strided_slice %7 {offsets = [0, 0], sizes = [32, 16], strides = [1, 1]} : vector<32x96xf32> to vector<32x16xf32>
    %9 = vector.shape_cast %8 : vector<32x16xf32> to vector<4x8x16xf32>
    %10 = vector.extract_strided_slice %7 {offsets = [0, 32], sizes = [32, 16], strides = [1, 1]} : vector<32x96xf32> to vector<32x16xf32>
    %11 = vector.shape_cast %10 : vector<32x16xf32> to vector<4x8x16xf32>
    %12 = vector.extract_strided_slice %7 {offsets = [0, 64], sizes = [32, 16], strides = [1, 1]} : vector<32x96xf32> to vector<32x16xf32>
    %13 = vector.shape_cast %12 : vector<32x16xf32> to vector<4x8x16xf32>
    "tpu.trace_start"() <{level = 10 : i32, message = "bqd,bkd->bqk"}> : () -> ()
    %cst_9 = arith.constant dense<0.000000e+00> : vector<4x8x8xf32>
    %14 = tpu.matmul %9, %11, %cst_9 {dimension_numbers = #tpu.dot_dimension_numbers<[2], [2], [1], [1], [0, 0, 0, 1, 1, 1], [0], [0]>} : vector<4x8x16xf32>, vector<4x8x16xf32>, vector<4x8x8xf32> -> vector<4x8x8xf32>
    "tpu.trace_stop"() : () -> ()
    %cst_10 = arith.constant 2.500000e-01 : f32
    %15 = vector.broadcast %cst_10 : f32 to vector<4x8x8xf32>
    %16 = arith.mulf %14, %15 : vector<4x8x8xf32>
    %17 = vector.broadcast %2 : vector<4x1x8xf32> to vector<4x8x8xf32>
    %18 = arith.addf %16, %17 : vector<4x8x8xf32>
    %cst_11 = arith.constant dense<0xFF800000> : vector<4x8xf32>
    %19 = vector.multi_reduction <maximumf>, %18, %cst_11 [2] : vector<4x8x8xf32> to vector<4x8xf32>
    %20 = vector.shape_cast %19 : vector<4x8xf32> to vector<4x8x1xf32>
    %21 = vector.broadcast %20 : vector<4x8x1xf32> to vector<4x8x8xf32>
    %22 = arith.subf %18, %21 : vector<4x8x8xf32>
    %23 = math.exp %22 : vector<4x8x8xf32>
    %cst_12 = arith.constant dense<0.000000e+00> : vector<4x8xf32>
    %24 = vector.multi_reduction <add>, %23, %cst_12 [2] : vector<4x8x8xf32> to vector<4x8xf32>
    %25 = vector.shape_cast %24 : vector<4x8xf32> to vector<4x8x1xf32>
    %26 = vector.broadcast %25 : vector<4x8x1xf32> to vector<4x8x8xf32>
    %27 = arith.divf %23, %26 : vector<4x8x8xf32>
    "tpu.trace_start"() <{level = 10 : i32, message = "bqk,bkd->bqd"}> : () -> ()
    %cst_13 = arith.constant dense<0.000000e+00> : vector<4x8x16xf32>
    %28 = tpu.matmul %27, %13, %cst_13 {dimension_numbers = #tpu.dot_dimension_numbers<[2], [1], [1], [2], [0, 0, 0, 1, 1, 2], [0], [0]>} : vector<4x8x8xf32>, vector<4x8x16xf32>, vector<4x8x16xf32> -> vector<4x8x16xf32>
    "tpu.trace_stop"() : () -> ()
    %29 = vector.shape_cast %28 : vector<4x8x16xf32> to vector<32x16xf32>
    %30 = vector.extract_strided_slice %7 {offsets = [0, 16], sizes = [32, 16], strides = [1, 1]} : vector<32x96xf32> to vector<32x16xf32>
    %31 = vector.shape_cast %30 : vector<32x16xf32> to vector<4x8x16xf32>
    %32 = vector.extract_strided_slice %7 {offsets = [0, 48], sizes = [32, 16], strides = [1, 1]} : vector<32x96xf32> to vector<32x16xf32>
    %33 = vector.shape_cast %32 : vector<32x16xf32> to vector<4x8x16xf32>
    %34 = vector.extract_strided_slice %7 {offsets = [0, 80], sizes = [32, 16], strides = [1, 1]} : vector<32x96xf32> to vector<32x16xf32>
    %35 = vector.shape_cast %34 : vector<32x16xf32> to vector<4x8x16xf32>
    "tpu.trace_start"() <{level = 10 : i32, message = "bqd,bkd->bqk"}> : () -> ()
    %cst_14 = arith.constant dense<0.000000e+00> : vector<4x8x8xf32>
    %36 = tpu.matmul %31, %33, %cst_14 {dimension_numbers = #tpu.dot_dimension_numbers<[2], [2], [1], [1], [0, 0, 0, 1, 1, 1], [0], [0]>} : vector<4x8x16xf32>, vector<4x8x16xf32>, vector<4x8x8xf32> -> vector<4x8x8xf32>
    "tpu.trace_stop"() : () -> ()
    %cst_15 = arith.constant 2.500000e-01 : f32
    %37 = vector.broadcast %cst_15 : f32 to vector<4x8x8xf32>
    %38 = arith.mulf %36, %37 : vector<4x8x8xf32>
    %39 = vector.broadcast %2 : vector<4x1x8xf32> to vector<4x8x8xf32>
    %40 = arith.addf %38, %39 : vector<4x8x8xf32>
    %cst_16 = arith.constant dense<0xFF800000> : vector<4x8xf32>
    %41 = vector.multi_reduction <maximumf>, %40, %cst_16 [2] : vector<4x8x8xf32> to vector<4x8xf32>
    %42 = vector.shape_cast %41 : vector<4x8xf32> to vector<4x8x1xf32>
    %43 = vector.broadcast %42 : vector<4x8x1xf32> to vector<4x8x8xf32>
    %44 = arith.subf %40, %43 : vector<4x8x8xf32>
    %45 = math.exp %44 : vector<4x8x8xf32>
    %cst_17 = arith.constant dense<0.000000e+00> : vector<4x8xf32>
    %46 = vector.multi_reduction <add>, %45, %cst_17 [2] : vector<4x8x8xf32> to vector<4x8xf32>
    %47 = vector.shape_cast %46 : vector<4x8xf32> to vector<4x8x1xf32>
    %48 = vector.broadcast %47 : vector<4x8x1xf32> to vector<4x8x8xf32>
    %49 = arith.divf %45, %48 : vector<4x8x8xf32>
    "tpu.trace_start"() <{level = 10 : i32, message = "bqk,bkd->bqd"}> : () -> ()
    %cst_18 = arith.constant dense<0.000000e+00> : vector<4x8x16xf32>
    %50 = tpu.matmul %49, %35, %cst_18 {dimension_numbers = #tpu.dot_dimension_numbers<[2], [1], [1], [2], [0, 0, 0, 1, 1, 2], [0], [0]>} : vector<4x8x8xf32>, vector<4x8x16xf32>, vector<4x8x16xf32> -> vector<4x8x16xf32>
    "tpu.trace_stop"() : () -> ()
    %51 = vector.shape_cast %50 : vector<4x8x16xf32> to vector<32x16xf32>
    %52 = tpu.concatenate %29, %51 in 1 : vector<32x16xf32>, vector<32x16xf32> -> vector<32x32xf32>
    %c0_19 = arith.constant 0 : index
    %c0_20 = arith.constant 0 : index
    %53 = vector.load %arg5[%c0_19, %c0_20] : memref<32x32xf32, #tpu.memory_space<vmem>>, vector<32x32xf32>
    %cst_21 = arith.constant dense<0.000000e+00> : vector<32x32xf32>
    %54 = tpu.matmul %52, %53, %cst_21 {dimension_numbers = #tpu.dot_dimension_numbers<[1], [0], [0], [1], [0, 0, 1, 1], [], []>} : vector<32x32xf32>, vector<32x32xf32>, vector<32x32xf32> -> vector<32x32xf32>
    %c0_22 = arith.constant 0 : index
    %c0_23 = arith.constant 0 : index
    %55 = vector.load %arg6[%c0_22, %c0_23] : memref<1x32xf32, #tpu.memory_space<vmem>>, vector<1x32xf32>
    %56 = vector.broadcast %55 : vector<1x32xf32> to vector<32x32xf32>
    %57 = arith.addf %54, %56 : vector<32x32xf32>
    %58 = arith.addf %57, %1 : vector<32x32xf32>
    %c0_24 = arith.constant 0 : index
    %c0_25 = arith.constant 0 : index
    %59 = vector.load %arg7[%c0_24, %c0_25] : memref<1x32xf32, #tpu.memory_space<vmem>>, vector<1x32xf32>
    %c0_26 = arith.constant 0 : index
    %c0_27 = arith.constant 0 : index
    %60 = vector.load %arg8[%c0_26, %c0_27] : memref<1x32xf32, #tpu.memory_space<vmem>>, vector<1x32xf32>
    %cst_28 = arith.constant dense<0.000000e+00> : vector<32xf32>
    %61 = vector.multi_reduction <add>, %58, %cst_28 [1] : vector<32x32xf32> to vector<32xf32>
    %62 = vector.shape_cast %61 : vector<32xf32> to vector<32x1xf32>
    %cst_29 = arith.constant 3.200000e+01 : f32
    %63 = vector.broadcast %cst_29 : f32 to vector<32x1xf32>
    %64 = arith.divf %62, %63 : vector<32x1xf32>
    %65 = vector.broadcast %64 : vector<32x1xf32> to vector<32x32xf32>
    %66 = arith.subf %58, %65 : vector<32x32xf32>
    %67 = arith.mulf %66, %66 : vector<32x32xf32>
    %cst_30 = arith.constant dense<0.000000e+00> : vector<32xf32>
    %68 = vector.multi_reduction <add>, %67, %cst_30 [1] : vector<32x32xf32> to vector<32xf32>
    %69 = vector.shape_cast %68 : vector<32xf32> to vector<32x1xf32>
    %cst_31 = arith.constant 3.200000e+01 : f32
    %70 = vector.broadcast %cst_31 : f32 to vector<32x1xf32>
    %71 = arith.divf %69, %70 : vector<32x1xf32>
    %72 = vector.broadcast %64 : vector<32x1xf32> to vector<32x32xf32>
    %73 = arith.subf %58, %72 : vector<32x32xf32>
    %cst_32 = arith.constant 9.99999996E-13 : f32
    %74 = vector.broadcast %cst_32 : f32 to vector<32x1xf32>
    %75 = arith.addf %71, %74 : vector<32x1xf32>
    %76 = math.rsqrt %75 : vector<32x1xf32>
    %77 = vector.broadcast %76 : vector<32x1xf32> to vector<32x32xf32>
    %78 = arith.mulf %73, %77 : vector<32x32xf32>
    %79 = vector.broadcast %59 : vector<1x32xf32> to vector<32x32xf32>
    %80 = arith.mulf %78, %79 : vector<32x32xf32>
    %81 = vector.broadcast %60 : vector<1x32xf32> to vector<32x32xf32>
    %82 = arith.addf %80, %81 : vector<32x32xf32>
    %c0_33 = arith.constant 0 : index
    %c0_34 = arith.constant 0 : index
    %83 = vector.load %arg9[%c0_33, %c0_34] : memref<32x64xf32, #tpu.memory_space<vmem>>, vector<32x64xf32>
    %cst_35 = arith.constant dense<0.000000e+00> : vector<32x64xf32>
    %84 = tpu.matmul %82, %83, %cst_35 {dimension_numbers = #tpu.dot_dimension_numbers<[1], [0], [0], [1], [0, 0, 1, 1], [], []>} : vector<32x32xf32>, vector<32x64xf32>, vector<32x64xf32> -> vector<32x64xf32>
    %c0_36 = arith.constant 0 : index
    %c0_37 = arith.constant 0 : index
    %85 = vector.load %arg10[%c0_36, %c0_37] : memref<1x64xf32, #tpu.memory_space<vmem>>, vector<1x64xf32>
    %86 = vector.broadcast %85 : vector<1x64xf32> to vector<32x64xf32>
    %87 = arith.addf %84, %86 : vector<32x64xf32>
    %cst_38 = arith.constant 5.000000e-01 : f32
    %88 = vector.broadcast %cst_38 : f32 to vector<32x64xf32>
    %89 = arith.mulf %88, %87 : vector<32x64xf32>
    %cst_39 = arith.constant 0.707106769 : f32
    %90 = vector.broadcast %cst_39 : f32 to vector<32x64xf32>
    %91 = arith.mulf %87, %90 : vector<32x64xf32>
    %cst_40 = arith.constant 0.000000e+00 : f32
    %92 = vector.broadcast %cst_40 : f32 to vector<32x64xf32>
    %93 = arith.cmpf oge, %91, %92 : vector<32x64xf32>
    %cst_41 = arith.constant 1.000000e+00 : f32
    %cst_42 = arith.constant -1.000000e+00 : f32
    %94 = vector.broadcast %cst_41 : f32 to vector<32x64xf32>
    %95 = vector.broadcast %cst_42 : f32 to vector<32x64xf32>
    %96 = arith.select %93, %94, %95 : vector<32x64xi1>, vector<32x64xf32>
    %97 = math.absf %91 : vector<32x64xf32>
    %cst_43 = arith.constant 0.327591091 : f32
    %98 = vector.broadcast %cst_43 : f32 to vector<32x64xf32>
    %99 = arith.mulf %98, %97 : vector<32x64xf32>
    %cst_44 = arith.constant 1.000000e+00 : f32
    %100 = vector.broadcast %cst_44 : f32 to vector<32x64xf32>
    %101 = arith.addf %100, %99 : vector<32x64xf32>
    %cst_45 = arith.constant 1.000000e+00 : f32
    %102 = vector.broadcast %cst_45 : f32 to vector<32x64xf32>
    %103 = arith.divf %102, %101 : vector<32x64xf32>
    %cst_46 = arith.constant 1.06140542 : f32
    %104 = vector.broadcast %cst_46 : f32 to vector<32x64xf32>
    %105 = arith.mulf %104, %103 : vector<32x64xf32>
    %cst_47 = arith.constant -1.45315206 : f32
    %106 = vector.broadcast %cst_47 : f32 to vector<32x64xf32>
    %107 = arith.addf %105, %106 : vector<32x64xf32>
    %108 = arith.mulf %107, %103 : vector<32x64xf32>
    %cst_48 = arith.constant 1.42141378 : f32
    %109 = vector.broadcast %cst_48 : f32 to vector<32x64xf32>
    %110 = arith.addf %108, %109 : vector<32x64xf32>
    %111 = arith.mulf %110, %103 : vector<32x64xf32>
    %cst_49 = arith.constant -0.284496725 : f32
    %112 = vector.broadcast %cst_49 : f32 to vector<32x64xf32>
    %113 = arith.addf %111, %112 : vector<32x64xf32>
    %114 = arith.mulf %113, %103 : vector<32x64xf32>
    %cst_50 = arith.constant 0.254829586 : f32
    %115 = vector.broadcast %cst_50 : f32 to vector<32x64xf32>
    %116 = arith.addf %114, %115 : vector<32x64xf32>
    %117 = arith.mulf %116, %103 : vector<32x64xf32>
    %cst_51 = arith.constant 0.000000e+00 : f32
    %118 = vector.broadcast %cst_51 : f32 to vector<32x64xf32>
    %119 = arith.subf %118, %97 : vector<32x64xf32>
    %120 = arith.mulf %119, %97 : vector<32x64xf32>
    %121 = math.exp %120 : vector<32x64xf32>
    %122 = arith.mulf %117, %121 : vector<32x64xf32>
    %cst_52 = arith.constant 1.000000e+00 : f32
    %123 = vector.broadcast %cst_52 : f32 to vector<32x64xf32>
    %124 = arith.subf %123, %122 : vector<32x64xf32>
    %125 = arith.mulf %96, %124 : vector<32x64xf32>
    %cst_53 = arith.constant 1.000000e+00 : f32
    %126 = vector.broadcast %cst_53 : f32 to vector<32x64xf32>
    %127 = arith.addf %126, %125 : vector<32x64xf32>
    %128 = arith.mulf %89, %127 : vector<32x64xf32>
    %c0_54 = arith.constant 0 : index
    %c0_55 = arith.constant 0 : index
    %129 = vector.load %arg11[%c0_54, %c0_55] : memref<64x32xf32, #tpu.memory_space<vmem>>, vector<64x32xf32>
    %cst_56 = arith.constant dense<0.000000e+00> : vector<32x32xf32>
    %130 = tpu.matmul %128, %129, %cst_56 {dimension_numbers = #tpu.dot_dimension_numbers<[1], [0], [0], [1], [0, 0, 1, 1], [], []>} : vector<32x64xf32>, vector<64x32xf32>, vector<32x32xf32> -> vector<32x32xf32>
    %c0_57 = arith.constant 0 : index
    %c0_58 = arith.constant 0 : index
    %131 = vector.load %arg12[%c0_57, %c0_58] : memref<1x32xf32, #tpu.memory_space<vmem>>, vector<1x32xf32>
    %132 = vector.broadcast %131 : vector<1x32xf32> to vector<32x32xf32>
    %133 = arith.addf %130, %132 : vector<32x32xf32>
    %134 = arith.addf %133, %82 : vector<32x32xf32>
    %c0_59 = arith.constant 0 : index
    %c0_60 = arith.constant 0 : index
    %135 = vector.load %arg13[%c0_59, %c0_60] : memref<1x32xf32, #tpu.memory_space<vmem>>, vector<1x32xf32>
    %c0_61 = arith.constant 0 : index
    %c0_62 = arith.constant 0 : index
    %136 = vector.load %arg14[%c0_61, %c0_62] : memref<1x32xf32, #tpu.memory_space<vmem>>, vector<1x32xf32>
    %cst_63 = arith.constant dense<0.000000e+00> : vector<32xf32>
    %137 = vector.multi_reduction <add>, %134, %cst_63 [1] : vector<32x32xf32> to vector<32xf32>
    %138 = vector.shape_cast %137 : vector<32xf32> to vector<32x1xf32>
    %cst_64 = arith.constant 3.200000e+01 : f32
    %139 = vector.broadcast %cst_64 : f32 to vector<32x1xf32>
    %140 = arith.divf %138, %139 : vector<32x1xf32>
    %141 = vector.broadcast %140 : vector<32x1xf32> to vector<32x32xf32>
    %142 = arith.subf %134, %141 : vector<32x32xf32>
    %143 = arith.mulf %142, %142 : vector<32x32xf32>
    %cst_65 = arith.constant dense<0.000000e+00> : vector<32xf32>
    %144 = vector.multi_reduction <add>, %143, %cst_65 [1] : vector<32x32xf32> to vector<32xf32>
    %145 = vector.shape_cast %144 : vector<32xf32> to vector<32x1xf32>
    %cst_66 = arith.constant 3.200000e+01 : f32
    %146 = vector.broadcast %cst_66 : f32 to vector<32x1xf32>
    %147 = arith.divf %145, %146 : vector<32x1xf32>
    %148 = vector.broadcast %140 : vector<32x1xf32> to vector<32x32xf32>
    %149 = arith.subf %134, %148 : vector<32x32xf32>
    %cst_67 = arith.constant 9.99999996E-13 : f32
    %150 = vector.broadcast %cst_67 : f32 to vector<32x1xf32>
    %151 = arith.addf %147, %150 : vector<32x1xf32>
    %152 = math.rsqrt %151 : vector<32x1xf32>
    %153 = vector.broadcast %152 : vector<32x1xf32> to vector<32x32xf32>
    %154 = arith.mulf %149, %153 : vector<32x32xf32>
    %155 = vector.broadcast %135 : vector<1x32xf32> to vector<32x32xf32>
    %156 = arith.mulf %154, %155 : vector<32x32xf32>
    %157 = vector.broadcast %136 : vector<1x32xf32> to vector<32x32xf32>
    %158 = arith.addf %156, %157 : vector<32x32xf32>
    %159 = vector.shape_cast %158 : vector<32x32xf32> to vector<4x8x32xf32>
    %c0_68 = arith.constant 0 : index
    %c0_69 = arith.constant 0 : index
    %c0_70 = arith.constant 0 : index
    %160 = vector.load %arg15[%c0_68, %c0_69, %c0_70] : memref<4x8x32xf32, #tpu.memory_space<vmem>>, vector<4x8x32xf32>
    tpu.vector_store %arg15[%c0_68, %c0_69, %c0_70], %159 {strides = array<i32>} : memref<4x8x32xf32, #tpu.memory_space<vmem>>, vector<4x8x32xf32>,
    return
  }
  func.func @transform_0(%arg0: i32) -> (i32, i32, i32) {
    %c0_i32 = arith.constant 0 : i32
    %c0_i32_0 = arith.constant 0 : i32
    %c0_i32_1 = arith.constant 0 : i32
    return %arg0, %c0_i32, %c0_i32_0 : i32, i32, i32
  }
  func.func @transform_1(%arg0: i32) -> (i32, i32, i32) {
    %c0_i32 = arith.constant 0 : i32
    %c0_i32_0 = arith.constant 0 : i32
    %c0_i32_1 = arith.constant 0 : i32
    return %arg0, %c0_i32, %c0_i32_0 : i32, i32, i32
  }
  func.func @transform_2(%arg0: i32) -> (i32, i32) {
    %c0_i32 = arith.constant 0 : i32
    %c0_i32_0 = arith.constant 0 : i32
    %c0_i32_1 = arith.constant 0 : i32
    return %c0_i32, %c0_i32_0 : i32, i32
  }
  func.func @transform_3(%arg0: i32) -> (i32, i32) {
    %c0_i32 = arith.constant 0 : i32
    %c0_i32_0 = arith.constant 0 : i32
    %c0_i32_1 = arith.constant 0 : i32
    return %c0_i32, %c0_i32_0 : i32, i32
  }
  func.func @transform_4(%arg0: i32) -> (i32, i32) {
    %c0_i32 = arith.constant 0 : i32
    %c0_i32_0 = arith.constant 0 : i32
    %c0_i32_1 = arith.constant 0 : i32
    return %c0_i32, %c0_i32_0 : i32, i32
  }
  func.func @transform_5(%arg0: i32) -> (i32, i32) {
    %c0_i32 = arith.constant 0 : i32
    %c0_i32_0 = arith.constant 0 : i32
    %c0_i32_1 = arith.constant 0 : i32
    return %c0_i32, %c0_i32_0 : i32, i32
  }
  func.func @transform_6(%arg0: i32) -> (i32, i32) {
    %c0_i32 = arith.constant 0 : i32
    %c0_i32_0 = arith.constant 0 : i32
    %c0_i32_1 = arith.constant 0 : i32
    return %c0_i32, %c0_i32_0 : i32, i32
  }
  func.func @transform_7(%arg0: i32) -> (i32, i32) {
    %c0_i32 = arith.constant 0 : i32
    %c0_i32_0 = arith.constant 0 : i32
    %c0_i32_1 = arith.constant 0 : i32
    return %c0_i32, %c0_i32_0 : i32, i32
  }
  func.func @transform_8(%arg0: i32) -> (i32, i32) {
    %c0_i32 = arith.constant 0 : i32
    %c0_i32_0 = arith.constant 0 : i32
    %c0_i32_1 = arith.constant 0 : i32
    return %c0_i32, %c0_i32_0 : i32, i32
  }
  func.func @transform_9(%arg0: i32) -> (i32, i32) {
    %c0_i32 = arith.constant 0 : i32
    %c0_i32_0 = arith.constant 0 : i32
    %c0_i32_1 = arith.constant 0 : i32
    return %c0_i32, %c0_i32_0 : i32, i32
  }
  func.func @transform_10(%arg0: i32) -> (i32, i32) {
    %c0_i32 = arith.constant 0 : i32
    %c0_i32_0 = arith.constant 0 : i32
    %c0_i32_1 = arith.constant 0 : i32
    return %c0_i32, %c0_i32_0 : i32, i32
  }
  func.func @transform_11(%arg0: i32) -> (i32, i32) {
    %c0_i32 = arith.constant 0 : i32
    %c0_i32_0 = arith.constant 0 : i32
    %c0_i32_1 = arith.constant 0 : i32
    return %c0_i32, %c0_i32_0 : i32, i32
  }
  func.func @transform_12(%arg0: i32) -> (i32, i32) {
    %c0_i32 = arith.constant 0 : i32
    %c0_i32_0 = arith.constant 0 : i32
    %c0_i32_1 = arith.constant 0 : i32
    return %c0_i32, %c0_i32_0 : i32, i32
  }
  func.func @transform_13(%arg0: i32) -> (i32, i32) {
    %c0_i32 = arith.constant 0 : i32
    %c0_i32_0 = arith.constant 0 : i32
    %c0_i32_1 = arith.constant 0 : i32
    return %c0_i32, %c0_i32_0 : i32, i32
  }
  func.func @transform_14(%arg0: i32) -> (i32, i32, i32) {
    %c0_i32 = arith.constant 0 : i32
    %c0_i32_0 = arith.constant 0 : i32
    %c0_i32_1 = arith.constant 0 : i32
    return %arg0, %c0_i32, %c0_i32_0 : i32, i32, i32
  }
}

module attributes {stable_mosaic.version = 11 : i64} {
  func.func @_gat_kernel(%arg0: i32, %arg1: memref<8x32xf32, #tpu.memory_space<vmem>>, %arg2: memref<8x8xf32, #tpu.memory_space<vmem>>, %arg3: memref<8x8xf32, #tpu.memory_space<vmem>>, %arg4: memref<32x64xf32, #tpu.memory_space<vmem>>, %arg5: memref<2x32xf32, #tpu.memory_space<vmem>>, %arg6: memref<64x32xf32, #tpu.memory_space<vmem>>, %arg7: memref<1x32xf32, #tpu.memory_space<vmem>>, %arg8: memref<64x32xf32, #tpu.memory_space<vmem>>, %arg9: memref<1x64xf32, #tpu.memory_space<vmem>>, %arg10: memref<1x64xf32, #tpu.memory_space<vmem>>, %arg11: memref<8x32xf32, #tpu.memory_space<vmem>>) attributes {dimension_semantics = [#tpu.dimension_semantics<arbitrary>], iteration_bounds = array<i64: 1>, scalar_prefetch = 0 : i64, scratch_operands = 0 : i64, tpu.core_type = #tpu.core_type<tc>, window_params = [{pipeline_mode = #tpu.pipeline_mode<synchronous>, transform_indices = @transform_0, window_bounds = array<i64: 8, 32>}, {pipeline_mode = #tpu.pipeline_mode<synchronous>, transform_indices = @transform_1, window_bounds = array<i64: 8, 8>}, {pipeline_mode = #tpu.pipeline_mode<synchronous>, transform_indices = @transform_2, window_bounds = array<i64: 8, 8>}, {pipeline_mode = #tpu.pipeline_mode<synchronous>, transform_indices = @transform_3, window_bounds = array<i64: 32, 64>}, {pipeline_mode = #tpu.pipeline_mode<synchronous>, transform_indices = @transform_4, window_bounds = array<i64: 2, 32>}, {pipeline_mode = #tpu.pipeline_mode<synchronous>, transform_indices = @transform_5, window_bounds = array<i64: 64, 32>}, {pipeline_mode = #tpu.pipeline_mode<synchronous>, transform_indices = @transform_6, window_bounds = array<i64: 1, 32>}, {pipeline_mode = #tpu.pipeline_mode<synchronous>, transform_indices = @transform_7, window_bounds = array<i64: 64, 32>}, {pipeline_mode = #tpu.pipeline_mode<synchronous>, transform_indices = @transform_8, window_bounds = array<i64: 1, 64>}, {pipeline_mode = #tpu.pipeline_mode<synchronous>, transform_indices = @transform_9, window_bounds = array<i64: 1, 64>}, {pipeline_mode = #tpu.pipeline_mode<synchronous>, transform_indices = @transform_10, window_bounds = array<i64: 8, 32>}]} {
    %c0 = arith.constant 0 : index
    %c0_0 = arith.constant 0 : index
    %0 = vector.load %arg1[%c0, %c0_0] : memref<8x32xf32, #tpu.memory_space<vmem>>, vector<8x32xf32>
    %c0_1 = arith.constant 0 : index
    %c0_2 = arith.constant 0 : index
    %1 = vector.load %arg2[%c0_1, %c0_2] : memref<8x8xf32, #tpu.memory_space<vmem>>, vector<8x8xf32>
    %c0_3 = arith.constant 0 : index
    %c0_4 = arith.constant 0 : index
    %2 = vector.load %arg3[%c0_3, %c0_4] : memref<8x8xf32, #tpu.memory_space<vmem>>, vector<8x8xf32>
    %c0_5 = arith.constant 0 : index
    %c0_6 = arith.constant 0 : index
    %3 = vector.load %arg5[%c0_5, %c0_6] : memref<2x32xf32, #tpu.memory_space<vmem>>, vector<2x32xf32>
    %c0_7 = arith.constant 0 : index
    %c0_8 = arith.constant 0 : index
    %4 = vector.load %arg7[%c0_7, %c0_8] : memref<1x32xf32, #tpu.memory_space<vmem>>, vector<1x32xf32>
    %c0_9 = arith.constant 0 : index
    %c0_10 = arith.constant 0 : index
    %5 = vector.load %arg4[%c0_9, %c0_10] : memref<32x64xf32, #tpu.memory_space<vmem>>, vector<32x64xf32>
    %cst = arith.constant dense<0.000000e+00> : vector<8x64xf32>
    %6 = tpu.matmul %0, %5, %cst {dimension_numbers = #tpu.dot_dimension_numbers<[1], [0], [0], [1], [0, 0, 1, 1], [], []>} : vector<8x32xf32>, vector<32x64xf32>, vector<8x64xf32> -> vector<8x64xf32>
    %7 = vector.extract_strided_slice %6 {offsets = [0, 0], sizes = [8, 32], strides = [1, 1]} : vector<8x64xf32> to vector<8x32xf32>
    %8 = vector.extract_strided_slice %3 {offsets = [0, 0], sizes = [1, 32], strides = [1, 1]} : vector<2x32xf32> to vector<1x32xf32>
    %9 = vector.shape_cast %7 : vector<8x32xf32> to vector<8x1x32xf32>
    %10 = vector.shape_cast %7 : vector<8x32xf32> to vector<1x8x32xf32>
    %11 = vector.broadcast %9 : vector<8x1x32xf32> to vector<8x8x32xf32>
    %12 = vector.broadcast %10 : vector<1x8x32xf32> to vector<8x8x32xf32>
    %13 = arith.addf %11, %12 : vector<8x8x32xf32>
    %cst_11 = arith.constant 0.000000e+00 : f32
    %14 = vector.broadcast %cst_11 : f32 to vector<8x8x32xf32>
    %15 = arith.cmpf oge, %13, %14 : vector<8x8x32xf32>
    %cst_12 = arith.constant 2.000000e-01 : f32
    %16 = vector.broadcast %cst_12 : f32 to vector<8x8x32xf32>
    %17 = arith.mulf %16, %13 : vector<8x8x32xf32>
    %18 = arith.select %15, %13, %17 : vector<8x8x32xi1>, vector<8x8x32xf32>
    %19 = vector.shape_cast %8 : vector<1x32xf32> to vector<1x1x32xf32>
    %20 = vector.broadcast %19 : vector<1x1x32xf32> to vector<8x8x32xf32>
    %21 = arith.mulf %18, %20 : vector<8x8x32xf32>
    %cst_13 = arith.constant dense<0.000000e+00> : vector<8x8xf32>
    %22 = vector.multi_reduction <add>, %21, %cst_13 [2] : vector<8x8x32xf32> to vector<8x8xf32>
    %cst_14 = arith.constant 0.000000e+00 : f32
    %23 = vector.broadcast %cst_14 : f32 to vector<8x8xf32>
    %24 = arith.cmpf ogt, %1, %23 : vector<8x8xf32>
    %cst_15 = arith.constant -1.000000e+30 : f32
    %25 = vector.broadcast %cst_15 : f32 to vector<8x8xf32>
    %26 = arith.select %24, %22, %25 : vector<8x8xi1>, vector<8x8xf32>
    %cst_16 = arith.constant dense<0xFF800000> : vector<8xf32>
    %27 = vector.multi_reduction <maximumf>, %26, %cst_16 [1] : vector<8x8xf32> to vector<8xf32>
    %28 = vector.shape_cast %27 : vector<8xf32> to vector<8x1xf32>
    %29 = vector.broadcast %28 : vector<8x1xf32> to vector<8x8xf32>
    %30 = arith.subf %26, %29 : vector<8x8xf32>
    %31 = math.exp %30 : vector<8x8xf32>
    %cst_17 = arith.constant 0.000000e+00 : f32
    %32 = vector.broadcast %cst_17 : f32 to vector<8x8xf32>
    %33 = arith.select %24, %31, %32 : vector<8x8xi1>, vector<8x8xf32>
    %cst_18 = arith.constant dense<0.000000e+00> : vector<8xf32>
    %34 = vector.multi_reduction <add>, %33, %cst_18 [1] : vector<8x8xf32> to vector<8xf32>
    %35 = vector.shape_cast %34 : vector<8xf32> to vector<8x1xf32>
    %cst_19 = arith.constant 1.000000e-30 : f32
    %36 = vector.broadcast %cst_19 : f32 to vector<8x1xf32>
    %37 = arith.maximumf %35, %36 : vector<8x1xf32>
    %38 = vector.broadcast %37 : vector<8x1xf32> to vector<8x8xf32>
    %39 = arith.divf %33, %38 : vector<8x8xf32>
    %cst_20 = arith.constant dense<0.000000e+00> : vector<8x32xf32>
    %40 = tpu.matmul %39, %7, %cst_20 {dimension_numbers = #tpu.dot_dimension_numbers<[1], [0], [0], [1], [0, 0, 1, 1], [], []>} : vector<8x8xf32>, vector<8x32xf32>, vector<8x32xf32> -> vector<8x32xf32>
    %41 = vector.extract_strided_slice %6 {offsets = [0, 32], sizes = [8, 32], strides = [1, 1]} : vector<8x64xf32> to vector<8x32xf32>
    %42 = vector.extract_strided_slice %3 {offsets = [1, 0], sizes = [1, 32], strides = [1, 1]} : vector<2x32xf32> to vector<1x32xf32>
    %43 = vector.shape_cast %41 : vector<8x32xf32> to vector<8x1x32xf32>
    %44 = vector.shape_cast %41 : vector<8x32xf32> to vector<1x8x32xf32>
    %45 = vector.broadcast %43 : vector<8x1x32xf32> to vector<8x8x32xf32>
    %46 = vector.broadcast %44 : vector<1x8x32xf32> to vector<8x8x32xf32>
    %47 = arith.addf %45, %46 : vector<8x8x32xf32>
    %cst_21 = arith.constant 0.000000e+00 : f32
    %48 = vector.broadcast %cst_21 : f32 to vector<8x8x32xf32>
    %49 = arith.cmpf oge, %47, %48 : vector<8x8x32xf32>
    %cst_22 = arith.constant 2.000000e-01 : f32
    %50 = vector.broadcast %cst_22 : f32 to vector<8x8x32xf32>
    %51 = arith.mulf %50, %47 : vector<8x8x32xf32>
    %52 = arith.select %49, %47, %51 : vector<8x8x32xi1>, vector<8x8x32xf32>
    %53 = vector.shape_cast %42 : vector<1x32xf32> to vector<1x1x32xf32>
    %54 = vector.broadcast %53 : vector<1x1x32xf32> to vector<8x8x32xf32>
    %55 = arith.mulf %52, %54 : vector<8x8x32xf32>
    %cst_23 = arith.constant dense<0.000000e+00> : vector<8x8xf32>
    %56 = vector.multi_reduction <add>, %55, %cst_23 [2] : vector<8x8x32xf32> to vector<8x8xf32>
    %cst_24 = arith.constant 0.000000e+00 : f32
    %57 = vector.broadcast %cst_24 : f32 to vector<8x8xf32>
    %58 = arith.cmpf ogt, %1, %57 : vector<8x8xf32>
    %cst_25 = arith.constant -1.000000e+30 : f32
    %59 = vector.broadcast %cst_25 : f32 to vector<8x8xf32>
    %60 = arith.select %58, %56, %59 : vector<8x8xi1>, vector<8x8xf32>
    %cst_26 = arith.constant dense<0xFF800000> : vector<8xf32>
    %61 = vector.multi_reduction <maximumf>, %60, %cst_26 [1] : vector<8x8xf32> to vector<8xf32>
    %62 = vector.shape_cast %61 : vector<8xf32> to vector<8x1xf32>
    %63 = vector.broadcast %62 : vector<8x1xf32> to vector<8x8xf32>
    %64 = arith.subf %60, %63 : vector<8x8xf32>
    %65 = math.exp %64 : vector<8x8xf32>
    %cst_27 = arith.constant 0.000000e+00 : f32
    %66 = vector.broadcast %cst_27 : f32 to vector<8x8xf32>
    %67 = arith.select %58, %65, %66 : vector<8x8xi1>, vector<8x8xf32>
    %cst_28 = arith.constant dense<0.000000e+00> : vector<8xf32>
    %68 = vector.multi_reduction <add>, %67, %cst_28 [1] : vector<8x8xf32> to vector<8xf32>
    %69 = vector.shape_cast %68 : vector<8xf32> to vector<8x1xf32>
    %cst_29 = arith.constant 1.000000e-30 : f32
    %70 = vector.broadcast %cst_29 : f32 to vector<8x1xf32>
    %71 = arith.maximumf %69, %70 : vector<8x1xf32>
    %72 = vector.broadcast %71 : vector<8x1xf32> to vector<8x8xf32>
    %73 = arith.divf %67, %72 : vector<8x8xf32>
    %cst_30 = arith.constant dense<0.000000e+00> : vector<8x32xf32>
    %74 = tpu.matmul %73, %41, %cst_30 {dimension_numbers = #tpu.dot_dimension_numbers<[1], [0], [0], [1], [0, 0, 1, 1], [], []>} : vector<8x8xf32>, vector<8x32xf32>, vector<8x32xf32> -> vector<8x32xf32>
    %75 = tpu.concatenate %40, %74 in 1 : vector<8x32xf32>, vector<8x32xf32> -> vector<8x64xf32>
    %cst_31 = arith.constant 0.000000e+00 : f32
    %76 = vector.broadcast %cst_31 : f32 to vector<8x64xf32>
    %77 = arith.cmpf ogt, %75, %76 : vector<8x64xf32>
    %cst_32 = arith.constant 0.000000e+00 : f32
    %78 = vector.broadcast %cst_32 : f32 to vector<8x64xf32>
    %79 = arith.minimumf %75, %78 : vector<8x64xf32>
    %80 = math.exp %79 : vector<8x64xf32>
    %cst_33 = arith.constant 1.000000e+00 : f32
    %81 = vector.broadcast %cst_33 : f32 to vector<8x64xf32>
    %82 = arith.subf %80, %81 : vector<8x64xf32>
    %83 = arith.select %77, %75, %82 : vector<8x64xi1>, vector<8x64xf32>
    %c0_34 = arith.constant 0 : index
    %c0_35 = arith.constant 0 : index
    %84 = vector.load %arg9[%c0_34, %c0_35] : memref<1x64xf32, #tpu.memory_space<vmem>>, vector<1x64xf32>
    %c0_36 = arith.constant 0 : index
    %c0_37 = arith.constant 0 : index
    %85 = vector.load %arg10[%c0_36, %c0_37] : memref<1x64xf32, #tpu.memory_space<vmem>>, vector<1x64xf32>
    %cst_38 = arith.constant dense<0.000000e+00> : vector<8xf32>
    %86 = vector.multi_reduction <add>, %83, %cst_38 [1] : vector<8x64xf32> to vector<8xf32>
    %87 = vector.shape_cast %86 : vector<8xf32> to vector<8x1xf32>
    %cst_39 = arith.constant 6.400000e+01 : f32
    %88 = vector.broadcast %cst_39 : f32 to vector<8x1xf32>
    %89 = arith.divf %87, %88 : vector<8x1xf32>
    %90 = vector.broadcast %89 : vector<8x1xf32> to vector<8x64xf32>
    %91 = arith.subf %83, %90 : vector<8x64xf32>
    %92 = arith.mulf %91, %91 : vector<8x64xf32>
    %cst_40 = arith.constant dense<0.000000e+00> : vector<8xf32>
    %93 = vector.multi_reduction <add>, %92, %cst_40 [1] : vector<8x64xf32> to vector<8xf32>
    %94 = vector.shape_cast %93 : vector<8xf32> to vector<8x1xf32>
    %cst_41 = arith.constant 6.400000e+01 : f32
    %95 = vector.broadcast %cst_41 : f32 to vector<8x1xf32>
    %96 = arith.divf %94, %95 : vector<8x1xf32>
    %97 = vector.broadcast %89 : vector<8x1xf32> to vector<8x64xf32>
    %98 = arith.subf %83, %97 : vector<8x64xf32>
    %cst_42 = arith.constant 9.99999974E-6 : f32
    %99 = vector.broadcast %cst_42 : f32 to vector<8x1xf32>
    %100 = arith.addf %96, %99 : vector<8x1xf32>
    %101 = math.rsqrt %100 : vector<8x1xf32>
    %102 = vector.broadcast %101 : vector<8x1xf32> to vector<8x64xf32>
    %103 = arith.mulf %98, %102 : vector<8x64xf32>
    %104 = vector.broadcast %84 : vector<1x64xf32> to vector<8x64xf32>
    %105 = arith.mulf %103, %104 : vector<8x64xf32>
    %106 = vector.broadcast %85 : vector<1x64xf32> to vector<8x64xf32>
    %107 = arith.addf %105, %106 : vector<8x64xf32>
    %cst_43 = arith.constant 0.000000e+00 : f32
    %108 = vector.broadcast %cst_43 : f32 to vector<8x64xf32>
    %109 = arith.maximumf %107, %108 : vector<8x64xf32>
    %c0_44 = arith.constant 0 : index
    %c0_45 = arith.constant 0 : index
    %110 = vector.load %arg6[%c0_44, %c0_45] : memref<64x32xf32, #tpu.memory_space<vmem>>, vector<64x32xf32>
    %cst_46 = arith.constant dense<0.000000e+00> : vector<8x32xf32>
    %111 = tpu.matmul %109, %110, %cst_46 {dimension_numbers = #tpu.dot_dimension_numbers<[1], [0], [0], [1], [0, 0, 1, 1], [], []>} : vector<8x64xf32>, vector<64x32xf32>, vector<8x32xf32> -> vector<8x32xf32>
    %112 = vector.shape_cast %111 : vector<8x32xf32> to vector<8x1x32xf32>
    %113 = vector.shape_cast %111 : vector<8x32xf32> to vector<1x8x32xf32>
    %114 = vector.broadcast %112 : vector<8x1x32xf32> to vector<8x8x32xf32>
    %115 = vector.broadcast %113 : vector<1x8x32xf32> to vector<8x8x32xf32>
    %116 = arith.addf %114, %115 : vector<8x8x32xf32>
    %cst_47 = arith.constant 0.000000e+00 : f32
    %117 = vector.broadcast %cst_47 : f32 to vector<8x8x32xf32>
    %118 = arith.cmpf oge, %116, %117 : vector<8x8x32xf32>
    %cst_48 = arith.constant 2.000000e-01 : f32
    %119 = vector.broadcast %cst_48 : f32 to vector<8x8x32xf32>
    %120 = arith.mulf %119, %116 : vector<8x8x32xf32>
    %121 = arith.select %118, %116, %120 : vector<8x8x32xi1>, vector<8x8x32xf32>
    %122 = vector.shape_cast %4 : vector<1x32xf32> to vector<1x1x32xf32>
    %123 = vector.broadcast %122 : vector<1x1x32xf32> to vector<8x8x32xf32>
    %124 = arith.mulf %121, %123 : vector<8x8x32xf32>
    %cst_49 = arith.constant dense<0.000000e+00> : vector<8x8xf32>
    %125 = vector.multi_reduction <add>, %124, %cst_49 [2] : vector<8x8x32xf32> to vector<8x8xf32>
    %cst_50 = arith.constant 0.000000e+00 : f32
    %126 = vector.broadcast %cst_50 : f32 to vector<8x8xf32>
    %127 = arith.cmpf ogt, %2, %126 : vector<8x8xf32>
    %cst_51 = arith.constant -1.000000e+30 : f32
    %128 = vector.broadcast %cst_51 : f32 to vector<8x8xf32>
    %129 = arith.select %127, %125, %128 : vector<8x8xi1>, vector<8x8xf32>
    %cst_52 = arith.constant dense<0xFF800000> : vector<8xf32>
    %130 = vector.multi_reduction <maximumf>, %129, %cst_52 [1] : vector<8x8xf32> to vector<8xf32>
    %131 = vector.shape_cast %130 : vector<8xf32> to vector<8x1xf32>
    %132 = vector.broadcast %131 : vector<8x1xf32> to vector<8x8xf32>
    %133 = arith.subf %129, %132 : vector<8x8xf32>
    %134 = math.exp %133 : vector<8x8xf32>
    %cst_53 = arith.constant 0.000000e+00 : f32
    %135 = vector.broadcast %cst_53 : f32 to vector<8x8xf32>
    %136 = arith.select %127, %134, %135 : vector<8x8xi1>, vector<8x8xf32>
    %cst_54 = arith.constant dense<0.000000e+00> : vector<8xf32>
    %137 = vector.multi_reduction <add>, %136, %cst_54 [1] : vector<8x8xf32> to vector<8xf32>
    %138 = vector.shape_cast %137 : vector<8xf32> to vector<8x1xf32>
    %cst_55 = arith.constant 1.000000e-30 : f32
    %139 = vector.broadcast %cst_55 : f32 to vector<8x1xf32>
    %140 = arith.maximumf %138, %139 : vector<8x1xf32>
    %141 = vector.broadcast %140 : vector<8x1xf32> to vector<8x8xf32>
    %142 = arith.divf %136, %141 : vector<8x8xf32>
    %cst_56 = arith.constant dense<0.000000e+00> : vector<8x32xf32>
    %143 = tpu.matmul %142, %111, %cst_56 {dimension_numbers = #tpu.dot_dimension_numbers<[1], [0], [0], [1], [0, 0, 1, 1], [], []>} : vector<8x8xf32>, vector<8x32xf32>, vector<8x32xf32> -> vector<8x32xf32>
    %c0_57 = arith.constant 0 : index
    %c0_58 = arith.constant 0 : index
    %144 = vector.load %arg8[%c0_57, %c0_58] : memref<64x32xf32, #tpu.memory_space<vmem>>, vector<64x32xf32>
    %cst_59 = arith.constant dense<0.000000e+00> : vector<8x32xf32>
    %145 = tpu.matmul %109, %144, %cst_59 {dimension_numbers = #tpu.dot_dimension_numbers<[1], [0], [0], [1], [0, 0, 1, 1], [], []>} : vector<8x64xf32>, vector<64x32xf32>, vector<8x32xf32> -> vector<8x32xf32>
    %146 = arith.addf %143, %145 : vector<8x32xf32>
    %cst_60 = arith.constant 0.000000e+00 : f32
    %147 = vector.broadcast %cst_60 : f32 to vector<8x32xf32>
    %148 = arith.cmpf ogt, %146, %147 : vector<8x32xf32>
    %cst_61 = arith.constant 0.000000e+00 : f32
    %149 = vector.broadcast %cst_61 : f32 to vector<8x32xf32>
    %150 = arith.minimumf %146, %149 : vector<8x32xf32>
    %151 = math.exp %150 : vector<8x32xf32>
    %cst_62 = arith.constant 1.000000e+00 : f32
    %152 = vector.broadcast %cst_62 : f32 to vector<8x32xf32>
    %153 = arith.subf %151, %152 : vector<8x32xf32>
    %154 = arith.select %148, %146, %153 : vector<8x32xi1>, vector<8x32xf32>
    %c0_63 = arith.constant 0 : index
    %c0_64 = arith.constant 0 : index
    %155 = vector.load %arg11[%c0_63, %c0_64] : memref<8x32xf32, #tpu.memory_space<vmem>>, vector<8x32xf32>
    tpu.vector_store %arg11[%c0_63, %c0_64], %154 {strides = array<i32>} : memref<8x32xf32, #tpu.memory_space<vmem>>, vector<8x32xf32>,
    return
  }
  func.func @transform_0(%arg0: i32) -> (i32, i32) {
    %c0_i32 = arith.constant 0 : i32
    %c0_i32_0 = arith.constant 0 : i32
    %c0_i32_1 = arith.constant 0 : i32
    return %c0_i32, %c0_i32_0 : i32, i32
  }
  func.func @transform_1(%arg0: i32) -> (i32, i32) {
    %c0_i32 = arith.constant 0 : i32
    %c0_i32_0 = arith.constant 0 : i32
    %c0_i32_1 = arith.constant 0 : i32
    return %c0_i32, %c0_i32_0 : i32, i32
  }
  func.func @transform_2(%arg0: i32) -> (i32, i32) {
    %c0_i32 = arith.constant 0 : i32
    %c0_i32_0 = arith.constant 0 : i32
    %c0_i32_1 = arith.constant 0 : i32
    return %c0_i32, %c0_i32_0 : i32, i32
  }
  func.func @transform_3(%arg0: i32) -> (i32, i32) {
    %c0_i32 = arith.constant 0 : i32
    %c0_i32_0 = arith.constant 0 : i32
    %c0_i32_1 = arith.constant 0 : i32
    return %c0_i32, %c0_i32_0 : i32, i32
  }
  func.func @transform_4(%arg0: i32) -> (i32, i32) {
    %c0_i32 = arith.constant 0 : i32
    %c0_i32_0 = arith.constant 0 : i32
    %c0_i32_1 = arith.constant 0 : i32
    return %c0_i32, %c0_i32_0 : i32, i32
  }
  func.func @transform_5(%arg0: i32) -> (i32, i32) {
    %c0_i32 = arith.constant 0 : i32
    %c0_i32_0 = arith.constant 0 : i32
    %c0_i32_1 = arith.constant 0 : i32
    return %c0_i32, %c0_i32_0 : i32, i32
  }
  func.func @transform_6(%arg0: i32) -> (i32, i32) {
    %c0_i32 = arith.constant 0 : i32
    %c0_i32_0 = arith.constant 0 : i32
    %c0_i32_1 = arith.constant 0 : i32
    return %c0_i32, %c0_i32_0 : i32, i32
  }
  func.func @transform_7(%arg0: i32) -> (i32, i32) {
    %c0_i32 = arith.constant 0 : i32
    %c0_i32_0 = arith.constant 0 : i32
    %c0_i32_1 = arith.constant 0 : i32
    return %c0_i32, %c0_i32_0 : i32, i32
  }
  func.func @transform_8(%arg0: i32) -> (i32, i32) {
    %c0_i32 = arith.constant 0 : i32
    %c0_i32_0 = arith.constant 0 : i32
    %c0_i32_1 = arith.constant 0 : i32
    return %c0_i32, %c0_i32_0 : i32, i32
  }
  func.func @transform_9(%arg0: i32) -> (i32, i32) {
    %c0_i32 = arith.constant 0 : i32
    %c0_i32_0 = arith.constant 0 : i32
    %c0_i32_1 = arith.constant 0 : i32
    return %c0_i32, %c0_i32_0 : i32, i32
  }
  func.func @transform_10(%arg0: i32) -> (i32, i32) {
    %c0_i32 = arith.constant 0 : i32
    %c0_i32_0 = arith.constant 0 : i32
    %c0_i32_1 = arith.constant 0 : i32
    return %c0_i32, %c0_i32_0 : i32, i32
  }
}

module attributes {stable_mosaic.version = 11 : i64} {
  func.func @_bert_layer_kernel(%arg0: i32, %arg1: memref<4x8x32xf32, #tpu.memory_space<vmem>>, %arg2: memref<4x1x8xf32, #tpu.memory_space<vmem>>, %arg3: memref<32x96xf32, #tpu.memory_space<vmem>>, %arg4: memref<1x96xf32, #tpu.memory_space<vmem>>, %arg5: memref<32x32xf32, #tpu.memory_space<vmem>>, %arg6: memref<1x32xf32, #tpu.memory_space<vmem>>, %arg7: memref<1x32xf32, #tpu.memory_space<vmem>>, %arg8: memref<1x32xf32, #tpu.memory_space<vmem>>, %arg9: memref<32x64xf32, #tpu.memory_space<vmem>>, %arg10: memref<1x64xf32, #tpu.memory_space<vmem>>, %arg11: memref<64x32xf32, #tpu.memory_space<vmem>>, %arg12: memref<1x32xf32, #tpu.memory_space<vmem>>, %arg13: memref<1x32xf32, #tpu.memory_space<vmem>>, %arg14: memref<1x32xf32, #tpu.memory_space<vmem>>, %arg15: memref<4x8x32xf32, #tpu.memory_space<vmem>>) attributes {dimension_semantics = [#tpu.dimension_semantics<parallel>], iteration_bounds = array<i64: 2>, scalar_prefetch = 0 : i64, scratch_operands = 0 : i64, tpu.core_type = #tpu.core_type<tc>, window_params = [{transform_indices = @transform_0, window_bounds = array<i64: 4, 8, 32>}, {transform_indices = @transform_1, window_bounds = array<i64: 4, 1, 8>}, {pipeline_mode = #tpu.pipeline_mode<synchronous>, transform_indices = @transform_2, window_bounds = array<i64: 32, 96>}, {pipeline_mode = #tpu.pipeline_mode<synchronous>, transform_indices = @transform_3, window_bounds = array<i64: 1, 96>}, {pipeline_mode = #tpu.pipeline_mode<synchronous>, transform_indices = @transform_4, window_bounds = array<i64: 32, 32>}, {pipeline_mode = #tpu.pipeline_mode<synchronous>, transform_indices = @transform_5, window_bounds = array<i64: 1, 32>}, {pipeline_mode = #tpu.pipeline_mode<synchronous>, transform_indices = @transform_6, window_bounds = array<i64: 1, 32>}, {pipeline_mode = #tpu.pipeline_mode<synchronous>, transform_indices = @transform_7, window_bounds = array<i64: 1, 32>}, {pipeline_mode = #tpu.pipeline_mode<synchronous>, transform_indices = @transform_8, window_bounds = array<i64: 32, 64>}, {pipeline_mode = #tpu.pipeline_mode<synchronous>, transform_indices = @transform_9, window_bounds = array<i64: 1, 64>}, {pipeline_mode = #tpu.pipeline_mode<synchronous>, transform_indices = @transform_10, window_bounds = array<i64: 64, 32>}, {pipeline_mode = #tpu.pipeline_mode<synchronous>, transform_indices = @transform_11, window_bounds = array<i64: 1, 32>}, {pipeline_mode = #tpu.pipeline_mode<synchronous>, transform_indices = @transform_12, window_bounds = array<i64: 1, 32>}, {pipeline_mode = #tpu.pipeline_mode<synchronous>, transform_indices = @transform_13, window_bounds = array<i64: 1, 32>}, {transform_indices = @transform_14, window_bounds = array<i64: 4, 8, 32>}]} {
    %c0 = arith.constant 0 : index
    %c0_0 = arith.constant 0 : index
    %c0_1 = arith.constant 0 : index
    %0 = vector.load %arg1[%c0, %c0_0, %c0_1] : memref<4x8x32xf32, #tpu.memory_space<vmem>>, vector<4x8x32xf32>
    %1 = vector.shape_cast %0 : vector<4x8x32xf32> to vector<32x32xf32>
    %c0_2 = arith.constant 0 : index
    %c0_3 = arith.constant 0 : index
    %c0_4 = arith.constant 0 : index
    %2 = vector.load %arg2[%c0_2, %c0_3, %c0_4] : memref<4x1x8xf32, #tpu.memory_space<vmem>>, vector<4x1x8xf32>
    %c0_5 = arith.constant 0 : index
    %c0_6 = arith.constant 0 : index
    %3 = vector.load %arg3[%c0_5, %c0_6] : memref<32x96xf32, #tpu.memory_space<vmem>>, vector<32x96xf32>
    %cst = arith.constant dense<0.000000e+00> : vector<32x96xf32>
    %4 = tpu.matmul %1, %3, %cst {dimension_numbers = #tpu.dot_dimension_numbers<[1], [0], [0], [1], [0, 0, 1, 1], [], []>} : vector<32x32xf32>, vector<32x96xf32>, vector<32x96xf32> -> vector<32x96xf32>
    %c0_7 = arith.constant 0 : index
    %c0_8 = arith.constant 0 : index
    %5 = vector.load %arg4[%c0_7, %c0_8] : memref<1x96xf32, #tpu.memory_space<vmem>>, vector<1x96xf32>
    %6 = vector.broadcast %5 : vector<1x96xf32> to vector<32x96xf32>
    %7 = arith.addf %4, %6 : vector<32x96xf32>
    %8 = vector.extract_strided_slice %7 {offsets = [0, 0], sizes = [32, 16], strides = [1, 1]} : vector<32x96xf32> to vector<32x16xf32>
    %9 = vector.shape_cast %8 : vector<32x16xf32> to vector<4x8x16xf32>
    %10 = vector.extract_strided_slice %7 {offsets = [0, 32], sizes = [32, 16], strides = [1, 1]} : vector<32x96xf32> to vector<32x16xf32>
    %11 = vector.shape_cast %10 : vector<32x16xf32> to vector<4x8x16xf32>
    %12 = vector.extract_strided_slice %7 {offsets = [0, 64], sizes = [32, 16], strides = [1, 1]} : vector<32x96xf32> to vector<32x16xf32>
    %13 = vector.shape_cast %12 : vector<32x16xf32> to vector<4x8x16xf32>
    "tpu.trace_start"() <{level = 10 : i32, message = "bqd,bkd->bqk"}> : () -> ()
    %cst_9 = arith.constant dense<0.000000e+00> : vector<4x8x8xf32>
    %14 = tpu.matmul %9, %11, %cst_9 {dimension_numbers = #tpu.dot_dimension_numbers<[2], [2], [1], [1], [0, 0, 0, 1, 1, 1], [0], [0]>} : vector<4x8x16xf32>, vector<4x8x16xf32>, vector<4x8x8xf32> -> vector<4x8x8xf32>
    "tpu.trace_stop"() : () -> ()
    %cst_10 = arith.constant 2.500000e-01 : f32
    %15 = vector.broadcast %cst_10 : f32 to vector<4x8x8xf32>
    %16 = arith.mulf %14, %15 : vector<4x8x8xf32>
    %17 = vector.broadcast %2 : vector<4x1x8xf32> to vector<4x8x8xf32>
    %18 = arith.addf %16, %17 : vector<4x8x8xf32>
    %cst_11 = arith.constant dense<0xFF800000> : vector<4x8xf32>
    %19 = vector.multi_reduction <maximumf>, %18, %cst_11 [2] : vector<4x8x8xf32> to vector<4x8xf32>
    %20 = vector.shape_cast %19 : vector<4x8xf32> to vector<4x8x1xf32>
    %21 = vector.broadcast %20 : vector<4x8x1xf32> to vector<4x8x8xf32>
    %22 = arith.subf %18, %21 : vector<4x8x8xf32>
    %23 = math.exp %22 : vector<4x8x8xf32>
    %cst_12 = arith.constant dense<0.000000e+00> : vector<4x8xf32>
    %24 = vector.multi_reduction <add>, %23, %cst_12 [2] : vector<4x8x8xf32> to vector<4x8xf32>
    %25 = vector.shape_cast %24 : vector<4x8xf32> to vector<4x8x1xf32>
    %26 = vector.broadcast %25 : vector<4x8x1xf32> to vector<4x8x8xf32>
    %27 = arith.divf %23, %26 : vector<4x8x8xf32>
    "tpu.trace_start"() <{level = 10 : i32, message = "bqk,bkd->bqd"}> : () -> ()
    %cst_13 = arith.constant dense<0.000000e+00> : vector<4x8x16xf32>
    %28 = tpu.matmul %27, %13, %cst_13 {dimension_numbers = #tpu.dot_dimension_numbers<[2], [1], [1], [2], [0, 0, 0, 1, 1, 2], [0], [0]>} : vector<4x8x8xf32>, vector<4x8x16xf32>, vector<4x8x16xf32> -> vector<4x8x16xf32>
    "tpu.trace_stop"() : () -> ()
    %29 = vector.shape_cast %28 : vector<4x8x16xf32> to vector<32x16xf32>
    %30 = vector.extract_strided_slice %7 {offsets = [0, 16], sizes = [32, 16], strides = [1, 1]} : vector<32x96xf32> to vector<32x16xf32>
    %31 = vector.shape_cast %30 : vector<32x16xf32> to vector<4x8x16xf32>
    %32 = vector.extract_strided_slice %7 {offsets = [0, 48], sizes = [32, 16], strides = [1, 1]} : vector<32x96xf32> to vector<32x16xf32>
    %33 = vector.shape_cast %32 : vector<32x16xf32> to vector<4x8x16xf32>
    %34 = vector.extract_strided_slice %7 {offsets = [0, 80], sizes = [32, 16], strides = [1, 1]} : vector<32x96xf32> to vector<32x16xf32>
    %35 = vector.shape_cast %34 : vector<32x16xf32> to vector<4x8x16xf32>
    "tpu.trace_start"() <{level = 10 : i32, message = "bqd,bkd->bqk"}> : () -> ()
    %cst_14 = arith.constant dense<0.000000e+00> : vector<4x8x8xf32>
    %36 = tpu.matmul %31, %33, %cst_14 {dimension_numbers = #tpu.dot_dimension_numbers<[2], [2], [1], [1], [0, 0, 0, 1, 1, 1], [0], [0]>} : vector<4x8x16xf32>, vector<4x8x16xf32>, vector<4x8x8xf32> -> vector<4x8x8xf32>
    "tpu.trace_stop"() : () -> ()
    %cst_15 = arith.constant 2.500000e-01 : f32
    %37 = vector.broadcast %cst_15 : f32 to vector<4x8x8xf32>
    %38 = arith.mulf %36, %37 : vector<4x8x8xf32>
    %39 = vector.broadcast %2 : vector<4x1x8xf32> to vector<4x8x8xf32>
    %40 = arith.addf %38, %39 : vector<4x8x8xf32>
    %cst_16 = arith.constant dense<0xFF800000> : vector<4x8xf32>
    %41 = vector.multi_reduction <maximumf>, %40, %cst_16 [2] : vector<4x8x8xf32> to vector<4x8xf32>
    %42 = vector.shape_cast %41 : vector<4x8xf32> to vector<4x8x1xf32>
    %43 = vector.broadcast %42 : vector<4x8x1xf32> to vector<4x8x8xf32>
    %44 = arith.subf %40, %43 : vector<4x8x8xf32>
    %45 = math.exp %44 : vector<4x8x8xf32>
    %cst_17 = arith.constant dense<0.000000e+00> : vector<4x8xf32>
    %46 = vector.multi_reduction <add>, %45, %cst_17 [2] : vector<4x8x8xf32> to vector<4x8xf32>
    %47 = vector.shape_cast %46 : vector<4x8xf32> to vector<4x8x1xf32>
    %48 = vector.broadcast %47 : vector<4x8x1xf32> to vector<4x8x8xf32>
    %49 = arith.divf %45, %48 : vector<4x8x8xf32>
    "tpu.trace_start"() <{level = 10 : i32, message = "bqk,bkd->bqd"}> : () -> ()
    %cst_18 = arith.constant dense<0.000000e+00> : vector<4x8x16xf32>
    %50 = tpu.matmul %49, %35, %cst_18 {dimension_numbers = #tpu.dot_dimension_numbers<[2], [1], [1], [2], [0, 0, 0, 1, 1, 2], [0], [0]>} : vector<4x8x8xf32>, vector<4x8x16xf32>, vector<4x8x16xf32> -> vector<4x8x16xf32>
    "tpu.trace_stop"() : () -> ()
    %51 = vector.shape_cast %50 : vector<4x8x16xf32> to vector<32x16xf32>
    %52 = tpu.concatenate %29, %51 in 1 : vector<32x16xf32>, vector<32x16xf32> -> vector<32x32xf32>
    %c0_19 = arith.constant 0 : index
    %c0_20 = arith.constant 0 : index
    %53 = vector.load %arg5[%c0_19, %c0_20] : memref<32x32xf32, #tpu.memory_space<vmem>>, vector<32x32xf32>
    %cst_21 = arith.constant dense<0.000000e+00> : vector<32x32xf32>
    %54 = tpu.matmul %52, %53, %cst_21 {dimension_numbers = #tpu.dot_dimension_numbers<[1], [0], [0], [1], [0, 0, 1, 1], [], []>} : vector<32x32xf32>, vector<32x32xf32>, vector<32x32xf32> -> vector<32x32xf32>
    %c0_22 = arith.constant 0 : index
    %c0_23 = arith.constant 0 : index
    %55 = vector.load %arg6[%c0_22, %c0_23] : memref<1x32xf32, #tpu.memory_space<vmem>>, vector<1x32xf32>
    %56 = vector.broadcast %55 : vector<1x32xf32> to vector<32x32xf32>
    %57 = arith.addf %54, %56 : vector<32x32xf32>
    %58 = arith.addf %57, %1 : vector<32x32xf32>
    %c0_24 = arith.constant 0 : index
    %c0_25 = arith.constant 0 : index
    %59 = vector.load %arg7[%c0_24, %c0_25] : memref<1x32xf32, #tpu.memory_space<vmem>>, vector<1x32xf32>
    %c0_26 = arith.constant 0 : index
    %c0_27 = arith.constant 0 : index
    %60 = vector.load %arg8[%c0_26, %c0_27] : memref<1x32xf32, #tpu.memory_space<vmem>>, vector<1x32xf32>
    %cst_28 = arith.constant dense<0.000000e+00> : vector<32xf32>
    %61 = vector.multi_reduction <add>, %58, %cst_28 [1] : vector<32x32xf32> to vector<32xf32>
    %62 = vector.shape_cast %61 : vector<32xf32> to vector<32x1xf32>
    %cst_29 = arith.constant 3.200000e+01 : f32
    %63 = vector.broadcast %cst_29 : f32 to vector<32x1xf32>
    %64 = arith.divf %62, %63 : vector<32x1xf32>
    %65 = vector.broadcast %64 : vector<32x1xf32> to vector<32x32xf32>
    %66 = arith.subf %58, %65 : vector<32x32xf32>
    %67 = arith.mulf %66, %66 : vector<32x32xf32>
    %cst_30 = arith.constant dense<0.000000e+00> : vector<32xf32>
    %68 = vector.multi_reduction <add>, %67, %cst_30 [1] : vector<32x32xf32> to vector<32xf32>
    %69 = vector.shape_cast %68 : vector<32xf32> to vector<32x1xf32>
    %cst_31 = arith.constant 3.200000e+01 : f32
    %70 = vector.broadcast %cst_31 : f32 to vector<32x1xf32>
    %71 = arith.divf %69, %70 : vector<32x1xf32>
    %72 = vector.broadcast %64 : vector<32x1xf32> to vector<32x32xf32>
    %73 = arith.subf %58, %72 : vector<32x32xf32>
    %cst_32 = arith.constant 9.99999996E-13 : f32
    %74 = vector.broadcast %cst_32 : f32 to vector<32x1xf32>
    %75 = arith.addf %71, %74 : vector<32x1xf32>
    %76 = math.rsqrt %75 : vector<32x1xf32>
    %77 = vector.broadcast %76 : vector<32x1xf32> to vector<32x32xf32>
    %78 = arith.mulf %73, %77 : vector<32x32xf32>
    %79 = vector.broadcast %59 : vector<1x32xf32> to vector<32x32xf32>
    %80 = arith.mulf %78, %79 : vector<32x32xf32>
    %81 = vector.broadcast %60 : vector<1x32xf32> to vector<32x32xf32>
    %82 = arith.addf %80, %81 : vector<32x32xf32>
    %c0_33 = arith.constant 0 : index
    %c0_34 = arith.constant 0 : index
    %83 = vector.load %arg9[%c0_33, %c0_34] : memref<32x64xf32, #tpu.memory_space<vmem>>, vector<32x64xf32>
    %cst_35 = arith.constant dense<0.000000e+00> : vector<32x64xf32>
    %84 = tpu.matmul %82, %83, %cst_35 {dimension_numbers = #tpu.dot_dimension_numbers<[1], [0], [0], [1], [0, 0, 1, 1], [], []>} : vector<32x32xf32>, vector<32x64xf32>, vector<32x64xf32> -> vector<32x64xf32>
    %c0_36 = arith.constant 0 : index
    %c0_37 = arith.constant 0 : index
    %85 = vector.load %arg10[%c0_36, %c0_37] : memref<1x64xf32, #tpu.memory_space<vmem>>, vector<1x64xf32>
    %86 = vector.broadcast %85 : vector<1x64xf32> to vector<32x64xf32>
    %87 = arith.addf %84, %86 : vector<32x64xf32>
    %cst_38 = arith.constant 5.000000e-01 : f32
    %88 = vector.broadcast %cst_38 : f32 to vector<32x64xf32>
    %89 = arith.mulf %88, %87 : vector<32x64xf32>
    %cst_39 = arith.constant 0.707106769 : f32
    %90 = vector.broadcast %cst_39 : f32 to vector<32x64xf32>
    %91 = arith.mulf %87, %90 : vector<32x64xf32>
    %cst_40 = arith.constant 0.000000e+00 : f32
    %92 = vector.broadcast %cst_40 : f32 to vector<32x64xf32>
    %93 = arith.cmpf oge, %91, %92 : vector<32x64xf32>
    %cst_41 = arith.constant 1.000000e+00 : f32
    %cst_42 = arith.constant -1.000000e+00 : f32
    %94 = vector.broadcast %cst_41 : f32 to vector<32x64xf32>
    %95 = vector.broadcast %cst_42 : f32 to vector<32x64xf32>
    %96 = arith.select %93, %94, %95 : vector<32x64xi1>, vector<32x64xf32>
    %97 = math.absf %91 : vector<32x64xf32>
    %cst_43 = arith.constant 0.327591091 : f32
    %98 = vector.broadcast %cst_43 : f32 to vector<32x64xf32>
    %99 = arith.mulf %98, %97 : vector<32x64xf32>
    %cst_44 = arith.constant 1.000000e+00 : f32
    %100 = vector.broadcast %cst_44 : f32 to vector<32x64xf32>
    %101 = arith.addf %100, %99 : vector<32x64xf32>
    %cst_45 = arith.constant 1.000000e+00 : f32
    %102 = vector.broadcast %cst_45 : f32 to vector<32x64xf32>
    %103 = arith.divf %102, %101 : vector<32x64xf32>
    %cst_46 = arith.constant 1.06140542 : f32
    %104 = vector.broadcast %cst_46 : f32 to vector<32x64xf32>
    %105 = arith.mulf %104, %103 : vector<32x64xf32>
    %cst_47 = arith.constant -1.45315206 : f32
    %106 = vector.broadcast %cst_47 : f32 to vector<32x64xf32>
    %107 = arith.addf %105, %106 : vector<32x64xf32>
    %108 = arith.mulf %107, %103 : vector<32x64xf32>
    %cst_48 = arith.constant 1.42141378 : f32
    %109 = vector.broadcast %cst_48 : f32 to vector<32x64xf32>
    %110 = arith.addf %108, %109 : vector<32x64xf32>
    %111 = arith.mulf %110, %103 : vector<32x64xf32>
    %cst_49 = arith.constant -0.284496725 : f32
    %112 = vector.broadcast %cst_49 : f32 to vector<32x64xf32>
    %113 = arith.addf %111, %112 : vector<32x64xf32>
    %114 = arith.mulf %113, %103 : vector<32x64xf32>
    %cst_50 = arith.constant 0.254829586 : f32
    %115 = vector.broadcast %cst_50 : f32 to vector<32x64xf32>
    %116 = arith.addf %114, %115 : vector<32x64xf32>
    %117 = arith.mulf %116, %103 : vector<32x64xf32>
    %cst_51 = arith.constant 0.000000e+00 : f32
    %118 = vector.broadcast %cst_51 : f32 to vector<32x64xf32>
    %119 = arith.subf %118, %97 : vector<32x64xf32>
    %120 = arith.mulf %119, %97 : vector<32x64xf32>
    %121 = math.exp %120 : vector<32x64xf32>
    %122 = arith.mulf %117, %121 : vector<32x64xf32>
    %cst_52 = arith.constant 1.000000e+00 : f32
    %123 = vector.broadcast %cst_52 : f32 to vector<32x64xf32>
    %124 = arith.subf %123, %122 : vector<32x64xf32>
    %125 = arith.mulf %96, %124 : vector<32x64xf32>
    %cst_53 = arith.constant 1.000000e+00 : f32
    %126 = vector.broadcast %cst_53 : f32 to vector<32x64xf32>
    %127 = arith.addf %126, %125 : vector<32x64xf32>
    %128 = arith.mulf %89, %127 : vector<32x64xf32>
    %c0_54 = arith.constant 0 : index
    %c0_55 = arith.constant 0 : index
    %129 = vector.load %arg11[%c0_54, %c0_55] : memref<64x32xf32, #tpu.memory_space<vmem>>, vector<64x32xf32>
    %cst_56 = arith.constant dense<0.000000e+00> : vector<32x32xf32>
    %130 = tpu.matmul %128, %129, %cst_56 {dimension_numbers = #tpu.dot_dimension_numbers<[1], [0], [0], [1], [0, 0, 1, 1], [], []>} : vector<32x64xf32>, vector<64x32xf32>, vector<32x32xf32> -> vector<32x32xf32>
    %c0_57 = arith.constant 0 : index
    %c0_58 = arith.constant 0 : index
    %131 = vector.load %arg12[%c0_57, %c0_58] : memref<1x32xf32, #tpu.memory_space<vmem>>, vector<1x32xf32>
    %132 = vector.broadcast %131 : vector<1x32xf32> to vector<32x32xf32>
    %133 = arith.addf %130, %132 : vector<32x32xf32>
    %134 = arith.addf %133, %82 : vector<32x32xf32>
    %c0_59 = arith.constant 0 : index
    %c0_60 = arith.constant 0 : index
    %135 = vector.load %arg13[%c0_59, %c0_60] : memref<1x32xf32, #tpu.memory_space<vmem>>, vector<1x32xf32>
    %c0_61 = arith.constant 0 : index
    %c0_62 = arith.constant 0 : index
    %136 = vector.load %arg14[%c0_61, %c0_62] : memref<1x32xf32, #tpu.memory_space<vmem>>, vector<1x32xf32>
    %cst_63 = arith.constant dense<0.000000e+00> : vector<32xf32>
    %137 = vector.multi_reduction <add>, %134, %cst_63 [1] : vector<32x32xf32> to vector<32xf32>
    %138 = vector.shape_cast %137 : vector<32xf32> to vector<32x1xf32>
    %cst_64 = arith.constant 3.200000e+01 : f32
    %139 = vector.broadcast %cst_64 : f32 to vector<32x1xf32>
    %140 = arith.divf %138, %139 : vector<32x1xf32>
    %141 = vector.broadcast %140 : vector<32x1xf32> to vector<32x32xf32>
    %142 = arith.subf %134, %141 : vector<32x32xf32>
    %143 = arith.mulf %142, %142 : vector<32x32xf32>
    %cst_65 = arith.constant dense<0.000000e+00> : vector<32xf32>
    %144 = vector.multi_reduction <add>, %143, %cst_65 [1] : vector<32x32xf32> to vector<32xf32>
    %145 = vector.shape_cast %144 : vector<32xf32> to vector<32x1xf32>
    %cst_66 = arith.constant 3.200000e+01 : f32
    %146 = vector.broadcast %cst_66 : f32 to vector<32x1xf32>
    %147 = arith.divf %145, %146 : vector<32x1xf32>
    %148 = vector.broadcast %140 : vector<32x1xf32> to vector<32x32xf32>
    %149 = arith.subf %134, %148 : vector<32x32xf32>
    %cst_67 = arith.constant 9.99999996E-13 : f32
    %150 = vector.broadcast %cst_67 : f32 to vector<32x1xf32>
    %151 = arith.addf %147, %150 : vector<32x1xf32>
    %152 = math.rsqrt %151 : vector<32x1xf32>
    %153 = vector.broadcast %152 : vector<32x1xf32> to vector<32x32xf32>
    %154 = arith.mulf %149, %153 : vector<32x32xf32>
    %155 = vector.broadcast %135 : vector<1x32xf32> to vector<32x32xf32>
    %156 = arith.mulf %154, %155 : vector<32x32xf32>
    %157 = vector.broadcast %136 : vector<1x32xf32> to vector<32x32xf32>
    %158 = arith.addf %156, %157 : vector<32x32xf32>
    %159 = vector.shape_cast %158 : vector<32x32xf32> to vector<4x8x32xf32>
    %c0_68 = arith.constant 0 : index
    %c0_69 = arith.constant 0 : index
    %c0_70 = arith.constant 0 : index
    %160 = vector.load %arg15[%c0_68, %c0_69, %c0_70] : memref<4x8x32xf32, #tpu.memory_space<vmem>>, vector<4x8x32xf32>
    tpu.vector_store %arg15[%c0_68, %c0_69, %c0_70], %159 {strides = array<i32>} : memref<4x8x32xf32, #tpu.memory_space<vmem>>, vector<4x8x32xf32>,
    return
  }
  func.func @transform_0(%arg0: i32) -> (i32, i32, i32) {
    %c0_i32 = arith.constant 0 : i32
    %c0_i32_0 = arith.constant 0 : i32
    %c0_i32_1 = arith.constant 0 : i32
    return %arg0, %c0_i32, %c0_i32_0 : i32, i32, i32
  }
  func.func @transform_1(%arg0: i32) -> (i32, i32, i32) {
    %c0_i32 = arith.constant 0 : i32
    %c0_i32_0 = arith.constant 0 : i32
    %c0_i32_1 = arith.constant 0 : i32
    return %arg0, %c0_i32, %c0_i32_0 : i32, i32, i32
  }
  func.func @transform_2(%arg0: i32) -> (i32, i32) {
    %c0_i32 = arith.constant 0 : i32
    %c0_i32_0 = arith.constant 0 : i32
    %c0_i32_1 = arith.constant 0 : i32
    return %c0_i32, %c0_i32_0 : i32, i32
  }
  func.func @transform_3(%arg0: i32) -> (i32, i32) {
    %c0_i32 = arith.constant 0 : i32
    %c0_i32_0 = arith.constant 0 : i32
    %c0_i32_1 = arith.constant 0 : i32
    return %c0_i32, %c0_i32_0 : i32, i32
  }
  func.func @transform_4(%arg0: i32) -> (i32, i32) {
    %c0_i32 = arith.constant 0 : i32
    %c0_i32_0 = arith.constant 0 : i32
    %c0_i32_1 = arith.constant 0 : i32
    return %c0_i32, %c0_i32_0 : i32, i32
  }
  func.func @transform_5(%arg0: i32) -> (i32, i32) {
    %c0_i32 = arith.constant 0 : i32
    %c0_i32_0 = arith.constant 0 : i32
    %c0_i32_1 = arith.constant 0 : i32
    return %c0_i32, %c0_i32_0 : i32, i32
  }
  func.func @transform_6(%arg0: i32) -> (i32, i32) {
    %c0_i32 = arith.constant 0 : i32
    %c0_i32_0 = arith.constant 0 : i32
    %c0_i32_1 = arith.constant 0 : i32
    return %c0_i32, %c0_i32_0 : i32, i32
  }
  func.func @transform_7(%arg0: i32) -> (i32, i32) {
    %c0_i32 = arith.constant 0 : i32
    %c0_i32_0 = arith.constant 0 : i32
    %c0_i32_1 = arith.constant 0 : i32
    return %c0_i32, %c0_i32_0 : i32, i32
  }
  func.func @transform_8(%arg0: i32) -> (i32, i32) {
    %c0_i32 = arith.constant 0 : i32
    %c0_i32_0 = arith.constant 0 : i32
    %c0_i32_1 = arith.constant 0 : i32
    return %c0_i32, %c0_i32_0 : i32, i32
  }
  func.func @transform_9(%arg0: i32) -> (i32, i32) {
    %c0_i32 = arith.constant 0 : i32
    %c0_i32_0 = arith.constant 0 : i32
    %c0_i32_1 = arith.constant 0 : i32
    return %c0_i32, %c0_i32_0 : i32, i32
  }
  func.func @transform_10(%arg0: i32) -> (i32, i32) {
    %c0_i32 = arith.constant 0 : i32
    %c0_i32_0 = arith.constant 0 : i32
    %c0_i32_1 = arith.constant 0 : i32
    return %c0_i32, %c0_i32_0 : i32, i32
  }
  func.func @transform_11(%arg0: i32) -> (i32, i32) {
    %c0_i32 = arith.constant 0 : i32
    %c0_i32_0 = arith.constant 0 : i32
    %c0_i32_1 = arith.constant 0 : i32
    return %c0_i32, %c0_i32_0 : i32, i32
  }
  func.func @transform_12(%arg0: i32) -> (i32, i32) {
    %c0_i32 = arith.constant 0 : i32
    %c0_i32_0 = arith.constant 0 : i32
    %c0_i32_1 = arith.constant 0 : i32
    return %c0_i32, %c0_i32_0 : i32, i32
  }
  func.func @transform_13(%arg0: i32) -> (i32, i32) {
    %c0_i32 = arith.constant 0 : i32
    %c0_i32_0 = arith.constant 0 : i32
    %c0_i32_1 = arith.constant 0 : i32
    return %c0_i32, %c0_i32_0 : i32, i32
  }
  func.func @transform_14(%arg0: i32) -> (i32, i32, i32) {
    %c0_i32 = arith.constant 0 : i32
    %c0_i32_0 = arith.constant 0 : i32
    %c0_i32_1 = arith.constant 0 : i32
    return %arg0, %c0_i32, %c0_i32_0 : i32, i32, i32
  }
}

</mosaic_0001>

<llo_original>
// kernel: graph_bert_encoder.4
$region0: #{graph_bert_encoder.4}
  #allocation0 [shape = 'u32[]', space=smem, size = 0x4, offset = 0x4, fixed_abs, tag = 'smem constant byte address 0x4 - core index']
  #allocation1 [shape = 'u32[144,128]{1,0:T(1,128)}', space=vmem, size = 0x12000, scoped, tag = 'internal scratch']
  %s0 = inlined_call_operand.vmem [shape: f32[8,32], index: 0, kind: input, shape index: {}]
  %s1 = inlined_call_operand.vmem [shape: f32[8,8], index: 1, kind: input, shape index: {}]
  %s2 = inlined_call_operand.vmem [shape: f32[8,8], index: 2, kind: input, shape index: {}]
  %s3 = inlined_call_operand.vmem [shape: f32[32,64], index: 3, kind: input, shape index: {}]
  %s4 = inlined_call_operand.vmem [shape: f32[2,32], index: 4, kind: input, shape index: {}]
  %s5 = inlined_call_operand.vmem [shape: f32[64,32], index: 5, kind: input, shape index: {}]
  %s6 = inlined_call_operand.vmem [shape: f32[1,32], index: 6, kind: input, shape index: {}]
  %s7 = inlined_call_operand.vmem [shape: f32[64,32], index: 7, kind: input, shape index: {}]
  %s8 = inlined_call_operand.vmem [shape: f32[1,64], index: 8, kind: input, shape index: {}]
  %s9 = inlined_call_operand.vmem [shape: f32[1,64], index: 9, kind: input, shape index: {}]
  %s10 = inlined_call_operand.vmem [shape: f32[8,32], index: 10, kind: output, shape index: {}]
  %s11 = sld [smem:[#allocation0]]
  $region50: #{graph_bert_encoder.4} parent=0
    _
  %s13 = ssub.s32 1, %s11
  %s14 = scalar_select 0, %s13, %s11
  // Predicated region
  $region2: #{graph_bert_encoder.4} parent=0 // pred_check
    _
  $region3: #{graph_bert_encoder.4} parent=0 // pred_check_branch
    %16 = sbr.rel (0) target = $region5
  $region4: #{graph_bert_encoder.4} parent=0 // pred_region
    _
  $region5: #{graph_bert_encoder.4} parent=0 // pred_fallthru
    _
  // Predicated region
  $region6: #{graph_bert_encoder.4} parent=0 // pred_check
    _
  $region7: #{graph_bert_encoder.4} parent=0 // pred_check_branch
    %18 = sbr.rel (0) target = $region9
  $region8: #{graph_bert_encoder.4} parent=0 // pred_region
    _
  $region9: #{graph_bert_encoder.4} parent=0 // pred_fallthru
    _
  // Predicated region
  $region10: #{graph_bert_encoder.4} parent=0 // pred_check
    _
  $region11: #{graph_bert_encoder.4} parent=0 // pred_check_branch
    %20 = sbr.rel (0) target = $region13
  $region12: #{graph_bert_encoder.4} parent=0 // pred_region
    _
  $region13: #{graph_bert_encoder.4} parent=0 // pred_fallthru
    _
  // Predicated region
  $region14: #{graph_bert_encoder.4} parent=0 // pred_check
    _
  $region15: #{graph_bert_encoder.4} parent=0 // pred_check_branch
    %22 = sbr.rel (0) target = $region17
  $region16: #{graph_bert_encoder.4} parent=0 // pred_region
    _
  $region17: #{graph_bert_encoder.4} parent=0 // pred_fallthru
    _
  // Predicated region
  $region18: #{graph_bert_encoder.4} parent=0 // pred_check
    _
  $region19: #{graph_bert_encoder.4} parent=0 // pred_check_branch
    %24 = sbr.rel (0) target = $region21
  $region20: #{graph_bert_encoder.4} parent=0 // pred_region
    _
  $region21: #{graph_bert_encoder.4} parent=0 // pred_fallthru
    _
  // Predicated region
  $region22: #{graph_bert_encoder.4} parent=0 // pred_check
    _
  $region23: #{graph_bert_encoder.4} parent=0 // pred_check_branch
    %26 = sbr.rel (0) target = $region25
  $region24: #{graph_bert_encoder.4} parent=0 // pred_region
    _
  $region25: #{graph_bert_encoder.4} parent=0 // pred_fallthru
    _
  // Predicated region
  $region26: #{graph_bert_encoder.4} parent=0 // pred_check
    _
  $region27: #{graph_bert_encoder.4} parent=0 // pred_check_branch
    %28 = sbr.rel (0) target = $region29
  $region28: #{graph_bert_encoder.4} parent=0 // pred_region
    _
  $region29: #{graph_bert_encoder.4} parent=0 // pred_fallthru
    _
  // Predicated region
  $region30: #{graph_bert_encoder.4} parent=0 // pred_check
    _
  $region31: #{graph_bert_encoder.4} parent=0 // pred_check_branch
    %30 = sbr.rel (0) target = $region33
  $region32: #{graph_bert_encoder.4} parent=0 // pred_region
    _
  $region33: #{graph_bert_encoder.4} parent=0 // pred_fallthru
    _
  // Predicated region
  $region34: #{graph_bert_encoder.4} parent=0 // pred_check
    _
  $region35: #{graph_bert_encoder.4} parent=0 // pred_check_branch
    %32 = sbr.rel (0) target = $region37
  $region36: #{graph_bert_encoder.4} parent=0 // pred_region
    _
  $region37: #{graph_bert_encoder.4} parent=0 // pred_fallthru
    _
  // Predicated region
  $region38: #{graph_bert_encoder.4} parent=0 // pred_check
    _
  $region39: #{graph_bert_encoder.4} parent=0 // pred_check_branch
    %34 = sbr.rel (0) target = $region41
  $region40: #{graph_bert_encoder.4} parent=0 // pred_region
    _
  $region41: #{graph_bert_encoder.4} parent=0 // pred_fallthru
    _
  %v35 = vld [vmem:[%s0] sm:$0xff]
  %v36 = vld [vmem:[%s1] sm:$0xff]
  %v37 = vld [vmem:[%s2] sm:$0xff]
  %v38 = vld [vmem:[%s4] sm:$0x3]
  %v39 = vld [vmem:[%s6] sm:$0x1]
  %v40 = vld [vmem:[%s3] sm:$0xff]
  %v41 = vld [vmem:[%s3 + $0x8] sm:$0xff]
  %v42 = vld [vmem:[%s3 + $0x10] sm:$0xff]
  %v43 = vld [vmem:[%s3 + $0x18] sm:$0xff]
  %vm44 = vcmask 261120
  %v46 = vsel %vm44, %v35, 0
  %48 = vmatprep.subr.mxu0 0.0
  %49 = vmatpush1.msra.mxu0 %v40
  %50 = vmatprep.subr.mxu0 0.0
  %51 = vmatpush1.msra.mxu0 %v41
  %52 = vmatprep.subr.mxu0 0.0
  %53 = vmatpush1.msra.mxu0 %v42
  %54 = vmatprep.subr.mxu0 0.0
  %55 = vmatpush1.msra.mxu0 %v43
  %56 = vmatprep.subr.mxu0 0.0
  %57 = vmatpush1.msra.mxu0 0.0
  %58 = vmatprep.subr.mxu0 0.0
  %59 = vmatpush1.msra.mxu0 0.0
  %60 = vmatprep.subr.mxu0 0.0
  %61 = vmatpush1.msra.mxu0 0.0
  %62 = vmatprep.subr.mxu0 0.0
  %63 = vmatpush1.msra.mxu0 0.0
  %64 = vmatprep.subr.mxu0 0.0
  %65 = vmatpush1.msra.mxu0 0.0
  %66 = vmatprep.subr.mxu0 0.0
  %67 = vmatpush1.msra.mxu0 0.0
  %68 = vmatprep.subr.mxu0 0.0
  %69 = vmatpush1.msra.mxu0 0.0
  %70 = vmatprep.subr.mxu0 0.0
  %71 = vmatpush1.msra.mxu0 0.0
  %72 = vmatprep.subr.mxu0 0.0
  %73 = vmatpush1.msra.mxu0 0.0
  %74 = vmatprep.subr.mxu0 0.0
  %75 = vmatpush1.msra.mxu0 0.0
  %76 = vmatprep.subr.mxu0 0.0
  %77 = vmatpush1.msra.mxu0 0.0
  %78 = vmatprep.subr.mxu0 0.0
  %79 = vmatpush1.msra.mxu0 0.0
  %80 = vmatprep.subr.mxu0 0.0
  %81 = vmatpush1.msra.mxu0 0.0
  %82 = vmatprep.subr.mxu0 0.0
  %83 = vmatpush1.msra.mxu0 0.0
  %84 = vmatprep.subr.mxu0 0.0
  %85 = vmatpush1.msra.mxu0 0.0
  %86 = vmatprep.subr.mxu0 0.0
  %87 = vmatpush1.msra.mxu0 0.0
  %88 = vmatprep.subr.mxu0 0.0
  %89 = vmatpush1.msra.mxu0 0.0
  %90 = vmatprep.subr.mxu0 0.0
  %91 = vmatpush1.msra.mxu0 0.0
  %92 = vmatprep.subr.mxu0 0.0
  %93 = vmatpush1.msra.mxu0 0.0
  %94 = vmatprep.subr.mxu0 0.0
  %95 = vmatpush1.msra.mxu0 0.0
  %96 = vmatprep.subr.mxu0 0.0
  %97 = vmatpush1.msra.mxu0 0.0
  %98 = vmatprep.subr.mxu0 0.0
  %99 = vmatpush1.msra.mxu0 0.0
  %100 = vmatprep.subr.mxu0 0.0
  %101 = vmatpush1.msra.mxu0 0.0
  %102 = vmatprep.subr.mxu0 0.0
  %103 = vmatpush1.msra.mxu0 0.0
  %104 = vmatprep.subr.mxu0 0.0
  %105 = vmatpush1.msra.mxu0 0.0
  %106 = vmatprep.subr.mxu0 0.0
  %107 = vmatpush1.msra.mxu0 0.0
  %108 = vmatprep.subr.mxu0 0.0
  %109 = vmatpush1.msra.mxu0 0.0
  %110 = vmatprep.subr.mxu0 0.0
  %111 = vmatpush1.msra.mxu0 0.0
  %112 = vmatprep.mubr.f32.mxu0 0.0
  %113 = vmatmul.mubr.f32.gmra.mrb[0].mxu0 %v46
  %v114 = vpop.f32.mrb[0].mxu0
  %v115 = vadd.f32 0.0, %v114
  %v116 = vpop.f32.mrb[0].mxu0
  %117 = vdwg.mxu0
  %v119 = vcombine.high %v115, %v115
  %v121 = vunpack.c.l.s4 1966171168
  %v122 = vunpack.c.0.s8 %v121
  %v123 = vlaneseq
  %v124 = vshrl.u32 %v123, 7
  %v125 = vsub.s32 %v122, %v124
  %v126 = vrot.slane %v115, %v125
  %v128 = vunpack.c.l.s4 1966171168
  %v129 = vunpack.c.0.s8 %v128
  %v130 = vlaneseq
  %v131 = vshrl.u32 %v130, 7
  %v132 = vsub.s32 %v129, %v131
  %v133 = vrot.slane %v119, %v132
  %v134 = vcombine.high %v126, %v126
  %v135 = vcombine.high %v133, %v133
  %v137 = vunpack.c.l.s4 1966171168
  %v138 = vunpack.c.0.s8 %v137
  %v139 = vlaneseq
  %v140 = vshrl.u32 %v139, 7
  %v141 = vsub.s32 %v138, %v140
  %v142 = vrot.slane %v126, %v141
  %v144 = vunpack.c.l.s4 1966171168
  %v145 = vunpack.c.0.s8 %v144
  %v146 = vlaneseq
  %v147 = vshrl.u32 %v146, 7
  %v148 = vsub.s32 %v145, %v147
  %v149 = vrot.slane %v133, %v148
  %v151 = vunpack.c.l.s4 1966171168
  %v152 = vunpack.c.0.s8 %v151
  %v153 = vlaneseq
  %v154 = vshrl.u32 %v153, 7
  %v155 = vsub.s32 %v152, %v154
  %v156 = vrot.slane %v134, %v155
  %v158 = vunpack.c.l.s4 1966171168
  %v159 = vunpack.c.0.s8 %v158
  %v160 = vlaneseq
  %v161 = vshrl.u32 %v160, 7
  %v162 = vsub.s32 %v159, %v161
  %v163 = vrot.slane %v135, %v162
  %v164 = vcombine.high %v142, %v142
  %v165 = vcombine.high %v149, %v149
  %v166 = vcombine.high %v156, %v156
  %v167 = vcombine.high %v163, %v163
  %v168 = vlaneseq
  %v169 = vshrl.u32 %v168, 7
  %v170 = vsub.s32 0, %v169
  %v171 = vrot.slane %v142, %v170
  %v172 = vlaneseq
  %v173 = vshrl.u32 %v172, 7
  %v174 = vsub.s32 0, %v173
  %v175 = vrot.slane %v156, %v174
  %v176 = vlaneseq
  %v177 = vshrl.u32 %v176, 7
  %v178 = vsub.s32 0, %v177
  %v179 = vrot.slane %v164, %v178
  %v180 = vlaneseq
  %v181 = vshrl.u32 %v180, 7
  %v182 = vsub.s32 0, %v181
  %v183 = vrot.slane %v166, %v182
  %v184 = vlaneseq
  %v185 = vshrl.u32 %v184, 7
  %v186 = vsub.s32 0, %v185
  %v187 = vrot.slane %v149, %v186
  %v188 = vlaneseq
  %v189 = vshrl.u32 %v188, 7
  %v190 = vsub.s32 0, %v189
  %v191 = vrot.slane %v163, %v190
  %v192 = vlaneseq
  %v193 = vshrl.u32 %v192, 7
  %v194 = vsub.s32 0, %v193
  %v195 = vrot.slane %v165, %v194
  %v196 = vlaneseq
  %v197 = vshrl.u32 %v196, 7
  %v198 = vsub.s32 0, %v197
  %v199 = vrot.slane %v167, %v198
  %v208 = vadd.f32 %v171, %v115
  %v209 = vadd.f32 %v175, %v115
  %v210 = vadd.f32 %v179, %v115
  %v211 = vadd.f32 %v183, %v115
  %v212 = vadd.f32 %v187, %v115
  %v213 = vadd.f32 %v191, %v115
  %v214 = vadd.f32 %v195, %v115
  %v215 = vadd.f32 %v199, %v115
  %vm216 = vcmp.ge.f32.partialorder %v208, 0.0
  %vm217 = vcmp.ge.f32.partialorder %v209, 0.0
  %vm218 = vcmp.ge.f32.partialorder %v210, 0.0
  %vm219 = vcmp.ge.f32.partialorder %v211, 0.0
  %vm220 = vcmp.ge.f32.partialorder %v212, 0.0
  %vm221 = vcmp.ge.f32.partialorder %v213, 0.0
  %vm222 = vcmp.ge.f32.partialorder %v214, 0.0
  %vm223 = vcmp.ge.f32.partialorder %v215, 0.0
  %v224 = vmul.f32 %v208, 0.2
  %v225 = vmul.f32 %v209, 0.2
  %v226 = vmul.f32 %v210, 0.2
  %v227 = vmul.f32 %v211, 0.2
  %v228 = vmul.f32 %v212, 0.2
  %v229 = vmul.f32 %v213, 0.2
  %v230 = vmul.f32 %v214, 0.2
  %v231 = vmul.f32 %v215, 0.2
  %v232 = vsel %vm216, %v208, %v224
  %v233 = vsel %vm217, %v209, %v225
  %v234 = vsel %vm218, %v210, %v226
  %v235 = vsel %vm219, %v211, %v227
  %v236 = vsel %vm220, %v212, %v228
  %v237 = vsel %vm221, %v213, %v229
  %v238 = vsel %vm222, %v214, %v230
  %v239 = vsel %vm223, %v215, %v231
  %v240 = vlaneseq
  %v241 = vshrl.u32 %v240, 7
  %v242 = vsub.s32 0, %v241
  %v243 = vrot.slane %v38, %v242
  %v244 = vmul.f32 %v232, %v243
  %v245 = vmul.f32 %v233, %v243
  %v246 = vmul.f32 %v234, %v243
  %v247 = vmul.f32 %v235, %v243
  %v248 = vmul.f32 %v236, %v243
  %v249 = vmul.f32 %v237, %v243
  %v250 = vmul.f32 %v238, %v243
  %v251 = vmul.f32 %v239, %v243
  %v252 = vsel %vm44, %v244, 0.0
  %253 = vadd.xlane.f32.xlu0 %v252
  %v254 = vpop.xlane.xlu0 %253
  %v255 = vsel %vm44, %v245, 0.0
  %256 = vadd.xlane.f32.xlu0 %v255
  %v257 = vpop.xlane.xlu0 %256
  %v258 = vsel %vm44, %v246, 0.0
  %259 = vadd.xlane.f32.xlu0 %v258
  %v260 = vpop.xlane.xlu0 %259
  %v261 = vsel %vm44, %v247, 0.0
  %262 = vadd.xlane.f32.xlu0 %v261
  %v263 = vpop.xlane.xlu0 %262
  %v264 = vsel %vm44, %v248, 0.0
  %265 = vadd.xlane.f32.xlu0 %v264
  %v266 = vpop.xlane.xlu0 %265
  %v267 = vsel %vm44, %v249, 0.0
  %268 = vadd.xlane.f32.xlu0 %v267
  %v269 = vpop.xlane.xlu0 %268
  %v270 = vsel %vm44, %v250, 0.0
  %271 = vadd.xlane.f32.xlu0 %v270
  %v272 = vpop.xlane.xlu0 %271
  %v273 = vsel %vm44, %v251, 0.0
  %274 = vadd.xlane.f32.xlu0 %v273
  %v275 = vpop.xlane.xlu0 %274
  %vm276 = vcmp.gt.f32.partialorder %v36, 0.0
  %v285 = vlaneseq
  %v286 = vand.u32 %v285, 127
  %v287 = vlaneseq
  %v288 = vshrl.u32 %v287, 7
  %v289 = vsub.s32 %v286, %v288
  %v290 = vrot.slane %v254, %v289
  %v291 = vlaneseq
  %v292 = vshrl.u32 %v291, 7
  %v293 = vsub.s32 %v286, %v292
  %v294 = vrot.slane %v257, %v293
  %v295 = vlaneseq
  %v296 = vshrl.u32 %v295, 7
  %v297 = vsub.s32 %v286, %v296
  %v298 = vrot.slane %v260, %v297
  %v299 = vlaneseq
  %v300 = vshrl.u32 %v299, 7
  %v301 = vsub.s32 %v286, %v300
  %v302 = vrot.slane %v263, %v301
  %v303 = vlaneseq
  %v304 = vshrl.u32 %v303, 7
  %v305 = vsub.s32 %v286, %v304
  %v306 = vrot.slane %v266, %v305
  %v307 = vlaneseq
  %v308 = vshrl.u32 %v307, 7
  %v309 = vsub.s32 %v286, %v308
  %v310 = vrot.slane %v269, %v309
  %v311 = vlaneseq
  %v312 = vshrl.u32 %v311, 7
  %v313 = vsub.s32 %v286, %v312
  %v314 = vrot.slane %v272, %v313
  %v315 = vlaneseq
  %v316 = vshrl.u32 %v315, 7
  %v317 = vsub.s32 %v286, %v316
  %v318 = vrot.slane %v275, %v317
  %vm319 = vcmask 1041409
  %v320 = vsel %vm319, %v294, %v290
  %vm321 = vcmask 1042434
  %v322 = vsel %vm321, %v298, %v320
  %vm323 = vcmask 1043459
  %v324 = vsel %vm323, %v302, %v322
  %vm325 = vcmask 1044484
  %v326 = vsel %vm325, %v306, %v324
  %vm327 = vcmask 1045509
  %v328 = vsel %vm327, %v310, %v326
  %vm329 = vcmask 1046534
  %v330 = vsel %vm329, %v314, %v328
  %vm331 = vcmask 1047559
  %v332 = vsel %vm331, %v318, %v330
  %v334 = vsel %vm276, %v332, -1e+30
  %vm335 = vcmask 64512
  %v336 = vsel %vm335, %v334, -inf
  %337 = vmax.xlane.f32.xlu0 %v336
  %v338 = vpop.xlane.xlu0 %337
  %v339 = vsub.f32 %v334, %v338
  %v340 = vmul.f32 %v339, 1.442695
  %v341 = vpow.pop %v340
  %v342 = vsel %vm276, %v341, 0.0
  %v343 = vsel %vm335, %v342, 0.0
  %344 = vadd.xlane.f32.xlu0 %v343
  %v345 = vpop.xlane.xlu0 %344
  %v346 = vmax.f32 %v345, 1e-30
  %v347 = vrcp.pop %v346
  %v348 = vmul.f32 %v342, %v347
  %v350 = vsel %vm335, %v348, 0
  %352 = vmatprep.subr.mxu0 0.0
  %353 = vmatpush1.msra.mxu0 %v115
  %354 = vmatprep.subr.mxu0 0.0
  %355 = vmatpush1.msra.mxu0 0.0
  %356 = vmatprep.subr.mxu0 0.0
  %357 = vmatpush1.msra.mxu0 0.0
  %358 = vmatprep.subr.mxu0 0.0
  %359 = vmatpush1.msra.mxu0 0.0
  %360 = vmatprep.subr.mxu0 0.0
  %361 = vmatpush1.msra.mxu0 0.0
  %362 = vmatprep.subr.mxu0 0.0
  %363 = vmatpush1.msra.mxu0 0.0
  %364 = vmatprep.subr.mxu0 0.0
  %365 = vmatpush1.msra.mxu0 0.0
  %366 = vmatprep.subr.mxu0 0.0
  %367 = vmatpush1.msra.mxu0 0.0
  %368 = vmatprep.subr.mxu0 0.0
  %369 = vmatpush1.msra.mxu0 0.0
  %370 = vmatprep.subr.mxu0 0.0
  %371 = vmatpush1.msra.mxu0 0.0
  %372 = vmatprep.subr.mxu0 0.0
  %373 = vmatpush1.msra.mxu0 0.0
  %374 = vmatprep.subr.mxu0 0.0
  %375 = vmatpush1.msra.mxu0 0.0
  %376 = vmatprep.subr.mxu0 0.0
  %377 = vmatpush1.msra.mxu0 0.0
  %378 = vmatprep.subr.mxu0 0.0
  %379 = vmatpush1.msra.mxu0 0.0
  %380 = vmatprep.subr.mxu0 0.0
  %381 = vmatpush1.msra.mxu0 0.0
  %382 = vmatprep.subr.mxu0 0.0
  %383 = vmatpush1.msra.mxu0 0.0
  %384 = vmatprep.subr.mxu0 0.0
  %385 = vmatpush1.msra.mxu0 0.0
  %386 = vmatprep.subr.mxu0 0.0
  %387 = vmatpush1.msra.mxu0 0.0
  %388 = vmatprep.subr.mxu0 0.0
  %389 = vmatpush1.msra.mxu0 0.0
  %390 = vmatprep.subr.mxu0 0.0
  %391 = vmatpush1.msra.mxu0 0.0
  %392 = vmatprep.subr.mxu0 0.0
  %393 = vmatpush1.msra.mxu0 0.0
  %394 = vmatprep.subr.mxu0 0.0
  %395 = vmatpush1.msra.mxu0 0.0
  %396 = vmatprep.subr.mxu0 0.0
  %397 = vmatpush1.msra.mxu0 0.0
  %398 = vmatprep.subr.mxu0 0.0
  %399 = vmatpush1.msra.mxu0 0.0
  %400 = vmatprep.subr.mxu0 0.0
  %401 = vmatpush1.msra.mxu0 0.0
  %402 = vmatprep.subr.mxu0 0.0
  %403 = vmatpush1.msra.mxu0 0.0
  %404 = vmatprep.subr.mxu0 0.0
  %405 = vmatpush1.msra.mxu0 0.0
  %406 = vmatprep.subr.mxu0 0.0
  %407 = vmatpush1.msra.mxu0 0.0
  %408 = vmatprep.subr.mxu0 0.0
  %409 = vmatpush1.msra.mxu0 0.0
  %410 = vmatprep.subr.mxu0 0.0
  %411 = vmatpush1.msra.mxu0 0.0
  %412 = vmatprep.subr.mxu0 0.0
  %413 = vmatpush1.msra.mxu0 0.0
  %414 = vmatprep.subr.mxu0 0.0
  %415 = vmatpush1.msra.mxu0 0.0
  %416 = vmatprep.mubr.f32.mxu0 0.0
  %417 = vmatmul.mubr.f32.gmra.mrb[0].mxu0 %v350
  %v418 = vpop.f32.mrb[0].mxu0
  %v419 = vadd.f32 0.0, %v418
  %v420 = vpop.f32.mrb[0].mxu0
  %421 = vdwg.mxu0
  %v422 = vlaneseq
  %v423 = vshrl.u32 %v422, 7
  %v424 = vsub.s32 1, %v423
  %v425 = vrot.slane %v38, %v424
  %427 = vrot.lane.b32.xlu0 %v425, 32
  %v428 = vpop.permute.xlu0 %427
  %v430 = vmul.f32 %v232, %v428
  %v431 = vmul.f32 %v233, %v428
  %v432 = vmul.f32 %v234, %v428
  %v433 = vmul.f32 %v235, %v428
  %v434 = vmul.f32 %v236, %v428
  %v435 = vmul.f32 %v237, %v428
  %v436 = vmul.f32 %v238, %v428
  %v437 = vmul.f32 %v239, %v428
  %446 = vrot.lane.b32.xlu0 %v430, 96
  %v447 = vpop.permute.xlu0 %446
  %448 = vrot.lane.b32.xlu0 %v431, 96
  %v449 = vpop.permute.xlu0 %448
  %450 = vrot.lane.b32.xlu0 %v432, 96
  %v451 = vpop.permute.xlu0 %450
  %452 = vrot.lane.b32.xlu0 %v433, 96
  %v453 = vpop.permute.xlu0 %452
  %454 = vrot.lane.b32.xlu0 %v434, 96
  %v455 = vpop.permute.xlu0 %454
  %456 = vrot.lane.b32.xlu0 %v435, 96
  %v457 = vpop.permute.xlu0 %456
  %458 = vrot.lane.b32.xlu0 %v436, 96
  %v459 = vpop.permute.xlu0 %458
  %460 = vrot.lane.b32.xlu0 %v437, 96
  %v461 = vpop.permute.xlu0 %460
  %v470 = vsel %vm44, %v447, 0.0
  %471 = vadd.xlane.f32.xlu0 %v470
  %v472 = vpop.xlane.xlu0 %471
  %v473 = vsel %vm44, %v449, 0.0
  %474 = vadd.xlane.f32.xlu0 %v473
  %v475 = vpop.xlane.xlu0 %474
  %v476 = vsel %vm44, %v451, 0.0
  %477 = vadd.xlane.f32.xlu0 %v476
  %v478 = vpop.xlane.xlu0 %477
  %v479 = vsel %vm44, %v453, 0.0
  %480 = vadd.xlane.f32.xlu0 %v479
  %v481 = vpop.xlane.xlu0 %480
  %v482 = vsel %vm44, %v455, 0.0
  %483 = vadd.xlane.f32.xlu0 %v482
  %v484 = vpop.xlane.xlu0 %483
  %v485 = vsel %vm44, %v457, 0.0
  %486 = vadd.xlane.f32.xlu0 %v485
  %v487 = vpop.xlane.xlu0 %486
  %v488 = vsel %vm44, %v459, 0.0
  %489 = vadd.xlane.f32.xlu0 %v488
  %v490 = vpop.xlane.xlu0 %489
  %v491 = vsel %vm44, %v461, 0.0
  %492 = vadd.xlane.f32.xlu0 %v491
  %v493 = vpop.xlane.xlu0 %492
  %v502 = vlaneseq
  %v503 = vshrl.u32 %v502, 7
  %v504 = vsub.s32 %v286, %v503
  %v505 = vrot.slane %v472, %v504
  %v506 = vlaneseq
  %v507 = vshrl.u32 %v506, 7
  %v508 = vsub.s32 %v286, %v507
  %v509 = vrot.slane %v475, %v508
  %v510 = vlaneseq
  %v511 = vshrl.u32 %v510, 7
  %v512 = vsub.s32 %v286, %v511
  %v513 = vrot.slane %v478, %v512
  %v514 = vlaneseq
  %v515 = vshrl.u32 %v514, 7
  %v516 = vsub.s32 %v286, %v515
  %v517 = vrot.slane %v481, %v516
  %v518 = vlaneseq
  %v519 = vshrl.u32 %v518, 7
  %v520 = vsub.s32 %v286, %v519
  %v521 = vrot.slane %v484, %v520
  %v522 = vlaneseq
  %v523 = vshrl.u32 %v522, 7
  %v524 = vsub.s32 %v286, %v523
  %v525 = vrot.slane %v487, %v524
  %v526 = vlaneseq
  %v527 = vshrl.u32 %v526, 7
  %v528 = vsub.s32 %v286, %v527
  %v529 = vrot.slane %v490, %v528
  %v530 = vlaneseq
  %v531 = vshrl.u32 %v530, 7
  %v532 = vsub.s32 %v286, %v531
  %v533 = vrot.slane %v493, %v532
  %v534 = vsel %vm319, %v509, %v505
  %v535 = vsel %vm321, %v513, %v534
  %v536 = vsel %vm323, %v517, %v535
  %v537 = vsel %vm325, %v521, %v536
  %v538 = vsel %vm327, %v525, %v537
  %v539 = vsel %vm329, %v529, %v538
  %v540 = vsel %vm331, %v533, %v539
  %v542 = vsel %vm276, %v540, -1e+30
  %v543 = vsel %vm335, %v542, -inf
  %544 = vmax.xlane.f32.xlu0 %v543
  %v545 = vpop.xlane.xlu0 %544
  %v546 = vsub.f32 %v542, %v545
  %v547 = vmul.f32 %v546, 1.442695
  %v548 = vpow.pop %v547
  %v549 = vsel %vm276, %v548, 0.0
  %v550 = vsel %vm335, %v549, 0.0
  %551 = vadd.xlane.f32.xlu0 %v550
  %v552 = vpop.xlane.xlu0 %551
  %v553 = vmax.f32 %v552, 1e-30
  %v554 = vrcp.pop %v553
  %v555 = vmul.f32 %v549, %v554
  %556 = vrot.lane.b32.xlu0 %v115, 96
  %v557 = vpop.permute.xlu0 %556
  %v560 = vsel %vm335, %v555, 0
  %562 = vmatprep.subr.mxu0 0.0
  %563 = vmatpush1.msra.mxu0 %v557
  %564 = vmatprep.subr.mxu0 0.0
  %565 = vmatpush1.msra.mxu0 0.0
  %566 = vmatprep.subr.mxu0 0.0
  %567 = vmatpush1.msra.mxu0 0.0
  %568 = vmatprep.subr.mxu0 0.0
  %569 = vmatpush1.msra.mxu0 0.0
  %570 = vmatprep.subr.mxu0 0.0
  %571 = vmatpush1.msra.mxu0 0.0
  %572 = vmatprep.subr.mxu0 0.0
  %573 = vmatpush1.msra.mxu0 0.0
  %574 = vmatprep.subr.mxu0 0.0
  %575 = vmatpush1.msra.mxu0 0.0
  %576 = vmatprep.subr.mxu0 0.0
  %577 = vmatpush1.msra.mxu0 0.0
  %578 = vmatprep.subr.mxu0 0.0
  %579 = vmatpush1.msra.mxu0 0.0
  %580 = vmatprep.subr.mxu0 0.0
  %581 = vmatpush1.msra.mxu0 0.0
  %582 = vmatprep.subr.mxu0 0.0
  %583 = vmatpush1.msra.mxu0 0.0
  %584 = vmatprep.subr.mxu0 0.0
  %585 = vmatpush1.msra.mxu0 0.0
  %586 = vmatprep.subr.mxu0 0.0
  %587 = vmatpush1.msra.mxu0 0.0
  %588 = vmatprep.subr.mxu0 0.0
  %589 = vmatpush1.msra.mxu0 0.0
  %590 = vmatprep.subr.mxu0 0.0
  %591 = vmatpush1.msra.mxu0 0.0
  %592 = vmatprep.subr.mxu0 0.0
  %593 = vmatpush1.msra.mxu0 0.0
  %594 = vmatprep.subr.mxu0 0.0
  %595 = vmatpush1.msra.mxu0 0.0
  %596 = vmatprep.subr.mxu0 0.0
  %597 = vmatpush1.msra.mxu0 0.0
  %598 = vmatprep.subr.mxu0 0.0
  %599 = vmatpush1.msra.mxu0 0.0
  %600 = vmatprep.subr.mxu0 0.0
  %601 = vmatpush1.msra.mxu0 0.0
  %602 = vmatprep.subr.mxu0 0.0
  %603 = vmatpush1.msra.mxu0 0.0
  %604 = vmatprep.subr.mxu0 0.0
  %605 = vmatpush1.msra.mxu0 0.0
  %606 = vmatprep.subr.mxu0 0.0
  %607 = vmatpush1.msra.mxu0 0.0
  %608 = vmatprep.subr.mxu0 0.0
  %609 = vmatpush1.msra.mxu0 0.0
  %610 = vmatprep.subr.mxu0 0.0
  %611 = vmatpush1.msra.mxu0 0.0
  %612 = vmatprep.subr.mxu0 0.0
  %613 = vmatpush1.msra.mxu0 0.0
  %614 = vmatprep.subr.mxu0 0.0
  %615 = vmatpush1.msra.mxu0 0.0
  %616 = vmatprep.subr.mxu0 0.0
  %617 = vmatpush1.msra.mxu0 0.0
  %618 = vmatprep.subr.mxu0 0.0
  %619 = vmatpush1.msra.mxu0 0.0
  %620 = vmatprep.subr.mxu0 0.0
  %621 = vmatpush1.msra.mxu0 0.0
  %622 = vmatprep.subr.mxu0 0.0
  %623 = vmatpush1.msra.mxu0 0.0
  %624 = vmatprep.subr.mxu0 0.0
  %625 = vmatpush1.msra.mxu0 0.0
  %626 = vmatprep.mubr.f32.mxu0 0.0
  %627 = vmatmul.mubr.f32.gmra.mrb[0].mxu0 %v560
  %v628 = vpop.f32.mrb[0].mxu0
  %v629 = vadd.f32 0.0, %v628
  %v630 = vpop.f32.mrb[0].mxu0
  %631 = vdwg.mxu0
  %633 = vrot.lane.b32.xlu0 %v629, 32
  %v634 = vpop.permute.xlu0 %633
  %v636 = vsel %vm44, %v419, %v634
  %vm637 = vcmp.gt.f32.partialorder %v636, 0.0
  %v638 = vmin.f32 %v636, 0.0
  %v639 = vmul.f32 %v638, 1.442695
  %v640 = vpow.pop %v639
  %v641 = vsub.f32 %v640, 1.0
  %v642 = vsel %vm637, %v636, %v641
  %v643 = vld [vmem:[%s8] sm:$0x1]
  %v644 = vld [vmem:[%s9] sm:$0x1]
  %vm645 = vcmask 523264
  %v646 = vsel %vm645, %v642, 0.0
  %647 = vadd.xlane.f32.xlu0 %v646
  %v648 = vpop.xlane.xlu0 %647
  %v649 = vrcp.pop 64.0
  %v650 = vmul.f32 %v648, %v649
  %v651 = vsub.f32 %v642, %v650
  %v652 = vmul.f32 %v651, %v651
  %v653 = vsel %vm645, %v652, 0.0
  %654 = vadd.xlane.f32.xlu0 %v653
  %v655 = vpop.xlane.xlu0 %654
  %v656 = vmul.f32 %v655, %v649
  %v657 = vadd.f32 %v656, 1e-05
  %v658 = vrsqrt.pop %v657
  %v659 = vmul.f32 %v651, %v658
  %v661 = vlaneseq
  %v662 = vshrl.u32 %v661, 7
  %v663 = vsub.s32 0, %v662
  %v664 = vrot.slane %v643, %v663
  %v666 = vmul.f32 %v659, %v664
  %v668 = vlaneseq
  %v669 = vshrl.u32 %v668, 7
  %v670 = vsub.s32 0, %v669
  %v671 = vrot.slane %v644, %v670
  %v673 = vadd.f32 %v666, %v671
  %v674 = vmax.f32 %v673, 0.0
  %v675 = vld [vmem:[%s5] sm:$0xff]
  %v676 = vld [vmem:[%s5 + $0x8] sm:$0xff]
  %v677 = vld [vmem:[%s5 + $0x10] sm:$0xff]
  %v678 = vld [vmem:[%s5 + $0x18] sm:$0xff]
  %v679 = vld [vmem:[%s5 + $0x20] sm:$0xff]
  %v680 = vld [vmem:[%s5 + $0x28] sm:$0xff]
  %v681 = vld [vmem:[%s5 + $0x30] sm:$0xff]
  %v682 = vld [vmem:[%s5 + $0x38] sm:$0xff]
  %v684 = vsel %vm645, %v674, 0
  %686 = vmatprep.subr.mxu0 0.0
  %687 = vmatpush1.msra.mxu0 %v675
  %688 = vmatprep.subr.mxu0 0.0
  %689 = vmatpush1.msra.mxu0 %v676
  %690 = vmatprep.subr.mxu0 0.0
  %691 = vmatpush1.msra.mxu0 %v677
  %692 = vmatprep.subr.mxu0 0.0
  %693 = vmatpush1.msra.mxu0 %v678
  %694 = vmatprep.subr.mxu0 0.0
  %695 = vmatpush1.msra.mxu0 %v679
  %696 = vmatprep.subr.mxu0 0.0
  %697 = vmatpush1.msra.mxu0 %v680
  %698 = vmatprep.subr.mxu0 0.0
  %699 = vmatpush1.msra.mxu0 %v681
  %700 = vmatprep.subr.mxu0 0.0
  %701 = vmatpush1.msra.mxu0 %v682
  %702 = vmatprep.subr.mxu0 0.0
  %703 = vmatpush1.msra.mxu0 0.0
  %704 = vmatprep.subr.mxu0 0.0
  %705 = vmatpush1.msra.mxu0 0.0
  %706 = vmatprep.subr.mxu0 0.0
  %707 = vmatpush1.msra.mxu0 0.0
  %708 = vmatprep.subr.mxu0 0.0
  %709 = vmatpush1.msra.mxu0 0.0
  %710 = vmatprep.subr.mxu0 0.0
  %711 = vmatpush1.msra.mxu0 0.0
  %712 = vmatprep.subr.mxu0 0.0
  %713 = vmatpush1.msra.mxu0 0.0
  %714 = vmatprep.subr.mxu0 0.0
  %715 = vmatpush1.msra.mxu0 0.0
  %716 = vmatprep.subr.mxu0 0.0
  %717 = vmatpush1.msra.mxu0 0.0
  %718 = vmatprep.subr.mxu0 0.0
  %719 = vmatpush1.msra.mxu0 0.0
  %720 = vmatprep.subr.mxu0 0.0
  %721 = vmatpush1.msra.mxu0 0.0
  %722 = vmatprep.subr.mxu0 0.0
  %723 = vmatpush1.msra.mxu0 0.0
  %724 = vmatprep.subr.mxu0 0.0
  %725 = vmatpush1.msra.mxu0 0.0
  %726 = vmatprep.subr.mxu0 0.0
  %727 = vmatpush1.msra.mxu0 0.0
  %728 = vmatprep.subr.mxu0 0.0
  %729 = vmatpush1.msra.mxu0 0.0
  %730 = vmatprep.subr.mxu0 0.0
  %731 = vmatpush1.msra.mxu0 0.0
  %732 = vmatprep.subr.mxu0 0.0
  %733 = vmatpush1.msra.mxu0 0.0
  %734 = vmatprep.subr.mxu0 0.0
  %735 = vmatpush1.msra.mxu0 0.0
  %736 = vmatprep.subr.mxu0 0.0
  %737 = vmatpush1.msra.mxu0 0.0
  %738 = vmatprep.subr.mxu0 0.0
  %739 = vmatpush1.msra.mxu0 0.0
  %740 = vmatprep.subr.mxu0 0.0
  %741 = vmatpush1.msra.mxu0 0.0
  %742 = vmatprep.subr.mxu0 0.0
  %743 = vmatpush1.msra.mxu0 0.0
  %744 = vmatprep.subr.mxu0 0.0
  %745 = vmatpush1.msra.mxu0 0.0
  %746 = vmatprep.subr.mxu0 0.0
  %747 = vmatpush1.msra.mxu0 0.0
  %748 = vmatprep.subr.mxu0 0.0
  %749 = vmatpush1.msra.mxu0 0.0
  %750 = vmatprep.mubr.f32.mxu0 0.0
  %751 = vmatmul.mubr.f32.gmra.mrb[0].mxu0 %v684
  %v752 = vpop.f32.mrb[0].mxu0
  %v753 = vadd.f32 0.0, %v752
  %v754 = vpop.f32.mrb[0].mxu0
  %755 = vdwg.mxu0
  %v757 = vcombine.high %v753, %v753
  %v759 = vunpack.c.l.s4 1966171168
  %v760 = vunpack.c.0.s8 %v759
  %v761 = vlaneseq
  %v762 = vshrl.u32 %v761, 7
  %v763 = vsub.s32 %v760, %v762
  %v764 = vrot.slane %v753, %v763
  %v766 = vunpack.c.l.s4 1966171168
  %v767 = vunpack.c.0.s8 %v766
  %v768 = vlaneseq
  %v769 = vshrl.u32 %v768, 7
  %v770 = vsub.s32 %v767, %v769
  %v771 = vrot.slane %v757, %v770
  %v772 = vcombine.high %v764, %v764
  %v773 = vcombine.high %v771, %v771
  %v775 = vunpack.c.l.s4 1966171168
  %v776 = vunpack.c.0.s8 %v775
  %v777 = vlaneseq
  %v778 = vshrl.u32 %v777, 7
  %v779 = vsub.s32 %v776, %v778
  %v780 = vrot.slane %v764, %v779
  %v782 = vunpack.c.l.s4 1966171168
  %v783 = vunpack.c.0.s8 %v782
  %v784 = vlaneseq
  %v785 = vshrl.u32 %v784, 7
  %v786 = vsub.s32 %v783, %v785
  %v787 = vrot.slane %v771, %v786
  %v789 = vunpack.c.l.s4 1966171168
  %v790 = vunpack.c.0.s8 %v789
  %v791 = vlaneseq
  %v792 = vshrl.u32 %v791, 7
  %v793 = vsub.s32 %v790, %v792
  %v794 = vrot.slane %v772, %v793
  %v796 = vunpack.c.l.s4 1966171168
  %v797 = vunpack.c.0.s8 %v796
  %v798 = vlaneseq
  %v799 = vshrl.u32 %v798, 7
  %v800 = vsub.s32 %v797, %v799
  %v801 = vrot.slane %v773, %v800
  %v802 = vcombine.high %v780, %v780
  %v803 = vcombine.high %v787, %v787
  %v804 = vcombine.high %v794, %v794
  %v805 = vcombine.high %v801, %v801
  %v806 = vlaneseq
  %v807 = vshrl.u32 %v806, 7
  %v808 = vsub.s32 0, %v807
  %v809 = vrot.slane %v780, %v808
  %v810 = vlaneseq
  %v811 = vshrl.u32 %v810, 7
  %v812 = vsub.s32 0, %v811
  %v813 = vrot.slane %v794, %v812
  %v814 = vlaneseq
  %v815 = vshrl.u32 %v814, 7
  %v816 = vsub.s32 0, %v815
  %v817 = vrot.slane %v802, %v816
  %v818 = vlaneseq
  %v819 = vshrl.u32 %v818, 7
  %v820 = vsub.s32 0, %v819
  %v821 = vrot.slane %v804, %v820
  %v822 = vlaneseq
  %v823 = vshrl.u32 %v822, 7
  %v824 = vsub.s32 0, %v823
  %v825 = vrot.slane %v787, %v824
  %v826 = vlaneseq
  %v827 = vshrl.u32 %v826, 7
  %v828 = vsub.s32 0, %v827
  %v829 = vrot.slane %v801, %v828
  %v830 = vlaneseq
  %v831 = vshrl.u32 %v830, 7
  %v832 = vsub.s32 0, %v831
  %v833 = vrot.slane %v803, %v832
  %v834 = vlaneseq
  %v835 = vshrl.u32 %v834, 7
  %v836 = vsub.s32 0, %v835
  %v837 = vrot.slane %v805, %v836
  %v846 = vadd.f32 %v809, %v753
  %v847 = vadd.f32 %v813, %v753
  %v848 = vadd.f32 %v817, %v753
  %v849 = vadd.f32 %v821, %v753
  %v850 = vadd.f32 %v825, %v753
  %v851 = vadd.f32 %v829, %v753
  %v852 = vadd.f32 %v833, %v753
  %v853 = vadd.f32 %v837, %v753
  %vm854 = vcmp.ge.f32.partialorder %v846, 0.0
  %vm855 = vcmp.ge.f32.partialorder %v847, 0.0
  %vm856 = vcmp.ge.f32.partialorder %v848, 0.0
  %vm857 = vcmp.ge.f32.partialorder %v849, 0.0
  %vm858 = vcmp.ge.f32.partialorder %v850, 0.0
  %vm859 = vcmp.ge.f32.partialorder %v851, 0.0
  %vm860 = vcmp.ge.f32.partialorder %v852, 0.0
  %vm861 = vcmp.ge.f32.partialorder %v853, 0.0
  %v862 = vmul.f32 %v846, 0.2
  %v863 = vmul.f32 %v847, 0.2
  %v864 = vmul.f32 %v848, 0.2
  %v865 = vmul.f32 %v849, 0.2
  %v866 = vmul.f32 %v850, 0.2
  %v867 = vmul.f32 %v851, 0.2
  %v868 = vmul.f32 %v852, 0.2
  %v869 = vmul.f32 %v853, 0.2
  %v870 = vsel %vm854, %v846, %v862
  %v871 = vsel %vm855, %v847, %v863
  %v872 = vsel %vm856, %v848, %v864
  %v873 = vsel %vm857, %v849, %v865
  %v874 = vsel %vm858, %v850, %v866
  %v875 = vsel %vm859, %v851, %v867
  %v876 = vsel %vm860, %v852, %v868
  %v877 = vsel %vm861, %v853, %v869
  %v879 = vlaneseq
  %v880 = vshrl.u32 %v879, 7
  %v881 = vsub.s32 0, %v880
  %v882 = vrot.slane %v39, %v881
  %v884 = vmul.f32 %v870, %v882
  %v885 = vmul.f32 %v871, %v882
  %v886 = vmul.f32 %v872, %v882
  %v887 = vmul.f32 %v873, %v882
  %v888 = vmul.f32 %v874, %v882
  %v889 = vmul.f32 %v875, %v882
  %v890 = vmul.f32 %v876, %v882
  %v891 = vmul.f32 %v877, %v882
  %v892 = vsel %vm44, %v884, 0.0
  %893 = vadd.xlane.f32.xlu0 %v892
  %v894 = vpop.xlane.xlu0 %893
  %v895 = vsel %vm44, %v885, 0.0
  %896 = vadd.xlane.f32.xlu0 %v895
  %v897 = vpop.xlane.xlu0 %896
  %v898 = vsel %vm44, %v886, 0.0
  %899 = vadd.xlane.f32.xlu0 %v898
  %v900 = vpop.xlane.xlu0 %899
  %v901 = vsel %vm44, %v887, 0.0
  %902 = vadd.xlane.f32.xlu0 %v901
  %v903 = vpop.xlane.xlu0 %902
  %v904 = vsel %vm44, %v888, 0.0
  %905 = vadd.xlane.f32.xlu0 %v904
  %v906 = vpop.xlane.xlu0 %905
  %v907 = vsel %vm44, %v889, 0.0
  %908 = vadd.xlane.f32.xlu0 %v907
  %v909 = vpop.xlane.xlu0 %908
  %v910 = vsel %vm44, %v890, 0.0
  %911 = vadd.xlane.f32.xlu0 %v910
  %v912 = vpop.xlane.xlu0 %911
  %v913 = vsel %vm44, %v891, 0.0
  %914 = vadd.xlane.f32.xlu0 %v913
  %v915 = vpop.xlane.xlu0 %914
  %vm916 = vcmp.gt.f32.partialorder %v37, 0.0
  %v925 = vlaneseq
  %v926 = vshrl.u32 %v925, 7
  %v927 = vsub.s32 %v286, %v926
  %v928 = vrot.slane %v894, %v927
  %v929 = vlaneseq
  %v930 = vshrl.u32 %v929, 7
  %v931 = vsub.s32 %v286, %v930
  %v932 = vrot.slane %v897, %v931
  %v933 = vlaneseq
  %v934 = vshrl.u32 %v933, 7
  %v935 = vsub.s32 %v286, %v934
  %v936 = vrot.slane %v900, %v935
  %v937 = vlaneseq
  %v938 = vshrl.u32 %v937, 7
  %v939 = vsub.s32 %v286, %v938
  %v940 = vrot.slane %v903, %v939
  %v941 = vlaneseq
  %v942 = vshrl.u32 %v941, 7
  %v943 = vsub.s32 %v286, %v942
  %v944 = vrot.slane %v906, %v943
  %v945 = vlaneseq
  %v946 = vshrl.u32 %v945, 7
  %v947 = vsub.s32 %v286, %v946
  %v948 = vrot.slane %v909, %v947
  %v949 = vlaneseq
  %v950 = vshrl.u32 %v949, 7
  %v951 = vsub.s32 %v286, %v950
  %v952 = vrot.slane %v912, %v951
  %v953 = vlaneseq
  %v954 = vshrl.u32 %v953, 7
  %v955 = vsub.s32 %v286, %v954
  %v956 = vrot.slane %v915, %v955
  %v957 = vsel %vm319, %v932, %v928
  %v958 = vsel %vm321, %v936, %v957
  %v959 = vsel %vm323, %v940, %v958
  %v960 = vsel %vm325, %v944, %v959
  %v961 = vsel %vm327, %v948, %v960
  %v962 = vsel %vm329, %v952, %v961
  %v963 = vsel %vm331, %v956, %v962
  %v965 = vsel %vm916, %v963, -1e+30
  %v966 = vsel %vm335, %v965, -inf
  %967 = vmax.xlane.f32.xlu0 %v966
  %v968 = vpop.xlane.xlu0 %967
  %v969 = vsub.f32 %v965, %v968
  %v970 = vmul.f32 %v969, 1.442695
  %v971 = vpow.pop %v970
  %v972 = vsel %vm916, %v971, 0.0
  %v973 = vsel %vm335, %v972, 0.0
  %974 = vadd.xlane.f32.xlu0 %v973
  %v975 = vpop.xlane.xlu0 %974
  %v976 = vmax.f32 %v975, 1e-30
  %v977 = vrcp.pop %v976
  %v978 = vmul.f32 %v972, %v977
  %v979 = vld [vmem:[%s7] sm:$0xff]
  %v980 = vld [vmem:[%s7 + $0x8] sm:$0xff]
  %v981 = vld [vmem:[%s7 + $0x10] sm:$0xff]
  %v982 = vld [vmem:[%s7 + $0x18] sm:$0xff]
  %v983 = vld [vmem:[%s7 + $0x20] sm:$0xff]
  %v984 = vld [vmem:[%s7 + $0x28] sm:$0xff]
  %v985 = vld [vmem:[%s7 + $0x30] sm:$0xff]
  %v986 = vld [vmem:[%s7 + $0x38] sm:$0xff]
  %987 = vmatprep.subr.mxu0 0.0
  %988 = vmatpush1.msra.mxu0 %v979
  %989 = vmatprep.subr.mxu0 0.0
  %990 = vmatpush1.msra.mxu0 %v980
  %991 = vmatprep.subr.mxu0 0.0
  %992 = vmatpush1.msra.mxu0 %v981
  %993 = vmatprep.subr.mxu0 0.0
  %994 = vmatpush1.msra.mxu0 %v982
  %995 = vmatprep.subr.mxu0 0.0
  %996 = vmatpush1.msra.mxu0 %v983
  %997 = vmatprep.subr.mxu0 0.0
  %998 = vmatpush1.msra.mxu0 %v984
  %999 = vmatprep.subr.mxu0 0.0
  %1000 = vmatpush1.msra.mxu0 %v985
  %1001 = vmatprep.subr.mxu0 0.0
  %1002 = vmatpush1.msra.mxu0 %v986
  %1003 = vmatprep.subr.mxu0 0.0
  %1004 = vmatpush1.msra.mxu0 0.0
  %1005 = vmatprep.subr.mxu0 0.0
  %1006 = vmatpush1.msra.mxu0 0.0
  %1007 = vmatprep.subr.mxu0 0.0
  %1008 = vmatpush1.msra.mxu0 0.0
  %1009 = vmatprep.subr.mxu0 0.0
  %1010 = vmatpush1.msra.mxu0 0.0
  %1011 = vmatprep.subr.mxu0 0.0
  %1012 = vmatpush1.msra.mxu0 0.0
  %1013 = vmatprep.subr.mxu0 0.0
  %1014 = vmatpush1.msra.mxu0 0.0
  %1015 = vmatprep.subr.mxu0 0.0
  %1016 = vmatpush1.msra.mxu0 0.0
  %1017 = vmatprep.subr.mxu0 0.0
  %1018 = vmatpush1.msra.mxu0 0.0
  %1019 = vmatprep.subr.mxu0 0.0
  %1020 = vmatpush1.msra.mxu0 0.0
  %1021 = vmatprep.subr.mxu0 0.0
  %1022 = vmatpush1.msra.mxu0 0.0
  %1023 = vmatprep.subr.mxu0 0.0
  %1024 = vmatpush1.msra.mxu0 0.0
  %1025 = vmatprep.subr.mxu0 0.0
  %1026 = vmatpush1.msra.mxu0 0.0
  %1027 = vmatprep.subr.mxu0 0.0
  %1028 = vmatpush1.msra.mxu0 0.0
  %1029 = vmatprep.subr.mxu0 0.0
  %1030 = vmatpush1.msra.mxu0 0.0
  %1031 = vmatprep.subr.mxu0 0.0
  %1032 = vmatpush1.msra.mxu0 0.0
  %1033 = vmatprep.subr.mxu0 0.0
  %1034 = vmatpush1.msra.mxu0 0.0
  %1035 = vmatprep.subr.mxu0 0.0
  %1036 = vmatpush1.msra.mxu0 0.0
  %1037 = vmatprep.subr.mxu0 0.0
  %1038 = vmatpush1.msra.mxu0 0.0
  %1039 = vmatprep.subr.mxu0 0.0
  %1040 = vmatpush1.msra.mxu0 0.0
  %1041 = vmatprep.subr.mxu0 0.0
  %1042 = vmatpush1.msra.mxu0 0.0
  %1043 = vmatprep.subr.mxu0 0.0
  %1044 = vmatpush1.msra.mxu0 0.0
  %1045 = vmatprep.subr.mxu0 0.0
  %1046 = vmatpush1.msra.mxu0 0.0
  %1047 = vmatprep.subr.mxu0 0.0
  %1048 = vmatpush1.msra.mxu0 0.0
  %1049 = vmatprep.subr.mxu0 0.0
  %1050 = vmatpush1.msra.mxu0 0.0
  %1051 = vmatprep.mubr.f32.mxu0 0.0
  %1052 = vmatmul.mubr.f32.gmra.mrb[0].mxu0 %v684
  %v1053 = vpop.f32.mrb[0].mxu0
  %v1054 = vadd.f32 0.0, %v1053
  %v1055 = vpop.f32.mrb[0].mxu0
  %1056 = vdwg.mxu0
  %v1058 = vsel %vm335, %v978, 0
  %1060 = vmatprep.subr.mxu0 0.0
  %1061 = vmatpush1.msra.mxu0 %v753
  %1062 = vmatprep.subr.mxu0 0.0
  %1063 = vmatpush1.msra.mxu0 0.0
  %1064 = vmatprep.subr.mxu0 0.0
  %1065 = vmatpush1.msra.mxu0 0.0
  %1066 = vmatprep.subr.mxu0 0.0
  %1067 = vmatpush1.msra.mxu0 0.0
  %1068 = vmatprep.subr.mxu0 0.0
  %1069 = vmatpush1.msra.mxu0 0.0
  %1070 = vmatprep.subr.mxu0 0.0
  %1071 = vmatpush1.msra.mxu0 0.0
  %1072 = vmatprep.subr.mxu0 0.0
  %1073 = vmatpush1.msra.mxu0 0.0
  %1074 = vmatprep.subr.mxu0 0.0
  %1075 = vmatpush1.msra.mxu0 0.0
  %1076 = vmatprep.subr.mxu0 0.0
  %1077 = vmatpush1.msra.mxu0 0.0
  %1078 = vmatprep.subr.mxu0 0.0
  %1079 = vmatpush1.msra.mxu0 0.0
  %1080 = vmatprep.subr.mxu0 0.0
  %1081 = vmatpush1.msra.mxu0 0.0
  %1082 = vmatprep.subr.mxu0 0.0
  %1083 = vmatpush1.msra.mxu0 0.0
  %1084 = vmatprep.subr.mxu0 0.0
  %1085 = vmatpush1.msra.mxu0 0.0
  %1086 = vmatprep.subr.mxu0 0.0
  %1087 = vmatpush1.msra.mxu0 0.0
  %1088 = vmatprep.subr.mxu0 0.0
  %1089 = vmatpush1.msra.mxu0 0.0
  %1090 = vmatprep.subr.mxu0 0.0
  %1091 = vmatpush1.msra.mxu0 0.0
  %1092 = vmatprep.subr.mxu0 0.0
  %1093 = vmatpush1.msra.mxu0 0.0
  %1094 = vmatprep.subr.mxu0 0.0
  %1095 = vmatpush1.msra.mxu0 0.0
  %1096 = vmatprep.subr.mxu0 0.0
  %1097 = vmatpush1.msra.mxu0 0.0
  %1098 = vmatprep.subr.mxu0 0.0
  %1099 = vmatpush1.msra.mxu0 0.0
  %1100 = vmatprep.subr.mxu0 0.0
  %1101 = vmatpush1.msra.mxu0 0.0
  %1102 = vmatprep.subr.mxu0 0.0
  %1103 = vmatpush1.msra.mxu0 0.0
  %1104 = vmatprep.subr.mxu0 0.0
  %1105 = vmatpush1.msra.mxu0 0.0
  %1106 = vmatprep.subr.mxu0 0.0
  %1107 = vmatpush1.msra.mxu0 0.0
  %1108 = vmatprep.subr.mxu0 0.0
  %1109 = vmatpush1.msra.mxu0 0.0
  %1110 = vmatprep.subr.mxu0 0.0
  %1111 = vmatpush1.msra.mxu0 0.0
  %1112 = vmatprep.subr.mxu0 0.0
  %1113 = vmatpush1.msra.mxu0 0.0
  %1114 = vmatprep.subr.mxu0 0.0
  %1115 = vmatpush1.msra.mxu0 0.0
  %1116 = vmatprep.subr.mxu0 0.0
  %1117 = vmatpush1.msra.mxu0 0.0
  %1118 = vmatprep.subr.mxu0 0.0
  %1119 = vmatpush1.msra.mxu0 0.0
  %1120 = vmatprep.subr.mxu0 0.0
  %1121 = vmatpush1.msra.mxu0 0.0
  %1122 = vmatprep.subr.mxu0 0.0
  %1123 = vmatpush1.msra.mxu0 0.0
  %1124 = vmatprep.mubr.f32.mxu0 0.0
  %1125 = vmatmul.mubr.f32.gmra.mrb[0].mxu0 %v1058
  %v1126 = vpop.f32.mrb[0].mxu0
  %v1127 = vadd.f32 %v1054, %v1126
  %v1128 = vpop.f32.mrb[0].mxu0
  %1129 = vdwg.mxu0
  %vm1130 = vcmp.gt.f32.partialorder %v1127, 0.0
  %v1131 = vmin.f32 %v1127, 0.0
  %v1132 = vmul.f32 %v1131, 1.442695
  %v1133 = vpow.pop %v1132
  %v1134 = vsub.f32 %v1133, 1.0
  %v1135 = vsel %vm1130, %v1127, %v1134
  %1136 = vst.msk [vmem:[%s10] sm:$0xff] %vm44, %v1135
  // Predicated region
  $region42: #{graph_bert_encoder.4} parent=0 // pred_check
    _
  $region43: #{graph_bert_encoder.4} parent=0 // pred_check_branch
    %1138 = sbr.rel (0) target = $region45
  $region44: #{graph_bert_encoder.4} parent=0 // pred_region
    _
  $region45: #{graph_bert_encoder.4} parent=0 // pred_fallthru
    _
  // Predicated region
  $region46: #{graph_bert_encoder.4} parent=0 // pred_check
    _
  $region47: #{graph_bert_encoder.4} parent=0 // pred_check_branch
    %1140 = sbr.rel (0) target = $region49
  $region48: #{graph_bert_encoder.4} parent=0 // pred_region
    _
  $region49: #{graph_bert_encoder.4} parent=0 // pred_fallthru
    _

// kernel: graph_bert_encoder.3
$region0: #{graph_bert_encoder.3}
  #allocation0 [shape = 'u32[]', space=smem, size = 0x4, offset = 0x4, fixed_abs, tag = 'smem constant byte address 0x4 - core index']
  #allocation1 [shape = 'u32[144,128]{1,0:T(1,128)}', space=vmem, size = 0x12000, scoped, tag = 'internal scratch']
  %s0 = inlined_call_operand.vmem [shape: f32[8,8,32], index: 0, kind: input, shape index: {}]
  %s1 = inlined_call_operand.vmem [shape: f32[8,1,8], index: 1, kind: input, shape index: {}]
  %s2 = inlined_call_operand.vmem [shape: f32[32,96], index: 2, kind: input, shape index: {}]
  %s3 = inlined_call_operand.vmem [shape: f32[1,96], index: 3, kind: input, shape index: {}]
  %s4 = inlined_call_operand.vmem [shape: f32[32,32], index: 4, kind: input, shape index: {}]
  %s5 = inlined_call_operand.vmem [shape: f32[1,32], index: 5, kind: input, shape index: {}]
  %s6 = inlined_call_operand.vmem [shape: f32[1,32], index: 6, kind: input, shape index: {}]
  %s7 = inlined_call_operand.vmem [shape: f32[1,32], index: 7, kind: input, shape index: {}]
  %s8 = inlined_call_operand.vmem [shape: f32[32,64], index: 8, kind: input, shape index: {}]
  %s9 = inlined_call_operand.vmem [shape: f32[1,64], index: 9, kind: input, shape index: {}]
  %s10 = inlined_call_operand.vmem [shape: f32[64,32], index: 10, kind: input, shape index: {}]
  %s11 = inlined_call_operand.vmem [shape: f32[1,32], index: 11, kind: input, shape index: {}]
  %s12 = inlined_call_operand.vmem [shape: f32[1,32], index: 12, kind: input, shape index: {}]
  %s13 = inlined_call_operand.vmem [shape: f32[1,32], index: 13, kind: input, shape index: {}]
  %s14 = inlined_call_operand.vmem [shape: f32[8,8,32], index: 14, kind: output, shape index: {}]
  %s15 = sld [smem:[#allocation0]]
  $region89: #{graph_bert_encoder.3} parent=0
    _
  %s17 = ssub.s32 1, %s15
  %s18 = scalar_select 0, %s17, %s15
  loop: start=0, step=1, limit=4
  $region2: #{graph_bert_encoder.3} parent=0 // loop_pre_header
    _
  $region3: #{graph_bert_encoder.3} parent=0 // loop_header
    %s20 = sphi 0, %s24
    %p21 = scmp.ge.s32.totalorder %s20, 4
    %s30 = sphi 0, %s32
    %s33 = sphi 0, %s30
    %s34 = sphi 0, %s33
    %s50 = sphi 0, %s34
    %s56 = sphi 0, %s58
    %s59 = sphi 0, %s56
    %s60 = sphi 0, %s59
    %s76 = sphi 0, %s60
    %s80 = sphi 0, %s80
    %s82 = sphi 0, %s80
    %s83 = sphi 0, %s82
    %s97 = sphi 0, %s83
    %s101 = sphi 0, %s101
    %s103 = sphi 0, %s101
    %s104 = sphi 0, %s103
    %s118 = sphi 0, %s104
    %s122 = sphi 0, %s122
    %s124 = sphi 0, %s122
    %s125 = sphi 0, %s124
    %s139 = sphi 0, %s125
    %s143 = sphi 0, %s143
    %s145 = sphi 0, %s143
    %s146 = sphi 0, %s145
    %s160 = sphi 0, %s146
    %s164 = sphi 0, %s164
    %s166 = sphi 0, %s164
    %s167 = sphi 0, %s166
    %s181 = sphi 0, %s167
    %s185 = sphi 0, %s185
    %s187 = sphi 0, %s185
    %s188 = sphi 0, %s187
    %s202 = sphi 0, %s188
    %s206 = sphi 0, %s206
    %s208 = sphi 0, %s206
    %s209 = sphi 0, %s208
    %s223 = sphi 0, %s209
    %s227 = sphi 0, %s227
    %s229 = sphi 0, %s227
    %s230 = sphi 0, %s229
    %s244 = sphi 0, %s230
    %s248 = sphi 0, %s248
    %s250 = sphi 0, %s248
    %s251 = sphi 0, %s250
    %s265 = sphi 0, %s251
    %s269 = sphi 0, %s269
    %s271 = sphi 0, %s269
    %s272 = sphi 0, %s271
    %s286 = sphi 0, %s272
    %s290 = sphi 0, %s290
    %s292 = sphi 0, %s290
    %s293 = sphi 0, %s292
    %s307 = sphi 0, %s293
    %s311 = sphi 0, %s311
    %s313 = sphi 0, %s311
    %s314 = sphi 0, %s313
    %s328 = sphi 0, %s314
    %s334 = sphi 0, %s336
    %s337 = sphi 0, %s334
    %s338 = sphi 0, %s337
    %s354 = sphi 0, %s338
  $region4: #{graph_bert_encoder.3} parent=0 // loop_header_branch
    %23 = sbr.rel (%p21) target = $region8
  $region5: #{graph_bert_encoder.3} parent=0 // loop_body
    %s25 = ssub.s32 %s20, 1
    %s26 = ssub.s32 %s20, 2
    %s27 = sadd.s32 %s20, 1
    %s28 = ssub.s32 %s20, %s27
    %p29 = scmp.eq.s32.totalorder %s28, 0
    %s31 = sadd.s32 %s30, 1
    %s32 = scalar_select %p29, %s30, %s31
    %p35 = pneg %p29
    %p36 = scmp.eq.s32.totalorder %s20, 1
    %p37 = por %p35, %p36
    %p38 = scmp.ne.s32.totalorder %s30, %s33
    %p39 = scmp.eq.s32.totalorder %s20, 0
    %p40 = por %p38, %p39
    %p41 = scmp.ne.s32.totalorder %s30, %s33
    %p42 = scmp.eq.s32.totalorder %s25, 1
    %p43 = por %p41, %p42
    %p44 = scmp.ne.s32.totalorder %s33, %s34
    %p45 = scmp.eq.s32.totalorder %s25, 0
    %p46 = por %p44, %p45
    %p47 = scmp.ne.s32.totalorder %s33, %s34
    %p48 = scmp.eq.s32.totalorder %s26, 1
    %p49 = por %p47, %p48
    %p51 = scmp.ne.s32.totalorder %s34, %s50
    %p52 = scmp.eq.s32.totalorder %s26, 0
    %p53 = por %p51, %p52
    %s54 = ssub.s32 %s20, %s27
    %p55 = scmp.eq.s32.totalorder %s54, 0
    %s57 = sadd.s32 %s56, 1
    %s58 = scalar_select %p55, %s56, %s57
    %p61 = pneg %p55
    %p62 = scmp.eq.s32.totalorder %s20, 1
    %p63 = por %p61, %p62
    %p64 = scmp.ne.s32.totalorder %s56, %s59
    %p65 = scmp.eq.s32.totalorder %s20, 0
    %p66 = por %p64, %p65
    %p67 = scmp.ne.s32.totalorder %s56, %s59
    %p68 = scmp.eq.s32.totalorder %s25, 1
    %p69 = por %p67, %p68
    %p70 = scmp.ne.s32.totalorder %s59, %s60
    %p71 = scmp.eq.s32.totalorder %s25, 0
    %p72 = por %p70, %p71
    %p73 = scmp.ne.s32.totalorder %s59, %s60
    %p74 = scmp.eq.s32.totalorder %s26, 1
    %p75 = por %p73, %p74
    %p77 = scmp.ne.s32.totalorder %s60, %s76
    %p78 = scmp.eq.s32.totalorder %s26, 0
    %p79 = por %p77, %p78
    %s81 = sadd.s32 %s80, 1
    %p84 = scmp.eq.s32.totalorder %s20, 1
    %p85 = scmp.ne.s32.totalorder %s80, %s82
    %p86 = scmp.eq.s32.totalorder %s20, 0
    %p87 = por %p85, %p86
    %p88 = scmp.ne.s32.totalorder %s80, %s82
    %p89 = scmp.eq.s32.totalorder %s25, 1
    %p90 = por %p88, %p89
    %p91 = scmp.ne.s32.totalorder %s82, %s83
    %p92 = scmp.eq.s32.totalorder %s25, 0
    %p93 = por %p91, %p92
    %p94 = scmp.ne.s32.totalorder %s82, %s83
    %p95 = scmp.eq.s32.totalorder %s26, 1
    %p96 = por %p94, %p95
    %p98 = scmp.ne.s32.totalorder %s83, %s97
    %p99 = scmp.eq.s32.totalorder %s26, 0
    %p100 = por %p98, %p99
    %s102 = sadd.s32 %s101, 1
    %p105 = scmp.eq.s32.totalorder %s20, 1
    %p106 = scmp.ne.s32.totalorder %s101, %s103
    %p107 = scmp.eq.s32.totalorder %s20, 0
    %p108 = por %p106, %p107
    %p109 = scmp.ne.s32.totalorder %s101, %s103
    %p110 = scmp.eq.s32.totalorder %s25, 1
    %p111 = por %p109, %p110
    %p112 = scmp.ne.s32.totalorder %s103, %s104
    %p113 = scmp.eq.s32.totalorder %s25, 0
    %p114 = por %p112, %p113
    %p115 = scmp.ne.s32.totalorder %s103, %s104
    %p116 = scmp.eq.s32.totalorder %s26, 1
    %p117 = por %p115, %p116
    %p119 = scmp.ne.s32.totalorder %s104, %s118
    %p120 = scmp.eq.s32.totalorder %s26, 0
    %p121 = por %p119, %p120
    %s123 = sadd.s32 %s122, 1
    %p126 = scmp.eq.s32.totalorder %s20, 1
    %p127 = scmp.ne.s32.totalorder %s122, %s124
    %p128 = scmp.eq.s32.totalorder %s20, 0
    %p129 = por %p127, %p128
    %p130 = scmp.ne.s32.totalorder %s122, %s124
    %p131 = scmp.eq.s32.totalorder %s25, 1
    %p132 = por %p130, %p131
    %p133 = scmp.ne.s32.totalorder %s124, %s125
    %p134 = scmp.eq.s32.totalorder %s25, 0
    %p135 = por %p133, %p134
    %p136 = scmp.ne.s32.totalorder %s124, %s125
    %p137 = scmp.eq.s32.totalorder %s26, 1
    %p138 = por %p136, %p137
    %p140 = scmp.ne.s32.totalorder %s125, %s139
    %p141 = scmp.eq.s32.totalorder %s26, 0
    %p142 = por %p140, %p141
    %s144 = sadd.s32 %s143, 1
    %p147 = scmp.eq.s32.totalorder %s20, 1
    %p148 = scmp.ne.s32.totalorder %s143, %s145
    %p149 = scmp.eq.s32.totalorder %s20, 0
    %p150 = por %p148, %p149
    %p151 = scmp.ne.s32.totalorder %s143, %s145
    %p152 = scmp.eq.s32.totalorder %s25, 1
    %p153 = por %p151, %p152
    %p154 = scmp.ne.s32.totalorder %s145, %s146
    %p155 = scmp.eq.s32.totalorder %s25, 0
    %p156 = por %p154, %p155
    %p157 = scmp.ne.s32.totalorder %s145, %s146
    %p158 = scmp.eq.s32.totalorder %s26, 1
    %p159 = por %p157, %p158
    %p161 = scmp.ne.s32.totalorder %s146, %s160
    %p162 = scmp.eq.s32.totalorder %s26, 0
    %p163 = por %p161, %p162
    %s165 = sadd.s32 %s164, 1
    %p168 = scmp.eq.s32.totalorder %s20, 1
    %p169 = scmp.ne.s32.totalorder %s164, %s166
    %p170 = scmp.eq.s32.totalorder %s20, 0
    %p171 = por %p169, %p170
    %p172 = scmp.ne.s32.totalorder %s164, %s166
    %p173 = scmp.eq.s32.totalorder %s25, 1
    %p174 = por %p172, %p173
    %p175 = scmp.ne.s32.totalorder %s166, %s167
    %p176 = scmp.eq.s32.totalorder %s25, 0
    %p177 = por %p175, %p176
    %p178 = scmp.ne.s32.totalorder %s166, %s167
    %p179 = scmp.eq.s32.totalorder %s26, 1
    %p180 = por %p178, %p179
    %p182 = scmp.ne.s32.totalorder %s167, %s181
    %p183 = scmp.eq.s32.totalorder %s26, 0
    %p184 = por %p182, %p183
    %s186 = sadd.s32 %s185, 1
    %p189 = scmp.eq.s32.totalorder %s20, 1
    %p190 = scmp.ne.s32.totalorder %s185, %s187
    %p191 = scmp.eq.s32.totalorder %s20, 0
    %p192 = por %p190, %p191
    %p193 = scmp.ne.s32.totalorder %s185, %s187
    %p194 = scmp.eq.s32.totalorder %s25, 1
    %p195 = por %p193, %p194
    %p196 = scmp.ne.s32.totalorder %s187, %s188
    %p197 = scmp.eq.s32.totalorder %s25, 0
    %p198 = por %p196, %p197
    %p199 = scmp.ne.s32.totalorder %s187, %s188
    %p200 = scmp.eq.s32.totalorder %s26, 1
    %p201 = por %p199, %p200
    %p203 = scmp.ne.s32.totalorder %s188, %s202
    %p204 = scmp.eq.s32.totalorder %s26, 0
    %p205 = por %p203, %p204
    %s207 = sadd.s32 %s206, 1
    %p210 = scmp.eq.s32.totalorder %s20, 1
    %p211 = scmp.ne.s32.totalorder %s206, %s208
    %p212 = scmp.eq.s32.totalorder %s20, 0
    %p213 = por %p211, %p212
    %p214 = scmp.ne.s32.totalorder %s206, %s208
    %p215 = scmp.eq.s32.totalorder %s25, 1
    %p216 = por %p214, %p215
    %p217 = scmp.ne.s32.totalorder %s208, %s209
    %p218 = scmp.eq.s32.totalorder %s25, 0
    %p219 = por %p217, %p218
    %p220 = scmp.ne.s32.totalorder %s208, %s209
    %p221 = scmp.eq.s32.totalorder %s26, 1
    %p222 = por %p220, %p221
    %p224 = scmp.ne.s32.totalorder %s209, %s223
    %p225 = scmp.eq.s32.totalorder %s26, 0
    %p226 = por %p224, %p225
    %s228 = sadd.s32 %s227, 1
    %p231 = scmp.eq.s32.totalorder %s20, 1
    %p232 = scmp.ne.s32.totalorder %s227, %s229
    %p233 = scmp.eq.s32.totalorder %s20, 0
    %p234 = por %p232, %p233
    %p235 = scmp.ne.s32.totalorder %s227, %s229
    %p236 = scmp.eq.s32.totalorder %s25, 1
    %p237 = por %p235, %p236
    %p238 = scmp.ne.s32.totalorder %s229, %s230
    %p239 = scmp.eq.s32.totalorder %s25, 0
    %p240 = por %p238, %p239
    %p241 = scmp.ne.s32.totalorder %s229, %s230
    %p242 = scmp.eq.s32.totalorder %s26, 1
    %p243 = por %p241, %p242
    %p245 = scmp.ne.s32.totalorder %s230, %s244
    %p246 = scmp.eq.s32.totalorder %s26, 0
    %p247 = por %p245, %p246
    %s249 = sadd.s32 %s248, 1
    %p252 = scmp.eq.s32.totalorder %s20, 1
    %p253 = scmp.ne.s32.totalorder %s248, %s250
    %p254 = scmp.eq.s32.totalorder %s20, 0
    %p255 = por %p253, %p254
    %p256 = scmp.ne.s32.totalorder %s248, %s250
    %p257 = scmp.eq.s32.totalorder %s25, 1
    %p258 = por %p256, %p257
    %p259 = scmp.ne.s32.totalorder %s250, %s251
    %p260 = scmp.eq.s32.totalorder %s25, 0
    %p261 = por %p259, %p260
    %p262 = scmp.ne.s32.totalorder %s250, %s251
    %p263 = scmp.eq.s32.totalorder %s26, 1
    %p264 = por %p262, %p263
    %p266 = scmp.ne.s32.totalorder %s251, %s265
    %p267 = scmp.eq.s32.totalorder %s26, 0
    %p268 = por %p266, %p267
    %s270 = sadd.s32 %s269, 1
    %p273 = scmp.eq.s32.totalorder %s20, 1
    %p274 = scmp.ne.s32.totalorder %s269, %s271
    %p275 = scmp.eq.s32.totalorder %s20, 0
    %p276 = por %p274, %p275
    %p277 = scmp.ne.s32.totalorder %s269, %s271
    %p278 = scmp.eq.s32.totalorder %s25, 1
    %p279 = por %p277, %p278
    %p280 = scmp.ne.s32.totalorder %s271, %s272
    %p281 = scmp.eq.s32.totalorder %s25, 0
    %p282 = por %p280, %p281
    %p283 = scmp.ne.s32.totalorder %s271, %s272
    %p284 = scmp.eq.s32.totalorder %s26, 1
    %p285 = por %p283, %p284
    %p287 = scmp.ne.s32.totalorder %s272, %s286
    %p288 = scmp.eq.s32.totalorder %s26, 0
    %p289 = por %p287, %p288
    %s291 = sadd.s32 %s290, 1
    %p294 = scmp.eq.s32.totalorder %s20, 1
    %p295 = scmp.ne.s32.totalorder %s290, %s292
    %p296 = scmp.eq.s32.totalorder %s20, 0
    %p297 = por %p295, %p296
    %p298 = scmp.ne.s32.totalorder %s290, %s292
    %p299 = scmp.eq.s32.totalorder %s25, 1
    %p300 = por %p298, %p299
    %p301 = scmp.ne.s32.totalorder %s292, %s293
    %p302 = scmp.eq.s32.totalorder %s25, 0
    %p303 = por %p301, %p302
    %p304 = scmp.ne.s32.totalorder %s292, %s293
    %p305 = scmp.eq.s32.totalorder %s26, 1
    %p306 = por %p304, %p305
    %p308 = scmp.ne.s32.totalorder %s293, %s307
    %p309 = scmp.eq.s32.totalorder %s26, 0
    %p310 = por %p308, %p309
    %s312 = sadd.s32 %s311, 1
    %p315 = scmp.eq.s32.totalorder %s20, 1
    %p316 = scmp.ne.s32.totalorder %s311, %s313
    %p317 = scmp.eq.s32.totalorder %s20, 0
    %p318 = por %p316, %p317
    %p319 = scmp.ne.s32.totalorder %s311, %s313
    %p320 = scmp.eq.s32.totalorder %s25, 1
    %p321 = por %p319, %p320
    %p322 = scmp.ne.s32.totalorder %s313, %s314
    %p323 = scmp.eq.s32.totalorder %s25, 0
    %p324 = por %p322, %p323
    %p325 = scmp.ne.s32.totalorder %s313, %s314
    %p326 = scmp.eq.s32.totalorder %s26, 1
    %p327 = por %p325, %p326
    %p329 = scmp.ne.s32.totalorder %s314, %s328
    %p330 = scmp.eq.s32.totalorder %s26, 0
    %p331 = por %p329, %p330
    %s332 = ssub.s32 %s20, %s27
    %p333 = scmp.eq.s32.totalorder %s332, 0
    %s335 = sadd.s32 %s334, 1
    %s336 = scalar_select %p333, %s334, %s335
    %p339 = pneg %p333
    %p340 = scmp.eq.s32.totalorder %s20, 1
    %p341 = por %p339, %p340
    %p342 = scmp.ne.s32.totalorder %s334, %s337
    %p343 = scmp.eq.s32.totalorder %s20, 0
    %p344 = por %p342, %p343
    %p345 = scmp.ne.s32.totalorder %s334, %s337
    %p346 = scmp.eq.s32.totalorder %s25, 1
    %p347 = por %p345, %p346
    %p348 = scmp.ne.s32.totalorder %s337, %s338
    %p349 = scmp.eq.s32.totalorder %s25, 0
    %p350 = por %p348, %p349
    %p351 = scmp.ne.s32.totalorder %s337, %s338
    %p352 = scmp.eq.s32.totalorder %s26, 1
    %p353 = por %p351, %p352
    %p355 = scmp.ne.s32.totalorder %s338, %s354
    %p356 = scmp.eq.s32.totalorder %s26, 0
    %p357 = por %p355, %p356
    %p358 = scmp.le.s32.totalorder 1, %s20
    %p359 = scmp.lt.s32.totalorder %s20, 3
    %p360 = pnand %p358, %p359
    %p361 = pneg %p360
    // Predicated region
    $region9: #{graph_bert_encoder.3} parent=5 // pred_check
      _
    $region10: #{graph_bert_encoder.3} parent=5 // pred_check_branch
      %363 = sbr.rel (%p360) target = $region12
    $region11: #{graph_bert_encoder.3} parent=5 // pred_region
      %s364 = ssub.s32 %s20, 1
      // Predicated region
      $region13: #{graph_bert_encoder.3} parent=11 // pred_check
        %p365 = pneg %p93
      $region14: #{graph_bert_encoder.3} parent=11 // pred_check_branch
        %367 = sbr.rel (%p365) target = $region16
      $region15: #{graph_bert_encoder.3} parent=11 // pred_region
        _
      $region16: #{graph_bert_encoder.3} parent=11 // pred_fallthru
        _
      // Predicated region
      $region17: #{graph_bert_encoder.3} parent=11 // pred_check
        %p368 = pneg %p114
      $region18: #{graph_bert_encoder.3} parent=11 // pred_check_branch
        %370 = sbr.rel (%p368) target = $region20
      $region19: #{graph_bert_encoder.3} parent=11 // pred_region
        _
      $region20: #{graph_bert_encoder.3} parent=11 // pred_fallthru
        _
      // Predicated region
      $region21: #{graph_bert_encoder.3} parent=11 // pred_check
        %p371 = pneg %p135
      $region22: #{graph_bert_encoder.3} parent=11 // pred_check_branch
        %373 = sbr.rel (%p371) target = $region24
      $region23: #{graph_bert_encoder.3} parent=11 // pred_region
        _
      $region24: #{graph_bert_encoder.3} parent=11 // pred_fallthru
        _
      // Predicated region
      $region25: #{graph_bert_encoder.3} parent=11 // pred_check
        %p374 = pneg %p156
      $region26: #{graph_bert_encoder.3} parent=11 // pred_check_branch
        %376 = sbr.rel (%p374) target = $region28
      $region27: #{graph_bert_encoder.3} parent=11 // pred_region
        _
      $region28: #{graph_bert_encoder.3} parent=11 // pred_fallthru
        _
      // Predicated region
      $region29: #{graph_bert_encoder.3} parent=11 // pred_check
        %p377 = pneg %p177
      $region30: #{graph_bert_encoder.3} parent=11 // pred_check_branch
        %379 = sbr.rel (%p377) target = $region32
      $region31: #{graph_bert_encoder.3} parent=11 // pred_region
        _
      $region32: #{graph_bert_encoder.3} parent=11 // pred_fallthru
        _
      // Predicated region
      $region33: #{graph_bert_encoder.3} parent=11 // pred_check
        %p380 = pneg %p198
      $region34: #{graph_bert_encoder.3} parent=11 // pred_check_branch
        %382 = sbr.rel (%p380) target = $region36
      $region35: #{graph_bert_encoder.3} parent=11 // pred_region
        _
      $region36: #{graph_bert_encoder.3} parent=11 // pred_fallthru
        _
      // Predicated region
      $region37: #{graph_bert_encoder.3} parent=11 // pred_check
        %p383 = pneg %p219
      $region38: #{graph_bert_encoder.3} parent=11 // pred_check_branch
        %385 = sbr.rel (%p383) target = $region40
      $region39: #{graph_bert_encoder.3} parent=11 // pred_region
        _
      $region40: #{graph_bert_encoder.3} parent=11 // pred_fallthru
        _
      // Predicated region
      $region41: #{graph_bert_encoder.3} parent=11 // pred_check
        %p386 = pneg %p240
      $region42: #{graph_bert_encoder.3} parent=11 // pred_check_branch
        %388 = sbr.rel (%p386) target = $region44
      $region43: #{graph_bert_encoder.3} parent=11 // pred_region
        _
      $region44: #{graph_bert_encoder.3} parent=11 // pred_fallthru
        _
      // Predicated region
      $region45: #{graph_bert_encoder.3} parent=11 // pred_check
        %p389 = pneg %p261
      $region46: #{graph_bert_encoder.3} parent=11 // pred_check_branch
        %391 = sbr.rel (%p389) target = $region48
      $region47: #{graph_bert_encoder.3} parent=11 // pred_region
        _
      $region48: #{graph_bert_encoder.3} parent=11 // pred_fallthru
        _
      // Predicated region
      $region49: #{graph_bert_encoder.3} parent=11 // pred_check
        %p392 = pneg %p282
      $region50: #{graph_bert_encoder.3} parent=11 // pred_check_branch
        %394 = sbr.rel (%p392) target = $region52
      $region51: #{graph_bert_encoder.3} parent=11 // pred_region
        _
      $region52: #{graph_bert_encoder.3} parent=11 // pred_fallthru
        _
      // Predicated region
      $region53: #{graph_bert_encoder.3} parent=11 // pred_check
        %p395 = pneg %p303
      $region54: #{graph_bert_encoder.3} parent=11 // pred_check_branch
        %397 = sbr.rel (%p395) target = $region56
      $region55: #{graph_bert_encoder.3} parent=11 // pred_region
        _
      $region56: #{graph_bert_encoder.3} parent=11 // pred_fallthru
        _
      // Predicated region
      $region57: #{graph_bert_encoder.3} parent=11 // pred_check
        %p398 = pneg %p324
      $region58: #{graph_bert_encoder.3} parent=11 // pred_check_branch
        %400 = sbr.rel (%p398) target = $region60
      $region59: #{graph_bert_encoder.3} parent=11 // pred_region
        _
      $region60: #{graph_bert_encoder.3} parent=11 // pred_fallthru
        _
    $region12: #{graph_bert_encoder.3} parent=5 // pred_fallthru
      _
    %p401 = scmp.lt.s32.totalorder %s20, 2
    // Predicated region
    $region61: #{graph_bert_encoder.3} parent=5 // pred_check
      %p402 = pneg %p401
    $region62: #{graph_bert_encoder.3} parent=5 // pred_check_branch
      %404 = sbr.rel (%p402) target = $region64
    $region63: #{graph_bert_encoder.3} parent=5 // pred_region
      // Predicated region
      $region65: #{graph_bert_encoder.3} parent=63 // pred_check
        %p405 = pneg %p40
      $region66: #{graph_bert_encoder.3} parent=63 // pred_check_branch
        %407 = sbr.rel (%p405) target = $region68
      $region67: #{graph_bert_encoder.3} parent=63 // pred_region
        %s408 = smul.u32 4, %s20
        %p409 = scmp.lt.s32.totalorder %s408, 7
        %s410 = scalar_select %p409, %s408, 7
        %s411 = smul.addr %s410, 8
        %s412 = scalar_lea.vmem %s0, %s411
        %s413 = smul.u32 4, %s20
      $region68: #{graph_bert_encoder.3} parent=63 // pred_fallthru
        _
      // Predicated region
      $region69: #{graph_bert_encoder.3} parent=63 // pred_check
        %p414 = pneg %p66
      $region70: #{graph_bert_encoder.3} parent=63 // pred_check_branch
        %416 = sbr.rel (%p414) target = $region72
      $region71: #{graph_bert_encoder.3} parent=63 // pred_region
        %s417 = smul.u32 4, %s20
        %p418 = scmp.lt.s32.totalorder %s417, 7
        %s419 = scalar_select %p418, %s417, 7
        %s420 = scalar_lea.vmem %s1, %s419
        %s421 = smul.u32 4, %s20
      $region72: #{graph_bert_encoder.3} parent=63 // pred_fallthru
        _
    $region64: #{graph_bert_encoder.3} parent=5 // pred_fallthru
      _
    %p422 = scmp.le.s32.totalorder 1, %s20
    %p423 = scmp.lt.s32.totalorder %s20, 3
    %p424 = pnand %p422, %p423
    %p425 = pneg %p424
    // Predicated region
    $region73: #{graph_bert_encoder.3} parent=5 // pred_check
      _
    $region74: #{graph_bert_encoder.3} parent=5 // pred_check_branch
      %427 = sbr.rel (%p424) target = $region76
    $region75: #{graph_bert_encoder.3} parent=5 // pred_region
      %s428 = ssub.s32 %s20, 1
      %s429 = smul.u32 4, %s25
      %p430 = scmp.lt.s32.totalorder %s429, 7
      %s431 = scalar_select %p430, %s429, 7
      %s432 = smul.addr %s431, 8
      %s433 = scalar_lea.vmem %s0, %s432
      %p434 = pneg %p46
      %p435 = pneg %p43
      %s436 = smul.u32 4, %s25
      %p437 = scmp.lt.s32.totalorder %s436, 7
      %s438 = scalar_select %p437, %s436, 7
      %s439 = scalar_lea.vmem %s1, %s438
      %p440 = pneg %p72
      %p441 = pneg %p69
      %p442 = pneg %p93
      %p443 = pneg %p90
      %p444 = pneg %p114
      %p445 = pneg %p111
      %p446 = pneg %p135
      %p447 = pneg %p132
      %p448 = pneg %p156
      %p449 = pneg %p153
      %p450 = pneg %p177
      %p451 = pneg %p174
      %p452 = pneg %p198
      %p453 = pneg %p195
      %p454 = pneg %p219
      %p455 = pneg %p216
      %p456 = pneg %p240
      %p457 = pneg %p237
      %p458 = pneg %p261
      %p459 = pneg %p258
      %p460 = pneg %p282
      %p461 = pneg %p279
      %p462 = pneg %p303
      %p463 = pneg %p300
      %p464 = pneg %p324
      %p465 = pneg %p321
      %p466 = pneg %p350
      %p467 = pneg %p347
      %s468 = smul.u32 4, %s25
      %p469 = scmp.lt.s32.totalorder %s468, 7
      %s470 = scalar_select %p469, %s468, 7
      %s471 = smul.addr %s470, 8
      %s472 = scalar_lea.vmem %s14, %s471
      %s473 = smul.u32 4, %s25
      %p474 = scmp.lt.s32.totalorder %s473, 7
      %s475 = scalar_select %p474, %s473, 7
      %s476 = smul.addr %s475, 8
      %s477 = scalar_lea.vmem %s0, %s476
      %s478 = smul.u32 4, %s25
      %s479 = smul.u32 4, %s25
      %p480 = scmp.lt.s32.totalorder %s479, 7
      %s481 = scalar_select %p480, %s479, 7
      %s482 = scalar_lea.vmem %s1, %s481
      %s483 = smul.u32 4, %s25
      %s484 = smul.u32 4, %s25
      %p485 = scmp.lt.s32.totalorder %s484, 7
      %s486 = scalar_select %p485, %s484, 7
      %s487 = smul.addr %s486, 8
      %s488 = scalar_lea.vmem %s14, %s487
      %s489 = smul.u32 4, %s25
      %v490 = vld [vmem:[%s477] sm:$0xff]
      %v491 = vld [vmem:[%s477 + $0x8] sm:$0xff]
      %v492 = vld [vmem:[%s477 + $0x10] sm:$0xff]
      %v493 = vld [vmem:[%s477 + $0x18] sm:$0xff]
      %v494 = vld [vmem:[%s482] sm:$0x1]
      %v495 = vld [vmem:[%s482 + $0x1] sm:$0x1]
      %v496 = vld [vmem:[%s482 + $0x2] sm:$0x1]
      %v497 = vld [vmem:[%s482 + $0x3] sm:$0x1]
      %v498 = vld [vmem:[%s2] sm:$0xff]
      %v499 = vld [vmem:[%s2 + $0x8] sm:$0xff]
      %v500 = vld [vmem:[%s2 + $0x10] sm:$0xff]
      %v501 = vld [vmem:[%s2 + $0x18] sm:$0xff]
      %v502 = vld [vmem:[%s3] sm:$0x1]
      %v504 = vlaneseq
      %v505 = vshrl.u32 %v504, 7
      %v506 = vsub.s32 0, %v505
      %v507 = vrot.slane %v502, %v506
      %vm509 = vcmask 261120
      %v511 = vsel %vm509, %v490, 0
      %v514 = vsel %vm509, %v491, 0
      %v517 = vsel %vm509, %v492, 0
      %v520 = vsel %vm509, %v493, 0
      %522 = vmatprep.subr.mxu0 0.0
      %523 = vmatpush1.msra.mxu0 %v498
      %524 = vmatprep.subr.mxu0 0.0
      %525 = vmatpush1.msra.mxu0 %v499
      %526 = vmatprep.subr.mxu0 0.0
      %527 = vmatpush1.msra.mxu0 %v500
      %528 = vmatprep.subr.mxu0 0.0
      %529 = vmatpush1.msra.mxu0 %v501
      %530 = vmatprep.subr.mxu0 0.0
      %531 = vmatpush1.msra.mxu0 0.0
      %532 = vmatprep.subr.mxu0 0.0
      %533 = vmatpush1.msra.mxu0 0.0
      %534 = vmatprep.subr.mxu0 0.0
      %535 = vmatpush1.msra.mxu0 0.0
      %536 = vmatprep.subr.mxu0 0.0
      %537 = vmatpush1.msra.mxu0 0.0
      %538 = vmatprep.subr.mxu0 0.0
      %539 = vmatpush1.msra.mxu0 0.0
      %540 = vmatprep.subr.mxu0 0.0
      %541 = vmatpush1.msra.mxu0 0.0
      %542 = vmatprep.subr.mxu0 0.0
      %543 = vmatpush1.msra.mxu0 0.0
      %544 = vmatprep.subr.mxu0 0.0
      %545 = vmatpush1.msra.mxu0 0.0
      %546 = vmatprep.subr.mxu0 0.0
      %547 = vmatpush1.msra.mxu0 0.0
      %548 = vmatprep.subr.mxu0 0.0
      %549 = vmatpush1.msra.mxu0 0.0
      %550 = vmatprep.subr.mxu0 0.0
      %551 = vmatpush1.msra.mxu0 0.0
      %552 = vmatprep.subr.mxu0 0.0
      %553 = vmatpush1.msra.mxu0 0.0
      %554 = vmatprep.subr.mxu0 0.0
      %555 = vmatpush1.msra.mxu0 0.0
      %556 = vmatprep.subr.mxu0 0.0
      %557 = vmatpush1.msra.mxu0 0.0
      %558 = vmatprep.subr.mxu0 0.0
      %559 = vmatpush1.msra.mxu0 0.0
      %560 = vmatprep.subr.mxu0 0.0
      %561 = vmatpush1.msra.mxu0 0.0
      %562 = vmatprep.subr.mxu0 0.0
      %563 = vmatpush1.msra.mxu0 0.0
      %564 = vmatprep.subr.mxu0 0.0
      %565 = vmatpush1.msra.mxu0 0.0
      %566 = vmatprep.subr.mxu0 0.0
      %567 = vmatpush1.msra.mxu0 0.0
      %568 = vmatprep.subr.mxu0 0.0
      %569 = vmatpush1.msra.mxu0 0.0
      %570 = vmatprep.subr.mxu0 0.0
      %571 = vmatpush1.msra.mxu0 0.0
      %572 = vmatprep.subr.mxu0 0.0
      %573 = vmatpush1.msra.mxu0 0.0
      %574 = vmatprep.subr.mxu0 0.0
      %575 = vmatpush1.msra.mxu0 0.0
      %576 = vmatprep.subr.mxu0 0.0
      %577 = vmatpush1.msra.mxu0 0.0
      %578 = vmatprep.subr.mxu0 0.0
      %579 = vmatpush1.msra.mxu0 0.0
      %580 = vmatprep.subr.mxu0 0.0
      %581 = vmatpush1.msra.mxu0 0.0
      %582 = vmatprep.subr.mxu0 0.0
      %583 = vmatpush1.msra.mxu0 0.0
      %584 = vmatprep.subr.mxu0 0.0
      %585 = vmatpush1.msra.mxu0 0.0
      %586 = vmatprep.mubr.f32.mxu0 0.0
      %587 = vmatmul.mubr.f32.gmra.mrb[0].mxu0 %v511
      %v588 = vpop.f32.mrb[0].mxu0
      %v589 = vadd.f32 %v507, %v588
      %v590 = vpop.f32.mrb[0].mxu0
      %591 = vmatprep.mubr.f32.mxu0 0.0
      %592 = vmatmul.mubr.f32.gmra.mrb[0].mxu0 %v514
      %v593 = vpop.f32.mrb[0].mxu0
      %v594 = vadd.f32 %v507, %v593
      %v595 = vpop.f32.mrb[0].mxu0
      %596 = vmatprep.mubr.f32.mxu0 0.0
      %597 = vmatmul.mubr.f32.gmra.mrb[0].mxu0 %v517
      %v598 = vpop.f32.mrb[0].mxu0
      %v599 = vadd.f32 %v507, %v598
      %v600 = vpop.f32.mrb[0].mxu0
      %601 = vmatprep.mubr.f32.mxu0 0.0
      %602 = vmatmul.mubr.f32.gmra.mrb[0].mxu0 %v520
      %v603 = vpop.f32.mrb[0].mxu0
      %v604 = vadd.f32 %v507, %v603
      %v605 = vpop.f32.mrb[0].mxu0
      %606 = vdwg.mxu0
      %608 = vrot.lane.b32.xlu0 %v589, 96
      %v609 = vpop.permute.xlu0 %608
      %vm610 = vcmask 130048
      %v611 = vsel %vm610, %v589, 0
      %v613 = vsel %vm610, %v609, 0
      %615 = vmatprep.subr.mxu0 0.0
      %616 = vmatpush1.xpose.msra.mxu0 %v613
      %617 = vmatprep.subr.mxu0 0.0
      %618 = vmatpush1.xpose.msra.mxu0 0.0
      %619 = vmatprep.subr.mxu0 0.0
      %620 = vmatpush1.xpose.msra.mxu0 0.0
      %621 = vmatprep.subr.mxu0 0.0
      %622 = vmatpush1.xpose.msra.mxu0 0.0
      %623 = vmatprep.subr.mxu0 0.0
      %624 = vmatpush1.xpose.msra.mxu0 0.0
      %625 = vmatprep.subr.mxu0 0.0
      %626 = vmatpush1.xpose.msra.mxu0 0.0
      %627 = vmatprep.subr.mxu0 0.0
      %628 = vmatpush1.xpose.msra.mxu0 0.0
      %629 = vmatprep.subr.mxu0 0.0
      %630 = vmatpush1.xpose.msra.mxu0 0.0
      %631 = vmatprep.subr.mxu0 0.0
      %632 = vmatpush1.xpose.msra.mxu0 0.0
      %633 = vmatprep.subr.mxu0 0.0
      %634 = vmatpush1.xpose.msra.mxu0 0.0
      %635 = vmatprep.subr.mxu0 0.0
      %636 = vmatpush1.xpose.msra.mxu0 0.0
      %637 = vmatprep.subr.mxu0 0.0
      %638 = vmatpush1.xpose.msra.mxu0 0.0
      %639 = vmatprep.subr.mxu0 0.0
      %640 = vmatpush1.xpose.msra.mxu0 0.0
      %641 = vmatprep.subr.mxu0 0.0
      %642 = vmatpush1.xpose.msra.mxu0 0.0
      %643 = vmatprep.subr.mxu0 0.0
      %644 = vmatpush1.xpose.msra.mxu0 0.0
      %645 = vmatprep.subr.mxu0 0.0
      %646 = vmatpush1.xpose.msra.mxu0 0.0
      %647 = vmatprep.subr.mxu0 0.0
      %648 = vmatpush1.xpose.msra.mxu0 0.0
      %649 = vmatprep.subr.mxu0 0.0
      %650 = vmatpush1.xpose.msra.mxu0 0.0
      %651 = vmatprep.subr.mxu0 0.0
      %652 = vmatpush1.xpose.msra.mxu0 0.0
      %653 = vmatprep.subr.mxu0 0.0
      %654 = vmatpush1.xpose.msra.mxu0 0.0
      %655 = vmatprep.subr.mxu0 0.0
      %656 = vmatpush1.xpose.msra.mxu0 0.0
      %657 = vmatprep.subr.mxu0 0.0
      %658 = vmatpush1.xpose.msra.mxu0 0.0
      %659 = vmatprep.subr.mxu0 0.0
      %660 = vmatpush1.xpose.msra.mxu0 0.0
      %661 = vmatprep.subr.mxu0 0.0
      %662 = vmatpush1.xpose.msra.mxu0 0.0
      %663 = vmatprep.subr.mxu0 0.0
      %664 = vmatpush1.xpose.msra.mxu0 0.0
      %665 = vmatprep.subr.mxu0 0.0
      %666 = vmatpush1.xpose.msra.mxu0 0.0
      %667 = vmatprep.subr.mxu0 0.0
      %668 = vmatpush1.xpose.msra.mxu0 0.0
      %669 = vmatprep.subr.mxu0 0.0
      %670 = vmatpush1.xpose.msra.mxu0 0.0
      %671 = vmatprep.subr.mxu0 0.0
      %672 = vmatpush1.xpose.msra.mxu0 0.0
      %673 = vmatprep.subr.mxu0 0.0
      %674 = vmatpush1.xpose.msra.mxu0 0.0
      %675 = vmatprep.subr.mxu0 0.0
      %676 = vmatpush1.xpose.msra.mxu0 0.0
      %677 = vmatprep.subr.mxu0 0.0
      %678 = vmatpush1.xpose.msra.mxu0 0.0
      %679 = vmatprep.mubr.f32.mxu0 0.0
      %680 = vmatmul.mubr.f32.gmra.mrb[0].mxu0 %v611
      %v681 = vpop.f32.mrb[0].mxu0
      %v682 = vadd.f32 0.0, %v681
      %v683 = vpop.f32.mrb[0].mxu0
      %684 = vdwg.mxu0
      %686 = vrot.lane.b32.xlu0 %v594, 96
      %v687 = vpop.permute.xlu0 %686
      %v688 = vsel %vm610, %v594, 0
      %v690 = vsel %vm610, %v687, 0
      %692 = vmatprep.subr.mxu0 0.0
      %693 = vmatpush1.xpose.msra.mxu0 %v690
      %694 = vmatprep.subr.mxu0 0.0
      %695 = vmatpush1.xpose.msra.mxu0 0.0
      %696 = vmatprep.subr.mxu0 0.0
      %697 = vmatpush1.xpose.msra.mxu0 0.0
      %698 = vmatprep.subr.mxu0 0.0
      %699 = vmatpush1.xpose.msra.mxu0 0.0
      %700 = vmatprep.subr.mxu0 0.0
      %701 = vmatpush1.xpose.msra.mxu0 0.0
      %702 = vmatprep.subr.mxu0 0.0
      %703 = vmatpush1.xpose.msra.mxu0 0.0
      %704 = vmatprep.subr.mxu0 0.0
      %705 = vmatpush1.xpose.msra.mxu0 0.0
      %706 = vmatprep.subr.mxu0 0.0
      %707 = vmatpush1.xpose.msra.mxu0 0.0
      %708 = vmatprep.subr.mxu0 0.0
      %709 = vmatpush1.xpose.msra.mxu0 0.0
      %710 = vmatprep.subr.mxu0 0.0
      %711 = vmatpush1.xpose.msra.mxu0 0.0
      %712 = vmatprep.subr.mxu0 0.0
      %713 = vmatpush1.xpose.msra.mxu0 0.0
      %714 = vmatprep.subr.mxu0 0.0
      %715 = vmatpush1.xpose.msra.mxu0 0.0
      %716 = vmatprep.subr.mxu0 0.0
      %717 = vmatpush1.xpose.msra.mxu0 0.0
      %718 = vmatprep.subr.mxu0 0.0
      %719 = vmatpush1.xpose.msra.mxu0 0.0
      %720 = vmatprep.subr.mxu0 0.0
      %721 = vmatpush1.xpose.msra.mxu0 0.0
      %722 = vmatprep.subr.mxu0 0.0
      %723 = vmatpush1.xpose.msra.mxu0 0.0
      %724 = vmatprep.subr.mxu0 0.0
      %725 = vmatpush1.xpose.msra.mxu0 0.0
      %726 = vmatprep.subr.mxu0 0.0
      %727 = vmatpush1.xpose.msra.mxu0 0.0
      %728 = vmatprep.subr.mxu0 0.0
      %729 = vmatpush1.xpose.msra.mxu0 0.0
      %730 = vmatprep.subr.mxu0 0.0
      %731 = vmatpush1.xpose.msra.mxu0 0.0
      %732 = vmatprep.subr.mxu0 0.0
      %733 = vmatpush1.xpose.msra.mxu0 0.0
      %734 = vmatprep.subr.mxu0 0.0
      %735 = vmatpush1.xpose.msra.mxu0 0.0
      %736 = vmatprep.subr.mxu0 0.0
      %737 = vmatpush1.xpose.msra.mxu0 0.0
      %738 = vmatprep.subr.mxu0 0.0
      %739 = vmatpush1.xpose.msra.mxu0 0.0
      %740 = vmatprep.subr.mxu0 0.0
      %741 = vmatpush1.xpose.msra.mxu0 0.0
      %742 = vmatprep.subr.mxu0 0.0
      %743 = vmatpush1.xpose.msra.mxu0 0.0
      %744 = vmatprep.subr.mxu0 0.0
      %745 = vmatpush1.xpose.msra.mxu0 0.0
      %746 = vmatprep.subr.mxu0 0.0
      %747 = vmatpush1.xpose.msra.mxu0 0.0
      %748 = vmatprep.subr.mxu0 0.0
      %749 = vmatpush1.xpose.msra.mxu0 0.0
      %750 = vmatprep.subr.mxu0 0.0
      %751 = vmatpush1.xpose.msra.mxu0 0.0
      %752 = vmatprep.subr.mxu0 0.0
      %753 = vmatpush1.xpose.msra.mxu0 0.0
      %754 = vmatprep.subr.mxu0 0.0
      %755 = vmatpush1.xpose.msra.mxu0 0.0
      %756 = vmatprep.mubr.f32.mxu0 0.0
      %757 = vmatmul.mubr.f32.gmra.mrb[0].mxu0 %v688
      %v758 = vpop.f32.mrb[0].mxu0
      %v759 = vadd.f32 0.0, %v758
      %v760 = vpop.f32.mrb[0].mxu0
      %761 = vdwg.mxu0
      %763 = vrot.lane.b32.xlu0 %v599, 96
      %v764 = vpop.permute.xlu0 %763
      %v765 = vsel %vm610, %v599, 0
      %v767 = vsel %vm610, %v764, 0
      %769 = vmatprep.subr.mxu0 0.0
      %770 = vmatpush1.xpose.msra.mxu0 %v767
      %771 = vmatprep.subr.mxu0 0.0
      %772 = vmatpush1.xpose.msra.mxu0 0.0
      %773 = vmatprep.subr.mxu0 0.0
      %774 = vmatpush1.xpose.msra.mxu0 0.0
      %775 = vmatprep.subr.mxu0 0.0
      %776 = vmatpush1.xpose.msra.mxu0 0.0
      %777 = vmatprep.subr.mxu0 0.0
      %778 = vmatpush1.xpose.msra.mxu0 0.0
      %779 = vmatprep.subr.mxu0 0.0
      %780 = vmatpush1.xpose.msra.mxu0 0.0
      %781 = vmatprep.subr.mxu0 0.0
      %782 = vmatpush1.xpose.msra.mxu0 0.0
      %783 = vmatprep.subr.mxu0 0.0
      %784 = vmatpush1.xpose.msra.mxu0 0.0
      %785 = vmatprep.subr.mxu0 0.0
      %786 = vmatpush1.xpose.msra.mxu0 0.0
      %787 = vmatprep.subr.mxu0 0.0
      %788 = vmatpush1.xpose.msra.mxu0 0.0
      %789 = vmatprep.subr.mxu0 0.0
      %790 = vmatpush1.xpose.msra.mxu0 0.0
      %791 = vmatprep.subr.mxu0 0.0
      %792 = vmatpush1.xpose.msra.mxu0 0.0
      %793 = vmatprep.subr.mxu0 0.0
      %794 = vmatpush1.xpose.msra.mxu0 0.0
      %795 = vmatprep.subr.mxu0 0.0
      %796 = vmatpush1.xpose.msra.mxu0 0.0
      %797 = vmatprep.subr.mxu0 0.0
      %798 = vmatpush1.xpose.msra.mxu0 0.0
      %799 = vmatprep.subr.mxu0 0.0
      %800 = vmatpush1.xpose.msra.mxu0 0.0
      %801 = vmatprep.subr.mxu0 0.0
      %802 = vmatpush1.xpose.msra.mxu0 0.0
      %803 = vmatprep.subr.mxu0 0.0
      %804 = vmatpush1.xpose.msra.mxu0 0.0
      %805 = vmatprep.subr.mxu0 0.0
      %806 = vmatpush1.xpose.msra.mxu0 0.0
      %807 = vmatprep.subr.mxu0 0.0
      %808 = vmatpush1.xpose.msra.mxu0 0.0
      %809 = vmatprep.subr.mxu0 0.0
      %810 = vmatpush1.xpose.msra.mxu0 0.0
      %811 = vmatprep.subr.mxu0 0.0
      %812 = vmatpush1.xpose.msra.mxu0 0.0
      %813 = vmatprep.subr.mxu0 0.0
      %814 = vmatpush1.xpose.msra.mxu0 0.0
      %815 = vmatprep.subr.mxu0 0.0
      %816 = vmatpush1.xpose.msra.mxu0 0.0
      %817 = vmatprep.subr.mxu0 0.0
      %818 = vmatpush1.xpose.msra.mxu0 0.0
      %819 = vmatprep.subr.mxu0 0.0
      %820 = vmatpush1.xpose.msra.mxu0 0.0
      %821 = vmatprep.subr.mxu0 0.0
      %822 = vmatpush1.xpose.msra.mxu0 0.0
      %823 = vmatprep.subr.mxu0 0.0
      %824 = vmatpush1.xpose.msra.mxu0 0.0
      %825 = vmatprep.subr.mxu0 0.0
      %826 = vmatpush1.xpose.msra.mxu0 0.0
      %827 = vmatprep.subr.mxu0 0.0
      %828 = vmatpush1.xpose.msra.mxu0 0.0
      %829 = vmatprep.subr.mxu0 0.0
      %830 = vmatpush1.xpose.msra.mxu0 0.0
      %831 = vmatprep.subr.mxu0 0.0
      %832 = vmatpush1.xpose.msra.mxu0 0.0
      %833 = vmatprep.mubr.f32.mxu0 0.0
      %834 = vmatmul.mubr.f32.gmra.mrb[0].mxu0 %v765
      %v835 = vpop.f32.mrb[0].mxu0
      %v836 = vadd.f32 0.0, %v835
      %v837 = vpop.f32.mrb[0].mxu0
      %838 = vdwg.mxu0
      %840 = vrot.lane.b32.xlu0 %v604, 96
      %v841 = vpop.permute.xlu0 %840
      %v842 = vsel %vm610, %v604, 0
      %v844 = vsel %vm610, %v841, 0
      %846 = vmatprep.subr.mxu0 0.0
      %847 = vmatpush1.xpose.msra.mxu0 %v844
      %848 = vmatprep.subr.mxu0 0.0
      %849 = vmatpush1.xpose.msra.mxu0 0.0
      %850 = vmatprep.subr.mxu0 0.0
      %851 = vmatpush1.xpose.msra.mxu0 0.0
      %852 = vmatprep.subr.mxu0 0.0
      %853 = vmatpush1.xpose.msra.mxu0 0.0
      %854 = vmatprep.subr.mxu0 0.0
      %855 = vmatpush1.xpose.msra.mxu0 0.0
      %856 = vmatprep.subr.mxu0 0.0
      %857 = vmatpush1.xpose.msra.mxu0 0.0
      %858 = vmatprep.subr.mxu0 0.0
      %859 = vmatpush1.xpose.msra.mxu0 0.0
      %860 = vmatprep.subr.mxu0 0.0
      %861 = vmatpush1.xpose.msra.mxu0 0.0
      %862 = vmatprep.subr.mxu0 0.0
      %863 = vmatpush1.xpose.msra.mxu0 0.0
      %864 = vmatprep.subr.mxu0 0.0
      %865 = vmatpush1.xpose.msra.mxu0 0.0
      %866 = vmatprep.subr.mxu0 0.0
      %867 = vmatpush1.xpose.msra.mxu0 0.0
      %868 = vmatprep.subr.mxu0 0.0
      %869 = vmatpush1.xpose.msra.mxu0 0.0
      %870 = vmatprep.subr.mxu0 0.0
      %871 = vmatpush1.xpose.msra.mxu0 0.0
      %872 = vmatprep.subr.mxu0 0.0
      %873 = vmatpush1.xpose.msra.mxu0 0.0
      %874 = vmatprep.subr.mxu0 0.0
      %875 = vmatpush1.xpose.msra.mxu0 0.0
      %876 = vmatprep.subr.mxu0 0.0
      %877 = vmatpush1.xpose.msra.mxu0 0.0
      %878 = vmatprep.subr.mxu0 0.0
      %879 = vmatpush1.xpose.msra.mxu0 0.0
      %880 = vmatprep.subr.mxu0 0.0
      %881 = vmatpush1.xpose.msra.mxu0 0.0
      %882 = vmatprep.subr.mxu0 0.0
      %883 = vmatpush1.xpose.msra.mxu0 0.0
      %884 = vmatprep.subr.mxu0 0.0
      %885 = vmatpush1.xpose.msra.mxu0 0.0
      %886 = vmatprep.subr.mxu0 0.0
      %887 = vmatpush1.xpose.msra.mxu0 0.0
      %888 = vmatprep.subr.mxu0 0.0
      %889 = vmatpush1.xpose.msra.mxu0 0.0
      %890 = vmatprep.subr.mxu0 0.0
      %891 = vmatpush1.xpose.msra.mxu0 0.0
      %892 = vmatprep.subr.mxu0 0.0
      %893 = vmatpush1.xpose.msra.mxu0 0.0
      %894 = vmatprep.subr.mxu0 0.0
      %895 = vmatpush1.xpose.msra.mxu0 0.0
      %896 = vmatprep.subr.mxu0 0.0
      %897 = vmatpush1.xpose.msra.mxu0 0.0
      %898 = vmatprep.subr.mxu0 0.0
      %899 = vmatpush1.xpose.msra.mxu0 0.0
      %900 = vmatprep.subr.mxu0 0.0
      %901 = vmatpush1.xpose.msra.mxu0 0.0
      %902 = vmatprep.subr.mxu0 0.0
      %903 = vmatpush1.xpose.msra.mxu0 0.0
      %904 = vmatprep.subr.mxu0 0.0
      %905 = vmatpush1.xpose.msra.mxu0 0.0
      %906 = vmatprep.subr.mxu0 0.0
      %907 = vmatpush1.xpose.msra.mxu0 0.0
      %908 = vmatprep.subr.mxu0 0.0
      %909 = vmatpush1.xpose.msra.mxu0 0.0
      %910 = vmatprep.mubr.f32.mxu0 0.0
      %911 = vmatmul.mubr.f32.gmra.mrb[0].mxu0 %v842
      %v912 = vpop.f32.mrb[0].mxu0
      %v913 = vadd.f32 0.0, %v912
      %v914 = vpop.f32.mrb[0].mxu0
      %915 = vdwg.mxu0
      %v916 = vmul.f32 %v682, 0.25
      %v917 = vmul.f32 %v759, 0.25
      %v918 = vmul.f32 %v836, 0.25
      %v919 = vmul.f32 %v913, 0.25
      %v924 = vlaneseq
      %v925 = vshrl.u32 %v924, 7
      %v926 = vsub.s32 0, %v925
      %v927 = vrot.slane %v494, %v926
      %v928 = vlaneseq
      %v929 = vshrl.u32 %v928, 7
      %v930 = vsub.s32 0, %v929
      %v931 = vrot.slane %v495, %v930
      %v932 = vlaneseq
      %v933 = vshrl.u32 %v932, 7
      %v934 = vsub.s32 0, %v933
      %v935 = vrot.slane %v496, %v934
      %v936 = vlaneseq
      %v937 = vshrl.u32 %v936, 7
      %v938 = vsub.s32 0, %v937
      %v939 = vrot.slane %v497, %v938
      %v944 = vadd.f32 %v916, %v927
      %v945 = vadd.f32 %v917, %v931
      %v946 = vadd.f32 %v918, %v935
      %v947 = vadd.f32 %v919, %v939
      %vm948 = vcmask 64512
      %v949 = vsel %vm948, %v944, -inf
      %950 = vmax.xlane.f32.xlu0 %v949
      %v951 = vpop.xlane.xlu0 %950
      %v952 = vsel %vm948, %v945, -inf
      %953 = vmax.xlane.f32.xlu0 %v952
      %v954 = vpop.xlane.xlu0 %953
      %v955 = vsel %vm948, %v946, -inf
      %956 = vmax.xlane.f32.xlu0 %v955
      %v957 = vpop.xlane.xlu0 %956
      %v958 = vsel %vm948, %v947, -inf
      %959 = vmax.xlane.f32.xlu0 %v958
      %v960 = vpop.xlane.xlu0 %959
      %v961 = vsub.f32 %v944, %v951
      %v962 = vsub.f32 %v945, %v954
      %v963 = vsub.f32 %v946, %v957
      %v964 = vsub.f32 %v947, %v960
      %v965 = vmul.f32 %v961, 1.442695
      %v966 = vpow.pop %v965
      %v967 = vmul.f32 %v962, 1.442695
      %v968 = vpow.pop %v967
      %v969 = vmul.f32 %v963, 1.442695
      %v970 = vpow.pop %v969
      %v971 = vmul.f32 %v964, 1.442695
      %v972 = vpow.pop %v971
      %v973 = vsel %vm948, %v966, 0.0
      %974 = vadd.xlane.f32.xlu0 %v973
      %v975 = vpop.xlane.xlu0 %974
      %v976 = vsel %vm948, %v968, 0.0
      %977 = vadd.xlane.f32.xlu0 %v976
      %v978 = vpop.xlane.xlu0 %977
      %v979 = vsel %vm948, %v970, 0.0
      %980 = vadd.xlane.f32.xlu0 %v979
      %v981 = vpop.xlane.xlu0 %980
      %v982 = vsel %vm948, %v972, 0.0
      %983 = vadd.xlane.f32.xlu0 %v982
      %v984 = vpop.xlane.xlu0 %983
      %v985 = vrcp.pop %v975
      %v986 = vmul.f32 %v966, %v985
      %v987 = vrcp.pop %v978
      %v988 = vmul.f32 %v968, %v987
      %v989 = vrcp.pop %v981
      %v990 = vmul.f32 %v970, %v989
      %v991 = vrcp.pop %v984
      %v992 = vmul.f32 %v972, %v991
      %993 = vrot.lane.b32.xlu0 %v589, 64
      %v994 = vpop.permute.xlu0 %993
      %v997 = vsel %vm948, %v986, 0
      %999 = vmatprep.subr.mxu0 0.0
      %1000 = vmatpush1.msra.mxu0 %v994
      %1001 = vmatprep.subr.mxu0 0.0
      %1002 = vmatpush1.msra.mxu0 0.0
      %1003 = vmatprep.subr.mxu0 0.0
      %1004 = vmatpush1.msra.mxu0 0.0
      %1005 = vmatprep.subr.mxu0 0.0
      %1006 = vmatpush1.msra.mxu0 0.0
      %1007 = vmatprep.subr.mxu0 0.0
      %1008 = vmatpush1.msra.mxu0 0.0
      %1009 = vmatprep.subr.mxu0 0.0
      %1010 = vmatpush1.msra.mxu0 0.0
      %1011 = vmatprep.subr.mxu0 0.0
      %1012 = vmatpush1.msra.mxu0 0.0
      %1013 = vmatprep.subr.mxu0 0.0
      %1014 = vmatpush1.msra.mxu0 0.0
      %1015 = vmatprep.subr.mxu0 0.0
      %1016 = vmatpush1.msra.mxu0 0.0
      %1017 = vmatprep.subr.mxu0 0.0
      %1018 = vmatpush1.msra.mxu0 0.0
      %1019 = vmatprep.subr.mxu0 0.0
      %1020 = vmatpush1.msra.mxu0 0.0
      %1021 = vmatprep.subr.mxu0 0.0
      %1022 = vmatpush1.msra.mxu0 0.0
      %1023 = vmatprep.subr.mxu0 0.0
      %1024 = vmatpush1.msra.mxu0 0.0
      %1025 = vmatprep.subr.mxu0 0.0
      %1026 = vmatpush1.msra.mxu0 0.0
      %1027 = vmatprep.subr.mxu0 0.0
      %1028 = vmatpush1.msra.mxu0 0.0
      %1029 = vmatprep.subr.mxu0 0.0
      %1030 = vmatpush1.msra.mxu0 0.0
      %1031 = vmatprep.subr.mxu0 0.0
      %1032 = vmatpush1.msra.mxu0 0.0
      %1033 = vmatprep.subr.mxu0 0.0
      %1034 = vmatpush1.msra.mxu0 0.0
      %1035 = vmatprep.subr.mxu0 0.0
      %1036 = vmatpush1.msra.mxu0 0.0
      %1037 = vmatprep.subr.mxu0 0.0
      %1038 = vmatpush1.msra.mxu0 0.0
      %1039 = vmatprep.subr.mxu0 0.0
      %1040 = vmatpush1.msra.mxu0 0.0
      %1041 = vmatprep.subr.mxu0 0.0
      %1042 = vmatpush1.msra.mxu0 0.0
      %1043 = vmatprep.subr.mxu0 0.0
      %1044 = vmatpush1.msra.mxu0 0.0
      %1045 = vmatprep.subr.mxu0 0.0
      %1046 = vmatpush1.msra.mxu0 0.0
      %1047 = vmatprep.subr.mxu0 0.0
      %1048 = vmatpush1.msra.mxu0 0.0
      %1049 = vmatprep.subr.mxu0 0.0
      %1050 = vmatpush1.msra.mxu0 0.0
      %1051 = vmatprep.subr.mxu0 0.0
      %1052 = vmatpush1.msra.mxu0 0.0
      %1053 = vmatprep.subr.mxu0 0.0
      %1054 = vmatpush1.msra.mxu0 0.0
      %1055 = vmatprep.subr.mxu0 0.0
      %1056 = vmatpush1.msra.mxu0 0.0
      %1057 = vmatprep.subr.mxu0 0.0
      %1058 = vmatpush1.msra.mxu0 0.0
      %1059 = vmatprep.subr.mxu0 0.0
      %1060 = vmatpush1.msra.mxu0 0.0
      %1061 = vmatprep.subr.mxu0 0.0
      %1062 = vmatpush1.msra.mxu0 0.0
      %1063 = vmatprep.mubr.f32.mxu0 0.0
      %1064 = vmatmul.mubr.f32.gmra.mrb[0].mxu0 %v997
      %v1065 = vpop.f32.mrb[0].mxu0
      %v1066 = vadd.f32 0.0, %v1065
      %v1067 = vpop.f32.mrb[0].mxu0
      %1068 = vdwg.mxu0
      %1069 = vrot.lane.b32.xlu0 %v594, 64
      %v1070 = vpop.permute.xlu0 %1069
      %v1073 = vsel %vm948, %v988, 0
      %1075 = vmatprep.subr.mxu0 0.0
      %1076 = vmatpush1.msra.mxu0 %v1070
      %1077 = vmatprep.subr.mxu0 0.0
      %1078 = vmatpush1.msra.mxu0 0.0
      %1079 = vmatprep.subr.mxu0 0.0
      %1080 = vmatpush1.msra.mxu0 0.0
      %1081 = vmatprep.subr.mxu0 0.0
      %1082 = vmatpush1.msra.mxu0 0.0
      %1083 = vmatprep.subr.mxu0 0.0
      %1084 = vmatpush1.msra.mxu0 0.0
      %1085 = vmatprep.subr.mxu0 0.0
      %1086 = vmatpush1.msra.mxu0 0.0
      %1087 = vmatprep.subr.mxu0 0.0
      %1088 = vmatpush1.msra.mxu0 0.0
      %1089 = vmatprep.subr.mxu0 0.0
      %1090 = vmatpush1.msra.mxu0 0.0
      %1091 = vmatprep.subr.mxu0 0.0
      %1092 = vmatpush1.msra.mxu0 0.0
      %1093 = vmatprep.subr.mxu0 0.0
      %1094 = vmatpush1.msra.mxu0 0.0
      %1095 = vmatprep.subr.mxu0 0.0
      %1096 = vmatpush1.msra.mxu0 0.0
      %1097 = vmatprep.subr.mxu0 0.0
      %1098 = vmatpush1.msra.mxu0 0.0
      %1099 = vmatprep.subr.mxu0 0.0
      %1100 = vmatpush1.msra.mxu0 0.0
      %1101 = vmatprep.subr.mxu0 0.0
      %1102 = vmatpush1.msra.mxu0 0.0
      %1103 = vmatprep.subr.mxu0 0.0
      %1104 = vmatpush1.msra.mxu0 0.0
      %1105 = vmatprep.subr.mxu0 0.0
      %1106 = vmatpush1.msra.mxu0 0.0
      %1107 = vmatprep.subr.mxu0 0.0
      %1108 = vmatpush1.msra.mxu0 0.0
      %1109 = vmatprep.subr.mxu0 0.0
      %1110 = vmatpush1.msra.mxu0 0.0
      %1111 = vmatprep.subr.mxu0 0.0
      %1112 = vmatpush1.msra.mxu0 0.0
      %1113 = vmatprep.subr.mxu0 0.0
      %1114 = vmatpush1.msra.mxu0 0.0
      %1115 = vmatprep.subr.mxu0 0.0
      %1116 = vmatpush1.msra.mxu0 0.0
      %1117 = vmatprep.subr.mxu0 0.0
      %1118 = vmatpush1.msra.mxu0 0.0
      %1119 = vmatprep.subr.mxu0 0.0
      %1120 = vmatpush1.msra.mxu0 0.0
      %1121 = vmatprep.subr.mxu0 0.0
      %1122 = vmatpush1.msra.mxu0 0.0
      %1123 = vmatprep.subr.mxu0 0.0
      %1124 = vmatpush1.msra.mxu0 0.0
      %1125 = vmatprep.subr.mxu0 0.0
      %1126 = vmatpush1.msra.mxu0 0.0
      %1127 = vmatprep.subr.mxu0 0.0
      %1128 = vmatpush1.msra.mxu0 0.0
      %1129 = vmatprep.subr.mxu0 0.0
      %1130 = vmatpush1.msra.mxu0 0.0
      %1131 = vmatprep.subr.mxu0 0.0
      %1132 = vmatpush1.msra.mxu0 0.0
      %1133 = vmatprep.subr.mxu0 0.0
      %1134 = vmatpush1.msra.mxu0 0.0
      %1135 = vmatprep.subr.mxu0 0.0
      %1136 = vmatpush1.msra.mxu0 0.0
      %1137 = vmatprep.subr.mxu0 0.0
      %1138 = vmatpush1.msra.mxu0 0.0
      %1139 = vmatprep.mubr.f32.mxu0 0.0
      %1140 = vmatmul.mubr.f32.gmra.mrb[0].mxu0 %v1073
      %v1141 = vpop.f32.mrb[0].mxu0
      %v1142 = vadd.f32 0.0, %v1141
      %v1143 = vpop.f32.mrb[0].mxu0
      %1144 = vdwg.mxu0
      %1145 = vrot.lane.b32.xlu0 %v599, 64
      %v1146 = vpop.permute.xlu0 %1145
      %v1149 = vsel %vm948, %v990, 0
      %1151 = vmatprep.subr.mxu0 0.0
      %1152 = vmatpush1.msra.mxu0 %v1146
      %1153 = vmatprep.subr.mxu0 0.0
      %1154 = vmatpush1.msra.mxu0 0.0
      %1155 = vmatprep.subr.mxu0 0.0
      %1156 = vmatpush1.msra.mxu0 0.0
      %1157 = vmatprep.subr.mxu0 0.0
      %1158 = vmatpush1.msra.mxu0 0.0
      %1159 = vmatprep.subr.mxu0 0.0
      %1160 = vmatpush1.msra.mxu0 0.0
      %1161 = vmatprep.subr.mxu0 0.0
      %1162 = vmatpush1.msra.mxu0 0.0
      %1163 = vmatprep.subr.mxu0 0.0
      %1164 = vmatpush1.msra.mxu0 0.0
      %1165 = vmatprep.subr.mxu0 0.0
      %1166 = vmatpush1.msra.mxu0 0.0
      %1167 = vmatprep.subr.mxu0 0.0
      %1168 = vmatpush1.msra.mxu0 0.0
      %1169 = vmatprep.subr.mxu0 0.0
      %1170 = vmatpush1.msra.mxu0 0.0
      %1171 = vmatprep.subr.mxu0 0.0
      %1172 = vmatpush1.msra.mxu0 0.0
      %1173 = vmatprep.subr.mxu0 0.0
      %1174 = vmatpush1.msra.mxu0 0.0
      %1175 = vmatprep.subr.mxu0 0.0
      %1176 = vmatpush1.msra.mxu0 0.0
      %1177 = vmatprep.subr.mxu0 0.0
      %1178 = vmatpush1.msra.mxu0 0.0
      %1179 = vmatprep.subr.mxu0 0.0
      %1180 = vmatpush1.msra.mxu0 0.0
      %1181 = vmatprep.subr.mxu0 0.0
      %1182 = vmatpush1.msra.mxu0 0.0
      %1183 = vmatprep.subr.mxu0 0.0
      %1184 = vmatpush1.msra.mxu0 0.0
      %1185 = vmatprep.subr.mxu0 0.0
      %1186 = vmatpush1.msra.mxu0 0.0
      %1187 = vmatprep.subr.mxu0 0.0
      %1188 = vmatpush1.msra.mxu0 0.0
      %1189 = vmatprep.subr.mxu0 0.0
      %1190 = vmatpush1.msra.mxu0 0.0
      %1191 = vmatprep.subr.mxu0 0.0
      %1192 = vmatpush1.msra.mxu0 0.0
      %1193 = vmatprep.subr.mxu0 0.0
      %1194 = vmatpush1.msra.mxu0 0.0
      %1195 = vmatprep.subr.mxu0 0.0
      %1196 = vmatpush1.msra.mxu0 0.0
      %1197 = vmatprep.subr.mxu0 0.0
      %1198 = vmatpush1.msra.mxu0 0.0
      %1199 = vmatprep.subr.mxu0 0.0
      %1200 = vmatpush1.msra.mxu0 0.0
      %1201 = vmatprep.subr.mxu0 0.0
      %1202 = vmatpush1.msra.mxu0 0.0
      %1203 = vmatprep.subr.mxu0 0.0
      %1204 = vmatpush1.msra.mxu0 0.0
      %1205 = vmatprep.subr.mxu0 0.0
      %1206 = vmatpush1.msra.mxu0 0.0
      %1207 = vmatprep.subr.mxu0 0.0
      %1208 = vmatpush1.msra.mxu0 0.0
      %1209 = vmatprep.subr.mxu0 0.0
      %1210 = vmatpush1.msra.mxu0 0.0
      %1211 = vmatprep.subr.mxu0 0.0
      %1212 = vmatpush1.msra.mxu0 0.0
      %1213 = vmatprep.subr.mxu0 0.0
      %1214 = vmatpush1.msra.mxu0 0.0
      %1215 = vmatprep.mubr.f32.mxu0 0.0
      %1216 = vmatmul.mubr.f32.gmra.mrb[0].mxu0 %v1149
      %v1217 = vpop.f32.mrb[0].mxu0
      %v1218 = vadd.f32 0.0, %v1217
      %v1219 = vpop.f32.mrb[0].mxu0
      %1220 = vdwg.mxu0
      %1221 = vrot.lane.b32.xlu0 %v604, 64
      %v1222 = vpop.permute.xlu0 %1221
      %v1225 = vsel %vm948, %v992, 0
      %1227 = vmatprep.subr.mxu0 0.0
      %1228 = vmatpush1.msra.mxu0 %v1222
      %1229 = vmatprep.subr.mxu0 0.0
      %1230 = vmatpush1.msra.mxu0 0.0
      %1231 = vmatprep.subr.mxu0 0.0
      %1232 = vmatpush1.msra.mxu0 0.0
      %1233 = vmatprep.subr.mxu0 0.0
      %1234 = vmatpush1.msra.mxu0 0.0
      %1235 = vmatprep.subr.mxu0 0.0
      %1236 = vmatpush1.msra.mxu0 0.0
      %1237 = vmatprep.subr.mxu0 0.0
      %1238 = vmatpush1.msra.mxu0 0.0
      %1239 = vmatprep.subr.mxu0 0.0
      %1240 = vmatpush1.msra.mxu0 0.0
      %1241 = vmatprep.subr.mxu0 0.0
      %1242 = vmatpush1.msra.mxu0 0.0
      %1243 = vmatprep.subr.mxu0 0.0
      %1244 = vmatpush1.msra.mxu0 0.0
      %1245 = vmatprep.subr.mxu0 0.0
      %1246 = vmatpush1.msra.mxu0 0.0
      %1247 = vmatprep.subr.mxu0 0.0
      %1248 = vmatpush1.msra.mxu0 0.0
      %1249 = vmatprep.subr.mxu0 0.0
      %1250 = vmatpush1.msra.mxu0 0.0
      %1251 = vmatprep.subr.mxu0 0.0
      %1252 = vmatpush1.msra.mxu0 0.0
      %1253 = vmatprep.subr.mxu0 0.0
      %1254 = vmatpush1.msra.mxu0 0.0
      %1255 = vmatprep.subr.mxu0 0.0
      %1256 = vmatpush1.msra.mxu0 0.0
      %1257 = vmatprep.subr.mxu0 0.0
      %1258 = vmatpush1.msra.mxu0 0.0
      %1259 = vmatprep.subr.mxu0 0.0
      %1260 = vmatpush1.msra.mxu0 0.0
      %1261 = vmatprep.subr.mxu0 0.0
      %1262 = vmatpush1.msra.mxu0 0.0
      %1263 = vmatprep.subr.mxu0 0.0
      %1264 = vmatpush1.msra.mxu0 0.0
      %1265 = vmatprep.subr.mxu0 0.0
      %1266 = vmatpush1.msra.mxu0 0.0
      %1267 = vmatprep.subr.mxu0 0.0
      %1268 = vmatpush1.msra.mxu0 0.0
      %1269 = vmatprep.subr.mxu0 0.0
      %1270 = vmatpush1.msra.mxu0 0.0
      %1271 = vmatprep.subr.mxu0 0.0
      %1272 = vmatpush1.msra.mxu0 0.0
      %1273 = vmatprep.subr.mxu0 0.0
      %1274 = vmatpush1.msra.mxu0 0.0
      %1275 = vmatprep.subr.mxu0 0.0
      %1276 = vmatpush1.msra.mxu0 0.0
      %1277 = vmatprep.subr.mxu0 0.0
      %1278 = vmatpush1.msra.mxu0 0.0
      %1279 = vmatprep.subr.mxu0 0.0
      %1280 = vmatpush1.msra.mxu0 0.0
      %1281 = vmatprep.subr.mxu0 0.0
      %1282 = vmatpush1.msra.mxu0 0.0
      %1283 = vmatprep.subr.mxu0 0.0
      %1284 = vmatpush1.msra.mxu0 0.0
      %1285 = vmatprep.subr.mxu0 0.0
      %1286 = vmatpush1.msra.mxu0 0.0
      %1287 = vmatprep.subr.mxu0 0.0
      %1288 = vmatpush1.msra.mxu0 0.0
      %1289 = vmatprep.subr.mxu0 0.0
      %1290 = vmatpush1.msra.mxu0 0.0
      %1291 = vmatprep.mubr.f32.mxu0 0.0
      %1292 = vmatmul.mubr.f32.gmra.mrb[0].mxu0 %v1225
      %v1293 = vpop.f32.mrb[0].mxu0
      %v1294 = vadd.f32 0.0, %v1293
      %v1295 = vpop.f32.mrb[0].mxu0
      %1296 = vdwg.mxu0
      %1297 = vrot.lane.b32.xlu0 %v589, 112
      %v1298 = vpop.permute.xlu0 %1297
      %1299 = vrot.lane.b32.xlu0 %v589, 80
      %v1300 = vpop.permute.xlu0 %1299
      %v1301 = vsel %vm610, %v1298, 0
      %v1303 = vsel %vm610, %v1300, 0
      %1305 = vmatprep.subr.mxu0 0.0
      %1306 = vmatpush1.xpose.msra.mxu0 %v1303
      %1307 = vmatprep.subr.mxu0 0.0
      %1308 = vmatpush1.xpose.msra.mxu0 0.0
      %1309 = vmatprep.subr.mxu0 0.0
      %1310 = vmatpush1.xpose.msra.mxu0 0.0
      %1311 = vmatprep.subr.mxu0 0.0
      %1312 = vmatpush1.xpose.msra.mxu0 0.0
      %1313 = vmatprep.subr.mxu0 0.0
      %1314 = vmatpush1.xpose.msra.mxu0 0.0
      %1315 = vmatprep.subr.mxu0 0.0
      %1316 = vmatpush1.xpose.msra.mxu0 0.0
      %1317 = vmatprep.subr.mxu0 0.0
      %1318 = vmatpush1.xpose.msra.mxu0 0.0
      %1319 = vmatprep.subr.mxu0 0.0
      %1320 = vmatpush1.xpose.msra.mxu0 0.0
      %1321 = vmatprep.subr.mxu0 0.0
      %1322 = vmatpush1.xpose.msra.mxu0 0.0
      %1323 = vmatprep.subr.mxu0 0.0
      %1324 = vmatpush1.xpose.msra.mxu0 0.0
      %1325 = vmatprep.subr.mxu0 0.0
      %1326 = vmatpush1.xpose.msra.mxu0 0.0
      %1327 = vmatprep.subr.mxu0 0.0
      %1328 = vmatpush1.xpose.msra.mxu0 0.0
      %1329 = vmatprep.subr.mxu0 0.0
      %1330 = vmatpush1.xpose.msra.mxu0 0.0
      %1331 = vmatprep.subr.mxu0 0.0
      %1332 = vmatpush1.xpose.msra.mxu0 0.0
      %1333 = vmatprep.subr.mxu0 0.0
      %1334 = vmatpush1.xpose.msra.mxu0 0.0
      %1335 = vmatprep.subr.mxu0 0.0
      %1336 = vmatpush1.xpose.msra.mxu0 0.0
      %1337 = vmatprep.subr.mxu0 0.0
      %1338 = vmatpush1.xpose.msra.mxu0 0.0
      %1339 = vmatprep.subr.mxu0 0.0
      %1340 = vmatpush1.xpose.msra.mxu0 0.0
      %1341 = vmatprep.subr.mxu0 0.0
      %1342 = vmatpush1.xpose.msra.mxu0 0.0
      %1343 = vmatprep.subr.mxu0 0.0
      %1344 = vmatpush1.xpose.msra.mxu0 0.0
      %1345 = vmatprep.subr.mxu0 0.0
      %1346 = vmatpush1.xpose.msra.mxu0 0.0
      %1347 = vmatprep.subr.mxu0 0.0
      %1348 = vmatpush1.xpose.msra.mxu0 0.0
      %1349 = vmatprep.subr.mxu0 0.0
      %1350 = vmatpush1.xpose.msra.mxu0 0.0
      %1351 = vmatprep.subr.mxu0 0.0
      %1352 = vmatpush1.xpose.msra.mxu0 0.0
      %1353 = vmatprep.subr.mxu0 0.0
      %1354 = vmatpush1.xpose.msra.mxu0 0.0
      %1355 = vmatprep.subr.mxu0 0.0
      %1356 = vmatpush1.xpose.msra.mxu0 0.0
      %1357 = vmatprep.subr.mxu0 0.0
      %1358 = vmatpush1.xpose.msra.mxu0 0.0
      %1359 = vmatprep.subr.mxu0 0.0
      %1360 = vmatpush1.xpose.msra.mxu0 0.0
      %1361 = vmatprep.subr.mxu0 0.0
      %1362 = vmatpush1.xpose.msra.mxu0 0.0
      %1363 = vmatprep.subr.mxu0 0.0
      %1364 = vmatpush1.xpose.msra.mxu0 0.0
      %1365 = vmatprep.subr.mxu0 0.0
      %1366 = vmatpush1.xpose.msra.mxu0 0.0
      %1367 = vmatprep.subr.mxu0 0.0
      %1368 = vmatpush1.xpose.msra.mxu0 0.0
      %1369 = vmatprep.mubr.f32.mxu0 0.0
      %1370 = vmatmul.mubr.f32.gmra.mrb[0].mxu0 %v1301
      %v1371 = vpop.f32.mrb[0].mxu0
      %v1372 = vadd.f32 0.0, %v1371
      %v1373 = vpop.f32.mrb[0].mxu0
      %1374 = vdwg.mxu0
      %1375 = vrot.lane.b32.xlu0 %v594, 112
      %v1376 = vpop.permute.xlu0 %1375
      %1377 = vrot.lane.b32.xlu0 %v594, 80
      %v1378 = vpop.permute.xlu0 %1377
      %v1379 = vsel %vm610, %v1376, 0
      %v1381 = vsel %vm610, %v1378, 0
      %1383 = vmatprep.subr.mxu0 0.0
      %1384 = vmatpush1.xpose.msra.mxu0 %v1381
      %1385 = vmatprep.subr.mxu0 0.0
      %1386 = vmatpush1.xpose.msra.mxu0 0.0
      %1387 = vmatprep.subr.mxu0 0.0
      %1388 = vmatpush1.xpose.msra.mxu0 0.0
      %1389 = vmatprep.subr.mxu0 0.0
      %1390 = vmatpush1.xpose.msra.mxu0 0.0
      %1391 = vmatprep.subr.mxu0 0.0
      %1392 = vmatpush1.xpose.msra.mxu0 0.0
      %1393 = vmatprep.subr.mxu0 0.0
      %1394 = vmatpush1.xpose.msra.mxu0 0.0
      %1395 = vmatprep.subr.mxu0 0.0
      %1396 = vmatpush1.xpose.msra.mxu0 0.0
      %1397 = vmatprep.subr.mxu0 0.0
      %1398 = vmatpush1.xpose.msra.mxu0 0.0
      %1399 = vmatprep.subr.mxu0 0.0
      %1400 = vmatpush1.xpose.msra.mxu0 0.0
      %1401 = vmatprep.subr.mxu0 0.0
      %1402 = vmatpush1.xpose.msra.mxu0 0.0
      %1403 = vmatprep.subr.mxu0 0.0
      %1404 = vmatpush1.xpose.msra.mxu0 0.0
      %1405 = vmatprep.subr.mxu0 0.0
      %1406 = vmatpush1.xpose.msra.mxu0 0.0
      %1407 = vmatprep.subr.mxu0 0.0
      %1408 = vmatpush1.xpose.msra.mxu0 0.0
      %1409 = vmatprep.subr.mxu0 0.0
      %1410 = vmatpush1.xpose.msra.mxu0 0.0
      %1411 = vmatprep.subr.mxu0 0.0
      %1412 = vmatpush1.xpose.msra.mxu0 0.0
      %1413 = vmatprep.subr.mxu0 0.0
      %1414 = vmatpush1.xpose.msra.mxu0 0.0
      %1415 = vmatprep.subr.mxu0 0.0
      %1416 = vmatpush1.xpose.msra.mxu0 0.0
      %1417 = vmatprep.subr.mxu0 0.0
      %1418 = vmatpush1.xpose.msra.mxu0 0.0
      %1419 = vmatprep.subr.mxu0 0.0
      %1420 = vmatpush1.xpose.msra.mxu0 0.0
      %1421 = vmatprep.subr.mxu0 0.0
      %1422 = vmatpush1.xpose.msra.mxu0 0.0
      %1423 = vmatprep.subr.mxu0 0.0
      %1424 = vmatpush1.xpose.msra.mxu0 0.0
      %1425 = vmatprep.subr.mxu0 0.0
      %1426 = vmatpush1.xpose.msra.mxu0 0.0
      %1427 = vmatprep.subr.mxu0 0.0
      %1428 = vmatpush1.xpose.msra.mxu0 0.0
      %1429 = vmatprep.subr.mxu0 0.0
      %1430 = vmatpush1.xpose.msra.mxu0 0.0
      %1431 = vmatprep.subr.mxu0 0.0
      %1432 = vmatpush1.xpose.msra.mxu0 0.0
      %1433 = vmatprep.subr.mxu0 0.0
      %1434 = vmatpush1.xpose.msra.mxu0 0.0
      %1435 = vmatprep.subr.mxu0 0.0
      %1436 = vmatpush1.xpose.msra.mxu0 0.0
      %1437 = vmatprep.subr.mxu0 0.0
      %1438 = vmatpush1.xpose.msra.mxu0 0.0
      %1439 = vmatprep.subr.mxu0 0.0
      %1440 = vmatpush1.xpose.msra.mxu0 0.0
      %1441 = vmatprep.subr.mxu0 0.0
      %1442 = vmatpush1.xpose.msra.mxu0 0.0
      %1443 = vmatprep.subr.mxu0 0.0
      %1444 = vmatpush1.xpose.msra.mxu0 0.0
      %1445 = vmatprep.subr.mxu0 0.0
      %1446 = vmatpush1.xpose.msra.mxu0 0.0
      %1447 = vmatprep.mubr.f32.mxu0 0.0
      %1448 = vmatmul.mubr.f32.gmra.mrb[0].mxu0 %v1379
      %v1449 = vpop.f32.mrb[0].mxu0
      %v1450 = vadd.f32 0.0, %v1449
      %v1451 = vpop.f32.mrb[0].mxu0
      %1452 = vdwg.mxu0
      %1453 = vrot.lane.b32.xlu0 %v599, 112
      %v1454 = vpop.permute.xlu0 %1453
      %1455 = vrot.lane.b32.xlu0 %v599, 80
      %v1456 = vpop.permute.xlu0 %1455
      %v1457 = vsel %vm610, %v1454, 0
      %v1459 = vsel %vm610, %v1456, 0
      %1461 = vmatprep.subr.mxu0 0.0
      %1462 = vmatpush1.xpose.msra.mxu0 %v1459
      %1463 = vmatprep.subr.mxu0 0.0
      %1464 = vmatpush1.xpose.msra.mxu0 0.0
      %1465 = vmatprep.subr.mxu0 0.0
      %1466 = vmatpush1.xpose.msra.mxu0 0.0
      %1467 = vmatprep.subr.mxu0 0.0
      %1468 = vmatpush1.xpose.msra.mxu0 0.0
      %1469 = vmatprep.subr.mxu0 0.0
      %1470 = vmatpush1.xpose.msra.mxu0 0.0
      %1471 = vmatprep.subr.mxu0 0.0
      %1472 = vmatpush1.xpose.msra.mxu0 0.0
      %1473 = vmatprep.subr.mxu0 0.0
      %1474 = vmatpush1.xpose.msra.mxu0 0.0
      %1475 = vmatprep.subr.mxu0 0.0
      %1476 = vmatpush1.xpose.msra.mxu0 0.0
      %1477 = vmatprep.subr.mxu0 0.0
      %1478 = vmatpush1.xpose.msra.mxu0 0.0
      %1479 = vmatprep.subr.mxu0 0.0
      %1480 = vmatpush1.xpose.msra.mxu0 0.0
      %1481 = vmatprep.subr.mxu0 0.0
      %1482 = vmatpush1.xpose.msra.mxu0 0.0
      %1483 = vmatprep.subr.mxu0 0.0
      %1484 = vmatpush1.xpose.msra.mxu0 0.0
      %1485 = vmatprep.subr.mxu0 0.0
      %1486 = vmatpush1.xpose.msra.mxu0 0.0
      %1487 = vmatprep.subr.mxu0 0.0
      %1488 = vmatpush1.xpose.msra.mxu0 0.0
      %1489 = vmatprep.subr.mxu0 0.0
      %1490 = vmatpush1.xpose.msra.mxu0 0.0
      %1491 = vmatprep.subr.mxu0 0.0
      %1492 = vmatpush1.xpose.msra.mxu0 0.0
      %1493 = vmatprep.subr.mxu0 0.0
      %1494 = vmatpush1.xpose.msra.mxu0 0.0
      %1495 = vmatprep.subr.mxu0 0.0
      %1496 = vmatpush1.xpose.msra.mxu0 0.0
      %1497 = vmatprep.subr.mxu0 0.0
      %1498 = vmatpush1.xpose.msra.mxu0 0.0
      %1499 = vmatprep.subr.mxu0 0.0
      %1500 = vmatpush1.xpose.msra.mxu0 0.0
      %1501 = vmatprep.subr.mxu0 0.0
      %1502 = vmatpush1.xpose.msra.mxu0 0.0
      %1503 = vmatprep.subr.mxu0 0.0
      %1504 = vmatpush1.xpose.msra.mxu0 0.0
      %1505 = vmatprep.subr.mxu0 0.0
      %1506 = vmatpush1.xpose.msra.mxu0 0.0
      %1507 = vmatprep.subr.mxu0 0.0
      %1508 = vmatpush1.xpose.msra.mxu0 0.0
      %1509 = vmatprep.subr.mxu0 0.0
      %1510 = vmatpush1.xpose.msra.mxu0 0.0
      %1511 = vmatprep.subr.mxu0 0.0
      %1512 = vmatpush1.xpose.msra.mxu0 0.0
      %1513 = vmatprep.subr.mxu0 0.0
      %1514 = vmatpush1.xpose.msra.mxu0 0.0
      %1515 = vmatprep.subr.mxu0 0.0
      %1516 = vmatpush1.xpose.msra.mxu0 0.0
      %1517 = vmatprep.subr.mxu0 0.0
      %1518 = vmatpush1.xpose.msra.mxu0 0.0
      %1519 = vmatprep.subr.mxu0 0.0
      %1520 = vmatpush1.xpose.msra.mxu0 0.0
      %1521 = vmatprep.subr.mxu0 0.0
      %1522 = vmatpush1.xpose.msra.mxu0 0.0
      %1523 = vmatprep.subr.mxu0 0.0
      %1524 = vmatpush1.xpose.msra.mxu0 0.0
      %1525 = vmatprep.mubr.f32.mxu0 0.0
      %1526 = vmatmul.mubr.f32.gmra.mrb[0].mxu0 %v1457
      %v1527 = vpop.f32.mrb[0].mxu0
      %v1528 = vadd.f32 0.0, %v1527
      %v1529 = vpop.f32.mrb[0].mxu0
      %1530 = vdwg.mxu0
      %1531 = vrot.lane.b32.xlu0 %v604, 112
      %v1532 = vpop.permute.xlu0 %1531
      %1533 = vrot.lane.b32.xlu0 %v604, 80
      %v1534 = vpop.permute.xlu0 %1533
      %v1535 = vsel %vm610, %v1532, 0
      %v1537 = vsel %vm610, %v1534, 0
      %1539 = vmatprep.subr.mxu0 0.0
      %1540 = vmatpush1.xpose.msra.mxu0 %v1537
      %1541 = vmatprep.subr.mxu0 0.0
      %1542 = vmatpush1.xpose.msra.mxu0 0.0
      %1543 = vmatprep.subr.mxu0 0.0
      %1544 = vmatpush1.xpose.msra.mxu0 0.0
      %1545 = vmatprep.subr.mxu0 0.0
      %1546 = vmatpush1.xpose.msra.mxu0 0.0
      %1547 = vmatprep.subr.mxu0 0.0
      %1548 = vmatpush1.xpose.msra.mxu0 0.0
      %1549 = vmatprep.subr.mxu0 0.0
      %1550 = vmatpush1.xpose.msra.mxu0 0.0
      %1551 = vmatprep.subr.mxu0 0.0
      %1552 = vmatpush1.xpose.msra.mxu0 0.0
      %1553 = vmatprep.subr.mxu0 0.0
      %1554 = vmatpush1.xpose.msra.mxu0 0.0
      %1555 = vmatprep.subr.mxu0 0.0
      %1556 = vmatpush1.xpose.msra.mxu0 0.0
      %1557 = vmatprep.subr.mxu0 0.0
      %1558 = vmatpush1.xpose.msra.mxu0 0.0
      %1559 = vmatprep.subr.mxu0 0.0
      %1560 = vmatpush1.xpose.msra.mxu0 0.0
      %1561 = vmatprep.subr.mxu0 0.0
      %1562 = vmatpush1.xpose.msra.mxu0 0.0
      %1563 = vmatprep.subr.mxu0 0.0
      %1564 = vmatpush1.xpose.msra.mxu0 0.0
      %1565 = vmatprep.subr.mxu0 0.0
      %1566 = vmatpush1.xpose.msra.mxu0 0.0
      %1567 = vmatprep.subr.mxu0 0.0
      %1568 = vmatpush1.xpose.msra.mxu0 0.0
      %1569 = vmatprep.subr.mxu0 0.0
      %1570 = vmatpush1.xpose.msra.mxu0 0.0
      %1571 = vmatprep.subr.mxu0 0.0
      %1572 = vmatpush1.xpose.msra.mxu0 0.0
      %1573 = vmatprep.subr.mxu0 0.0
      %1574 = vmatpush1.xpose.msra.mxu0 0.0
      %1575 = vmatprep.subr.mxu0 0.0
      %1576 = vmatpush1.xpose.msra.mxu0 0.0
      %1577 = vmatprep.subr.mxu0 0.0
      %1578 = vmatpush1.xpose.msra.mxu0 0.0
      %1579 = vmatprep.subr.mxu0 0.0
      %1580 = vmatpush1.xpose.msra.mxu0 0.0
      %1581 = vmatprep.subr.mxu0 0.0
      %1582 = vmatpush1.xpose.msra.mxu0 0.0
      %1583 = vmatprep.subr.mxu0 0.0
      %1584 = vmatpush1.xpose.msra.mxu0 0.0
      %1585 = vmatprep.subr.mxu0 0.0
      %1586 = vmatpush1.xpose.msra.mxu0 0.0
      %1587 = vmatprep.subr.mxu0 0.0
      %1588 = vmatpush1.xpose.msra.mxu0 0.0
      %1589 = vmatprep.subr.mxu0 0.0
      %1590 = vmatpush1.xpose.msra.mxu0 0.0
      %1591 = vmatprep.subr.mxu0 0.0
      %1592 = vmatpush1.xpose.msra.mxu0 0.0
      %1593 = vmatprep.subr.mxu0 0.0
      %1594 = vmatpush1.xpose.msra.mxu0 0.0
      %1595 = vmatprep.subr.mxu0 0.0
      %1596 = vmatpush1.xpose.msra.mxu0 0.0
      %1597 = vmatprep.subr.mxu0 0.0
      %1598 = vmatpush1.xpose.msra.mxu0 0.0
      %1599 = vmatprep.subr.mxu0 0.0
      %1600 = vmatpush1.xpose.msra.mxu0 0.0
      %1601 = vmatprep.subr.mxu0 0.0
      %1602 = vmatpush1.xpose.msra.mxu0 0.0
      %1603 = vmatprep.mubr.f32.mxu0 0.0
      %1604 = vmatmul.mubr.f32.gmra.mrb[0].mxu0 %v1535
      %v1605 = vpop.f32.mrb[0].mxu0
      %v1606 = vadd.f32 0.0, %v1605
      %v1607 = vpop.f32.mrb[0].mxu0
      %1608 = vdwg.mxu0
      %v1609 = vmul.f32 %v1372, 0.25
      %v1610 = vmul.f32 %v1450, 0.25
      %v1611 = vmul.f32 %v1528, 0.25
      %v1612 = vmul.f32 %v1606, 0.25
      %v1613 = vadd.f32 %v1609, %v927
      %v1614 = vadd.f32 %v1610, %v931
      %v1615 = vadd.f32 %v1611, %v935
      %v1616 = vadd.f32 %v1612, %v939
      %v1617 = vsel %vm948, %v1613, -inf
      %1618 = vmax.xlane.f32.xlu0 %v1617
      %v1619 = vpop.xlane.xlu0 %1618
      %v1620 = vsel %vm948, %v1614, -inf
      %1621 = vmax.xlane.f32.xlu0 %v1620
      %v1622 = vpop.xlane.xlu0 %1621
      %v1623 = vsel %vm948, %v1615, -inf
      %1624 = vmax.xlane.f32.xlu0 %v1623
      %v1625 = vpop.xlane.xlu0 %1624
      %v1626 = vsel %vm948, %v1616, -inf
      %1627 = vmax.xlane.f32.xlu0 %v1626
      %v1628 = vpop.xlane.xlu0 %1627
      %v1629 = vsub.f32 %v1613, %v1619
      %v1630 = vsub.f32 %v1614, %v1622
      %v1631 = vsub.f32 %v1615, %v1625
      %v1632 = vsub.f32 %v1616, %v1628
      %v1633 = vmul.f32 %v1629, 1.442695
      %v1634 = vpow.pop %v1633
      %v1635 = vmul.f32 %v1630, 1.442695
      %v1636 = vpow.pop %v1635
      %v1637 = vmul.f32 %v1631, 1.442695
      %v1638 = vpow.pop %v1637
      %v1639 = vmul.f32 %v1632, 1.442695
      %v1640 = vpow.pop %v1639
      %v1641 = vsel %vm948, %v1634, 0.0
      %1642 = vadd.xlane.f32.xlu0 %v1641
      %v1643 = vpop.xlane.xlu0 %1642
      %v1644 = vsel %vm948, %v1636, 0.0
      %1645 = vadd.xlane.f32.xlu0 %v1644
      %v1646 = vpop.xlane.xlu0 %1645
      %v1647 = vsel %vm948, %v1638, 0.0
      %1648 = vadd.xlane.f32.xlu0 %v1647
      %v1649 = vpop.xlane.xlu0 %1648
      %v1650 = vsel %vm948, %v1640, 0.0
      %1651 = vadd.xlane.f32.xlu0 %v1650
      %v1652 = vpop.xlane.xlu0 %1651
      %v1653 = vrcp.pop %v1643
      %v1654 = vmul.f32 %v1634, %v1653
      %v1655 = vrcp.pop %v1646
      %v1656 = vmul.f32 %v1636, %v1655
      %v1657 = vrcp.pop %v1649
      %v1658 = vmul.f32 %v1638, %v1657
      %v1659 = vrcp.pop %v1652
      %v1660 = vmul.f32 %v1640, %v1659
      %1661 = vrot.lane.b32.xlu0 %v589, 48
      %v1662 = vpop.permute.xlu0 %1661
      %v1665 = vsel %vm948, %v1654, 0
      %1667 = vmatprep.subr.mxu0 0.0
      %1668 = vmatpush1.msra.mxu0 %v1662
      %1669 = vmatprep.subr.mxu0 0.0
      %1670 = vmatpush1.msra.mxu0 0.0
      %1671 = vmatprep.subr.mxu0 0.0
      %1672 = vmatpush1.msra.mxu0 0.0
      %1673 = vmatprep.subr.mxu0 0.0
      %1674 = vmatpush1.msra.mxu0 0.0
      %1675 = vmatprep.subr.mxu0 0.0
      %1676 = vmatpush1.msra.mxu0 0.0
      %1677 = vmatprep.subr.mxu0 0.0
      %1678 = vmatpush1.msra.mxu0 0.0
      %1679 = vmatprep.subr.mxu0 0.0
      %1680 = vmatpush1.msra.mxu0 0.0
      %1681 = vmatprep.subr.mxu0 0.0
      %1682 = vmatpush1.msra.mxu0 0.0
      %1683 = vmatprep.subr.mxu0 0.0
      %1684 = vmatpush1.msra.mxu0 0.0
      %1685 = vmatprep.subr.mxu0 0.0
      %1686 = vmatpush1.msra.mxu0 0.0
      %1687 = vmatprep.subr.mxu0 0.0
      %1688 = vmatpush1.msra.mxu0 0.0
      %1689 = vmatprep.subr.mxu0 0.0
      %1690 = vmatpush1.msra.mxu0 0.0
      %1691 = vmatprep.subr.mxu0 0.0
      %1692 = vmatpush1.msra.mxu0 0.0
      %1693 = vmatprep.subr.mxu0 0.0
      %1694 = vmatpush1.msra.mxu0 0.0
      %1695 = vmatprep.subr.mxu0 0.0
      %1696 = vmatpush1.msra.mxu0 0.0
      %1697 = vmatprep.subr.mxu0 0.0
      %1698 = vmatpush1.msra.mxu0 0.0
      %1699 = vmatprep.subr.mxu0 0.0
      %1700 = vmatpush1.msra.mxu0 0.0
      %1701 = vmatprep.subr.mxu0 0.0
      %1702 = vmatpush1.msra.mxu0 0.0
      %1703 = vmatprep.subr.mxu0 0.0
      %1704 = vmatpush1.msra.mxu0 0.0
      %1705 = vmatprep.subr.mxu0 0.0
      %1706 = vmatpush1.msra.mxu0 0.0
      %1707 = vmatprep.subr.mxu0 0.0
      %1708 = vmatpush1.msra.mxu0 0.0
      %1709 = vmatprep.subr.mxu0 0.0
      %1710 = vmatpush1.msra.mxu0 0.0
      %1711 = vmatprep.subr.mxu0 0.0
      %1712 = vmatpush1.msra.mxu0 0.0
      %1713 = vmatprep.subr.mxu0 0.0
      %1714 = vmatpush1.msra.mxu0 0.0
      %1715 = vmatprep.subr.mxu0 0.0
      %1716 = vmatpush1.msra.mxu0 0.0
      %1717 = vmatprep.subr.mxu0 0.0
      %1718 = vmatpush1.msra.mxu0 0.0
      %1719 = vmatprep.subr.mxu0 0.0
      %1720 = vmatpush1.msra.mxu0 0.0
      %1721 = vmatprep.subr.mxu0 0.0
      %1722 = vmatpush1.msra.mxu0 0.0
      %1723 = vmatprep.subr.mxu0 0.0
      %1724 = vmatpush1.msra.mxu0 0.0
      %1725 = vmatprep.subr.mxu0 0.0
      %1726 = vmatpush1.msra.mxu0 0.0
      %1727 = vmatprep.subr.mxu0 0.0
      %1728 = vmatpush1.msra.mxu0 0.0
      %1729 = vmatprep.subr.mxu0 0.0
      %1730 = vmatpush1.msra.mxu0 0.0
      %1731 = vmatprep.mubr.f32.mxu0 0.0
      %1732 = vmatmul.mubr.f32.gmra.mrb[0].mxu0 %v1665
      %v1733 = vpop.f32.mrb[0].mxu0
      %v1734 = vadd.f32 0.0, %v1733
      %v1735 = vpop.f32.mrb[0].mxu0
      %1736 = vdwg.mxu0
      %1737 = vrot.lane.b32.xlu0 %v594, 48
      %v1738 = vpop.permute.xlu0 %1737
      %v1741 = vsel %vm948, %v1656, 0
      %1743 = vmatprep.subr.mxu0 0.0
      %1744 = vmatpush1.msra.mxu0 %v1738
      %1745 = vmatprep.subr.mxu0 0.0
      %1746 = vmatpush1.msra.mxu0 0.0
      %1747 = vmatprep.subr.mxu0 0.0
      %1748 = vmatpush1.msra.mxu0 0.0
      %1749 = vmatprep.subr.mxu0 0.0
      %1750 = vmatpush1.msra.mxu0 0.0
      %1751 = vmatprep.subr.mxu0 0.0
      %1752 = vmatpush1.msra.mxu0 0.0
      %1753 = vmatprep.subr.mxu0 0.0
      %1754 = vmatpush1.msra.mxu0 0.0
      %1755 = vmatprep.subr.mxu0 0.0
      %1756 = vmatpush1.msra.mxu0 0.0
      %1757 = vmatprep.subr.mxu0 0.0
      %1758 = vmatpush1.msra.mxu0 0.0
      %1759 = vmatprep.subr.mxu0 0.0
      %1760 = vmatpush1.msra.mxu0 0.0
      %1761 = vmatprep.subr.mxu0 0.0
      %1762 = vmatpush1.msra.mxu0 0.0
      %1763 = vmatprep.subr.mxu0 0.0
      %1764 = vmatpush1.msra.mxu0 0.0
      %1765 = vmatprep.subr.mxu0 0.0
      %1766 = vmatpush1.msra.mxu0 0.0
      %1767 = vmatprep.subr.mxu0 0.0
      %1768 = vmatpush1.msra.mxu0 0.0
      %1769 = vmatprep.subr.mxu0 0.0
      %1770 = vmatpush1.msra.mxu0 0.0
      %1771 = vmatprep.subr.mxu0 0.0
      %1772 = vmatpush1.msra.mxu0 0.0
      %1773 = vmatprep.subr.mxu0 0.0
      %1774 = vmatpush1.msra.mxu0 0.0
      %1775 = vmatprep.subr.mxu0 0.0
      %1776 = vmatpush1.msra.mxu0 0.0
      %1777 = vmatprep.subr.mxu0 0.0
      %1778 = vmatpush1.msra.mxu0 0.0
      %1779 = vmatprep.subr.mxu0 0.0
      %1780 = vmatpush1.msra.mxu0 0.0
      %1781 = vmatprep.subr.mxu0 0.0
      %1782 = vmatpush1.msra.mxu0 0.0
      %1783 = vmatprep.subr.mxu0 0.0
      %1784 = vmatpush1.msra.mxu0 0.0
      %1785 = vmatprep.subr.mxu0 0.0
      %1786 = vmatpush1.msra.mxu0 0.0
      %1787 = vmatprep.subr.mxu0 0.0
      %1788 = vmatpush1.msra.mxu0 0.0
      %1789 = vmatprep.subr.mxu0 0.0
      %1790 = vmatpush1.msra.mxu0 0.0
      %1791 = vmatprep.subr.mxu0 0.0
      %1792 = vmatpush1.msra.mxu0 0.0
      %1793 = vmatprep.subr.mxu0 0.0
      %1794 = vmatpush1.msra.mxu0 0.0
      %1795 = vmatprep.subr.mxu0 0.0
      %1796 = vmatpush1.msra.mxu0 0.0
      %1797 = vmatprep.subr.mxu0 0.0
      %1798 = vmatpush1.msra.mxu0 0.0
      %1799 = vmatprep.subr.mxu0 0.0
      %1800 = vmatpush1.msra.mxu0 0.0
      %1801 = vmatprep.subr.mxu0 0.0
      %1802 = vmatpush1.msra.mxu0 0.0
      %1803 = vmatprep.subr.mxu0 0.0
      %1804 = vmatpush1.msra.mxu0 0.0
      %1805 = vmatprep.subr.mxu0 0.0
      %1806 = vmatpush1.msra.mxu0 0.0
      %1807 = vmatprep.mubr.f32.mxu0 0.0
      %1808 = vmatmul.mubr.f32.gmra.mrb[0].mxu0 %v1741
      %v1809 = vpop.f32.mrb[0].mxu0
      %v1810 = vadd.f32 0.0, %v1809
      %v1811 = vpop.f32.mrb[0].mxu0
      %1812 = vdwg.mxu0
      %1813 = vrot.lane.b32.xlu0 %v599, 48
      %v1814 = vpop.permute.xlu0 %1813
      %v1817 = vsel %vm948, %v1658, 0
      %1819 = vmatprep.subr.mxu0 0.0
      %1820 = vmatpush1.msra.mxu0 %v1814
      %1821 = vmatprep.subr.mxu0 0.0
      %1822 = vmatpush1.msra.mxu0 0.0
      %1823 = vmatprep.subr.mxu0 0.0
      %1824 = vmatpush1.msra.mxu0 0.0
      %1825 = vmatprep.subr.mxu0 0.0
      %1826 = vmatpush1.msra.mxu0 0.0
      %1827 = vmatprep.subr.mxu0 0.0
      %1828 = vmatpush1.msra.mxu0 0.0
      %1829 = vmatprep.subr.mxu0 0.0
      %1830 = vmatpush1.msra.mxu0 0.0
      %1831 = vmatprep.subr.mxu0 0.0
      %1832 = vmatpush1.msra.mxu0 0.0
      %1833 = vmatprep.subr.mxu0 0.0
      %1834 = vmatpush1.msra.mxu0 0.0
      %1835 = vmatprep.subr.mxu0 0.0
      %1836 = vmatpush1.msra.mxu0 0.0
      %1837 = vmatprep.subr.mxu0 0.0
      %1838 = vmatpush1.msra.mxu0 0.0
      %1839 = vmatprep.subr.mxu0 0.0
      %1840 = vmatpush1.msra.mxu0 0.0
      %1841 = vmatprep.subr.mxu0 0.0
      %1842 = vmatpush1.msra.mxu0 0.0
      %1843 = vmatprep.subr.mxu0 0.0
      %1844 = vmatpush1.msra.mxu0 0.0
      %1845 = vmatprep.subr.mxu0 0.0
      %1846 = vmatpush1.msra.mxu0 0.0
      %1847 = vmatprep.subr.mxu0 0.0
      %1848 = vmatpush1.msra.mxu0 0.0
      %1849 = vmatprep.subr.mxu0 0.0
      %1850 = vmatpush1.msra.mxu0 0.0
      %1851 = vmatprep.subr.mxu0 0.0
      %1852 = vmatpush1.msra.mxu0 0.0
      %1853 = vmatprep.subr.mxu0 0.0
      %1854 = vmatpush1.msra.mxu0 0.0
      %1855 = vmatprep.subr.mxu0 0.0
      %1856 = vmatpush1.msra.mxu0 0.0
      %1857 = vmatprep.subr.mxu0 0.0
      %1858 = vmatpush1.msra.mxu0 0.0
      %1859 = vmatprep.subr.mxu0 0.0
      %1860 = vmatpush1.msra.mxu0 0.0
      %1861 = vmatprep.subr.mxu0 0.0
      %1862 = vmatpush1.msra.mxu0 0.0
      %1863 = vmatprep.subr.mxu0 0.0
      %1864 = vmatpush1.msra.mxu0 0.0
      %1865 = vmatprep.subr.mxu0 0.0
      %1866 = vmatpush1.msra.mxu0 0.0
      %1867 = vmatprep.subr.mxu0 0.0
      %1868 = vmatpush1.msra.mxu0 0.0
      %1869 = vmatprep.subr.mxu0 0.0
      %1870 = vmatpush1.msra.mxu0 0.0
      %1871 = vmatprep.subr.mxu0 0.0
      %1872 = vmatpush1.msra.mxu0 0.0
      %1873 = vmatprep.subr.mxu0 0.0
      %1874 = vmatpush1.msra.mxu0 0.0
      %1875 = vmatprep.subr.mxu0 0.0
      %1876 = vmatpush1.msra.mxu0 0.0
      %1877 = vmatprep.subr.mxu0 0.0
      %1878 = vmatpush1.msra.mxu0 0.0
      %1879 = vmatprep.subr.mxu0 0.0
      %1880 = vmatpush1.msra.mxu0 0.0
      %1881 = vmatprep.subr.mxu0 0.0
      %1882 = vmatpush1.msra.mxu0 0.0
      %1883 = vmatprep.mubr.f32.mxu0 0.0
      %1884 = vmatmul.mubr.f32.gmra.mrb[0].mxu0 %v1817
      %v1885 = vpop.f32.mrb[0].mxu0
      %v1886 = vadd.f32 0.0, %v1885
      %v1887 = vpop.f32.mrb[0].mxu0
      %1888 = vdwg.mxu0
      %1889 = vrot.lane.b32.xlu0 %v604, 48
      %v1890 = vpop.permute.xlu0 %1889
      %v1893 = vsel %vm948, %v1660, 0
      %1895 = vmatprep.subr.mxu0 0.0
      %1896 = vmatpush1.msra.mxu0 %v1890
      %1897 = vmatprep.subr.mxu0 0.0
      %1898 = vmatpush1.msra.mxu0 0.0
      %1899 = vmatprep.subr.mxu0 0.0
      %1900 = vmatpush1.msra.mxu0 0.0
      %1901 = vmatprep.subr.mxu0 0.0
      %1902 = vmatpush1.msra.mxu0 0.0
      %1903 = vmatprep.subr.mxu0 0.0
      %1904 = vmatpush1.msra.mxu0 0.0
      %1905 = vmatprep.subr.mxu0 0.0
      %1906 = vmatpush1.msra.mxu0 0.0
      %1907 = vmatprep.subr.mxu0 0.0
      %1908 = vmatpush1.msra.mxu0 0.0
      %1909 = vmatprep.subr.mxu0 0.0
      %1910 = vmatpush1.msra.mxu0 0.0
      %1911 = vmatprep.subr.mxu0 0.0
      %1912 = vmatpush1.msra.mxu0 0.0
      %1913 = vmatprep.subr.mxu0 0.0
      %1914 = vmatpush1.msra.mxu0 0.0
      %1915 = vmatprep.subr.mxu0 0.0
      %1916 = vmatpush1.msra.mxu0 0.0
      %1917 = vmatprep.subr.mxu0 0.0
      %1918 = vmatpush1.msra.mxu0 0.0
      %1919 = vmatprep.subr.mxu0 0.0
      %1920 = vmatpush1.msra.mxu0 0.0
      %1921 = vmatprep.subr.mxu0 0.0
      %1922 = vmatpush1.msra.mxu0 0.0
      %1923 = vmatprep.subr.mxu0 0.0
      %1924 = vmatpush1.msra.mxu0 0.0
      %1925 = vmatprep.subr.mxu0 0.0
      %1926 = vmatpush1.msra.mxu0 0.0
      %1927 = vmatprep.subr.mxu0 0.0
      %1928 = vmatpush1.msra.mxu0 0.0
      %1929 = vmatprep.subr.mxu0 0.0
      %1930 = vmatpush1.msra.mxu0 0.0
      %1931 = vmatprep.subr.mxu0 0.0
      %1932 = vmatpush1.msra.mxu0 0.0
      %1933 = vmatprep.subr.mxu0 0.0
      %1934 = vmatpush1.msra.mxu0 0.0
      %1935 = vmatprep.subr.mxu0 0.0
      %1936 = vmatpush1.msra.mxu0 0.0
      %1937 = vmatprep.subr.mxu0 0.0
      %1938 = vmatpush1.msra.mxu0 0.0
      %1939 = vmatprep.subr.mxu0 0.0
      %1940 = vmatpush1.msra.mxu0 0.0
      %1941 = vmatprep.subr.mxu0 0.0
      %1942 = vmatpush1.msra.mxu0 0.0
      %1943 = vmatprep.subr.mxu0 0.0
      %1944 = vmatpush1.msra.mxu0 0.0
      %1945 = vmatprep.subr.mxu0 0.0
      %1946 = vmatpush1.msra.mxu0 0.0
      %1947 = vmatprep.subr.mxu0 0.0
      %1948 = vmatpush1.msra.mxu0 0.0
      %1949 = vmatprep.subr.mxu0 0.0
      %1950 = vmatpush1.msra.mxu0 0.0
      %1951 = vmatprep.subr.mxu0 0.0
      %1952 = vmatpush1.msra.mxu0 0.0
      %1953 = vmatprep.subr.mxu0 0.0
      %1954 = vmatpush1.msra.mxu0 0.0
      %1955 = vmatprep.subr.mxu0 0.0
      %1956 = vmatpush1.msra.mxu0 0.0
      %1957 = vmatprep.subr.mxu0 0.0
      %1958 = vmatpush1.msra.mxu0 0.0
      %1959 = vmatprep.mubr.f32.mxu0 0.0
      %1960 = vmatmul.mubr.f32.gmra.mrb[0].mxu0 %v1893
      %v1961 = vpop.f32.mrb[0].mxu0
      %v1962 = vadd.f32 0.0, %v1961
      %v1963 = vpop.f32.mrb[0].mxu0
      %1964 = vdwg.mxu0
      %1969 = vrot.lane.b32.xlu0 %v1734, 16
      %v1970 = vpop.permute.xlu0 %1969
      %1971 = vrot.lane.b32.xlu0 %v1810, 16
      %v1972 = vpop.permute.xlu0 %1971
      %1973 = vrot.lane.b32.xlu0 %v1886, 16
      %v1974 = vpop.permute.xlu0 %1973
      %1975 = vrot.lane.b32.xlu0 %v1962, 16
      %v1976 = vpop.permute.xlu0 %1975
      %v1981 = vsel %vm610, %v1066, %v1970
      %v1982 = vsel %vm610, %v1142, %v1972
      %v1983 = vsel %vm610, %v1218, %v1974
      %v1984 = vsel %vm610, %v1294, %v1976
      %v1985 = vld [vmem:[%s4] sm:$0xff]
      %v1986 = vld [vmem:[%s4 + $0x8] sm:$0xff]
      %v1987 = vld [vmem:[%s4 + $0x10] sm:$0xff]
      %v1988 = vld [vmem:[%s4 + $0x18] sm:$0xff]
      %v1989 = vld [vmem:[%s5] sm:$0x1]
      %v1991 = vlaneseq
      %v1992 = vshrl.u32 %v1991, 7
      %v1993 = vsub.s32 0, %v1992
      %v1994 = vrot.slane %v1989, %v1993
      %v1997 = vsel %vm509, %v1981, 0
      %v2000 = vsel %vm509, %v1982, 0
      %v2003 = vsel %vm509, %v1983, 0
      %v2006 = vsel %vm509, %v1984, 0
      %2008 = vmatprep.subr.mxu0 0.0
      %2009 = vmatpush1.msra.mxu0 %v1985
      %2010 = vmatprep.subr.mxu0 0.0
      %2011 = vmatpush1.msra.mxu0 %v1986
      %2012 = vmatprep.subr.mxu0 0.0
      %2013 = vmatpush1.msra.mxu0 %v1987
      %2014 = vmatprep.subr.mxu0 0.0
      %2015 = vmatpush1.msra.mxu0 %v1988
      %2016 = vmatprep.subr.mxu0 0.0
      %2017 = vmatpush1.msra.mxu0 0.0
      %2018 = vmatprep.subr.mxu0 0.0
      %2019 = vmatpush1.msra.mxu0 0.0
      %2020 = vmatprep.subr.mxu0 0.0
      %2021 = vmatpush1.msra.mxu0 0.0
      %2022 = vmatprep.subr.mxu0 0.0
      %2023 = vmatpush1.msra.mxu0 0.0
      %2024 = vmatprep.subr.mxu0 0.0
      %2025 = vmatpush1.msra.mxu0 0.0
      %2026 = vmatprep.subr.mxu0 0.0
      %2027 = vmatpush1.msra.mxu0 0.0
      %2028 = vmatprep.subr.mxu0 0.0
      %2029 = vmatpush1.msra.mxu0 0.0
      %2030 = vmatprep.subr.mxu0 0.0
      %2031 = vmatpush1.msra.mxu0 0.0
      %2032 = vmatprep.subr.mxu0 0.0
      %2033 = vmatpush1.msra.mxu0 0.0
      %2034 = vmatprep.subr.mxu0 0.0
      %2035 = vmatpush1.msra.mxu0 0.0
      %2036 = vmatprep.subr.mxu0 0.0
      %2037 = vmatpush1.msra.mxu0 0.0
      %2038 = vmatprep.subr.mxu0 0.0
      %2039 = vmatpush1.msra.mxu0 0.0
      %2040 = vmatprep.subr.mxu0 0.0
      %2041 = vmatpush1.msra.mxu0 0.0
      %2042 = vmatprep.subr.mxu0 0.0
      %2043 = vmatpush1.msra.mxu0 0.0
      %2044 = vmatprep.subr.mxu0 0.0
      %2045 = vmatpush1.msra.mxu0 0.0
      %2046 = vmatprep.subr.mxu0 0.0
      %2047 = vmatpush1.msra.mxu0 0.0
      %2048 = vmatprep.subr.mxu0 0.0
      %2049 = vmatpush1.msra.mxu0 0.0
      %2050 = vmatprep.subr.mxu0 0.0
      %2051 = vmatpush1.msra.mxu0 0.0
      %2052 = vmatprep.subr.mxu0 0.0
      %2053 = vmatpush1.msra.mxu0 0.0
      %2054 = vmatprep.subr.mxu0 0.0
      %2055 = vmatpush1.msra.mxu0 0.0
      %2056 = vmatprep.subr.mxu0 0.0
      %2057 = vmatpush1.msra.mxu0 0.0
      %2058 = vmatprep.subr.mxu0 0.0
      %2059 = vmatpush1.msra.mxu0 0.0
      %2060 = vmatprep.subr.mxu0 0.0
      %2061 = vmatpush1.msra.mxu0 0.0
      %2062 = vmatprep.subr.mxu0 0.0
      %2063 = vmatpush1.msra.mxu0 0.0
      %2064 = vmatprep.subr.mxu0 0.0
      %2065 = vmatpush1.msra.mxu0 0.0
      %2066 = vmatprep.subr.mxu0 0.0
      %2067 = vmatpush1.msra.mxu0 0.0
      %2068 = vmatprep.subr.mxu0 0.0
      %2069 = vmatpush1.msra.mxu0 0.0
      %2070 = vmatprep.subr.mxu0 0.0
      %2071 = vmatpush1.msra.mxu0 0.0
      %2072 = vmatprep.mubr.f32.mxu0 0.0
      %2073 = vmatmul.mubr.f32.gmra.mrb[0].mxu0 %v1997
      %v2074 = vpop.f32.mrb[0].mxu0
      %v2075 = vadd.f32 %v1994, %v2074
      %v2076 = vpop.f32.mrb[0].mxu0
      %2077 = vmatprep.mubr.f32.mxu0 0.0
      %2078 = vmatmul.mubr.f32.gmra.mrb[0].mxu0 %v2000
      %v2079 = vpop.f32.mrb[0].mxu0
      %v2080 = vadd.f32 %v1994, %v2079
      %v2081 = vpop.f32.mrb[0].mxu0
      %2082 = vmatprep.mubr.f32.mxu0 0.0
      %2083 = vmatmul.mubr.f32.gmra.mrb[0].mxu0 %v2003
      %v2084 = vpop.f32.mrb[0].mxu0
      %v2085 = vadd.f32 %v1994, %v2084
      %v2086 = vpop.f32.mrb[0].mxu0
      %2087 = vmatprep.mubr.f32.mxu0 0.0
      %2088 = vmatmul.mubr.f32.gmra.mrb[0].mxu0 %v2006
      %v2089 = vpop.f32.mrb[0].mxu0
      %v2090 = vadd.f32 %v1994, %v2089
      %v2091 = vpop.f32.mrb[0].mxu0
      %2092 = vdwg.mxu0
      %v2093 = vadd.f32 %v2075, %v490
      %v2094 = vadd.f32 %v2080, %v491
      %v2095 = vadd.f32 %v2085, %v492
      %v2096 = vadd.f32 %v2090, %v493
      %v2097 = vld [vmem:[%s6] sm:$0x1]
      %v2098 = vld [vmem:[%s7] sm:$0x1]
      %v2099 = vsel %vm509, %v2093, 0.0
      %2100 = vadd.xlane.f32.xlu0 %v2099
      %v2101 = vpop.xlane.xlu0 %2100
      %v2102 = vsel %vm509, %v2094, 0.0
      %2103 = vadd.xlane.f32.xlu0 %v2102
      %v2104 = vpop.xlane.xlu0 %2103
      %v2105 = vsel %vm509, %v2095, 0.0
      %2106 = vadd.xlane.f32.xlu0 %v2105
      %v2107 = vpop.xlane.xlu0 %2106
      %v2108 = vsel %vm509, %v2096, 0.0
      %2109 = vadd.xlane.f32.xlu0 %v2108
      %v2110 = vpop.xlane.xlu0 %2109
      %v2111 = vrcp.pop 32.0
      %v2112 = vmul.f32 %v2101, %v2111
      %v2113 = vmul.f32 %v2104, %v2111
      %v2114 = vmul.f32 %v2107, %v2111
      %v2115 = vmul.f32 %v2110, %v2111
      %v2116 = vsub.f32 %v2093, %v2112
      %v2117 = vsub.f32 %v2094, %v2113
      %v2118 = vsub.f32 %v2095, %v2114
      %v2119 = vsub.f32 %v2096, %v2115
      %v2120 = vmul.f32 %v2116, %v2116
      %v2121 = vmul.f32 %v2117, %v2117
      %v2122 = vmul.f32 %v2118, %v2118
      %v2123 = vmul.f32 %v2119, %v2119
      %v2124 = vsel %vm509, %v2120, 0.0
      %2125 = vadd.xlane.f32.xlu0 %v2124
      %v2126 = vpop.xlane.xlu0 %2125
      %v2127 = vsel %vm509, %v2121, 0.0
      %2128 = vadd.xlane.f32.xlu0 %v2127
      %v2129 = vpop.xlane.xlu0 %2128
      %v2130 = vsel %vm509, %v2122, 0.0
      %2131 = vadd.xlane.f32.xlu0 %v2130
      %v2132 = vpop.xlane.xlu0 %2131
      %v2133 = vsel %vm509, %v2123, 0.0
      %2134 = vadd.xlane.f32.xlu0 %v2133
      %v2135 = vpop.xlane.xlu0 %2134
      %v2136 = vmul.f32 %v2126, %v2111
      %v2137 = vmul.f32 %v2129, %v2111
      %v2138 = vmul.f32 %v2132, %v2111
      %v2139 = vmul.f32 %v2135, %v2111
      %v2140 = vadd.f32 %v2136, 1e-12
      %v2141 = vadd.f32 %v2137, 1e-12
      %v2142 = vadd.f32 %v2138, 1e-12
      %v2143 = vadd.f32 %v2139, 1e-12
      %v2144 = vrsqrt.pop %v2140
      %v2145 = vrsqrt.pop %v2141
      %v2146 = vrsqrt.pop %v2142
      %v2147 = vrsqrt.pop %v2143
      %v2148 = vmul.f32 %v2116, %v2144
      %v2149 = vmul.f32 %v2117, %v2145
      %v2150 = vmul.f32 %v2118, %v2146
      %v2151 = vmul.f32 %v2119, %v2147
      %v2153 = vlaneseq
      %v2154 = vshrl.u32 %v2153, 7
      %v2155 = vsub.s32 0, %v2154
      %v2156 = vrot.slane %v2097, %v2155
      %v2158 = vmul.f32 %v2148, %v2156
      %v2159 = vmul.f32 %v2149, %v2156
      %v2160 = vmul.f32 %v2150, %v2156
      %v2161 = vmul.f32 %v2151, %v2156
      %v2163 = vlaneseq
      %v2164 = vshrl.u32 %v2163, 7
      %v2165 = vsub.s32 0, %v2164
      %v2166 = vrot.slane %v2098, %v2165
      %v2168 = vadd.f32 %v2158, %v2166
      %v2169 = vadd.f32 %v2159, %v2166
      %v2170 = vadd.f32 %v2160, %v2166
      %v2171 = vadd.f32 %v2161, %v2166
      %v2172 = vld [vmem:[%s8] sm:$0xff]
      %v2173 = vld [vmem:[%s8 + $0x8] sm:$0xff]
      %v2174 = vld [vmem:[%s8 + $0x10] sm:$0xff]
      %v2175 = vld [vmem:[%s8 + $0x18] sm:$0xff]
      %v2176 = vld [vmem:[%s9] sm:$0x1]
      %v2178 = vlaneseq
      %v2179 = vshrl.u32 %v2178, 7
      %v2180 = vsub.s32 0, %v2179
      %v2181 = vrot.slane %v2176, %v2180
      %v2184 = vsel %vm509, %v2168, 0
      %v2187 = vsel %vm509, %v2169, 0
      %v2190 = vsel %vm509, %v2170, 0
      %v2193 = vsel %vm509, %v2171, 0
      %2195 = vmatprep.subr.mxu0 0.0
      %2196 = vmatpush1.msra.mxu0 %v2172
      %2197 = vmatprep.subr.mxu0 0.0
      %2198 = vmatpush1.msra.mxu0 %v2173
      %2199 = vmatprep.subr.mxu0 0.0
      %2200 = vmatpush1.msra.mxu0 %v2174
      %2201 = vmatprep.subr.mxu0 0.0
      %2202 = vmatpush1.msra.mxu0 %v2175
      %2203 = vmatprep.subr.mxu0 0.0
      %2204 = vmatpush1.msra.mxu0 0.0
      %2205 = vmatprep.subr.mxu0 0.0
      %2206 = vmatpush1.msra.mxu0 0.0
      %2207 = vmatprep.subr.mxu0 0.0
      %2208 = vmatpush1.msra.mxu0 0.0
      %2209 = vmatprep.subr.mxu0 0.0
      %2210 = vmatpush1.msra.mxu0 0.0
      %2211 = vmatprep.subr.mxu0 0.0
      %2212 = vmatpush1.msra.mxu0 0.0
      %2213 = vmatprep.subr.mxu0 0.0
      %2214 = vmatpush1.msra.mxu0 0.0
      %2215 = vmatprep.subr.mxu0 0.0
      %2216 = vmatpush1.msra.mxu0 0.0
      %2217 = vmatprep.subr.mxu0 0.0
      %2218 = vmatpush1.msra.mxu0 0.0
      %2219 = vmatprep.subr.mxu0 0.0
      %2220 = vmatpush1.msra.mxu0 0.0
      %2221 = vmatprep.subr.mxu0 0.0
      %2222 = vmatpush1.msra.mxu0 0.0
      %2223 = vmatprep.subr.mxu0 0.0
      %2224 = vmatpush1.msra.mxu0 0.0
      %2225 = vmatprep.subr.mxu0 0.0
      %2226 = vmatpush1.msra.mxu0 0.0
      %2227 = vmatprep.subr.mxu0 0.0
      %2228 = vmatpush1.msra.mxu0 0.0
      %2229 = vmatprep.subr.mxu0 0.0
      %2230 = vmatpush1.msra.mxu0 0.0
      %2231 = vmatprep.subr.mxu0 0.0
      %2232 = vmatpush1.msra.mxu0 0.0
      %2233 = vmatprep.subr.mxu0 0.0
      %2234 = vmatpush1.msra.mxu0 0.0
      %2235 = vmatprep.subr.mxu0 0.0
      %2236 = vmatpush1.msra.mxu0 0.0
      %2237 = vmatprep.subr.mxu0 0.0
      %2238 = vmatpush1.msra.mxu0 0.0
      %2239 = vmatprep.subr.mxu0 0.0
      %2240 = vmatpush1.msra.mxu0 0.0
      %2241 = vmatprep.subr.mxu0 0.0
      %2242 = vmatpush1.msra.mxu0 0.0
      %2243 = vmatprep.subr.mxu0 0.0
      %2244 = vmatpush1.msra.mxu0 0.0
      %2245 = vmatprep.subr.mxu0 0.0
      %2246 = vmatpush1.msra.mxu0 0.0
      %2247 = vmatprep.subr.mxu0 0.0
      %2248 = vmatpush1.msra.mxu0 0.0
      %2249 = vmatprep.subr.mxu0 0.0
      %2250 = vmatpush1.msra.mxu0 0.0
      %2251 = vmatprep.subr.mxu0 0.0
      %2252 = vmatpush1.msra.mxu0 0.0
      %2253 = vmatprep.subr.mxu0 0.0
      %2254 = vmatpush1.msra.mxu0 0.0
      %2255 = vmatprep.subr.mxu0 0.0
      %2256 = vmatpush1.msra.mxu0 0.0
      %2257 = vmatprep.subr.mxu0 0.0
      %2258 = vmatpush1.msra.mxu0 0.0
      %2259 = vmatprep.mubr.f32.mxu0 0.0
      %2260 = vmatmul.mubr.f32.gmra.mrb[0].mxu0 %v2184
      %v2261 = vpop.f32.mrb[0].mxu0
      %v2262 = vadd.f32 %v2181, %v2261
      %v2263 = vpop.f32.mrb[0].mxu0
      %2264 = vmatprep.mubr.f32.mxu0 0.0
      %2265 = vmatmul.mubr.f32.gmra.mrb[0].mxu0 %v2187
      %v2266 = vpop.f32.mrb[0].mxu0
      %v2267 = vadd.f32 %v2181, %v2266
      %v2268 = vpop.f32.mrb[0].mxu0
      %2269 = vmatprep.mubr.f32.mxu0 0.0
      %2270 = vmatmul.mubr.f32.gmra.mrb[0].mxu0 %v2190
      %v2271 = vpop.f32.mrb[0].mxu0
      %v2272 = vadd.f32 %v2181, %v2271
      %v2273 = vpop.f32.mrb[0].mxu0
      %2274 = vmatprep.mubr.f32.mxu0 0.0
      %2275 = vmatmul.mubr.f32.gmra.mrb[0].mxu0 %v2193
      %v2276 = vpop.f32.mrb[0].mxu0
      %v2277 = vadd.f32 %v2181, %v2276
      %v2278 = vpop.f32.mrb[0].mxu0
      %2279 = vdwg.mxu0
      %v2280 = vmul.f32 %v2262, 0.5
      %v2281 = vmul.f32 %v2267, 0.5
      %v2282 = vmul.f32 %v2272, 0.5
      %v2283 = vmul.f32 %v2277, 0.5
      %v2284 = vmul.f32 %v2262, 0.70710677
      %v2285 = vmul.f32 %v2267, 0.70710677
      %v2286 = vmul.f32 %v2272, 0.70710677
      %v2287 = vmul.f32 %v2277, 0.70710677
      %vm2288 = vcmp.ge.f32.partialorder %v2284, 0.0
      %vm2289 = vcmp.ge.f32.partialorder %v2285, 0.0
      %vm2290 = vcmp.ge.f32.partialorder %v2286, 0.0
      %vm2291 = vcmp.ge.f32.partialorder %v2287, 0.0
      %v2292 = vsel %vm2288, 1.0, -1.0
      %v2293 = vsel %vm2289, 1.0, -1.0
      %v2294 = vsel %vm2290, 1.0, -1.0
      %v2295 = vsel %vm2291, 1.0, -1.0
      %v2296 = vand.u32 2147483647, %v2284
      %v2297 = vand.u32 2147483647, %v2285
      %v2298 = vand.u32 2147483647, %v2286
      %v2299 = vand.u32 2147483647, %v2287
      %v2300 = vmul.f32 %v2296, 0.3275911
      %v2301 = vmul.f32 %v2297, 0.3275911
      %v2302 = vmul.f32 %v2298, 0.3275911
      %v2303 = vmul.f32 %v2299, 0.3275911
      %v2304 = vadd.f32 %v2300, 1.0
      %v2305 = vadd.f32 %v2301, 1.0
      %v2306 = vadd.f32 %v2302, 1.0
      %v2307 = vadd.f32 %v2303, 1.0
      %v2308 = vrcp.pop %v2304
      %v2309 = vmul.f32 1.0, %v2308
      %v2310 = vrcp.pop %v2305
      %v2311 = vmul.f32 1.0, %v2310
      %v2312 = vrcp.pop %v2306
      %v2313 = vmul.f32 1.0, %v2312
      %v2314 = vrcp.pop %v2307
      %v2315 = vmul.f32 1.0, %v2314
      %v2316 = vmul.f32 %v2309, 1.0614054
      %v2317 = vmul.f32 %v2311, 1.0614054
      %v2318 = vmul.f32 %v2313, 1.0614054
      %v2319 = vmul.f32 %v2315, 1.0614054
      %v2320 = vadd.f32 %v2316, -1.4531521
      %v2321 = vadd.f32 %v2317, -1.4531521
      %v2322 = vadd.f32 %v2318, -1.4531521
      %v2323 = vadd.f32 %v2319, -1.4531521
      %v2324 = vmul.f32 %v2320, %v2309
      %v2325 = vmul.f32 %v2321, %v2311
      %v2326 = vmul.f32 %v2322, %v2313
      %v2327 = vmul.f32 %v2323, %v2315
      %v2328 = vadd.f32 %v2324, 1.4214138
      %v2329 = vadd.f32 %v2325, 1.4214138
      %v2330 = vadd.f32 %v2326, 1.4214138
      %v2331 = vadd.f32 %v2327, 1.4214138
      %v2332 = vmul.f32 %v2328, %v2309
      %v2333 = vmul.f32 %v2329, %v2311
      %v2334 = vmul.f32 %v2330, %v2313
      %v2335 = vmul.f32 %v2331, %v2315
      %v2336 = vadd.f32 %v2332, -0.28449672
      %v2337 = vadd.f32 %v2333, -0.28449672
      %v2338 = vadd.f32 %v2334, -0.28449672
      %v2339 = vadd.f32 %v2335, -0.28449672
      %v2340 = vmul.f32 %v2336, %v2309
      %v2341 = vmul.f32 %v2337, %v2311
      %v2342 = vmul.f32 %v2338, %v2313
      %v2343 = vmul.f32 %v2339, %v2315
      %v2344 = vadd.f32 %v2340, 0.2548296
      %v2345 = vadd.f32 %v2341, 0.2548296
      %v2346 = vadd.f32 %v2342, 0.2548296
      %v2347 = vadd.f32 %v2343, 0.2548296
      %v2348 = vmul.f32 %v2344, %v2309
      %v2349 = vmul.f32 %v2345, %v2311
      %v2350 = vmul.f32 %v2346, %v2313
      %v2351 = vmul.f32 %v2347, %v2315
      %v2352 = vsub.f32 0.0, %v2296
      %v2353 = vsub.f32 0.0, %v2297
      %v2354 = vsub.f32 0.0, %v2298
      %v2355 = vsub.f32 0.0, %v2299
      %v2356 = vmul.f32 %v2352, %v2296
      %v2357 = vmul.f32 %v2353, %v2297
      %v2358 = vmul.f32 %v2354, %v2298
      %v2359 = vmul.f32 %v2355, %v2299
      %v2360 = vmul.f32 %v2356, 1.442695
      %v2361 = vpow.pop %v2360
      %v2362 = vmul.f32 %v2357, 1.442695
      %v2363 = vpow.pop %v2362
      %v2364 = vmul.f32 %v2358, 1.442695
      %v2365 = vpow.pop %v2364
      %v2366 = vmul.f32 %v2359, 1.442695
      %v2367 = vpow.pop %v2366
      %v2368 = vmul.f32 %v2348, %v2361
      %v2369 = vmul.f32 %v2349, %v2363
      %v2370 = vmul.f32 %v2350, %v2365
      %v2371 = vmul.f32 %v2351, %v2367
      %v2372 = vsub.f32 1.0, %v2368
      %v2373 = vsub.f32 1.0, %v2369
      %v2374 = vsub.f32 1.0, %v2370
      %v2375 = vsub.f32 1.0, %v2371
      %v2376 = vmul.f32 %v2292, %v2372
      %v2377 = vmul.f32 %v2293, %v2373
      %v2378 = vmul.f32 %v2294, %v2374
      %v2379 = vmul.f32 %v2295, %v2375
      %v2380 = vadd.f32 %v2376, 1.0
      %v2381 = vadd.f32 %v2377, 1.0
      %v2382 = vadd.f32 %v2378, 1.0
      %v2383 = vadd.f32 %v2379, 1.0
      %v2384 = vmul.f32 %v2280, %v2380
      %v2385 = vmul.f32 %v2281, %v2381
      %v2386 = vmul.f32 %v2282, %v2382
      %v2387 = vmul.f32 %v2283, %v2383
      %v2388 = vld [vmem:[%s10] sm:$0xff]
      %v2389 = vld [vmem:[%s10 + $0x8] sm:$0xff]
      %v2390 = vld [vmem:[%s10 + $0x10] sm:$0xff]
      %v2391 = vld [vmem:[%s10 + $0x18] sm:$0xff]
      %v2392 = vld [vmem:[%s10 + $0x20] sm:$0xff]
      %v2393 = vld [vmem:[%s10 + $0x28] sm:$0xff]
      %v2394 = vld [vmem:[%s10 + $0x30] sm:$0xff]
      %v2395 = vld [vmem:[%s10 + $0x38] sm:$0xff]
      %v2396 = vld [vmem:[%s11] sm:$0x1]
      %v2398 = vlaneseq
      %v2399 = vshrl.u32 %v2398, 7
      %v2400 = vsub.s32 0, %v2399
      %v2401 = vrot.slane %v2396, %v2400
      %vm2403 = vcmask 523264
      %v2405 = vsel %vm2403, %v2384, 0
      %v2408 = vsel %vm2403, %v2385, 0
      %v2411 = vsel %vm2403, %v2386, 0
      %v2414 = vsel %vm2403, %v2387, 0
      %2416 = vmatprep.subr.mxu0 0.0
      %2417 = vmatpush1.msra.mxu0 %v2388
      %2418 = vmatprep.subr.mxu0 0.0
      %2419 = vmatpush1.msra.mxu0 %v2389
      %2420 = vmatprep.subr.mxu0 0.0
      %2421 = vmatpush1.msra.mxu0 %v2390
      %2422 = vmatprep.subr.mxu0 0.0
      %2423 = vmatpush1.msra.mxu0 %v2391
      %2424 = vmatprep.subr.mxu0 0.0
      %2425 = vmatpush1.msra.mxu0 %v2392
      %2426 = vmatprep.subr.mxu0 0.0
      %2427 = vmatpush1.msra.mxu0 %v2393
      %2428 = vmatprep.subr.mxu0 0.0
      %2429 = vmatpush1.msra.mxu0 %v2394
      %2430 = vmatprep.subr.mxu0 0.0
      %2431 = vmatpush1.msra.mxu0 %v2395
      %2432 = vmatprep.subr.mxu0 0.0
      %2433 = vmatpush1.msra.mxu0 0.0
      %2434 = vmatprep.subr.mxu0 0.0
      %2435 = vmatpush1.msra.mxu0 0.0
      %2436 = vmatprep.subr.mxu0 0.0
      %2437 = vmatpush1.msra.mxu0 0.0
      %2438 = vmatprep.subr.mxu0 0.0
      %2439 = vmatpush1.msra.mxu0 0.0
      %2440 = vmatprep.subr.mxu0 0.0
      %2441 = vmatpush1.msra.mxu0 0.0
      %2442 = vmatprep.subr.mxu0 0.0
      %2443 = vmatpush1.msra.mxu0 0.0
      %2444 = vmatprep.subr.mxu0 0.0
      %2445 = vmatpush1.msra.mxu0 0.0
      %2446 = vmatprep.subr.mxu0 0.0
      %2447 = vmatpush1.msra.mxu0 0.0
      %2448 = vmatprep.subr.mxu0 0.0
      %2449 = vmatpush1.msra.mxu0 0.0
      %2450 = vmatprep.subr.mxu0 0.0
      %2451 = vmatpush1.msra.mxu0 0.0
      %2452 = vmatprep.subr.mxu0 0.0
      %2453 = vmatpush1.msra.mxu0 0.0
      %2454 = vmatprep.subr.mxu0 0.0
      %2455 = vmatpush1.msra.mxu0 0.0
      %2456 = vmatprep.subr.mxu0 0.0
      %2457 = vmatpush1.msra.mxu0 0.0
      %2458 = vmatprep.subr.mxu0 0.0
      %2459 = vmatpush1.msra.mxu0 0.0
      %2460 = vmatprep.subr.mxu0 0.0
      %2461 = vmatpush1.msra.mxu0 0.0
      %2462 = vmatprep.subr.mxu0 0.0
      %2463 = vmatpush1.msra.mxu0 0.0
      %2464 = vmatprep.subr.mxu0 0.0
      %2465 = vmatpush1.msra.mxu0 0.0
      %2466 = vmatprep.subr.mxu0 0.0
      %2467 = vmatpush1.msra.mxu0 0.0
      %2468 = vmatprep.subr.mxu0 0.0
      %2469 = vmatpush1.msra.mxu0 0.0
      %2470 = vmatprep.subr.mxu0 0.0
      %2471 = vmatpush1.msra.mxu0 0.0
      %2472 = vmatprep.subr.mxu0 0.0
      %2473 = vmatpush1.msra.mxu0 0.0
      %2474 = vmatprep.subr.mxu0 0.0
      %2475 = vmatpush1.msra.mxu0 0.0
      %2476 = vmatprep.subr.mxu0 0.0
      %2477 = vmatpush1.msra.mxu0 0.0
      %2478 = vmatprep.subr.mxu0 0.0
      %2479 = vmatpush1.msra.mxu0 0.0
      %2480 = vmatprep.mubr.f32.mxu0 0.0
      %2481 = vmatmul.mubr.f32.gmra.mrb[0].mxu0 %v2405
      %v2482 = vpop.f32.mrb[0].mxu0
      %v2483 = vadd.f32 %v2401, %v2482
      %v2484 = vpop.f32.mrb[0].mxu0
      %2485 = vmatprep.mubr.f32.mxu0 0.0
      %2486 = vmatmul.mubr.f32.gmra.mrb[0].mxu0 %v2408
      %v2487 = vpop.f32.mrb[0].mxu0
      %v2488 = vadd.f32 %v2401, %v2487
      %v2489 = vpop.f32.mrb[0].mxu0
      %2490 = vmatprep.mubr.f32.mxu0 0.0
      %2491 = vmatmul.mubr.f32.gmra.mrb[0].mxu0 %v2411
      %v2492 = vpop.f32.mrb[0].mxu0
      %v2493 = vadd.f32 %v2401, %v2492
      %v2494 = vpop.f32.mrb[0].mxu0
      %2495 = vmatprep.mubr.f32.mxu0 0.0
      %2496 = vmatmul.mubr.f32.gmra.mrb[0].mxu0 %v2414
      %v2497 = vpop.f32.mrb[0].mxu0
      %v2498 = vadd.f32 %v2401, %v2497
      %v2499 = vpop.f32.mrb[0].mxu0
      %2500 = vdwg.mxu0
      %v2501 = vadd.f32 %v2483, %v2168
      %v2502 = vadd.f32 %v2488, %v2169
      %v2503 = vadd.f32 %v2493, %v2170
      %v2504 = vadd.f32 %v2498, %v2171
      %v2505 = vld [vmem:[%s12] sm:$0x1]
      %v2506 = vld [vmem:[%s13] sm:$0x1]
      %v2507 = vsel %vm509, %v2501, 0.0
      %2508 = vadd.xlane.f32.xlu0 %v2507
      %v2509 = vpop.xlane.xlu0 %2508
      %v2510 = vsel %vm509, %v2502, 0.0
      %2511 = vadd.xlane.f32.xlu0 %v2510
      %v2512 = vpop.xlane.xlu0 %2511
      %v2513 = vsel %vm509, %v2503, 0.0
      %2514 = vadd.xlane.f32.xlu0 %v2513
      %v2515 = vpop.xlane.xlu0 %2514
      %v2516 = vsel %vm509, %v2504, 0.0
      %2517 = vadd.xlane.f32.xlu0 %v2516
      %v2518 = vpop.xlane.xlu0 %2517
      %v2519 = vmul.f32 %v2509, %v2111
      %v2520 = vmul.f32 %v2512, %v2111
      %v2521 = vmul.f32 %v2515, %v2111
      %v2522 = vmul.f32 %v2518, %v2111
      %v2523 = vsub.f32 %v2501, %v2519
      %v2524 = vsub.f32 %v2502, %v2520
      %v2525 = vsub.f32 %v2503, %v2521
      %v2526 = vsub.f32 %v2504, %v2522
      %v2527 = vmul.f32 %v2523, %v2523
      %v2528 = vmul.f32 %v2524, %v2524
      %v2529 = vmul.f32 %v2525, %v2525
      %v2530 = vmul.f32 %v2526, %v2526
      %v2531 = vsel %vm509, %v2527, 0.0
      %2532 = vadd.xlane.f32.xlu0 %v2531
      %v2533 = vpop.xlane.xlu0 %2532
      %v2534 = vsel %vm509, %v2528, 0.0
      %2535 = vadd.xlane.f32.xlu0 %v2534
      %v2536 = vpop.xlane.xlu0 %2535
      %v2537 = vsel %vm509, %v2529, 0.0
      %2538 = vadd.xlane.f32.xlu0 %v2537
      %v2539 = vpop.xlane.xlu0 %2538
      %v2540 = vsel %vm509, %v2530, 0.0
      %2541 = vadd.xlane.f32.xlu0 %v2540
      %v2542 = vpop.xlane.xlu0 %2541
      %v2543 = vmul.f32 %v2533, %v2111
      %v2544 = vmul.f32 %v2536, %v2111
      %v2545 = vmul.f32 %v2539, %v2111
      %v2546 = vmul.f32 %v2542, %v2111
      %v2547 = vadd.f32 %v2543, 1e-12
      %v2548 = vadd.f32 %v2544, 1e-12
      %v2549 = vadd.f32 %v2545, 1e-12
      %v2550 = vadd.f32 %v2546, 1e-12
      %v2551 = vrsqrt.pop %v2547
      %v2552 = vrsqrt.pop %v2548
      %v2553 = vrsqrt.pop %v2549
      %v2554 = vrsqrt.pop %v2550
      %v2555 = vmul.f32 %v2523, %v2551
      %v2556 = vmul.f32 %v2524, %v2552
      %v2557 = vmul.f32 %v2525, %v2553
      %v2558 = vmul.f32 %v2526, %v2554
      %v2560 = vlaneseq
      %v2561 = vshrl.u32 %v2560, 7
      %v2562 = vsub.s32 0, %v2561
      %v2563 = vrot.slane %v2505, %v2562
      %v2565 = vmul.f32 %v2555, %v2563
      %v2566 = vmul.f32 %v2556, %v2563
      %v2567 = vmul.f32 %v2557, %v2563
      %v2568 = vmul.f32 %v2558, %v2563
      %v2570 = vlaneseq
      %v2571 = vshrl.u32 %v2570, 7
      %v2572 = vsub.s32 0, %v2571
      %v2573 = vrot.slane %v2506, %v2572
      %v2575 = vadd.f32 %v2565, %v2573
      %v2576 = vadd.f32 %v2566, %v2573
      %v2577 = vadd.f32 %v2567, %v2573
      %v2578 = vadd.f32 %v2568, %v2573
      %2579 = vst.msk [vmem:[%s488] sm:$0xff] %vm509, %v2575
      %2580 = vst.msk [vmem:[%s488 + $0x8] sm:$0xff] %vm509, %v2576
      %2581 = vst.msk [vmem:[%s488 + $0x10] sm:$0xff] %vm509, %v2577
      %2582 = vst.msk [vmem:[%s488 + $0x18] sm:$0xff] %vm509, %v2578
      %s2583 = smul.u32 4, %s25
      %p2584 = scmp.lt.s32.totalorder %s2583, 7
      %s2585 = scalar_select %p2584, %s2583, 7
      %s2586 = smul.addr %s2585, 8
      %s2587 = scalar_lea.vmem %s14, %s2586
      // Predicated region
      $region77: #{graph_bert_encoder.3} parent=75 // pred_check
        %p2588 = pneg %p347
      $region78: #{graph_bert_encoder.3} parent=75 // pred_check_branch
        %2590 = sbr.rel (%p2588) target = $region80
      $region79: #{graph_bert_encoder.3} parent=75 // pred_region
        %s2591 = smul.u32 4, %s25
      $region80: #{graph_bert_encoder.3} parent=75 // pred_fallthru
        _
    $region76: #{graph_bert_encoder.3} parent=5 // pred_fallthru
      _
    %p2592 = scmp.le.s32.totalorder 2, %s20
    // Predicated region
    $region81: #{graph_bert_encoder.3} parent=5 // pred_check
      %p2593 = pneg %p2592
    $region82: #{graph_bert_encoder.3} parent=5 // pred_check_branch
      %2595 = sbr.rel (%p2593) target = $region84
    $region83: #{graph_bert_encoder.3} parent=5 // pred_region
      %s2596 = ssub.s32 %s20, 2
      // Predicated region
      $region85: #{graph_bert_encoder.3} parent=83 // pred_check
        %p2597 = pneg %p353
      $region86: #{graph_bert_encoder.3} parent=83 // pred_check_branch
        %2599 = sbr.rel (%p2597) target = $region88
      $region87: #{graph_bert_encoder.3} parent=83 // pred_region
        %s2600 = smul.u32 4, %s26
        %p2601 = scmp.lt.s32.totalorder %s2600, 7
        %s2602 = scalar_select %p2601, %s2600, 7
        %s2603 = smul.addr %s2602, 8
        %s2604 = scalar_lea.vmem %s14, %s2603
      $region88: #{graph_bert_encoder.3} parent=83 // pred_fallthru
        _
    $region84: #{graph_bert_encoder.3} parent=5 // pred_fallthru
      _
  $region6: #{graph_bert_encoder.3} parent=0 // loop_footer
    %s24 = sadd.s32 1, %s20
  $region7: #{graph_bert_encoder.3} parent=0 // loop_footer_branch
    %19 = sbr.rel target = $region3
  $region8: #{graph_bert_encoder.3} parent=0 // loop_exit
    _

// kernel: graph_bert_encoder.5
$region0: #{graph_bert_encoder.5}
  #allocation0 [shape = 'u32[]', space=smem, size = 0x4, offset = 0x4, fixed_abs, tag = 'smem constant byte address 0x4 - core index']
  #allocation1 [shape = 'u32[144,128]{1,0:T(1,128)}', space=vmem, size = 0x12000, scoped, tag = 'internal scratch']
  %s0 = inlined_call_operand.vmem [shape: f32[8,8,32], index: 0, kind: input, shape index: {}]
  %s1 = inlined_call_operand.vmem [shape: f32[8,1,8], index: 1, kind: input, shape index: {}]
  %s2 = inlined_call_operand.vmem [shape: f32[32,96], index: 2, kind: input, shape index: {}]
  %s3 = inlined_call_operand.vmem [shape: f32[1,96], index: 3, kind: input, shape index: {}]
  %s4 = inlined_call_operand.vmem [shape: f32[32,32], index: 4, kind: input, shape index: {}]
  %s5 = inlined_call_operand.vmem [shape: f32[1,32], index: 5, kind: input, shape index: {}]
  %s6 = inlined_call_operand.vmem [shape: f32[1,32], index: 6, kind: input, shape index: {}]
  %s7 = inlined_call_operand.vmem [shape: f32[1,32], index: 7, kind: input, shape index: {}]
  %s8 = inlined_call_operand.vmem [shape: f32[32,64], index: 8, kind: input, shape index: {}]
  %s9 = inlined_call_operand.vmem [shape: f32[1,64], index: 9, kind: input, shape index: {}]
  %s10 = inlined_call_operand.vmem [shape: f32[64,32], index: 10, kind: input, shape index: {}]
  %s11 = inlined_call_operand.vmem [shape: f32[1,32], index: 11, kind: input, shape index: {}]
  %s12 = inlined_call_operand.vmem [shape: f32[1,32], index: 12, kind: input, shape index: {}]
  %s13 = inlined_call_operand.vmem [shape: f32[1,32], index: 13, kind: input, shape index: {}]
  %s14 = inlined_call_operand.hbm [shape: f32[8,8,32], index: 14, kind: output, shape index: {}]
  %s15 = sld [smem:[#allocation0]]
  $region89: #{graph_bert_encoder.5} parent=0
    _
  %s17 = ssub.s32 1, %s15
  %s18 = scalar_select 0, %s17, %s15
  $region1: #{graph_bert_encoder.5} parent=0
    #allocation2 [shape = 'u8[32768]{0}', space=vmem, size = 0x8000, scoped, tag = 'output window, operand 0']
    #allocation3 [shape = 's32[2]{0}', space=sflag, size = 0x8, scoped, tag = 'scoped memory for graph_bert_encoder.5']
    %19 = vsyncpa [#allocation3], 0
    %s20 = scalar_lea.sflag [#allocation3], 1
    %21 = vsyncpa %s20, 0
    loop: start=0, step=1, limit=4
    $region2: #{graph_bert_encoder.5} parent=1 // loop_pre_header
      _
    $region3: #{graph_bert_encoder.5} parent=1 // loop_header
      %s23 = sphi 0, %s27
      %p24 = scmp.ge.s32.totalorder %s23, 4
      %s33 = sphi 0, %s35
      %s36 = sphi 0, %s33
      %s37 = sphi 0, %s36
      %s53 = sphi 0, %s37
      %s59 = sphi 0, %s61
      %s62 = sphi 0, %s59
      %s63 = sphi 0, %s62
      %s79 = sphi 0, %s63
      %s83 = sphi 0, %s83
      %s85 = sphi 0, %s83
      %s86 = sphi 0, %s85
      %s100 = sphi 0, %s86
      %s104 = sphi 0, %s104
      %s106 = sphi 0, %s104
      %s107 = sphi 0, %s106
      %s121 = sphi 0, %s107
      %s125 = sphi 0, %s125
      %s127 = sphi 0, %s125
      %s128 = sphi 0, %s127
      %s142 = sphi 0, %s128
      %s146 = sphi 0, %s146
      %s148 = sphi 0, %s146
      %s149 = sphi 0, %s148
      %s163 = sphi 0, %s149
      %s167 = sphi 0, %s167
      %s169 = sphi 0, %s167
      %s170 = sphi 0, %s169
      %s184 = sphi 0, %s170
      %s188 = sphi 0, %s188
      %s190 = sphi 0, %s188
      %s191 = sphi 0, %s190
      %s205 = sphi 0, %s191
      %s209 = sphi 0, %s209
      %s211 = sphi 0, %s209
      %s212 = sphi 0, %s211
      %s226 = sphi 0, %s212
      %s230 = sphi 0, %s230
      %s232 = sphi 0, %s230
      %s233 = sphi 0, %s232
      %s247 = sphi 0, %s233
      %s251 = sphi 0, %s251
      %s253 = sphi 0, %s251
      %s254 = sphi 0, %s253
      %s268 = sphi 0, %s254
      %s272 = sphi 0, %s272
      %s274 = sphi 0, %s272
      %s275 = sphi 0, %s274
      %s289 = sphi 0, %s275
      %s293 = sphi 0, %s293
      %s295 = sphi 0, %s293
      %s296 = sphi 0, %s295
      %s310 = sphi 0, %s296
      %s314 = sphi 0, %s314
      %s316 = sphi 0, %s314
      %s317 = sphi 0, %s316
      %s331 = sphi 0, %s317
      %s337 = sphi 0, %s339
      %s340 = sphi 0, %s337
      %s341 = sphi 0, %s340
      %s357 = sphi 0, %s341
    $region4: #{graph_bert_encoder.5} parent=1 // loop_header_branch
      %26 = sbr.rel (%p24) target = $region8
    $region5: #{graph_bert_encoder.5} parent=1 // loop_body
      %s28 = ssub.s32 %s23, 1
      %s29 = ssub.s32 %s23, 2
      %s30 = sadd.s32 %s23, 1
      %s31 = ssub.s32 %s23, %s30
      %p32 = scmp.eq.s32.totalorder %s31, 0
      %s34 = sadd.s32 %s33, 1
      %s35 = scalar_select %p32, %s33, %s34
      %p38 = pneg %p32
      %p39 = scmp.eq.s32.totalorder %s23, 1
      %p40 = por %p38, %p39
      %p41 = scmp.ne.s32.totalorder %s33, %s36
      %p42 = scmp.eq.s32.totalorder %s23, 0
      %p43 = por %p41, %p42
      %p44 = scmp.ne.s32.totalorder %s33, %s36
      %p45 = scmp.eq.s32.totalorder %s28, 1
      %p46 = por %p44, %p45
      %p47 = scmp.ne.s32.totalorder %s36, %s37
      %p48 = scmp.eq.s32.totalorder %s28, 0
      %p49 = por %p47, %p48
      %p50 = scmp.ne.s32.totalorder %s36, %s37
      %p51 = scmp.eq.s32.totalorder %s29, 1
      %p52 = por %p50, %p51
      %p54 = scmp.ne.s32.totalorder %s37, %s53
      %p55 = scmp.eq.s32.totalorder %s29, 0
      %p56 = por %p54, %p55
      %s57 = ssub.s32 %s23, %s30
      %p58 = scmp.eq.s32.totalorder %s57, 0
      %s60 = sadd.s32 %s59, 1
      %s61 = scalar_select %p58, %s59, %s60
      %p64 = pneg %p58
      %p65 = scmp.eq.s32.totalorder %s23, 1
      %p66 = por %p64, %p65
      %p67 = scmp.ne.s32.totalorder %s59, %s62
      %p68 = scmp.eq.s32.totalorder %s23, 0
      %p69 = por %p67, %p68
      %p70 = scmp.ne.s32.totalorder %s59, %s62
      %p71 = scmp.eq.s32.totalorder %s28, 1
      %p72 = por %p70, %p71
      %p73 = scmp.ne.s32.totalorder %s62, %s63
      %p74 = scmp.eq.s32.totalorder %s28, 0
      %p75 = por %p73, %p74
      %p76 = scmp.ne.s32.totalorder %s62, %s63
      %p77 = scmp.eq.s32.totalorder %s29, 1
      %p78 = por %p76, %p77
      %p80 = scmp.ne.s32.totalorder %s63, %s79
      %p81 = scmp.eq.s32.totalorder %s29, 0
      %p82 = por %p80, %p81
      %s84 = sadd.s32 %s83, 1
      %p87 = scmp.eq.s32.totalorder %s23, 1
      %p88 = scmp.ne.s32.totalorder %s83, %s85
      %p89 = scmp.eq.s32.totalorder %s23, 0
      %p90 = por %p88, %p89
      %p91 = scmp.ne.s32.totalorder %s83, %s85
      %p92 = scmp.eq.s32.totalorder %s28, 1
      %p93 = por %p91, %p92
      %p94 = scmp.ne.s32.totalorder %s85, %s86
      %p95 = scmp.eq.s32.totalorder %s28, 0
      %p96 = por %p94, %p95
      %p97 = scmp.ne.s32.totalorder %s85, %s86
      %p98 = scmp.eq.s32.totalorder %s29, 1
      %p99 = por %p97, %p98
      %p101 = scmp.ne.s32.totalorder %s86, %s100
      %p102 = scmp.eq.s32.totalorder %s29, 0
      %p103 = por %p101, %p102
      %s105 = sadd.s32 %s104, 1
      %p108 = scmp.eq.s32.totalorder %s23, 1
      %p109 = scmp.ne.s32.totalorder %s104, %s106
      %p110 = scmp.eq.s32.totalorder %s23, 0
      %p111 = por %p109, %p110
      %p112 = scmp.ne.s32.totalorder %s104, %s106
      %p113 = scmp.eq.s32.totalorder %s28, 1
      %p114 = por %p112, %p113
      %p115 = scmp.ne.s32.totalorder %s106, %s107
      %p116 = scmp.eq.s32.totalorder %s28, 0
      %p117 = por %p115, %p116
      %p118 = scmp.ne.s32.totalorder %s106, %s107
      %p119 = scmp.eq.s32.totalorder %s29, 1
      %p120 = por %p118, %p119
      %p122 = scmp.ne.s32.totalorder %s107, %s121
      %p123 = scmp.eq.s32.totalorder %s29, 0
      %p124 = por %p122, %p123
      %s126 = sadd.s32 %s125, 1
      %p129 = scmp.eq.s32.totalorder %s23, 1
      %p130 = scmp.ne.s32.totalorder %s125, %s127
      %p131 = scmp.eq.s32.totalorder %s23, 0
      %p132 = por %p130, %p131
      %p133 = scmp.ne.s32.totalorder %s125, %s127
      %p134 = scmp.eq.s32.totalorder %s28, 1
      %p135 = por %p133, %p134
      %p136 = scmp.ne.s32.totalorder %s127, %s128
      %p137 = scmp.eq.s32.totalorder %s28, 0
      %p138 = por %p136, %p137
      %p139 = scmp.ne.s32.totalorder %s127, %s128
      %p140 = scmp.eq.s32.totalorder %s29, 1
      %p141 = por %p139, %p140
      %p143 = scmp.ne.s32.totalorder %s128, %s142
      %p144 = scmp.eq.s32.totalorder %s29, 0
      %p145 = por %p143, %p144
      %s147 = sadd.s32 %s146, 1
      %p150 = scmp.eq.s32.totalorder %s23, 1
      %p151 = scmp.ne.s32.totalorder %s146, %s148
      %p152 = scmp.eq.s32.totalorder %s23, 0
      %p153 = por %p151, %p152
      %p154 = scmp.ne.s32.totalorder %s146, %s148
      %p155 = scmp.eq.s32.totalorder %s28, 1
      %p156 = por %p154, %p155
      %p157 = scmp.ne.s32.totalorder %s148, %s149
      %p158 = scmp.eq.s32.totalorder %s28, 0
      %p159 = por %p157, %p158
      %p160 = scmp.ne.s32.totalorder %s148, %s149
      %p161 = scmp.eq.s32.totalorder %s29, 1
      %p162 = por %p160, %p161
      %p164 = scmp.ne.s32.totalorder %s149, %s163
      %p165 = scmp.eq.s32.totalorder %s29, 0
      %p166 = por %p164, %p165
      %s168 = sadd.s32 %s167, 1
      %p171 = scmp.eq.s32.totalorder %s23, 1
      %p172 = scmp.ne.s32.totalorder %s167, %s169
      %p173 = scmp.eq.s32.totalorder %s23, 0
      %p174 = por %p172, %p173
      %p175 = scmp.ne.s32.totalorder %s167, %s169
      %p176 = scmp.eq.s32.totalorder %s28, 1
      %p177 = por %p175, %p176
      %p178 = scmp.ne.s32.totalorder %s169, %s170
      %p179 = scmp.eq.s32.totalorder %s28, 0
      %p180 = por %p178, %p179
      %p181 = scmp.ne.s32.totalorder %s169, %s170
      %p182 = scmp.eq.s32.totalorder %s29, 1
      %p183 = por %p181, %p182
      %p185 = scmp.ne.s32.totalorder %s170, %s184
      %p186 = scmp.eq.s32.totalorder %s29, 0
      %p187 = por %p185, %p186
      %s189 = sadd.s32 %s188, 1
      %p192 = scmp.eq.s32.totalorder %s23, 1
      %p193 = scmp.ne.s32.totalorder %s188, %s190
      %p194 = scmp.eq.s32.totalorder %s23, 0
      %p195 = por %p193, %p194
      %p196 = scmp.ne.s32.totalorder %s188, %s190
      %p197 = scmp.eq.s32.totalorder %s28, 1
      %p198 = por %p196, %p197
      %p199 = scmp.ne.s32.totalorder %s190, %s191
      %p200 = scmp.eq.s32.totalorder %s28, 0
      %p201 = por %p199, %p200
      %p202 = scmp.ne.s32.totalorder %s190, %s191
      %p203 = scmp.eq.s32.totalorder %s29, 1
      %p204 = por %p202, %p203
      %p206 = scmp.ne.s32.totalorder %s191, %s205
      %p207 = scmp.eq.s32.totalorder %s29, 0
      %p208 = por %p206, %p207
      %s210 = sadd.s32 %s209, 1
      %p213 = scmp.eq.s32.totalorder %s23, 1
      %p214 = scmp.ne.s32.totalorder %s209, %s211
      %p215 = scmp.eq.s32.totalorder %s23, 0
      %p216 = por %p214, %p215
      %p217 = scmp.ne.s32.totalorder %s209, %s211
      %p218 = scmp.eq.s32.totalorder %s28, 1
      %p219 = por %p217, %p218
      %p220 = scmp.ne.s32.totalorder %s211, %s212
      %p221 = scmp.eq.s32.totalorder %s28, 0
      %p222 = por %p220, %p221
      %p223 = scmp.ne.s32.totalorder %s211, %s212
      %p224 = scmp.eq.s32.totalorder %s29, 1
      %p225 = por %p223, %p224
      %p227 = scmp.ne.s32.totalorder %s212, %s226
      %p228 = scmp.eq.s32.totalorder %s29, 0
      %p229 = por %p227, %p228
      %s231 = sadd.s32 %s230, 1
      %p234 = scmp.eq.s32.totalorder %s23, 1
      %p235 = scmp.ne.s32.totalorder %s230, %s232
      %p236 = scmp.eq.s32.totalorder %s23, 0
      %p237 = por %p235, %p236
      %p238 = scmp.ne.s32.totalorder %s230, %s232
      %p239 = scmp.eq.s32.totalorder %s28, 1
      %p240 = por %p238, %p239
      %p241 = scmp.ne.s32.totalorder %s232, %s233
      %p242 = scmp.eq.s32.totalorder %s28, 0
      %p243 = por %p241, %p242
      %p244 = scmp.ne.s32.totalorder %s232, %s233
      %p245 = scmp.eq.s32.totalorder %s29, 1
      %p246 = por %p244, %p245
      %p248 = scmp.ne.s32.totalorder %s233, %s247
      %p249 = scmp.eq.s32.totalorder %s29, 0
      %p250 = por %p248, %p249
      %s252 = sadd.s32 %s251, 1
      %p255 = scmp.eq.s32.totalorder %s23, 1
      %p256 = scmp.ne.s32.totalorder %s251, %s253
      %p257 = scmp.eq.s32.totalorder %s23, 0
      %p258 = por %p256, %p257
      %p259 = scmp.ne.s32.totalorder %s251, %s253
      %p260 = scmp.eq.s32.totalorder %s28, 1
      %p261 = por %p259, %p260
      %p262 = scmp.ne.s32.totalorder %s253, %s254
      %p263 = scmp.eq.s32.totalorder %s28, 0
      %p264 = por %p262, %p263
      %p265 = scmp.ne.s32.totalorder %s253, %s254
      %p266 = scmp.eq.s32.totalorder %s29, 1
      %p267 = por %p265, %p266
      %p269 = scmp.ne.s32.totalorder %s254, %s268
      %p270 = scmp.eq.s32.totalorder %s29, 0
      %p271 = por %p269, %p270
      %s273 = sadd.s32 %s272, 1
      %p276 = scmp.eq.s32.totalorder %s23, 1
      %p277 = scmp.ne.s32.totalorder %s272, %s274
      %p278 = scmp.eq.s32.totalorder %s23, 0
      %p279 = por %p277, %p278
      %p280 = scmp.ne.s32.totalorder %s272, %s274
      %p281 = scmp.eq.s32.totalorder %s28, 1
      %p282 = por %p280, %p281
      %p283 = scmp.ne.s32.totalorder %s274, %s275
      %p284 = scmp.eq.s32.totalorder %s28, 0
      %p285 = por %p283, %p284
      %p286 = scmp.ne.s32.totalorder %s274, %s275
      %p287 = scmp.eq.s32.totalorder %s29, 1
      %p288 = por %p286, %p287
      %p290 = scmp.ne.s32.totalorder %s275, %s289
      %p291 = scmp.eq.s32.totalorder %s29, 0
      %p292 = por %p290, %p291
      %s294 = sadd.s32 %s293, 1
      %p297 = scmp.eq.s32.totalorder %s23, 1
      %p298 = scmp.ne.s32.totalorder %s293, %s295
      %p299 = scmp.eq.s32.totalorder %s23, 0
      %p300 = por %p298, %p299
      %p301 = scmp.ne.s32.totalorder %s293, %s295
      %p302 = scmp.eq.s32.totalorder %s28, 1
      %p303 = por %p301, %p302
      %p304 = scmp.ne.s32.totalorder %s295, %s296
      %p305 = scmp.eq.s32.totalorder %s28, 0
      %p306 = por %p304, %p305
      %p307 = scmp.ne.s32.totalorder %s295, %s296
      %p308 = scmp.eq.s32.totalorder %s29, 1
      %p309 = por %p307, %p308
      %p311 = scmp.ne.s32.totalorder %s296, %s310
      %p312 = scmp.eq.s32.totalorder %s29, 0
      %p313 = por %p311, %p312
      %s315 = sadd.s32 %s314, 1
      %p318 = scmp.eq.s32.totalorder %s23, 1
      %p319 = scmp.ne.s32.totalorder %s314, %s316
      %p320 = scmp.eq.s32.totalorder %s23, 0
      %p321 = por %p319, %p320
      %p322 = scmp.ne.s32.totalorder %s314, %s316
      %p323 = scmp.eq.s32.totalorder %s28, 1
      %p324 = por %p322, %p323
      %p325 = scmp.ne.s32.totalorder %s316, %s317
      %p326 = scmp.eq.s32.totalorder %s28, 0
      %p327 = por %p325, %p326
      %p328 = scmp.ne.s32.totalorder %s316, %s317
      %p329 = scmp.eq.s32.totalorder %s29, 1
      %p330 = por %p328, %p329
      %p332 = scmp.ne.s32.totalorder %s317, %s331
      %p333 = scmp.eq.s32.totalorder %s29, 0
      %p334 = por %p332, %p333
      %s335 = ssub.s32 %s23, %s30
      %p336 = scmp.eq.s32.totalorder %s335, 0
      %s338 = sadd.s32 %s337, 1
      %s339 = scalar_select %p336, %s337, %s338
      %p342 = pneg %p336
      %p343 = scmp.eq.s32.totalorder %s23, 1
      %p344 = por %p342, %p343
      %p345 = scmp.ne.s32.totalorder %s337, %s340
      %p346 = scmp.eq.s32.totalorder %s23, 0
      %p347 = por %p345, %p346
      %p348 = scmp.ne.s32.totalorder %s337, %s340
      %p349 = scmp.eq.s32.totalorder %s28, 1
      %p350 = por %p348, %p349
      %p351 = scmp.ne.s32.totalorder %s340, %s341
      %p352 = scmp.eq.s32.totalorder %s28, 0
      %p353 = por %p351, %p352
      %p354 = scmp.ne.s32.totalorder %s340, %s341
      %p355 = scmp.eq.s32.totalorder %s29, 1
      %p356 = por %p354, %p355
      %p358 = scmp.ne.s32.totalorder %s341, %s357
      %p359 = scmp.eq.s32.totalorder %s29, 0
      %p360 = por %p358, %p359
      %p361 = scmp.le.s32.totalorder 1, %s23
      %p362 = scmp.lt.s32.totalorder %s23, 3
      %p363 = pnand %p361, %p362
      %p364 = pneg %p363
      // Predicated region
      $region9: #{graph_bert_encoder.5} parent=5 // pred_check
        _
      $region10: #{graph_bert_encoder.5} parent=5 // pred_check_branch
        %366 = sbr.rel (%p363) target = $region12
      $region11: #{graph_bert_encoder.5} parent=5 // pred_region
        %s367 = ssub.s32 %s23, 1
        // Predicated region
        $region13: #{graph_bert_encoder.5} parent=11 // pred_check
          %p368 = pneg %p96
        $region14: #{graph_bert_encoder.5} parent=11 // pred_check_branch
          %370 = sbr.rel (%p368) target = $region16
        $region15: #{graph_bert_encoder.5} parent=11 // pred_region
          _
        $region16: #{graph_bert_encoder.5} parent=11 // pred_fallthru
          _
        // Predicated region
        $region17: #{graph_bert_encoder.5} parent=11 // pred_check
          %p371 = pneg %p117
        $region18: #{graph_bert_encoder.5} parent=11 // pred_check_branch
          %373 = sbr.rel (%p371) target = $region20
        $region19: #{graph_bert_encoder.5} parent=11 // pred_region
          _
        $region20: #{graph_bert_encoder.5} parent=11 // pred_fallthru
          _
        // Predicated region
        $region21: #{graph_bert_encoder.5} parent=11 // pred_check
          %p374 = pneg %p138
        $region22: #{graph_bert_encoder.5} parent=11 // pred_check_branch
          %376 = sbr.rel (%p374) target = $region24
        $region23: #{graph_bert_encoder.5} parent=11 // pred_region
          _
        $region24: #{graph_bert_encoder.5} parent=11 // pred_fallthru
          _
        // Predicated region
        $region25: #{graph_bert_encoder.5} parent=11 // pred_check
          %p377 = pneg %p159
        $region26: #{graph_bert_encoder.5} parent=11 // pred_check_branch
          %379 = sbr.rel (%p377) target = $region28
        $region27: #{graph_bert_encoder.5} parent=11 // pred_region
          _
        $region28: #{graph_bert_encoder.5} parent=11 // pred_fallthru
          _
        // Predicated region
        $region29: #{graph_bert_encoder.5} parent=11 // pred_check
          %p380 = pneg %p180
        $region30: #{graph_bert_encoder.5} parent=11 // pred_check_branch
          %382 = sbr.rel (%p380) target = $region32
        $region31: #{graph_bert_encoder.5} parent=11 // pred_region
          _
        $region32: #{graph_bert_encoder.5} parent=11 // pred_fallthru
          _
        // Predicated region
        $region33: #{graph_bert_encoder.5} parent=11 // pred_check
          %p383 = pneg %p201
        $region34: #{graph_bert_encoder.5} parent=11 // pred_check_branch
          %385 = sbr.rel (%p383) target = $region36
        $region35: #{graph_bert_encoder.5} parent=11 // pred_region
          _
        $region36: #{graph_bert_encoder.5} parent=11 // pred_fallthru
          _
        // Predicated region
        $region37: #{graph_bert_encoder.5} parent=11 // pred_check
          %p386 = pneg %p222
        $region38: #{graph_bert_encoder.5} parent=11 // pred_check_branch
          %388 = sbr.rel (%p386) target = $region40
        $region39: #{graph_bert_encoder.5} parent=11 // pred_region
          _
        $region40: #{graph_bert_encoder.5} parent=11 // pred_fallthru
          _
        // Predicated region
        $region41: #{graph_bert_encoder.5} parent=11 // pred_check
          %p389 = pneg %p243
        $region42: #{graph_bert_encoder.5} parent=11 // pred_check_branch
          %391 = sbr.rel (%p389) target = $region44
        $region43: #{graph_bert_encoder.5} parent=11 // pred_region
          _
        $region44: #{graph_bert_encoder.5} parent=11 // pred_fallthru
          _
        // Predicated region
        $region45: #{graph_bert_encoder.5} parent=11 // pred_check
          %p392 = pneg %p264
        $region46: #{graph_bert_encoder.5} parent=11 // pred_check_branch
          %394 = sbr.rel (%p392) target = $region48
        $region47: #{graph_bert_encoder.5} parent=11 // pred_region
          _
        $region48: #{graph_bert_encoder.5} parent=11 // pred_fallthru
          _
        // Predicated region
        $region49: #{graph_bert_encoder.5} parent=11 // pred_check
          %p395 = pneg %p285
        $region50: #{graph_bert_encoder.5} parent=11 // pred_check_branch
          %397 = sbr.rel (%p395) target = $region52
        $region51: #{graph_bert_encoder.5} parent=11 // pred_region
          _
        $region52: #{graph_bert_encoder.5} parent=11 // pred_fallthru
          _
        // Predicated region
        $region53: #{graph_bert_encoder.5} parent=11 // pred_check
          %p398 = pneg %p306
        $region54: #{graph_bert_encoder.5} parent=11 // pred_check_branch
          %400 = sbr.rel (%p398) target = $region56
        $region55: #{graph_bert_encoder.5} parent=11 // pred_region
          _
        $region56: #{graph_bert_encoder.5} parent=11 // pred_fallthru
          _
        // Predicated region
        $region57: #{graph_bert_encoder.5} parent=11 // pred_check
          %p401 = pneg %p327
        $region58: #{graph_bert_encoder.5} parent=11 // pred_check_branch
          %403 = sbr.rel (%p401) target = $region60
        $region59: #{graph_bert_encoder.5} parent=11 // pred_region
          _
        $region60: #{graph_bert_encoder.5} parent=11 // pred_fallthru
          _
      $region12: #{graph_bert_encoder.5} parent=5 // pred_fallthru
        _
      %p404 = scmp.lt.s32.totalorder %s23, 2
      // Predicated region
      $region61: #{graph_bert_encoder.5} parent=5 // pred_check
        %p405 = pneg %p404
      $region62: #{graph_bert_encoder.5} parent=5 // pred_check_branch
        %407 = sbr.rel (%p405) target = $region64
      $region63: #{graph_bert_encoder.5} parent=5 // pred_region
        // Predicated region
        $region65: #{graph_bert_encoder.5} parent=63 // pred_check
          %p408 = pneg %p43
        $region66: #{graph_bert_encoder.5} parent=63 // pred_check_branch
          %410 = sbr.rel (%p408) target = $region68
        $region67: #{graph_bert_encoder.5} parent=63 // pred_region
          %s411 = smul.u32 4, %s23
          %p412 = scmp.lt.s32.totalorder %s411, 7
          %s413 = scalar_select %p412, %s411, 7
          %s414 = smul.addr %s413, 8
          %s415 = scalar_lea.vmem %s0, %s414
          %s416 = smul.u32 4, %s23
        $region68: #{graph_bert_encoder.5} parent=63 // pred_fallthru
          _
        // Predicated region
        $region69: #{graph_bert_encoder.5} parent=63 // pred_check
          %p417 = pneg %p69
        $region70: #{graph_bert_encoder.5} parent=63 // pred_check_branch
          %419 = sbr.rel (%p417) target = $region72
        $region71: #{graph_bert_encoder.5} parent=63 // pred_region
          %s420 = smul.u32 4, %s23
          %p421 = scmp.lt.s32.totalorder %s420, 7
          %s422 = scalar_select %p421, %s420, 7
          %s423 = scalar_lea.vmem %s1, %s422
          %s424 = smul.u32 4, %s23
        $region72: #{graph_bert_encoder.5} parent=63 // pred_fallthru
          _
      $region64: #{graph_bert_encoder.5} parent=5 // pred_fallthru
        _
      %p425 = scmp.le.s32.totalorder 1, %s23
      %p426 = scmp.lt.s32.totalorder %s23, 3
      %p427 = pnand %p425, %p426
      %p428 = pneg %p427
      // Predicated region
      $region73: #{graph_bert_encoder.5} parent=5 // pred_check
        _
      $region74: #{graph_bert_encoder.5} parent=5 // pred_check_branch
        %430 = sbr.rel (%p427) target = $region76
      $region75: #{graph_bert_encoder.5} parent=5 // pred_region
        %s431 = ssub.s32 %s23, 1
        %s432 = smul.u32 4, %s28
        %p433 = scmp.lt.s32.totalorder %s432, 7
        %s434 = scalar_select %p433, %s432, 7
        %s435 = smul.addr %s434, 8
        %s436 = scalar_lea.vmem %s0, %s435
        %p437 = pneg %p49
        %p438 = pneg %p46
        %s439 = smul.u32 4, %s28
        %p440 = scmp.lt.s32.totalorder %s439, 7
        %s441 = scalar_select %p440, %s439, 7
        %s442 = scalar_lea.vmem %s1, %s441
        %p443 = pneg %p75
        %p444 = pneg %p72
        %p445 = pneg %p96
        %p446 = pneg %p93
        %p447 = pneg %p117
        %p448 = pneg %p114
        %p449 = pneg %p138
        %p450 = pneg %p135
        %p451 = pneg %p159
        %p452 = pneg %p156
        %p453 = pneg %p180
        %p454 = pneg %p177
        %p455 = pneg %p201
        %p456 = pneg %p198
        %p457 = pneg %p222
        %p458 = pneg %p219
        %p459 = pneg %p243
        %p460 = pneg %p240
        %p461 = pneg %p264
        %p462 = pneg %p261
        %p463 = pneg %p285
        %p464 = pneg %p282
        %p465 = pneg %p306
        %p466 = pneg %p303
        %p467 = pneg %p327
        %p468 = pneg %p324
        %p469 = pneg %p353
        %p470 = pneg %p350
        %s471 = sand.u32 %s340, 1
        %s472 = scalar_lea.sflag [#allocation3], %s471
        %s473 = sand.u32 %s340, 1
        %s474 = smul.addr %s473, 32
        %s475 = scalar_lea.vmem [#allocation2], %s474
        %s476 = smul.u32 4, %s28
        %p477 = scmp.lt.s32.totalorder %s476, 7
        %s478 = scalar_select %p477, %s476, 7
        %s479 = smul.addr %s478, 8
        %s480 = scalar_lea.vmem %s0, %s479
        %s481 = smul.u32 4, %s28
        %s482 = smul.u32 4, %s28
        %p483 = scmp.lt.s32.totalorder %s482, 7
        %s484 = scalar_select %p483, %s482, 7
        %s485 = scalar_lea.vmem %s1, %s484
        %s486 = smul.u32 4, %s28
        %s487 = smul.u32 4, %s28
        %v488 = vld [vmem:[%s480] sm:$0xff]
        %v489 = vld [vmem:[%s480 + $0x8] sm:$0xff]
        %v490 = vld [vmem:[%s480 + $0x10] sm:$0xff]
        %v491 = vld [vmem:[%s480 + $0x18] sm:$0xff]
        %v492 = vld [vmem:[%s485] sm:$0x1]
        %v493 = vld [vmem:[%s485 + $0x1] sm:$0x1]
        %v494 = vld [vmem:[%s485 + $0x2] sm:$0x1]
        %v495 = vld [vmem:[%s485 + $0x3] sm:$0x1]
        %v496 = vld [vmem:[%s2] sm:$0xff]
        %v497 = vld [vmem:[%s2 + $0x8] sm:$0xff]
        %v498 = vld [vmem:[%s2 + $0x10] sm:$0xff]
        %v499 = vld [vmem:[%s2 + $0x18] sm:$0xff]
        %v500 = vld [vmem:[%s3] sm:$0x1]
        %v502 = vlaneseq
        %v503 = vshrl.u32 %v502, 7
        %v504 = vsub.s32 0, %v503
        %v505 = vrot.slane %v500, %v504
        %vm507 = vcmask 261120
        %v509 = vsel %vm507, %v488, 0
        %v512 = vsel %vm507, %v489, 0
        %v515 = vsel %vm507, %v490, 0
        %v518 = vsel %vm507, %v491, 0
        %520 = vmatprep.subr.mxu0 0.0
        %521 = vmatpush1.msra.mxu0 %v496
        %522 = vmatprep.subr.mxu0 0.0
        %523 = vmatpush1.msra.mxu0 %v497
        %524 = vmatprep.subr.mxu0 0.0
        %525 = vmatpush1.msra.mxu0 %v498
        %526 = vmatprep.subr.mxu0 0.0
        %527 = vmatpush1.msra.mxu0 %v499
        %528 = vmatprep.subr.mxu0 0.0
        %529 = vmatpush1.msra.mxu0 0.0
        %530 = vmatprep.subr.mxu0 0.0
        %531 = vmatpush1.msra.mxu0 0.0
        %532 = vmatprep.subr.mxu0 0.0
        %533 = vmatpush1.msra.mxu0 0.0
        %534 = vmatprep.subr.mxu0 0.0
        %535 = vmatpush1.msra.mxu0 0.0
        %536 = vmatprep.subr.mxu0 0.0
        %537 = vmatpush1.msra.mxu0 0.0
        %538 = vmatprep.subr.mxu0 0.0
        %539 = vmatpush1.msra.mxu0 0.0
        %540 = vmatprep.subr.mxu0 0.0
        %541 = vmatpush1.msra.mxu0 0.0
        %542 = vmatprep.subr.mxu0 0.0
        %543 = vmatpush1.msra.mxu0 0.0
        %544 = vmatprep.subr.mxu0 0.0
        %545 = vmatpush1.msra.mxu0 0.0
        %546 = vmatprep.subr.mxu0 0.0
        %547 = vmatpush1.msra.mxu0 0.0
        %548 = vmatprep.subr.mxu0 0.0
        %549 = vmatpush1.msra.mxu0 0.0
        %550 = vmatprep.subr.mxu0 0.0
        %551 = vmatpush1.msra.mxu0 0.0
        %552 = vmatprep.subr.mxu0 0.0
        %553 = vmatpush1.msra.mxu0 0.0
        %554 = vmatprep.subr.mxu0 0.0
        %555 = vmatpush1.msra.mxu0 0.0
        %556 = vmatprep.subr.mxu0 0.0
        %557 = vmatpush1.msra.mxu0 0.0
        %558 = vmatprep.subr.mxu0 0.0
        %559 = vmatpush1.msra.mxu0 0.0
        %560 = vmatprep.subr.mxu0 0.0
        %561 = vmatpush1.msra.mxu0 0.0
        %562 = vmatprep.subr.mxu0 0.0
        %563 = vmatpush1.msra.mxu0 0.0
        %564 = vmatprep.subr.mxu0 0.0
        %565 = vmatpush1.msra.mxu0 0.0
        %566 = vmatprep.subr.mxu0 0.0
        %567 = vmatpush1.msra.mxu0 0.0
        %568 = vmatprep.subr.mxu0 0.0
        %569 = vmatpush1.msra.mxu0 0.0
        %570 = vmatprep.subr.mxu0 0.0
        %571 = vmatpush1.msra.mxu0 0.0
        %572 = vmatprep.subr.mxu0 0.0
        %573 = vmatpush1.msra.mxu0 0.0
        %574 = vmatprep.subr.mxu0 0.0
        %575 = vmatpush1.msra.mxu0 0.0
        %576 = vmatprep.subr.mxu0 0.0
        %577 = vmatpush1.msra.mxu0 0.0
        %578 = vmatprep.subr.mxu0 0.0
        %579 = vmatpush1.msra.mxu0 0.0
        %580 = vmatprep.subr.mxu0 0.0
        %581 = vmatpush1.msra.mxu0 0.0
        %582 = vmatprep.subr.mxu0 0.0
        %583 = vmatpush1.msra.mxu0 0.0
        %584 = vmatprep.mubr.f32.mxu0 0.0
        %585 = vmatmul.mubr.f32.gmra.mrb[0].mxu0 %v509
        %v586 = vpop.f32.mrb[0].mxu0
        %v587 = vadd.f32 %v505, %v586
        %v588 = vpop.f32.mrb[0].mxu0
        %589 = vmatprep.mubr.f32.mxu0 0.0
        %590 = vmatmul.mubr.f32.gmra.mrb[0].mxu0 %v512
        %v591 = vpop.f32.mrb[0].mxu0
        %v592 = vadd.f32 %v505, %v591
        %v593 = vpop.f32.mrb[0].mxu0
        %594 = vmatprep.mubr.f32.mxu0 0.0
        %595 = vmatmul.mubr.f32.gmra.mrb[0].mxu0 %v515
        %v596 = vpop.f32.mrb[0].mxu0
        %v597 = vadd.f32 %v505, %v596
        %v598 = vpop.f32.mrb[0].mxu0
        %599 = vmatprep.mubr.f32.mxu0 0.0
        %600 = vmatmul.mubr.f32.gmra.mrb[0].mxu0 %v518
        %v601 = vpop.f32.mrb[0].mxu0
        %v602 = vadd.f32 %v505, %v601
        %v603 = vpop.f32.mrb[0].mxu0
        %604 = vdwg.mxu0
        %606 = vrot.lane.b32.xlu0 %v587, 96
        %v607 = vpop.permute.xlu0 %606
        %vm608 = vcmask 130048
        %v609 = vsel %vm608, %v587, 0
        %v611 = vsel %vm608, %v607, 0
        %613 = vmatprep.subr.mxu0 0.0
        %614 = vmatpush1.xpose.msra.mxu0 %v611
        %615 = vmatprep.subr.mxu0 0.0
        %616 = vmatpush1.xpose.msra.mxu0 0.0
        %617 = vmatprep.subr.mxu0 0.0
        %618 = vmatpush1.xpose.msra.mxu0 0.0
        %619 = vmatprep.subr.mxu0 0.0
        %620 = vmatpush1.xpose.msra.mxu0 0.0
        %621 = vmatprep.subr.mxu0 0.0
        %622 = vmatpush1.xpose.msra.mxu0 0.0
        %623 = vmatprep.subr.mxu0 0.0
        %624 = vmatpush1.xpose.msra.mxu0 0.0
        %625 = vmatprep.subr.mxu0 0.0
        %626 = vmatpush1.xpose.msra.mxu0 0.0
        %627 = vmatprep.subr.mxu0 0.0
        %628 = vmatpush1.xpose.msra.mxu0 0.0
        %629 = vmatprep.subr.mxu0 0.0
        %630 = vmatpush1.xpose.msra.mxu0 0.0
        %631 = vmatprep.subr.mxu0 0.0
        %632 = vmatpush1.xpose.msra.mxu0 0.0
        %633 = vmatprep.subr.mxu0 0.0
        %634 = vmatpush1.xpose.msra.mxu0 0.0
        %635 = vmatprep.subr.mxu0 0.0
        %636 = vmatpush1.xpose.msra.mxu0 0.0
        %637 = vmatprep.subr.mxu0 0.0
        %638 = vmatpush1.xpose.msra.mxu0 0.0
        %639 = vmatprep.subr.mxu0 0.0
        %640 = vmatpush1.xpose.msra.mxu0 0.0
        %641 = vmatprep.subr.mxu0 0.0
        %642 = vmatpush1.xpose.msra.mxu0 0.0
        %643 = vmatprep.subr.mxu0 0.0
        %644 = vmatpush1.xpose.msra.mxu0 0.0
        %645 = vmatprep.subr.mxu0 0.0
        %646 = vmatpush1.xpose.msra.mxu0 0.0
        %647 = vmatprep.subr.mxu0 0.0
        %648 = vmatpush1.xpose.msra.mxu0 0.0
        %649 = vmatprep.subr.mxu0 0.0
        %650 = vmatpush1.xpose.msra.mxu0 0.0
        %651 = vmatprep.subr.mxu0 0.0
        %652 = vmatpush1.xpose.msra.mxu0 0.0
        %653 = vmatprep.subr.mxu0 0.0
        %654 = vmatpush1.xpose.msra.mxu0 0.0
        %655 = vmatprep.subr.mxu0 0.0
        %656 = vmatpush1.xpose.msra.mxu0 0.0
        %657 = vmatprep.subr.mxu0 0.0
        %658 = vmatpush1.xpose.msra.mxu0 0.0
        %659 = vmatprep.subr.mxu0 0.0
        %660 = vmatpush1.xpose.msra.mxu0 0.0
        %661 = vmatprep.subr.mxu0 0.0
        %662 = vmatpush1.xpose.msra.mxu0 0.0
        %663 = vmatprep.subr.mxu0 0.0
        %664 = vmatpush1.xpose.msra.mxu0 0.0
        %665 = vmatprep.subr.mxu0 0.0
        %666 = vmatpush1.xpose.msra.mxu0 0.0
        %667 = vmatprep.subr.mxu0 0.0
        %668 = vmatpush1.xpose.msra.mxu0 0.0
        %669 = vmatprep.subr.mxu0 0.0
        %670 = vmatpush1.xpose.msra.mxu0 0.0
        %671 = vmatprep.subr.mxu0 0.0
        %672 = vmatpush1.xpose.msra.mxu0 0.0
        %673 = vmatprep.subr.mxu0 0.0
        %674 = vmatpush1.xpose.msra.mxu0 0.0
        %675 = vmatprep.subr.mxu0 0.0
        %676 = vmatpush1.xpose.msra.mxu0 0.0
        %677 = vmatprep.mubr.f32.mxu0 0.0
        %678 = vmatmul.mubr.f32.gmra.mrb[0].mxu0 %v609
        %v679 = vpop.f32.mrb[0].mxu0
        %v680 = vadd.f32 0.0, %v679
        %v681 = vpop.f32.mrb[0].mxu0
        %682 = vdwg.mxu0
        %684 = vrot.lane.b32.xlu0 %v592, 96
        %v685 = vpop.permute.xlu0 %684
        %v686 = vsel %vm608, %v592, 0
        %v688 = vsel %vm608, %v685, 0
        %690 = vmatprep.subr.mxu0 0.0
        %691 = vmatpush1.xpose.msra.mxu0 %v688
        %692 = vmatprep.subr.mxu0 0.0
        %693 = vmatpush1.xpose.msra.mxu0 0.0
        %694 = vmatprep.subr.mxu0 0.0
        %695 = vmatpush1.xpose.msra.mxu0 0.0
        %696 = vmatprep.subr.mxu0 0.0
        %697 = vmatpush1.xpose.msra.mxu0 0.0
        %698 = vmatprep.subr.mxu0 0.0
        %699 = vmatpush1.xpose.msra.mxu0 0.0
        %700 = vmatprep.subr.mxu0 0.0
        %701 = vmatpush1.xpose.msra.mxu0 0.0
        %702 = vmatprep.subr.mxu0 0.0
        %703 = vmatpush1.xpose.msra.mxu0 0.0
        %704 = vmatprep.subr.mxu0 0.0
        %705 = vmatpush1.xpose.msra.mxu0 0.0
        %706 = vmatprep.subr.mxu0 0.0
        %707 = vmatpush1.xpose.msra.mxu0 0.0
        %708 = vmatprep.subr.mxu0 0.0
        %709 = vmatpush1.xpose.msra.mxu0 0.0
        %710 = vmatprep.subr.mxu0 0.0
        %711 = vmatpush1.xpose.msra.mxu0 0.0
        %712 = vmatprep.subr.mxu0 0.0
        %713 = vmatpush1.xpose.msra.mxu0 0.0
        %714 = vmatprep.subr.mxu0 0.0
        %715 = vmatpush1.xpose.msra.mxu0 0.0
        %716 = vmatprep.subr.mxu0 0.0
        %717 = vmatpush1.xpose.msra.mxu0 0.0
        %718 = vmatprep.subr.mxu0 0.0
        %719 = vmatpush1.xpose.msra.mxu0 0.0
        %720 = vmatprep.subr.mxu0 0.0
        %721 = vmatpush1.xpose.msra.mxu0 0.0
        %722 = vmatprep.subr.mxu0 0.0
        %723 = vmatpush1.xpose.msra.mxu0 0.0
        %724 = vmatprep.subr.mxu0 0.0
        %725 = vmatpush1.xpose.msra.mxu0 0.0
        %726 = vmatprep.subr.mxu0 0.0
        %727 = vmatpush1.xpose.msra.mxu0 0.0
        %728 = vmatprep.subr.mxu0 0.0
        %729 = vmatpush1.xpose.msra.mxu0 0.0
        %730 = vmatprep.subr.mxu0 0.0
        %731 = vmatpush1.xpose.msra.mxu0 0.0
        %732 = vmatprep.subr.mxu0 0.0
        %733 = vmatpush1.xpose.msra.mxu0 0.0
        %734 = vmatprep.subr.mxu0 0.0
        %735 = vmatpush1.xpose.msra.mxu0 0.0
        %736 = vmatprep.subr.mxu0 0.0
        %737 = vmatpush1.xpose.msra.mxu0 0.0
        %738 = vmatprep.subr.mxu0 0.0
        %739 = vmatpush1.xpose.msra.mxu0 0.0
        %740 = vmatprep.subr.mxu0 0.0
        %741 = vmatpush1.xpose.msra.mxu0 0.0
        %742 = vmatprep.subr.mxu0 0.0
        %743 = vmatpush1.xpose.msra.mxu0 0.0
        %744 = vmatprep.subr.mxu0 0.0
        %745 = vmatpush1.xpose.msra.mxu0 0.0
        %746 = vmatprep.subr.mxu0 0.0
        %747 = vmatpush1.xpose.msra.mxu0 0.0
        %748 = vmatprep.subr.mxu0 0.0
        %749 = vmatpush1.xpose.msra.mxu0 0.0
        %750 = vmatprep.subr.mxu0 0.0
        %751 = vmatpush1.xpose.msra.mxu0 0.0
        %752 = vmatprep.subr.mxu0 0.0
        %753 = vmatpush1.xpose.msra.mxu0 0.0
        %754 = vmatprep.mubr.f32.mxu0 0.0
        %755 = vmatmul.mubr.f32.gmra.mrb[0].mxu0 %v686
        %v756 = vpop.f32.mrb[0].mxu0
        %v757 = vadd.f32 0.0, %v756
        %v758 = vpop.f32.mrb[0].mxu0
        %759 = vdwg.mxu0
        %761 = vrot.lane.b32.xlu0 %v597, 96
        %v762 = vpop.permute.xlu0 %761
        %v763 = vsel %vm608, %v597, 0
        %v765 = vsel %vm608, %v762, 0
        %767 = vmatprep.subr.mxu0 0.0
        %768 = vmatpush1.xpose.msra.mxu0 %v765
        %769 = vmatprep.subr.mxu0 0.0
        %770 = vmatpush1.xpose.msra.mxu0 0.0
        %771 = vmatprep.subr.mxu0 0.0
        %772 = vmatpush1.xpose.msra.mxu0 0.0
        %773 = vmatprep.subr.mxu0 0.0
        %774 = vmatpush1.xpose.msra.mxu0 0.0
        %775 = vmatprep.subr.mxu0 0.0
        %776 = vmatpush1.xpose.msra.mxu0 0.0
        %777 = vmatprep.subr.mxu0 0.0
        %778 = vmatpush1.xpose.msra.mxu0 0.0
        %779 = vmatprep.subr.mxu0 0.0
        %780 = vmatpush1.xpose.msra.mxu0 0.0
        %781 = vmatprep.subr.mxu0 0.0
        %782 = vmatpush1.xpose.msra.mxu0 0.0
        %783 = vmatprep.subr.mxu0 0.0
        %784 = vmatpush1.xpose.msra.mxu0 0.0
        %785 = vmatprep.subr.mxu0 0.0
        %786 = vmatpush1.xpose.msra.mxu0 0.0
        %787 = vmatprep.subr.mxu0 0.0
        %788 = vmatpush1.xpose.msra.mxu0 0.0
        %789 = vmatprep.subr.mxu0 0.0
        %790 = vmatpush1.xpose.msra.mxu0 0.0
        %791 = vmatprep.subr.mxu0 0.0
        %792 = vmatpush1.xpose.msra.mxu0 0.0
        %793 = vmatprep.subr.mxu0 0.0
        %794 = vmatpush1.xpose.msra.mxu0 0.0
        %795 = vmatprep.subr.mxu0 0.0
        %796 = vmatpush1.xpose.msra.mxu0 0.0
        %797 = vmatprep.subr.mxu0 0.0
        %798 = vmatpush1.xpose.msra.mxu0 0.0
        %799 = vmatprep.subr.mxu0 0.0
        %800 = vmatpush1.xpose.msra.mxu0 0.0
        %801 = vmatprep.subr.mxu0 0.0
        %802 = vmatpush1.xpose.msra.mxu0 0.0
        %803 = vmatprep.subr.mxu0 0.0
        %804 = vmatpush1.xpose.msra.mxu0 0.0
        %805 = vmatprep.subr.mxu0 0.0
        %806 = vmatpush1.xpose.msra.mxu0 0.0
        %807 = vmatprep.subr.mxu0 0.0
        %808 = vmatpush1.xpose.msra.mxu0 0.0
        %809 = vmatprep.subr.mxu0 0.0
        %810 = vmatpush1.xpose.msra.mxu0 0.0
        %811 = vmatprep.subr.mxu0 0.0
        %812 = vmatpush1.xpose.msra.mxu0 0.0
        %813 = vmatprep.subr.mxu0 0.0
        %814 = vmatpush1.xpose.msra.mxu0 0.0
        %815 = vmatprep.subr.mxu0 0.0
        %816 = vmatpush1.xpose.msra.mxu0 0.0
        %817 = vmatprep.subr.mxu0 0.0
        %818 = vmatpush1.xpose.msra.mxu0 0.0
        %819 = vmatprep.subr.mxu0 0.0
        %820 = vmatpush1.xpose.msra.mxu0 0.0
        %821 = vmatprep.subr.mxu0 0.0
        %822 = vmatpush1.xpose.msra.mxu0 0.0
        %823 = vmatprep.subr.mxu0 0.0
        %824 = vmatpush1.xpose.msra.mxu0 0.0
        %825 = vmatprep.subr.mxu0 0.0
        %826 = vmatpush1.xpose.msra.mxu0 0.0
        %827 = vmatprep.subr.mxu0 0.0
        %828 = vmatpush1.xpose.msra.mxu0 0.0
        %829 = vmatprep.subr.mxu0 0.0
        %830 = vmatpush1.xpose.msra.mxu0 0.0
        %831 = vmatprep.mubr.f32.mxu0 0.0
        %832 = vmatmul.mubr.f32.gmra.mrb[0].mxu0 %v763
        %v833 = vpop.f32.mrb[0].mxu0
        %v834 = vadd.f32 0.0, %v833
        %v835 = vpop.f32.mrb[0].mxu0
        %836 = vdwg.mxu0
        %838 = vrot.lane.b32.xlu0 %v602, 96
        %v839 = vpop.permute.xlu0 %838
        %v840 = vsel %vm608, %v602, 0
        %v842 = vsel %vm608, %v839, 0
        %844 = vmatprep.subr.mxu0 0.0
        %845 = vmatpush1.xpose.msra.mxu0 %v842
        %846 = vmatprep.subr.mxu0 0.0
        %847 = vmatpush1.xpose.msra.mxu0 0.0
        %848 = vmatprep.subr.mxu0 0.0
        %849 = vmatpush1.xpose.msra.mxu0 0.0
        %850 = vmatprep.subr.mxu0 0.0
        %851 = vmatpush1.xpose.msra.mxu0 0.0
        %852 = vmatprep.subr.mxu0 0.0
        %853 = vmatpush1.xpose.msra.mxu0 0.0
        %854 = vmatprep.subr.mxu0 0.0
        %855 = vmatpush1.xpose.msra.mxu0 0.0
        %856 = vmatprep.subr.mxu0 0.0
        %857 = vmatpush1.xpose.msra.mxu0 0.0
        %858 = vmatprep.subr.mxu0 0.0
        %859 = vmatpush1.xpose.msra.mxu0 0.0
        %860 = vmatprep.subr.mxu0 0.0
        %861 = vmatpush1.xpose.msra.mxu0 0.0
        %862 = vmatprep.subr.mxu0 0.0
        %863 = vmatpush1.xpose.msra.mxu0 0.0
        %864 = vmatprep.subr.mxu0 0.0
        %865 = vmatpush1.xpose.msra.mxu0 0.0
        %866 = vmatprep.subr.mxu0 0.0
        %867 = vmatpush1.xpose.msra.mxu0 0.0
        %868 = vmatprep.subr.mxu0 0.0
        %869 = vmatpush1.xpose.msra.mxu0 0.0
        %870 = vmatprep.subr.mxu0 0.0
        %871 = vmatpush1.xpose.msra.mxu0 0.0
        %872 = vmatprep.subr.mxu0 0.0
        %873 = vmatpush1.xpose.msra.mxu0 0.0
        %874 = vmatprep.subr.mxu0 0.0
        %875 = vmatpush1.xpose.msra.mxu0 0.0
        %876 = vmatprep.subr.mxu0 0.0
        %877 = vmatpush1.xpose.msra.mxu0 0.0
        %878 = vmatprep.subr.mxu0 0.0
        %879 = vmatpush1.xpose.msra.mxu0 0.0
        %880 = vmatprep.subr.mxu0 0.0
        %881 = vmatpush1.xpose.msra.mxu0 0.0
        %882 = vmatprep.subr.mxu0 0.0
        %883 = vmatpush1.xpose.msra.mxu0 0.0
        %884 = vmatprep.subr.mxu0 0.0
        %885 = vmatpush1.xpose.msra.mxu0 0.0
        %886 = vmatprep.subr.mxu0 0.0
        %887 = vmatpush1.xpose.msra.mxu0 0.0
        %888 = vmatprep.subr.mxu0 0.0
        %889 = vmatpush1.xpose.msra.mxu0 0.0
        %890 = vmatprep.subr.mxu0 0.0
        %891 = vmatpush1.xpose.msra.mxu0 0.0
        %892 = vmatprep.subr.mxu0 0.0
        %893 = vmatpush1.xpose.msra.mxu0 0.0
        %894 = vmatprep.subr.mxu0 0.0
        %895 = vmatpush1.xpose.msra.mxu0 0.0
        %896 = vmatprep.subr.mxu0 0.0
        %897 = vmatpush1.xpose.msra.mxu0 0.0
        %898 = vmatprep.subr.mxu0 0.0
        %899 = vmatpush1.xpose.msra.mxu0 0.0
        %900 = vmatprep.subr.mxu0 0.0
        %901 = vmatpush1.xpose.msra.mxu0 0.0
        %902 = vmatprep.subr.mxu0 0.0
        %903 = vmatpush1.xpose.msra.mxu0 0.0
        %904 = vmatprep.subr.mxu0 0.0
        %905 = vmatpush1.xpose.msra.mxu0 0.0
        %906 = vmatprep.subr.mxu0 0.0
        %907 = vmatpush1.xpose.msra.mxu0 0.0
        %908 = vmatprep.mubr.f32.mxu0 0.0
        %909 = vmatmul.mubr.f32.gmra.mrb[0].mxu0 %v840
        %v910 = vpop.f32.mrb[0].mxu0
        %v911 = vadd.f32 0.0, %v910
        %v912 = vpop.f32.mrb[0].mxu0
        %913 = vdwg.mxu0
        %v914 = vmul.f32 %v680, 0.25
        %v915 = vmul.f32 %v757, 0.25
        %v916 = vmul.f32 %v834, 0.25
        %v917 = vmul.f32 %v911, 0.25
        %v922 = vlaneseq
        %v923 = vshrl.u32 %v922, 7
        %v924 = vsub.s32 0, %v923
        %v925 = vrot.slane %v492, %v924
        %v926 = vlaneseq
        %v927 = vshrl.u32 %v926, 7
        %v928 = vsub.s32 0, %v927
        %v929 = vrot.slane %v493, %v928
        %v930 = vlaneseq
        %v931 = vshrl.u32 %v930, 7
        %v932 = vsub.s32 0, %v931
        %v933 = vrot.slane %v494, %v932
        %v934 = vlaneseq
        %v935 = vshrl.u32 %v934, 7
        %v936 = vsub.s32 0, %v935
        %v937 = vrot.slane %v495, %v936
        %v942 = vadd.f32 %v914, %v925
        %v943 = vadd.f32 %v915, %v929
        %v944 = vadd.f32 %v916, %v933
        %v945 = vadd.f32 %v917, %v937
        %vm946 = vcmask 64512
        %v947 = vsel %vm946, %v942, -inf
        %948 = vmax.xlane.f32.xlu0 %v947
        %v949 = vpop.xlane.xlu0 %948
        %v950 = vsel %vm946, %v943, -inf
        %951 = vmax.xlane.f32.xlu0 %v950
        %v952 = vpop.xlane.xlu0 %951
        %v953 = vsel %vm946, %v944, -inf
        %954 = vmax.xlane.f32.xlu0 %v953
        %v955 = vpop.xlane.xlu0 %954
        %v956 = vsel %vm946, %v945, -inf
        %957 = vmax.xlane.f32.xlu0 %v956
        %v958 = vpop.xlane.xlu0 %957
        %v959 = vsub.f32 %v942, %v949
        %v960 = vsub.f32 %v943, %v952
        %v961 = vsub.f32 %v944, %v955
        %v962 = vsub.f32 %v945, %v958
        %v963 = vmul.f32 %v959, 1.442695
        %v964 = vpow.pop %v963
        %v965 = vmul.f32 %v960, 1.442695
        %v966 = vpow.pop %v965
        %v967 = vmul.f32 %v961, 1.442695
        %v968 = vpow.pop %v967
        %v969 = vmul.f32 %v962, 1.442695
        %v970 = vpow.pop %v969
        %v971 = vsel %vm946, %v964, 0.0
        %972 = vadd.xlane.f32.xlu0 %v971
        %v973 = vpop.xlane.xlu0 %972
        %v974 = vsel %vm946, %v966, 0.0
        %975 = vadd.xlane.f32.xlu0 %v974
        %v976 = vpop.xlane.xlu0 %975
        %v977 = vsel %vm946, %v968, 0.0
        %978 = vadd.xlane.f32.xlu0 %v977
        %v979 = vpop.xlane.xlu0 %978
        %v980 = vsel %vm946, %v970, 0.0
        %981 = vadd.xlane.f32.xlu0 %v980
        %v982 = vpop.xlane.xlu0 %981
        %v983 = vrcp.pop %v973
        %v984 = vmul.f32 %v964, %v983
        %v985 = vrcp.pop %v976
        %v986 = vmul.f32 %v966, %v985
        %v987 = vrcp.pop %v979
        %v988 = vmul.f32 %v968, %v987
        %v989 = vrcp.pop %v982
        %v990 = vmul.f32 %v970, %v989
        %991 = vrot.lane.b32.xlu0 %v587, 64
        %v992 = vpop.permute.xlu0 %991
        %v995 = vsel %vm946, %v984, 0
        %997 = vmatprep.subr.mxu0 0.0
        %998 = vmatpush1.msra.mxu0 %v992
        %999 = vmatprep.subr.mxu0 0.0
        %1000 = vmatpush1.msra.mxu0 0.0
        %1001 = vmatprep.subr.mxu0 0.0
        %1002 = vmatpush1.msra.mxu0 0.0
        %1003 = vmatprep.subr.mxu0 0.0
        %1004 = vmatpush1.msra.mxu0 0.0
        %1005 = vmatprep.subr.mxu0 0.0
        %1006 = vmatpush1.msra.mxu0 0.0
        %1007 = vmatprep.subr.mxu0 0.0
        %1008 = vmatpush1.msra.mxu0 0.0
        %1009 = vmatprep.subr.mxu0 0.0
        %1010 = vmatpush1.msra.mxu0 0.0
        %1011 = vmatprep.subr.mxu0 0.0
        %1012 = vmatpush1.msra.mxu0 0.0
        %1013 = vmatprep.subr.mxu0 0.0
        %1014 = vmatpush1.msra.mxu0 0.0
        %1015 = vmatprep.subr.mxu0 0.0
        %1016 = vmatpush1.msra.mxu0 0.0
        %1017 = vmatprep.subr.mxu0 0.0
        %1018 = vmatpush1.msra.mxu0 0.0
        %1019 = vmatprep.subr.mxu0 0.0
        %1020 = vmatpush1.msra.mxu0 0.0
        %1021 = vmatprep.subr.mxu0 0.0
        %1022 = vmatpush1.msra.mxu0 0.0
        %1023 = vmatprep.subr.mxu0 0.0
        %1024 = vmatpush1.msra.mxu0 0.0
        %1025 = vmatprep.subr.mxu0 0.0
        %1026 = vmatpush1.msra.mxu0 0.0
        %1027 = vmatprep.subr.mxu0 0.0
        %1028 = vmatpush1.msra.mxu0 0.0
        %1029 = vmatprep.subr.mxu0 0.0
        %1030 = vmatpush1.msra.mxu0 0.0
        %1031 = vmatprep.subr.mxu0 0.0
        %1032 = vmatpush1.msra.mxu0 0.0
        %1033 = vmatprep.subr.mxu0 0.0
        %1034 = vmatpush1.msra.mxu0 0.0
        %1035 = vmatprep.subr.mxu0 0.0
        %1036 = vmatpush1.msra.mxu0 0.0
        %1037 = vmatprep.subr.mxu0 0.0
        %1038 = vmatpush1.msra.mxu0 0.0
        %1039 = vmatprep.subr.mxu0 0.0
        %1040 = vmatpush1.msra.mxu0 0.0
        %1041 = vmatprep.subr.mxu0 0.0
        %1042 = vmatpush1.msra.mxu0 0.0
        %1043 = vmatprep.subr.mxu0 0.0
        %1044 = vmatpush1.msra.mxu0 0.0
        %1045 = vmatprep.subr.mxu0 0.0
        %1046 = vmatpush1.msra.mxu0 0.0
        %1047 = vmatprep.subr.mxu0 0.0
        %1048 = vmatpush1.msra.mxu0 0.0
        %1049 = vmatprep.subr.mxu0 0.0
        %1050 = vmatpush1.msra.mxu0 0.0
        %1051 = vmatprep.subr.mxu0 0.0
        %1052 = vmatpush1.msra.mxu0 0.0
        %1053 = vmatprep.subr.mxu0 0.0
        %1054 = vmatpush1.msra.mxu0 0.0
        %1055 = vmatprep.subr.mxu0 0.0
        %1056 = vmatpush1.msra.mxu0 0.0
        %1057 = vmatprep.subr.mxu0 0.0
        %1058 = vmatpush1.msra.mxu0 0.0
        %1059 = vmatprep.subr.mxu0 0.0
        %1060 = vmatpush1.msra.mxu0 0.0
        %1061 = vmatprep.mubr.f32.mxu0 0.0
        %1062 = vmatmul.mubr.f32.gmra.mrb[0].mxu0 %v995
        %v1063 = vpop.f32.mrb[0].mxu0
        %v1064 = vadd.f32 0.0, %v1063
        %v1065 = vpop.f32.mrb[0].mxu0
        %1066 = vdwg.mxu0
        %1067 = vrot.lane.b32.xlu0 %v592, 64
        %v1068 = vpop.permute.xlu0 %1067
        %v1071 = vsel %vm946, %v986, 0
        %1073 = vmatprep.subr.mxu0 0.0
        %1074 = vmatpush1.msra.mxu0 %v1068
        %1075 = vmatprep.subr.mxu0 0.0
        %1076 = vmatpush1.msra.mxu0 0.0
        %1077 = vmatprep.subr.mxu0 0.0
        %1078 = vmatpush1.msra.mxu0 0.0
        %1079 = vmatprep.subr.mxu0 0.0
        %1080 = vmatpush1.msra.mxu0 0.0
        %1081 = vmatprep.subr.mxu0 0.0
        %1082 = vmatpush1.msra.mxu0 0.0
        %1083 = vmatprep.subr.mxu0 0.0
        %1084 = vmatpush1.msra.mxu0 0.0
        %1085 = vmatprep.subr.mxu0 0.0
        %1086 = vmatpush1.msra.mxu0 0.0
        %1087 = vmatprep.subr.mxu0 0.0
        %1088 = vmatpush1.msra.mxu0 0.0
        %1089 = vmatprep.subr.mxu0 0.0
        %1090 = vmatpush1.msra.mxu0 0.0
        %1091 = vmatprep.subr.mxu0 0.0
        %1092 = vmatpush1.msra.mxu0 0.0
        %1093 = vmatprep.subr.mxu0 0.0
        %1094 = vmatpush1.msra.mxu0 0.0
        %1095 = vmatprep.subr.mxu0 0.0
        %1096 = vmatpush1.msra.mxu0 0.0
        %1097 = vmatprep.subr.mxu0 0.0
        %1098 = vmatpush1.msra.mxu0 0.0
        %1099 = vmatprep.subr.mxu0 0.0
        %1100 = vmatpush1.msra.mxu0 0.0
        %1101 = vmatprep.subr.mxu0 0.0
        %1102 = vmatpush1.msra.mxu0 0.0
        %1103 = vmatprep.subr.mxu0 0.0
        %1104 = vmatpush1.msra.mxu0 0.0
        %1105 = vmatprep.subr.mxu0 0.0
        %1106 = vmatpush1.msra.mxu0 0.0
        %1107 = vmatprep.subr.mxu0 0.0
        %1108 = vmatpush1.msra.mxu0 0.0
        %1109 = vmatprep.subr.mxu0 0.0
        %1110 = vmatpush1.msra.mxu0 0.0
        %1111 = vmatprep.subr.mxu0 0.0
        %1112 = vmatpush1.msra.mxu0 0.0
        %1113 = vmatprep.subr.mxu0 0.0
        %1114 = vmatpush1.msra.mxu0 0.0
        %1115 = vmatprep.subr.mxu0 0.0
        %1116 = vmatpush1.msra.mxu0 0.0
        %1117 = vmatprep.subr.mxu0 0.0
        %1118 = vmatpush1.msra.mxu0 0.0
        %1119 = vmatprep.subr.mxu0 0.0
        %1120 = vmatpush1.msra.mxu0 0.0
        %1121 = vmatprep.subr.mxu0 0.0
        %1122 = vmatpush1.msra.mxu0 0.0
        %1123 = vmatprep.subr.mxu0 0.0
        %1124 = vmatpush1.msra.mxu0 0.0
        %1125 = vmatprep.subr.mxu0 0.0
        %1126 = vmatpush1.msra.mxu0 0.0
        %1127 = vmatprep.subr.mxu0 0.0
        %1128 = vmatpush1.msra.mxu0 0.0
        %1129 = vmatprep.subr.mxu0 0.0
        %1130 = vmatpush1.msra.mxu0 0.0
        %1131 = vmatprep.subr.mxu0 0.0
        %1132 = vmatpush1.msra.mxu0 0.0
        %1133 = vmatprep.subr.mxu0 0.0
        %1134 = vmatpush1.msra.mxu0 0.0
        %1135 = vmatprep.subr.mxu0 0.0
        %1136 = vmatpush1.msra.mxu0 0.0
        %1137 = vmatprep.mubr.f32.mxu0 0.0
        %1138 = vmatmul.mubr.f32.gmra.mrb[0].mxu0 %v1071
        %v1139 = vpop.f32.mrb[0].mxu0
        %v1140 = vadd.f32 0.0, %v1139
        %v1141 = vpop.f32.mrb[0].mxu0
        %1142 = vdwg.mxu0
        %1143 = vrot.lane.b32.xlu0 %v597, 64
        %v1144 = vpop.permute.xlu0 %1143
        %v1147 = vsel %vm946, %v988, 0
        %1149 = vmatprep.subr.mxu0 0.0
        %1150 = vmatpush1.msra.mxu0 %v1144
        %1151 = vmatprep.subr.mxu0 0.0
        %1152 = vmatpush1.msra.mxu0 0.0
        %1153 = vmatprep.subr.mxu0 0.0
        %1154 = vmatpush1.msra.mxu0 0.0
        %1155 = vmatprep.subr.mxu0 0.0
        %1156 = vmatpush1.msra.mxu0 0.0
        %1157 = vmatprep.subr.mxu0 0.0
        %1158 = vmatpush1.msra.mxu0 0.0
        %1159 = vmatprep.subr.mxu0 0.0
        %1160 = vmatpush1.msra.mxu0 0.0
        %1161 = vmatprep.subr.mxu0 0.0
        %1162 = vmatpush1.msra.mxu0 0.0
        %1163 = vmatprep.subr.mxu0 0.0
        %1164 = vmatpush1.msra.mxu0 0.0
        %1165 = vmatprep.subr.mxu0 0.0
        %1166 = vmatpush1.msra.mxu0 0.0
        %1167 = vmatprep.subr.mxu0 0.0
        %1168 = vmatpush1.msra.mxu0 0.0
        %1169 = vmatprep.subr.mxu0 0.0
        %1170 = vmatpush1.msra.mxu0 0.0
        %1171 = vmatprep.subr.mxu0 0.0
        %1172 = vmatpush1.msra.mxu0 0.0
        %1173 = vmatprep.subr.mxu0 0.0
        %1174 = vmatpush1.msra.mxu0 0.0
        %1175 = vmatprep.subr.mxu0 0.0
        %1176 = vmatpush1.msra.mxu0 0.0
        %1177 = vmatprep.subr.mxu0 0.0
        %1178 = vmatpush1.msra.mxu0 0.0
        %1179 = vmatprep.subr.mxu0 0.0
        %1180 = vmatpush1.msra.mxu0 0.0
        %1181 = vmatprep.subr.mxu0 0.0
        %1182 = vmatpush1.msra.mxu0 0.0
        %1183 = vmatprep.subr.mxu0 0.0
        %1184 = vmatpush1.msra.mxu0 0.0
        %1185 = vmatprep.subr.mxu0 0.0
        %1186 = vmatpush1.msra.mxu0 0.0
        %1187 = vmatprep.subr.mxu0 0.0
        %1188 = vmatpush1.msra.mxu0 0.0
        %1189 = vmatprep.subr.mxu0 0.0
        %1190 = vmatpush1.msra.mxu0 0.0
        %1191 = vmatprep.subr.mxu0 0.0
        %1192 = vmatpush1.msra.mxu0 0.0
        %1193 = vmatprep.subr.mxu0 0.0
        %1194 = vmatpush1.msra.mxu0 0.0
        %1195 = vmatprep.subr.mxu0 0.0
        %1196 = vmatpush1.msra.mxu0 0.0
        %1197 = vmatprep.subr.mxu0 0.0
        %1198 = vmatpush1.msra.mxu0 0.0
        %1199 = vmatprep.subr.mxu0 0.0
        %1200 = vmatpush1.msra.mxu0 0.0
        %1201 = vmatprep.subr.mxu0 0.0
        %1202 = vmatpush1.msra.mxu0 0.0
        %1203 = vmatprep.subr.mxu0 0.0
        %1204 = vmatpush1.msra.mxu0 0.0
        %1205 = vmatprep.subr.mxu0 0.0
        %1206 = vmatpush1.msra.mxu0 0.0
        %1207 = vmatprep.subr.mxu0 0.0
        %1208 = vmatpush1.msra.mxu0 0.0
        %1209 = vmatprep.subr.mxu0 0.0
        %1210 = vmatpush1.msra.mxu0 0.0
        %1211 = vmatprep.subr.mxu0 0.0
        %1212 = vmatpush1.msra.mxu0 0.0
        %1213 = vmatprep.mubr.f32.mxu0 0.0
        %1214 = vmatmul.mubr.f32.gmra.mrb[0].mxu0 %v1147
        %v1215 = vpop.f32.mrb[0].mxu0
        %v1216 = vadd.f32 0.0, %v1215
        %v1217 = vpop.f32.mrb[0].mxu0
        %1218 = vdwg.mxu0
        %1219 = vrot.lane.b32.xlu0 %v602, 64
        %v1220 = vpop.permute.xlu0 %1219
        %v1223 = vsel %vm946, %v990, 0
        %1225 = vmatprep.subr.mxu0 0.0
        %1226 = vmatpush1.msra.mxu0 %v1220
        %1227 = vmatprep.subr.mxu0 0.0
        %1228 = vmatpush1.msra.mxu0 0.0
        %1229 = vmatprep.subr.mxu0 0.0
        %1230 = vmatpush1.msra.mxu0 0.0
        %1231 = vmatprep.subr.mxu0 0.0
        %1232 = vmatpush1.msra.mxu0 0.0
        %1233 = vmatprep.subr.mxu0 0.0
        %1234 = vmatpush1.msra.mxu0 0.0
        %1235 = vmatprep.subr.mxu0 0.0
        %1236 = vmatpush1.msra.mxu0 0.0
        %1237 = vmatprep.subr.mxu0 0.0
        %1238 = vmatpush1.msra.mxu0 0.0
        %1239 = vmatprep.subr.mxu0 0.0
        %1240 = vmatpush1.msra.mxu0 0.0
        %1241 = vmatprep.subr.mxu0 0.0
        %1242 = vmatpush1.msra.mxu0 0.0
        %1243 = vmatprep.subr.mxu0 0.0
        %1244 = vmatpush1.msra.mxu0 0.0
        %1245 = vmatprep.subr.mxu0 0.0
        %1246 = vmatpush1.msra.mxu0 0.0
        %1247 = vmatprep.subr.mxu0 0.0
        %1248 = vmatpush1.msra.mxu0 0.0
        %1249 = vmatprep.subr.mxu0 0.0
        %1250 = vmatpush1.msra.mxu0 0.0
        %1251 = vmatprep.subr.mxu0 0.0
        %1252 = vmatpush1.msra.mxu0 0.0
        %1253 = vmatprep.subr.mxu0 0.0
        %1254 = vmatpush1.msra.mxu0 0.0
        %1255 = vmatprep.subr.mxu0 0.0
        %1256 = vmatpush1.msra.mxu0 0.0
        %1257 = vmatprep.subr.mxu0 0.0
        %1258 = vmatpush1.msra.mxu0 0.0
        %1259 = vmatprep.subr.mxu0 0.0
        %1260 = vmatpush1.msra.mxu0 0.0
        %1261 = vmatprep.subr.mxu0 0.0
        %1262 = vmatpush1.msra.mxu0 0.0
        %1263 = vmatprep.subr.mxu0 0.0
        %1264 = vmatpush1.msra.mxu0 0.0
        %1265 = vmatprep.subr.mxu0 0.0
        %1266 = vmatpush1.msra.mxu0 0.0
        %1267 = vmatprep.subr.mxu0 0.0
        %1268 = vmatpush1.msra.mxu0 0.0
        %1269 = vmatprep.subr.mxu0 0.0
        %1270 = vmatpush1.msra.mxu0 0.0
        %1271 = vmatprep.subr.mxu0 0.0
        %1272 = vmatpush1.msra.mxu0 0.0
        %1273 = vmatprep.subr.mxu0 0.0
        %1274 = vmatpush1.msra.mxu0 0.0
        %1275 = vmatprep.subr.mxu0 0.0
        %1276 = vmatpush1.msra.mxu0 0.0
        %1277 = vmatprep.subr.mxu0 0.0
        %1278 = vmatpush1.msra.mxu0 0.0
        %1279 = vmatprep.subr.mxu0 0.0
        %1280 = vmatpush1.msra.mxu0 0.0
        %1281 = vmatprep.subr.mxu0 0.0
        %1282 = vmatpush1.msra.mxu0 0.0
        %1283 = vmatprep.subr.mxu0 0.0
        %1284 = vmatpush1.msra.mxu0 0.0
        %1285 = vmatprep.subr.mxu0 0.0
        %1286 = vmatpush1.msra.mxu0 0.0
        %1287 = vmatprep.subr.mxu0 0.0
        %1288 = vmatpush1.msra.mxu0 0.0
        %1289 = vmatprep.mubr.f32.mxu0 0.0
        %1290 = vmatmul.mubr.f32.gmra.mrb[0].mxu0 %v1223
        %v1291 = vpop.f32.mrb[0].mxu0
        %v1292 = vadd.f32 0.0, %v1291
        %v1293 = vpop.f32.mrb[0].mxu0
        %1294 = vdwg.mxu0
        %1295 = vrot.lane.b32.xlu0 %v587, 112
        %v1296 = vpop.permute.xlu0 %1295
        %1297 = vrot.lane.b32.xlu0 %v587, 80
        %v1298 = vpop.permute.xlu0 %1297
        %v1299 = vsel %vm608, %v1296, 0
        %v1301 = vsel %vm608, %v1298, 0
        %1303 = vmatprep.subr.mxu0 0.0
        %1304 = vmatpush1.xpose.msra.mxu0 %v1301
        %1305 = vmatprep.subr.mxu0 0.0
        %1306 = vmatpush1.xpose.msra.mxu0 0.0
        %1307 = vmatprep.subr.mxu0 0.0
        %1308 = vmatpush1.xpose.msra.mxu0 0.0
        %1309 = vmatprep.subr.mxu0 0.0
        %1310 = vmatpush1.xpose.msra.mxu0 0.0
        %1311 = vmatprep.subr.mxu0 0.0
        %1312 = vmatpush1.xpose.msra.mxu0 0.0
        %1313 = vmatprep.subr.mxu0 0.0
        %1314 = vmatpush1.xpose.msra.mxu0 0.0
        %1315 = vmatprep.subr.mxu0 0.0
        %1316 = vmatpush1.xpose.msra.mxu0 0.0
        %1317 = vmatprep.subr.mxu0 0.0
        %1318 = vmatpush1.xpose.msra.mxu0 0.0
        %1319 = vmatprep.subr.mxu0 0.0
        %1320 = vmatpush1.xpose.msra.mxu0 0.0
        %1321 = vmatprep.subr.mxu0 0.0
        %1322 = vmatpush1.xpose.msra.mxu0 0.0
        %1323 = vmatprep.subr.mxu0 0.0
        %1324 = vmatpush1.xpose.msra.mxu0 0.0
        %1325 = vmatprep.subr.mxu0 0.0
        %1326 = vmatpush1.xpose.msra.mxu0 0.0
        %1327 = vmatprep.subr.mxu0 0.0
        %1328 = vmatpush1.xpose.msra.mxu0 0.0
        %1329 = vmatprep.subr.mxu0 0.0
        %1330 = vmatpush1.xpose.msra.mxu0 0.0
        %1331 = vmatprep.subr.mxu0 0.0
        %1332 = vmatpush1.xpose.msra.mxu0 0.0
        %1333 = vmatprep.subr.mxu0 0.0
        %1334 = vmatpush1.xpose.msra.mxu0 0.0
        %1335 = vmatprep.subr.mxu0 0.0
        %1336 = vmatpush1.xpose.msra.mxu0 0.0
        %1337 = vmatprep.subr.mxu0 0.0
        %1338 = vmatpush1.xpose.msra.mxu0 0.0
        %1339 = vmatprep.subr.mxu0 0.0
        %1340 = vmatpush1.xpose.msra.mxu0 0.0
        %1341 = vmatprep.subr.mxu0 0.0
        %1342 = vmatpush1.xpose.msra.mxu0 0.0
        %1343 = vmatprep.subr.mxu0 0.0
        %1344 = vmatpush1.xpose.msra.mxu0 0.0
        %1345 = vmatprep.subr.mxu0 0.0
        %1346 = vmatpush1.xpose.msra.mxu0 0.0
        %1347 = vmatprep.subr.mxu0 0.0
        %1348 = vmatpush1.xpose.msra.mxu0 0.0
        %1349 = vmatprep.subr.mxu0 0.0
        %1350 = vmatpush1.xpose.msra.mxu0 0.0
        %1351 = vmatprep.subr.mxu0 0.0
        %1352 = vmatpush1.xpose.msra.mxu0 0.0
        %1353 = vmatprep.subr.mxu0 0.0
        %1354 = vmatpush1.xpose.msra.mxu0 0.0
        %1355 = vmatprep.subr.mxu0 0.0
        %1356 = vmatpush1.xpose.msra.mxu0 0.0
        %1357 = vmatprep.subr.mxu0 0.0
        %1358 = vmatpush1.xpose.msra.mxu0 0.0
        %1359 = vmatprep.subr.mxu0 0.0
        %1360 = vmatpush1.xpose.msra.mxu0 0.0
        %1361 = vmatprep.subr.mxu0 0.0
        %1362 = vmatpush1.xpose.msra.mxu0 0.0
        %1363 = vmatprep.subr.mxu0 0.0
        %1364 = vmatpush1.xpose.msra.mxu0 0.0
        %1365 = vmatprep.subr.mxu0 0.0
        %1366 = vmatpush1.xpose.msra.mxu0 0.0
        %1367 = vmatprep.mubr.f32.mxu0 0.0
        %1368 = vmatmul.mubr.f32.gmra.mrb[0].mxu0 %v1299
        %v1369 = vpop.f32.mrb[0].mxu0
        %v1370 = vadd.f32 0.0, %v1369
        %v1371 = vpop.f32.mrb[0].mxu0
        %1372 = vdwg.mxu0
        %1373 = vrot.lane.b32.xlu0 %v592, 112
        %v1374 = vpop.permute.xlu0 %1373
        %1375 = vrot.lane.b32.xlu0 %v592, 80
        %v1376 = vpop.permute.xlu0 %1375
        %v1377 = vsel %vm608, %v1374, 0
        %v1379 = vsel %vm608, %v1376, 0
        %1381 = vmatprep.subr.mxu0 0.0
        %1382 = vmatpush1.xpose.msra.mxu0 %v1379
        %1383 = vmatprep.subr.mxu0 0.0
        %1384 = vmatpush1.xpose.msra.mxu0 0.0
        %1385 = vmatprep.subr.mxu0 0.0
        %1386 = vmatpush1.xpose.msra.mxu0 0.0
        %1387 = vmatprep.subr.mxu0 0.0
        %1388 = vmatpush1.xpose.msra.mxu0 0.0
        %1389 = vmatprep.subr.mxu0 0.0
        %1390 = vmatpush1.xpose.msra.mxu0 0.0
        %1391 = vmatprep.subr.mxu0 0.0
        %1392 = vmatpush1.xpose.msra.mxu0 0.0
        %1393 = vmatprep.subr.mxu0 0.0
        %1394 = vmatpush1.xpose.msra.mxu0 0.0
        %1395 = vmatprep.subr.mxu0 0.0
        %1396 = vmatpush1.xpose.msra.mxu0 0.0
        %1397 = vmatprep.subr.mxu0 0.0
        %1398 = vmatpush1.xpose.msra.mxu0 0.0
        %1399 = vmatprep.subr.mxu0 0.0
        %1400 = vmatpush1.xpose.msra.mxu0 0.0
        %1401 = vmatprep.subr.mxu0 0.0
        %1402 = vmatpush1.xpose.msra.mxu0 0.0
        %1403 = vmatprep.subr.mxu0 0.0
        %1404 = vmatpush1.xpose.msra.mxu0 0.0
        %1405 = vmatprep.subr.mxu0 0.0
        %1406 = vmatpush1.xpose.msra.mxu0 0.0
        %1407 = vmatprep.subr.mxu0 0.0
        %1408 = vmatpush1.xpose.msra.mxu0 0.0
        %1409 = vmatprep.subr.mxu0 0.0
        %1410 = vmatpush1.xpose.msra.mxu0 0.0
        %1411 = vmatprep.subr.mxu0 0.0
        %1412 = vmatpush1.xpose.msra.mxu0 0.0
        %1413 = vmatprep.subr.mxu0 0.0
        %1414 = vmatpush1.xpose.msra.mxu0 0.0
        %1415 = vmatprep.subr.mxu0 0.0
        %1416 = vmatpush1.xpose.msra.mxu0 0.0
        %1417 = vmatprep.subr.mxu0 0.0
        %1418 = vmatpush1.xpose.msra.mxu0 0.0
        %1419 = vmatprep.subr.mxu0 0.0
        %1420 = vmatpush1.xpose.msra.mxu0 0.0
        %1421 = vmatprep.subr.mxu0 0.0
        %1422 = vmatpush1.xpose.msra.mxu0 0.0
        %1423 = vmatprep.subr.mxu0 0.0
        %1424 = vmatpush1.xpose.msra.mxu0 0.0
        %1425 = vmatprep.subr.mxu0 0.0
        %1426 = vmatpush1.xpose.msra.mxu0 0.0
        %1427 = vmatprep.subr.mxu0 0.0
        %1428 = vmatpush1.xpose.msra.mxu0 0.0
        %1429 = vmatprep.subr.mxu0 0.0
        %1430 = vmatpush1.xpose.msra.mxu0 0.0
        %1431 = vmatprep.subr.mxu0 0.0
        %1432 = vmatpush1.xpose.msra.mxu0 0.0
        %1433 = vmatprep.subr.mxu0 0.0
        %1434 = vmatpush1.xpose.msra.mxu0 0.0
        %1435 = vmatprep.subr.mxu0 0.0
        %1436 = vmatpush1.xpose.msra.mxu0 0.0
        %1437 = vmatprep.subr.mxu0 0.0
        %1438 = vmatpush1.xpose.msra.mxu0 0.0
        %1439 = vmatprep.subr.mxu0 0.0
        %1440 = vmatpush1.xpose.msra.mxu0 0.0
        %1441 = vmatprep.subr.mxu0 0.0
        %1442 = vmatpush1.xpose.msra.mxu0 0.0
        %1443 = vmatprep.subr.mxu0 0.0
        %1444 = vmatpush1.xpose.msra.mxu0 0.0
        %1445 = vmatprep.mubr.f32.mxu0 0.0
        %1446 = vmatmul.mubr.f32.gmra.mrb[0].mxu0 %v1377
        %v1447 = vpop.f32.mrb[0].mxu0
        %v1448 = vadd.f32 0.0, %v1447
        %v1449 = vpop.f32.mrb[0].mxu0
        %1450 = vdwg.mxu0
        %1451 = vrot.lane.b32.xlu0 %v597, 112
        %v1452 = vpop.permute.xlu0 %1451
        %1453 = vrot.lane.b32.xlu0 %v597, 80
        %v1454 = vpop.permute.xlu0 %1453
        %v1455 = vsel %vm608, %v1452, 0
        %v1457 = vsel %vm608, %v1454, 0
        %1459 = vmatprep.subr.mxu0 0.0
        %1460 = vmatpush1.xpose.msra.mxu0 %v1457
        %1461 = vmatprep.subr.mxu0 0.0
        %1462 = vmatpush1.xpose.msra.mxu0 0.0
        %1463 = vmatprep.subr.mxu0 0.0
        %1464 = vmatpush1.xpose.msra.mxu0 0.0
        %1465 = vmatprep.subr.mxu0 0.0
        %1466 = vmatpush1.xpose.msra.mxu0 0.0
        %1467 = vmatprep.subr.mxu0 0.0
        %1468 = vmatpush1.xpose.msra.mxu0 0.0
        %1469 = vmatprep.subr.mxu0 0.0
        %1470 = vmatpush1.xpose.msra.mxu0 0.0
        %1471 = vmatprep.subr.mxu0 0.0
        %1472 = vmatpush1.xpose.msra.mxu0 0.0
        %1473 = vmatprep.subr.mxu0 0.0
        %1474 = vmatpush1.xpose.msra.mxu0 0.0
        %1475 = vmatprep.subr.mxu0 0.0
        %1476 = vmatpush1.xpose.msra.mxu0 0.0
        %1477 = vmatprep.subr.mxu0 0.0
        %1478 = vmatpush1.xpose.msra.mxu0 0.0
        %1479 = vmatprep.subr.mxu0 0.0
        %1480 = vmatpush1.xpose.msra.mxu0 0.0
        %1481 = vmatprep.subr.mxu0 0.0
        %1482 = vmatpush1.xpose.msra.mxu0 0.0
        %1483 = vmatprep.subr.mxu0 0.0
        %1484 = vmatpush1.xpose.msra.mxu0 0.0
        %1485 = vmatprep.subr.mxu0 0.0
        %1486 = vmatpush1.xpose.msra.mxu0 0.0
        %1487 = vmatprep.subr.mxu0 0.0
        %1488 = vmatpush1.xpose.msra.mxu0 0.0
        %1489 = vmatprep.subr.mxu0 0.0
        %1490 = vmatpush1.xpose.msra.mxu0 0.0
        %1491 = vmatprep.subr.mxu0 0.0
        %1492 = vmatpush1.xpose.msra.mxu0 0.0
        %1493 = vmatprep.subr.mxu0 0.0
        %1494 = vmatpush1.xpose.msra.mxu0 0.0
        %1495 = vmatprep.subr.mxu0 0.0
        %1496 = vmatpush1.xpose.msra.mxu0 0.0
        %1497 = vmatprep.subr.mxu0 0.0
        %1498 = vmatpush1.xpose.msra.mxu0 0.0
        %1499 = vmatprep.subr.mxu0 0.0
        %1500 = vmatpush1.xpose.msra.mxu0 0.0
        %1501 = vmatprep.subr.mxu0 0.0
        %1502 = vmatpush1.xpose.msra.mxu0 0.0
        %1503 = vmatprep.subr.mxu0 0.0
        %1504 = vmatpush1.xpose.msra.mxu0 0.0
        %1505 = vmatprep.subr.mxu0 0.0
        %1506 = vmatpush1.xpose.msra.mxu0 0.0
        %1507 = vmatprep.subr.mxu0 0.0
        %1508 = vmatpush1.xpose.msra.mxu0 0.0
        %1509 = vmatprep.subr.mxu0 0.0
        %1510 = vmatpush1.xpose.msra.mxu0 0.0
        %1511 = vmatprep.subr.mxu0 0.0
        %1512 = vmatpush1.xpose.msra.mxu0 0.0
        %1513 = vmatprep.subr.mxu0 0.0
        %1514 = vmatpush1.xpose.msra.mxu0 0.0
        %1515 = vmatprep.subr.mxu0 0.0
        %1516 = vmatpush1.xpose.msra.mxu0 0.0
        %1517 = vmatprep.subr.mxu0 0.0
        %1518 = vmatpush1.xpose.msra.mxu0 0.0
        %1519 = vmatprep.subr.mxu0 0.0
        %1520 = vmatpush1.xpose.msra.mxu0 0.0
        %1521 = vmatprep.subr.mxu0 0.0
        %1522 = vmatpush1.xpose.msra.mxu0 0.0
        %1523 = vmatprep.mubr.f32.mxu0 0.0
        %1524 = vmatmul.mubr.f32.gmra.mrb[0].mxu0 %v1455
        %v1525 = vpop.f32.mrb[0].mxu0
        %v1526 = vadd.f32 0.0, %v1525
        %v1527 = vpop.f32.mrb[0].mxu0
        %1528 = vdwg.mxu0
        %1529 = vrot.lane.b32.xlu0 %v602, 112
        %v1530 = vpop.permute.xlu0 %1529
        %1531 = vrot.lane.b32.xlu0 %v602, 80
        %v1532 = vpop.permute.xlu0 %1531
        %v1533 = vsel %vm608, %v1530, 0
        %v1535 = vsel %vm608, %v1532, 0
        %1537 = vmatprep.subr.mxu0 0.0
        %1538 = vmatpush1.xpose.msra.mxu0 %v1535
        %1539 = vmatprep.subr.mxu0 0.0
        %1540 = vmatpush1.xpose.msra.mxu0 0.0
        %1541 = vmatprep.subr.mxu0 0.0
        %1542 = vmatpush1.xpose.msra.mxu0 0.0
        %1543 = vmatprep.subr.mxu0 0.0
        %1544 = vmatpush1.xpose.msra.mxu0 0.0
        %1545 = vmatprep.subr.mxu0 0.0
        %1546 = vmatpush1.xpose.msra.mxu0 0.0
        %1547 = vmatprep.subr.mxu0 0.0
        %1548 = vmatpush1.xpose.msra.mxu0 0.0
        %1549 = vmatprep.subr.mxu0 0.0
        %1550 = vmatpush1.xpose.msra.mxu0 0.0
        %1551 = vmatprep.subr.mxu0 0.0
        %1552 = vmatpush1.xpose.msra.mxu0 0.0
        %1553 = vmatprep.subr.mxu0 0.0
        %1554 = vmatpush1.xpose.msra.mxu0 0.0
        %1555 = vmatprep.subr.mxu0 0.0
        %1556 = vmatpush1.xpose.msra.mxu0 0.0
        %1557 = vmatprep.subr.mxu0 0.0
        %1558 = vmatpush1.xpose.msra.mxu0 0.0
        %1559 = vmatprep.subr.mxu0 0.0
        %1560 = vmatpush1.xpose.msra.mxu0 0.0
        %1561 = vmatprep.subr.mxu0 0.0
        %1562 = vmatpush1.xpose.msra.mxu0 0.0
        %1563 = vmatprep.subr.mxu0 0.0
        %1564 = vmatpush1.xpose.msra.mxu0 0.0
        %1565 = vmatprep.subr.mxu0 0.0
        %1566 = vmatpush1.xpose.msra.mxu0 0.0
        %1567 = vmatprep.subr.mxu0 0.0
        %1568 = vmatpush1.xpose.msra.mxu0 0.0
        %1569 = vmatprep.subr.mxu0 0.0
        %1570 = vmatpush1.xpose.msra.mxu0 0.0
        %1571 = vmatprep.subr.mxu0 0.0
        %1572 = vmatpush1.xpose.msra.mxu0 0.0
        %1573 = vmatprep.subr.mxu0 0.0
        %1574 = vmatpush1.xpose.msra.mxu0 0.0
        %1575 = vmatprep.subr.mxu0 0.0
        %1576 = vmatpush1.xpose.msra.mxu0 0.0
        %1577 = vmatprep.subr.mxu0 0.0
        %1578 = vmatpush1.xpose.msra.mxu0 0.0
        %1579 = vmatprep.subr.mxu0 0.0
        %1580 = vmatpush1.xpose.msra.mxu0 0.0
        %1581 = vmatprep.subr.mxu0 0.0
        %1582 = vmatpush1.xpose.msra.mxu0 0.0
        %1583 = vmatprep.subr.mxu0 0.0
        %1584 = vmatpush1.xpose.msra.mxu0 0.0
        %1585 = vmatprep.subr.mxu0 0.0
        %1586 = vmatpush1.xpose.msra.mxu0 0.0
        %1587 = vmatprep.subr.mxu0 0.0
        %1588 = vmatpush1.xpose.msra.mxu0 0.0
        %1589 = vmatprep.subr.mxu0 0.0
        %1590 = vmatpush1.xpose.msra.mxu0 0.0
        %1591 = vmatprep.subr.mxu0 0.0
        %1592 = vmatpush1.xpose.msra.mxu0 0.0
        %1593 = vmatprep.subr.mxu0 0.0
        %1594 = vmatpush1.xpose.msra.mxu0 0.0
        %1595 = vmatprep.subr.mxu0 0.0
        %1596 = vmatpush1.xpose.msra.mxu0 0.0
        %1597 = vmatprep.subr.mxu0 0.0
        %1598 = vmatpush1.xpose.msra.mxu0 0.0
        %1599 = vmatprep.subr.mxu0 0.0
        %1600 = vmatpush1.xpose.msra.mxu0 0.0
        %1601 = vmatprep.mubr.f32.mxu0 0.0
        %1602 = vmatmul.mubr.f32.gmra.mrb[0].mxu0 %v1533
        %v1603 = vpop.f32.mrb[0].mxu0
        %v1604 = vadd.f32 0.0, %v1603
        %v1605 = vpop.f32.mrb[0].mxu0
        %1606 = vdwg.mxu0
        %v1607 = vmul.f32 %v1370, 0.25
        %v1608 = vmul.f32 %v1448, 0.25
        %v1609 = vmul.f32 %v1526, 0.25
        %v1610 = vmul.f32 %v1604, 0.25
        %v1611 = vadd.f32 %v1607, %v925
        %v1612 = vadd.f32 %v1608, %v929
        %v1613 = vadd.f32 %v1609, %v933
        %v1614 = vadd.f32 %v1610, %v937
        %v1615 = vsel %vm946, %v1611, -inf
        %1616 = vmax.xlane.f32.xlu0 %v1615
        %v1617 = vpop.xlane.xlu0 %1616
        %v1618 = vsel %vm946, %v1612, -inf
        %1619 = vmax.xlane.f32.xlu0 %v1618
        %v1620 = vpop.xlane.xlu0 %1619
        %v1621 = vsel %vm946, %v1613, -inf
        %1622 = vmax.xlane.f32.xlu0 %v1621
        %v1623 = vpop.xlane.xlu0 %1622
        %v1624 = vsel %vm946, %v1614, -inf
        %1625 = vmax.xlane.f32.xlu0 %v1624
        %v1626 = vpop.xlane.xlu0 %1625
        %v1627 = vsub.f32 %v1611, %v1617
        %v1628 = vsub.f32 %v1612, %v1620
        %v1629 = vsub.f32 %v1613, %v1623
        %v1630 = vsub.f32 %v1614, %v1626
        %v1631 = vmul.f32 %v1627, 1.442695
        %v1632 = vpow.pop %v1631
        %v1633 = vmul.f32 %v1628, 1.442695
        %v1634 = vpow.pop %v1633
        %v1635 = vmul.f32 %v1629, 1.442695
        %v1636 = vpow.pop %v1635
        %v1637 = vmul.f32 %v1630, 1.442695
        %v1638 = vpow.pop %v1637
        %v1639 = vsel %vm946, %v1632, 0.0
        %1640 = vadd.xlane.f32.xlu0 %v1639
        %v1641 = vpop.xlane.xlu0 %1640
        %v1642 = vsel %vm946, %v1634, 0.0
        %1643 = vadd.xlane.f32.xlu0 %v1642
        %v1644 = vpop.xlane.xlu0 %1643
        %v1645 = vsel %vm946, %v1636, 0.0
        %1646 = vadd.xlane.f32.xlu0 %v1645
        %v1647 = vpop.xlane.xlu0 %1646
        %v1648 = vsel %vm946, %v1638, 0.0
        %1649 = vadd.xlane.f32.xlu0 %v1648
        %v1650 = vpop.xlane.xlu0 %1649
        %v1651 = vrcp.pop %v1641
        %v1652 = vmul.f32 %v1632, %v1651
        %v1653 = vrcp.pop %v1644
        %v1654 = vmul.f32 %v1634, %v1653
        %v1655 = vrcp.pop %v1647
        %v1656 = vmul.f32 %v1636, %v1655
        %v1657 = vrcp.pop %v1650
        %v1658 = vmul.f32 %v1638, %v1657
        %1659 = vrot.lane.b32.xlu0 %v587, 48
        %v1660 = vpop.permute.xlu0 %1659
        %v1663 = vsel %vm946, %v1652, 0
        %1665 = vmatprep.subr.mxu0 0.0
        %1666 = vmatpush1.msra.mxu0 %v1660
        %1667 = vmatprep.subr.mxu0 0.0
        %1668 = vmatpush1.msra.mxu0 0.0
        %1669 = vmatprep.subr.mxu0 0.0
        %1670 = vmatpush1.msra.mxu0 0.0
        %1671 = vmatprep.subr.mxu0 0.0
        %1672 = vmatpush1.msra.mxu0 0.0
        %1673 = vmatprep.subr.mxu0 0.0
        %1674 = vmatpush1.msra.mxu0 0.0
        %1675 = vmatprep.subr.mxu0 0.0
        %1676 = vmatpush1.msra.mxu0 0.0
        %1677 = vmatprep.subr.mxu0 0.0
        %1678 = vmatpush1.msra.mxu0 0.0
        %1679 = vmatprep.subr.mxu0 0.0
        %1680 = vmatpush1.msra.mxu0 0.0
        %1681 = vmatprep.subr.mxu0 0.0
        %1682 = vmatpush1.msra.mxu0 0.0
        %1683 = vmatprep.subr.mxu0 0.0
        %1684 = vmatpush1.msra.mxu0 0.0
        %1685 = vmatprep.subr.mxu0 0.0
        %1686 = vmatpush1.msra.mxu0 0.0
        %1687 = vmatprep.subr.mxu0 0.0
        %1688 = vmatpush1.msra.mxu0 0.0
        %1689 = vmatprep.subr.mxu0 0.0
        %1690 = vmatpush1.msra.mxu0 0.0
        %1691 = vmatprep.subr.mxu0 0.0
        %1692 = vmatpush1.msra.mxu0 0.0
        %1693 = vmatprep.subr.mxu0 0.0
        %1694 = vmatpush1.msra.mxu0 0.0
        %1695 = vmatprep.subr.mxu0 0.0
        %1696 = vmatpush1.msra.mxu0 0.0
        %1697 = vmatprep.subr.mxu0 0.0
        %1698 = vmatpush1.msra.mxu0 0.0
        %1699 = vmatprep.subr.mxu0 0.0
        %1700 = vmatpush1.msra.mxu0 0.0
        %1701 = vmatprep.subr.mxu0 0.0
        %1702 = vmatpush1.msra.mxu0 0.0
        %1703 = vmatprep.subr.mxu0 0.0
        %1704 = vmatpush1.msra.mxu0 0.0
        %1705 = vmatprep.subr.mxu0 0.0
        %1706 = vmatpush1.msra.mxu0 0.0
        %1707 = vmatprep.subr.mxu0 0.0
        %1708 = vmatpush1.msra.mxu0 0.0
        %1709 = vmatprep.subr.mxu0 0.0
        %1710 = vmatpush1.msra.mxu0 0.0
        %1711 = vmatprep.subr.mxu0 0.0
        %1712 = vmatpush1.msra.mxu0 0.0
        %1713 = vmatprep.subr.mxu0 0.0
        %1714 = vmatpush1.msra.mxu0 0.0
        %1715 = vmatprep.subr.mxu0 0.0
        %1716 = vmatpush1.msra.mxu0 0.0
        %1717 = vmatprep.subr.mxu0 0.0
        %1718 = vmatpush1.msra.mxu0 0.0
        %1719 = vmatprep.subr.mxu0 0.0
        %1720 = vmatpush1.msra.mxu0 0.0
        %1721 = vmatprep.subr.mxu0 0.0
        %1722 = vmatpush1.msra.mxu0 0.0
        %1723 = vmatprep.subr.mxu0 0.0
        %1724 = vmatpush1.msra.mxu0 0.0
        %1725 = vmatprep.subr.mxu0 0.0
        %1726 = vmatpush1.msra.mxu0 0.0
        %1727 = vmatprep.subr.mxu0 0.0
        %1728 = vmatpush1.msra.mxu0 0.0
        %1729 = vmatprep.mubr.f32.mxu0 0.0
        %1730 = vmatmul.mubr.f32.gmra.mrb[0].mxu0 %v1663
        %v1731 = vpop.f32.mrb[0].mxu0
        %v1732 = vadd.f32 0.0, %v1731
        %v1733 = vpop.f32.mrb[0].mxu0
        %1734 = vdwg.mxu0
        %1735 = vrot.lane.b32.xlu0 %v592, 48
        %v1736 = vpop.permute.xlu0 %1735
        %v1739 = vsel %vm946, %v1654, 0
        %1741 = vmatprep.subr.mxu0 0.0
        %1742 = vmatpush1.msra.mxu0 %v1736
        %1743 = vmatprep.subr.mxu0 0.0
        %1744 = vmatpush1.msra.mxu0 0.0
        %1745 = vmatprep.subr.mxu0 0.0
        %1746 = vmatpush1.msra.mxu0 0.0
        %1747 = vmatprep.subr.mxu0 0.0
        %1748 = vmatpush1.msra.mxu0 0.0
        %1749 = vmatprep.subr.mxu0 0.0
        %1750 = vmatpush1.msra.mxu0 0.0
        %1751 = vmatprep.subr.mxu0 0.0
        %1752 = vmatpush1.msra.mxu0 0.0
        %1753 = vmatprep.subr.mxu0 0.0
        %1754 = vmatpush1.msra.mxu0 0.0
        %1755 = vmatprep.subr.mxu0 0.0
        %1756 = vmatpush1.msra.mxu0 0.0
        %1757 = vmatprep.subr.mxu0 0.0
        %1758 = vmatpush1.msra.mxu0 0.0
        %1759 = vmatprep.subr.mxu0 0.0
        %1760 = vmatpush1.msra.mxu0 0.0
        %1761 = vmatprep.subr.mxu0 0.0
        %1762 = vmatpush1.msra.mxu0 0.0
        %1763 = vmatprep.subr.mxu0 0.0
        %1764 = vmatpush1.msra.mxu0 0.0
        %1765 = vmatprep.subr.mxu0 0.0
        %1766 = vmatpush1.msra.mxu0 0.0
        %1767 = vmatprep.subr.mxu0 0.0
        %1768 = vmatpush1.msra.mxu0 0.0
        %1769 = vmatprep.subr.mxu0 0.0
        %1770 = vmatpush1.msra.mxu0 0.0
        %1771 = vmatprep.subr.mxu0 0.0
        %1772 = vmatpush1.msra.mxu0 0.0
        %1773 = vmatprep.subr.mxu0 0.0
        %1774 = vmatpush1.msra.mxu0 0.0
        %1775 = vmatprep.subr.mxu0 0.0
        %1776 = vmatpush1.msra.mxu0 0.0
        %1777 = vmatprep.subr.mxu0 0.0
        %1778 = vmatpush1.msra.mxu0 0.0
        %1779 = vmatprep.subr.mxu0 0.0
        %1780 = vmatpush1.msra.mxu0 0.0
        %1781 = vmatprep.subr.mxu0 0.0
        %1782 = vmatpush1.msra.mxu0 0.0
        %1783 = vmatprep.subr.mxu0 0.0
        %1784 = vmatpush1.msra.mxu0 0.0
        %1785 = vmatprep.subr.mxu0 0.0
        %1786 = vmatpush1.msra.mxu0 0.0
        %1787 = vmatprep.subr.mxu0 0.0
        %1788 = vmatpush1.msra.mxu0 0.0
        %1789 = vmatprep.subr.mxu0 0.0
        %1790 = vmatpush1.msra.mxu0 0.0
        %1791 = vmatprep.subr.mxu0 0.0
        %1792 = vmatpush1.msra.mxu0 0.0
        %1793 = vmatprep.subr.mxu0 0.0
        %1794 = vmatpush1.msra.mxu0 0.0
        %1795 = vmatprep.subr.mxu0 0.0
        %1796 = vmatpush1.msra.mxu0 0.0
        %1797 = vmatprep.subr.mxu0 0.0
        %1798 = vmatpush1.msra.mxu0 0.0
        %1799 = vmatprep.subr.mxu0 0.0
        %1800 = vmatpush1.msra.mxu0 0.0
        %1801 = vmatprep.subr.mxu0 0.0
        %1802 = vmatpush1.msra.mxu0 0.0
        %1803 = vmatprep.subr.mxu0 0.0
        %1804 = vmatpush1.msra.mxu0 0.0
        %1805 = vmatprep.mubr.f32.mxu0 0.0
        %1806 = vmatmul.mubr.f32.gmra.mrb[0].mxu0 %v1739
        %v1807 = vpop.f32.mrb[0].mxu0
        %v1808 = vadd.f32 0.0, %v1807
        %v1809 = vpop.f32.mrb[0].mxu0
        %1810 = vdwg.mxu0
        %1811 = vrot.lane.b32.xlu0 %v597, 48
        %v1812 = vpop.permute.xlu0 %1811
        %v1815 = vsel %vm946, %v1656, 0
        %1817 = vmatprep.subr.mxu0 0.0
        %1818 = vmatpush1.msra.mxu0 %v1812
        %1819 = vmatprep.subr.mxu0 0.0
        %1820 = vmatpush1.msra.mxu0 0.0
        %1821 = vmatprep.subr.mxu0 0.0
        %1822 = vmatpush1.msra.mxu0 0.0
        %1823 = vmatprep.subr.mxu0 0.0
        %1824 = vmatpush1.msra.mxu0 0.0
        %1825 = vmatprep.subr.mxu0 0.0
        %1826 = vmatpush1.msra.mxu0 0.0
        %1827 = vmatprep.subr.mxu0 0.0
        %1828 = vmatpush1.msra.mxu0 0.0
        %1829 = vmatprep.subr.mxu0 0.0
        %1830 = vmatpush1.msra.mxu0 0.0
        %1831 = vmatprep.subr.mxu0 0.0
        %1832 = vmatpush1.msra.mxu0 0.0
        %1833 = vmatprep.subr.mxu0 0.0
        %1834 = vmatpush1.msra.mxu0 0.0
        %1835 = vmatprep.subr.mxu0 0.0
        %1836 = vmatpush1.msra.mxu0 0.0
        %1837 = vmatprep.subr.mxu0 0.0
        %1838 = vmatpush1.msra.mxu0 0.0
        %1839 = vmatprep.subr.mxu0 0.0
        %1840 = vmatpush1.msra.mxu0 0.0
        %1841 = vmatprep.subr.mxu0 0.0
        %1842 = vmatpush1.msra.mxu0 0.0
        %1843 = vmatprep.subr.mxu0 0.0
        %1844 = vmatpush1.msra.mxu0 0.0
        %1845 = vmatprep.subr.mxu0 0.0
        %1846 = vmatpush1.msra.mxu0 0.0
        %1847 = vmatprep.subr.mxu0 0.0
        %1848 = vmatpush1.msra.mxu0 0.0
        %1849 = vmatprep.subr.mxu0 0.0
        %1850 = vmatpush1.msra.mxu0 0.0
        %1851 = vmatprep.subr.mxu0 0.0
        %1852 = vmatpush1.msra.mxu0 0.0
        %1853 = vmatprep.subr.mxu0 0.0
        %1854 = vmatpush1.msra.mxu0 0.0
        %1855 = vmatprep.subr.mxu0 0.0
        %1856 = vmatpush1.msra.mxu0 0.0
        %1857 = vmatprep.subr.mxu0 0.0
        %1858 = vmatpush1.msra.mxu0 0.0
        %1859 = vmatprep.subr.mxu0 0.0
        %1860 = vmatpush1.msra.mxu0 0.0
        %1861 = vmatprep.subr.mxu0 0.0
        %1862 = vmatpush1.msra.mxu0 0.0
        %1863 = vmatprep.subr.mxu0 0.0
        %1864 = vmatpush1.msra.mxu0 0.0
        %1865 = vmatprep.subr.mxu0 0.0
        %1866 = vmatpush1.msra.mxu0 0.0
        %1867 = vmatprep.subr.mxu0 0.0
        %1868 = vmatpush1.msra.mxu0 0.0
        %1869 = vmatprep.subr.mxu0 0.0
        %1870 = vmatpush1.msra.mxu0 0.0
        %1871 = vmatprep.subr.mxu0 0.0
        %1872 = vmatpush1.msra.mxu0 0.0
        %1873 = vmatprep.subr.mxu0 0.0
        %1874 = vmatpush1.msra.mxu0 0.0
        %1875 = vmatprep.subr.mxu0 0.0
        %1876 = vmatpush1.msra.mxu0 0.0
        %1877 = vmatprep.subr.mxu0 0.0
        %1878 = vmatpush1.msra.mxu0 0.0
        %1879 = vmatprep.subr.mxu0 0.0
        %1880 = vmatpush1.msra.mxu0 0.0
        %1881 = vmatprep.mubr.f32.mxu0 0.0
        %1882 = vmatmul.mubr.f32.gmra.mrb[0].mxu0 %v1815
        %v1883 = vpop.f32.mrb[0].mxu0
        %v1884 = vadd.f32 0.0, %v1883
        %v1885 = vpop.f32.mrb[0].mxu0
        %1886 = vdwg.mxu0
        %1887 = vrot.lane.b32.xlu0 %v602, 48
        %v1888 = vpop.permute.xlu0 %1887
        %v1891 = vsel %vm946, %v1658, 0
        %1893 = vmatprep.subr.mxu0 0.0
        %1894 = vmatpush1.msra.mxu0 %v1888
        %1895 = vmatprep.subr.mxu0 0.0
        %1896 = vmatpush1.msra.mxu0 0.0
        %1897 = vmatprep.subr.mxu0 0.0
        %1898 = vmatpush1.msra.mxu0 0.0
        %1899 = vmatprep.subr.mxu0 0.0
        %1900 = vmatpush1.msra.mxu0 0.0
        %1901 = vmatprep.subr.mxu0 0.0
        %1902 = vmatpush1.msra.mxu0 0.0
        %1903 = vmatprep.subr.mxu0 0.0
        %1904 = vmatpush1.msra.mxu0 0.0
        %1905 = vmatprep.subr.mxu0 0.0
        %1906 = vmatpush1.msra.mxu0 0.0
        %1907 = vmatprep.subr.mxu0 0.0
        %1908 = vmatpush1.msra.mxu0 0.0
        %1909 = vmatprep.subr.mxu0 0.0
        %1910 = vmatpush1.msra.mxu0 0.0
        %1911 = vmatprep.subr.mxu0 0.0
        %1912 = vmatpush1.msra.mxu0 0.0
        %1913 = vmatprep.subr.mxu0 0.0
        %1914 = vmatpush1.msra.mxu0 0.0
        %1915 = vmatprep.subr.mxu0 0.0
        %1916 = vmatpush1.msra.mxu0 0.0
        %1917 = vmatprep.subr.mxu0 0.0
        %1918 = vmatpush1.msra.mxu0 0.0
        %1919 = vmatprep.subr.mxu0 0.0
        %1920 = vmatpush1.msra.mxu0 0.0
        %1921 = vmatprep.subr.mxu0 0.0
        %1922 = vmatpush1.msra.mxu0 0.0
        %1923 = vmatprep.subr.mxu0 0.0
        %1924 = vmatpush1.msra.mxu0 0.0
        %1925 = vmatprep.subr.mxu0 0.0
        %1926 = vmatpush1.msra.mxu0 0.0
        %1927 = vmatprep.subr.mxu0 0.0
        %1928 = vmatpush1.msra.mxu0 0.0
        %1929 = vmatprep.subr.mxu0 0.0
        %1930 = vmatpush1.msra.mxu0 0.0
        %1931 = vmatprep.subr.mxu0 0.0
        %1932 = vmatpush1.msra.mxu0 0.0
        %1933 = vmatprep.subr.mxu0 0.0
        %1934 = vmatpush1.msra.mxu0 0.0
        %1935 = vmatprep.subr.mxu0 0.0
        %1936 = vmatpush1.msra.mxu0 0.0
        %1937 = vmatprep.subr.mxu0 0.0
        %1938 = vmatpush1.msra.mxu0 0.0
        %1939 = vmatprep.subr.mxu0 0.0
        %1940 = vmatpush1.msra.mxu0 0.0
        %1941 = vmatprep.subr.mxu0 0.0
        %1942 = vmatpush1.msra.mxu0 0.0
        %1943 = vmatprep.subr.mxu0 0.0
        %1944 = vmatpush1.msra.mxu0 0.0
        %1945 = vmatprep.subr.mxu0 0.0
        %1946 = vmatpush1.msra.mxu0 0.0
        %1947 = vmatprep.subr.mxu0 0.0
        %1948 = vmatpush1.msra.mxu0 0.0
        %1949 = vmatprep.subr.mxu0 0.0
        %1950 = vmatpush1.msra.mxu0 0.0
        %1951 = vmatprep.subr.mxu0 0.0
        %1952 = vmatpush1.msra.mxu0 0.0
        %1953 = vmatprep.subr.mxu0 0.0
        %1954 = vmatpush1.msra.mxu0 0.0
        %1955 = vmatprep.subr.mxu0 0.0
        %1956 = vmatpush1.msra.mxu0 0.0
        %1957 = vmatprep.mubr.f32.mxu0 0.0
        %1958 = vmatmul.mubr.f32.gmra.mrb[0].mxu0 %v1891
        %v1959 = vpop.f32.mrb[0].mxu0
        %v1960 = vadd.f32 0.0, %v1959
        %v1961 = vpop.f32.mrb[0].mxu0
        %1962 = vdwg.mxu0
        %1967 = vrot.lane.b32.xlu0 %v1732, 16
        %v1968 = vpop.permute.xlu0 %1967
        %1969 = vrot.lane.b32.xlu0 %v1808, 16
        %v1970 = vpop.permute.xlu0 %1969
        %1971 = vrot.lane.b32.xlu0 %v1884, 16
        %v1972 = vpop.permute.xlu0 %1971
        %1973 = vrot.lane.b32.xlu0 %v1960, 16
        %v1974 = vpop.permute.xlu0 %1973
        %v1979 = vsel %vm608, %v1064, %v1968
        %v1980 = vsel %vm608, %v1140, %v1970
        %v1981 = vsel %vm608, %v1216, %v1972
        %v1982 = vsel %vm608, %v1292, %v1974
        %v1983 = vld [vmem:[%s4] sm:$0xff]
        %v1984 = vld [vmem:[%s4 + $0x8] sm:$0xff]
        %v1985 = vld [vmem:[%s4 + $0x10] sm:$0xff]
        %v1986 = vld [vmem:[%s4 + $0x18] sm:$0xff]
        %v1987 = vld [vmem:[%s5] sm:$0x1]
        %v1989 = vlaneseq
        %v1990 = vshrl.u32 %v1989, 7
        %v1991 = vsub.s32 0, %v1990
        %v1992 = vrot.slane %v1987, %v1991
        %v1995 = vsel %vm507, %v1979, 0
        %v1998 = vsel %vm507, %v1980, 0
        %v2001 = vsel %vm507, %v1981, 0
        %v2004 = vsel %vm507, %v1982, 0
        %2006 = vmatprep.subr.mxu0 0.0
        %2007 = vmatpush1.msra.mxu0 %v1983
        %2008 = vmatprep.subr.mxu0 0.0
        %2009 = vmatpush1.msra.mxu0 %v1984
        %2010 = vmatprep.subr.mxu0 0.0
        %2011 = vmatpush1.msra.mxu0 %v1985
        %2012 = vmatprep.subr.mxu0 0.0
        %2013 = vmatpush1.msra.mxu0 %v1986
        %2014 = vmatprep.subr.mxu0 0.0
        %2015 = vmatpush1.msra.mxu0 0.0
        %2016 = vmatprep.subr.mxu0 0.0
        %2017 = vmatpush1.msra.mxu0 0.0
        %2018 = vmatprep.subr.mxu0 0.0
        %2019 = vmatpush1.msra.mxu0 0.0
        %2020 = vmatprep.subr.mxu0 0.0
        %2021 = vmatpush1.msra.mxu0 0.0
        %2022 = vmatprep.subr.mxu0 0.0
        %2023 = vmatpush1.msra.mxu0 0.0
        %2024 = vmatprep.subr.mxu0 0.0
        %2025 = vmatpush1.msra.mxu0 0.0
        %2026 = vmatprep.subr.mxu0 0.0
        %2027 = vmatpush1.msra.mxu0 0.0
        %2028 = vmatprep.subr.mxu0 0.0
        %2029 = vmatpush1.msra.mxu0 0.0
        %2030 = vmatprep.subr.mxu0 0.0
        %2031 = vmatpush1.msra.mxu0 0.0
        %2032 = vmatprep.subr.mxu0 0.0
        %2033 = vmatpush1.msra.mxu0 0.0
        %2034 = vmatprep.subr.mxu0 0.0
        %2035 = vmatpush1.msra.mxu0 0.0
        %2036 = vmatprep.subr.mxu0 0.0
        %2037 = vmatpush1.msra.mxu0 0.0
        %2038 = vmatprep.subr.mxu0 0.0
        %2039 = vmatpush1.msra.mxu0 0.0
        %2040 = vmatprep.subr.mxu0 0.0
        %2041 = vmatpush1.msra.mxu0 0.0
        %2042 = vmatprep.subr.mxu0 0.0
        %2043 = vmatpush1.msra.mxu0 0.0
        %2044 = vmatprep.subr.mxu0 0.0
        %2045 = vmatpush1.msra.mxu0 0.0
        %2046 = vmatprep.subr.mxu0 0.0
        %2047 = vmatpush1.msra.mxu0 0.0
        %2048 = vmatprep.subr.mxu0 0.0
        %2049 = vmatpush1.msra.mxu0 0.0
        %2050 = vmatprep.subr.mxu0 0.0
        %2051 = vmatpush1.msra.mxu0 0.0
        %2052 = vmatprep.subr.mxu0 0.0
        %2053 = vmatpush1.msra.mxu0 0.0
        %2054 = vmatprep.subr.mxu0 0.0
        %2055 = vmatpush1.msra.mxu0 0.0
        %2056 = vmatprep.subr.mxu0 0.0
        %2057 = vmatpush1.msra.mxu0 0.0
        %2058 = vmatprep.subr.mxu0 0.0
        %2059 = vmatpush1.msra.mxu0 0.0
        %2060 = vmatprep.subr.mxu0 0.0
        %2061 = vmatpush1.msra.mxu0 0.0
        %2062 = vmatprep.subr.mxu0 0.0
        %2063 = vmatpush1.msra.mxu0 0.0
        %2064 = vmatprep.subr.mxu0 0.0
        %2065 = vmatpush1.msra.mxu0 0.0
        %2066 = vmatprep.subr.mxu0 0.0
        %2067 = vmatpush1.msra.mxu0 0.0
        %2068 = vmatprep.subr.mxu0 0.0
        %2069 = vmatpush1.msra.mxu0 0.0
        %2070 = vmatprep.mubr.f32.mxu0 0.0
        %2071 = vmatmul.mubr.f32.gmra.mrb[0].mxu0 %v1995
        %v2072 = vpop.f32.mrb[0].mxu0
        %v2073 = vadd.f32 %v1992, %v2072
        %v2074 = vpop.f32.mrb[0].mxu0
        %2075 = vmatprep.mubr.f32.mxu0 0.0
        %2076 = vmatmul.mubr.f32.gmra.mrb[0].mxu0 %v1998
        %v2077 = vpop.f32.mrb[0].mxu0
        %v2078 = vadd.f32 %v1992, %v2077
        %v2079 = vpop.f32.mrb[0].mxu0
        %2080 = vmatprep.mubr.f32.mxu0 0.0
        %2081 = vmatmul.mubr.f32.gmra.mrb[0].mxu0 %v2001
        %v2082 = vpop.f32.mrb[0].mxu0
        %v2083 = vadd.f32 %v1992, %v2082
        %v2084 = vpop.f32.mrb[0].mxu0
        %2085 = vmatprep.mubr.f32.mxu0 0.0
        %2086 = vmatmul.mubr.f32.gmra.mrb[0].mxu0 %v2004
        %v2087 = vpop.f32.mrb[0].mxu0
        %v2088 = vadd.f32 %v1992, %v2087
        %v2089 = vpop.f32.mrb[0].mxu0
        %2090 = vdwg.mxu0
        %v2091 = vadd.f32 %v2073, %v488
        %v2092 = vadd.f32 %v2078, %v489
        %v2093 = vadd.f32 %v2083, %v490
        %v2094 = vadd.f32 %v2088, %v491
        %v2095 = vld [vmem:[%s6] sm:$0x1]
        %v2096 = vld [vmem:[%s7] sm:$0x1]
        %v2097 = vsel %vm507, %v2091, 0.0
        %2098 = vadd.xlane.f32.xlu0 %v2097
        %v2099 = vpop.xlane.xlu0 %2098
        %v2100 = vsel %vm507, %v2092, 0.0
        %2101 = vadd.xlane.f32.xlu0 %v2100
        %v2102 = vpop.xlane.xlu0 %2101
        %v2103 = vsel %vm507, %v2093, 0.0
        %2104 = vadd.xlane.f32.xlu0 %v2103
        %v2105 = vpop.xlane.xlu0 %2104
        %v2106 = vsel %vm507, %v2094, 0.0
        %2107 = vadd.xlane.f32.xlu0 %v2106
        %v2108 = vpop.xlane.xlu0 %2107
        %v2109 = vrcp.pop 32.0
        %v2110 = vmul.f32 %v2099, %v2109
        %v2111 = vmul.f32 %v2102, %v2109
        %v2112 = vmul.f32 %v2105, %v2109
        %v2113 = vmul.f32 %v2108, %v2109
        %v2114 = vsub.f32 %v2091, %v2110
        %v2115 = vsub.f32 %v2092, %v2111
        %v2116 = vsub.f32 %v2093, %v2112
        %v2117 = vsub.f32 %v2094, %v2113
        %v2118 = vmul.f32 %v2114, %v2114
        %v2119 = vmul.f32 %v2115, %v2115
        %v2120 = vmul.f32 %v2116, %v2116
        %v2121 = vmul.f32 %v2117, %v2117
        %v2122 = vsel %vm507, %v2118, 0.0
        %2123 = vadd.xlane.f32.xlu0 %v2122
        %v2124 = vpop.xlane.xlu0 %2123
        %v2125 = vsel %vm507, %v2119, 0.0
        %2126 = vadd.xlane.f32.xlu0 %v2125
        %v2127 = vpop.xlane.xlu0 %2126
        %v2128 = vsel %vm507, %v2120, 0.0
        %2129 = vadd.xlane.f32.xlu0 %v2128
        %v2130 = vpop.xlane.xlu0 %2129
        %v2131 = vsel %vm507, %v2121, 0.0
        %2132 = vadd.xlane.f32.xlu0 %v2131
        %v2133 = vpop.xlane.xlu0 %2132
        %v2134 = vmul.f32 %v2124, %v2109
        %v2135 = vmul.f32 %v2127, %v2109
        %v2136 = vmul.f32 %v2130, %v2109
        %v2137 = vmul.f32 %v2133, %v2109
        %v2138 = vadd.f32 %v2134, 1e-12
        %v2139 = vadd.f32 %v2135, 1e-12
        %v2140 = vadd.f32 %v2136, 1e-12
        %v2141 = vadd.f32 %v2137, 1e-12
        %v2142 = vrsqrt.pop %v2138
        %v2143 = vrsqrt.pop %v2139
        %v2144 = vrsqrt.pop %v2140
        %v2145 = vrsqrt.pop %v2141
        %v2146 = vmul.f32 %v2114, %v2142
        %v2147 = vmul.f32 %v2115, %v2143
        %v2148 = vmul.f32 %v2116, %v2144
        %v2149 = vmul.f32 %v2117, %v2145
        %v2151 = vlaneseq
        %v2152 = vshrl.u32 %v2151, 7
        %v2153 = vsub.s32 0, %v2152
        %v2154 = vrot.slane %v2095, %v2153
        %v2156 = vmul.f32 %v2146, %v2154
        %v2157 = vmul.f32 %v2147, %v2154
        %v2158 = vmul.f32 %v2148, %v2154
        %v2159 = vmul.f32 %v2149, %v2154
        %v2161 = vlaneseq
        %v2162 = vshrl.u32 %v2161, 7
        %v2163 = vsub.s32 0, %v2162
        %v2164 = vrot.slane %v2096, %v2163
        %v2166 = vadd.f32 %v2156, %v2164
        %v2167 = vadd.f32 %v2157, %v2164
        %v2168 = vadd.f32 %v2158, %v2164
        %v2169 = vadd.f32 %v2159, %v2164
        %v2170 = vld [vmem:[%s8] sm:$0xff]
        %v2171 = vld [vmem:[%s8 + $0x8] sm:$0xff]
        %v2172 = vld [vmem:[%s8 + $0x10] sm:$0xff]
        %v2173 = vld [vmem:[%s8 + $0x18] sm:$0xff]
        %v2174 = vld [vmem:[%s9] sm:$0x1]
        %v2176 = vlaneseq
        %v2177 = vshrl.u32 %v2176, 7
        %v2178 = vsub.s32 0, %v2177
        %v2179 = vrot.slane %v2174, %v2178
        %v2182 = vsel %vm507, %v2166, 0
        %v2185 = vsel %vm507, %v2167, 0
        %v2188 = vsel %vm507, %v2168, 0
        %v2191 = vsel %vm507, %v2169, 0
        %2193 = vmatprep.subr.mxu0 0.0
        %2194 = vmatpush1.msra.mxu0 %v2170
        %2195 = vmatprep.subr.mxu0 0.0
        %2196 = vmatpush1.msra.mxu0 %v2171
        %2197 = vmatprep.subr.mxu0 0.0
        %2198 = vmatpush1.msra.mxu0 %v2172
        %2199 = vmatprep.subr.mxu0 0.0
        %2200 = vmatpush1.msra.mxu0 %v2173
        %2201 = vmatprep.subr.mxu0 0.0
        %2202 = vmatpush1.msra.mxu0 0.0
        %2203 = vmatprep.subr.mxu0 0.0
        %2204 = vmatpush1.msra.mxu0 0.0
        %2205 = vmatprep.subr.mxu0 0.0
        %2206 = vmatpush1.msra.mxu0 0.0
        %2207 = vmatprep.subr.mxu0 0.0
        %2208 = vmatpush1.msra.mxu0 0.0
        %2209 = vmatprep.subr.mxu0 0.0
        %2210 = vmatpush1.msra.mxu0 0.0
        %2211 = vmatprep.subr.mxu0 0.0
        %2212 = vmatpush1.msra.mxu0 0.0
        %2213 = vmatprep.subr.mxu0 0.0
        %2214 = vmatpush1.msra.mxu0 0.0
        %2215 = vmatprep.subr.mxu0 0.0
        %2216 = vmatpush1.msra.mxu0 0.0
        %2217 = vmatprep.subr.mxu0 0.0
        %2218 = vmatpush1.msra.mxu0 0.0
        %2219 = vmatprep.subr.mxu0 0.0
        %2220 = vmatpush1.msra.mxu0 0.0
        %2221 = vmatprep.subr.mxu0 0.0
        %2222 = vmatpush1.msra.mxu0 0.0
        %2223 = vmatprep.subr.mxu0 0.0
        %2224 = vmatpush1.msra.mxu0 0.0
        %2225 = vmatprep.subr.mxu0 0.0
        %2226 = vmatpush1.msra.mxu0 0.0
        %2227 = vmatprep.subr.mxu0 0.0
        %2228 = vmatpush1.msra.mxu0 0.0
        %2229 = vmatprep.subr.mxu0 0.0
        %2230 = vmatpush1.msra.mxu0 0.0
        %2231 = vmatprep.subr.mxu0 0.0
        %2232 = vmatpush1.msra.mxu0 0.0
        %2233 = vmatprep.subr.mxu0 0.0
        %2234 = vmatpush1.msra.mxu0 0.0
        %2235 = vmatprep.subr.mxu0 0.0
        %2236 = vmatpush1.msra.mxu0 0.0
        %2237 = vmatprep.subr.mxu0 0.0
        %2238 = vmatpush1.msra.mxu0 0.0
        %2239 = vmatprep.subr.mxu0 0.0
        %2240 = vmatpush1.msra.mxu0 0.0
        %2241 = vmatprep.subr.mxu0 0.0
        %2242 = vmatpush1.msra.mxu0 0.0
        %2243 = vmatprep.subr.mxu0 0.0
        %2244 = vmatpush1.msra.mxu0 0.0
        %2245 = vmatprep.subr.mxu0 0.0
        %2246 = vmatpush1.msra.mxu0 0.0
        %2247 = vmatprep.subr.mxu0 0.0
        %2248 = vmatpush1.msra.mxu0 0.0
        %2249 = vmatprep.subr.mxu0 0.0
        %2250 = vmatpush1.msra.mxu0 0.0
        %2251 = vmatprep.subr.mxu0 0.0
        %2252 = vmatpush1.msra.mxu0 0.0
        %2253 = vmatprep.subr.mxu0 0.0
        %2254 = vmatpush1.msra.mxu0 0.0
        %2255 = vmatprep.subr.mxu0 0.0
        %2256 = vmatpush1.msra.mxu0 0.0
        %2257 = vmatprep.mubr.f32.mxu0 0.0
        %2258 = vmatmul.mubr.f32.gmra.mrb[0].mxu0 %v2182
        %v2259 = vpop.f32.mrb[0].mxu0
        %v2260 = vadd.f32 %v2179, %v2259
        %v2261 = vpop.f32.mrb[0].mxu0
        %2262 = vmatprep.mubr.f32.mxu0 0.0
        %2263 = vmatmul.mubr.f32.gmra.mrb[0].mxu0 %v2185
        %v2264 = vpop.f32.mrb[0].mxu0
        %v2265 = vadd.f32 %v2179, %v2264
        %v2266 = vpop.f32.mrb[0].mxu0
        %2267 = vmatprep.mubr.f32.mxu0 0.0
        %2268 = vmatmul.mubr.f32.gmra.mrb[0].mxu0 %v2188
        %v2269 = vpop.f32.mrb[0].mxu0
        %v2270 = vadd.f32 %v2179, %v2269
        %v2271 = vpop.f32.mrb[0].mxu0
        %2272 = vmatprep.mubr.f32.mxu0 0.0
        %2273 = vmatmul.mubr.f32.gmra.mrb[0].mxu0 %v2191
        %v2274 = vpop.f32.mrb[0].mxu0
        %v2275 = vadd.f32 %v2179, %v2274
        %v2276 = vpop.f32.mrb[0].mxu0
        %2277 = vdwg.mxu0
        %v2278 = vmul.f32 %v2260, 0.5
        %v2279 = vmul.f32 %v2265, 0.5
        %v2280 = vmul.f32 %v2270, 0.5
        %v2281 = vmul.f32 %v2275, 0.5
        %v2282 = vmul.f32 %v2260, 0.70710677
        %v2283 = vmul.f32 %v2265, 0.70710677
        %v2284 = vmul.f32 %v2270, 0.70710677
        %v2285 = vmul.f32 %v2275, 0.70710677
        %vm2286 = vcmp.ge.f32.partialorder %v2282, 0.0
        %vm2287 = vcmp.ge.f32.partialorder %v2283, 0.0
        %vm2288 = vcmp.ge.f32.partialorder %v2284, 0.0
        %vm2289 = vcmp.ge.f32.partialorder %v2285, 0.0
        %v2290 = vsel %vm2286, 1.0, -1.0
        %v2291 = vsel %vm2287, 1.0, -1.0
        %v2292 = vsel %vm2288, 1.0, -1.0
        %v2293 = vsel %vm2289, 1.0, -1.0
        %v2294 = vand.u32 2147483647, %v2282
        %v2295 = vand.u32 2147483647, %v2283
        %v2296 = vand.u32 2147483647, %v2284
        %v2297 = vand.u32 2147483647, %v2285
        %v2298 = vmul.f32 %v2294, 0.3275911
        %v2299 = vmul.f32 %v2295, 0.3275911
        %v2300 = vmul.f32 %v2296, 0.3275911
        %v2301 = vmul.f32 %v2297, 0.3275911
        %v2302 = vadd.f32 %v2298, 1.0
        %v2303 = vadd.f32 %v2299, 1.0
        %v2304 = vadd.f32 %v2300, 1.0
        %v2305 = vadd.f32 %v2301, 1.0
        %v2306 = vrcp.pop %v2302
        %v2307 = vmul.f32 1.0, %v2306
        %v2308 = vrcp.pop %v2303
        %v2309 = vmul.f32 1.0, %v2308
        %v2310 = vrcp.pop %v2304
        %v2311 = vmul.f32 1.0, %v2310
        %v2312 = vrcp.pop %v2305
        %v2313 = vmul.f32 1.0, %v2312
        %v2314 = vmul.f32 %v2307, 1.0614054
        %v2315 = vmul.f32 %v2309, 1.0614054
        %v2316 = vmul.f32 %v2311, 1.0614054
        %v2317 = vmul.f32 %v2313, 1.0614054
        %v2318 = vadd.f32 %v2314, -1.4531521
        %v2319 = vadd.f32 %v2315, -1.4531521
        %v2320 = vadd.f32 %v2316, -1.4531521
        %v2321 = vadd.f32 %v2317, -1.4531521
        %v2322 = vmul.f32 %v2318, %v2307
        %v2323 = vmul.f32 %v2319, %v2309
        %v2324 = vmul.f32 %v2320, %v2311
        %v2325 = vmul.f32 %v2321, %v2313
        %v2326 = vadd.f32 %v2322, 1.4214138
        %v2327 = vadd.f32 %v2323, 1.4214138
        %v2328 = vadd.f32 %v2324, 1.4214138
        %v2329 = vadd.f32 %v2325, 1.4214138
        %v2330 = vmul.f32 %v2326, %v2307
        %v2331 = vmul.f32 %v2327, %v2309
        %v2332 = vmul.f32 %v2328, %v2311
        %v2333 = vmul.f32 %v2329, %v2313
        %v2334 = vadd.f32 %v2330, -0.28449672
        %v2335 = vadd.f32 %v2331, -0.28449672
        %v2336 = vadd.f32 %v2332, -0.28449672
        %v2337 = vadd.f32 %v2333, -0.28449672
        %v2338 = vmul.f32 %v2334, %v2307
        %v2339 = vmul.f32 %v2335, %v2309
        %v2340 = vmul.f32 %v2336, %v2311
        %v2341 = vmul.f32 %v2337, %v2313
        %v2342 = vadd.f32 %v2338, 0.2548296
        %v2343 = vadd.f32 %v2339, 0.2548296
        %v2344 = vadd.f32 %v2340, 0.2548296
        %v2345 = vadd.f32 %v2341, 0.2548296
        %v2346 = vmul.f32 %v2342, %v2307
        %v2347 = vmul.f32 %v2343, %v2309
        %v2348 = vmul.f32 %v2344, %v2311
        %v2349 = vmul.f32 %v2345, %v2313
        %v2350 = vsub.f32 0.0, %v2294
        %v2351 = vsub.f32 0.0, %v2295
        %v2352 = vsub.f32 0.0, %v2296
        %v2353 = vsub.f32 0.0, %v2297
        %v2354 = vmul.f32 %v2350, %v2294
        %v2355 = vmul.f32 %v2351, %v2295
        %v2356 = vmul.f32 %v2352, %v2296
        %v2357 = vmul.f32 %v2353, %v2297
        %v2358 = vmul.f32 %v2354, 1.442695
        %v2359 = vpow.pop %v2358
        %v2360 = vmul.f32 %v2355, 1.442695
        %v2361 = vpow.pop %v2360
        %v2362 = vmul.f32 %v2356, 1.442695
        %v2363 = vpow.pop %v2362
        %v2364 = vmul.f32 %v2357, 1.442695
        %v2365 = vpow.pop %v2364
        %v2366 = vmul.f32 %v2346, %v2359
        %v2367 = vmul.f32 %v2347, %v2361
        %v2368 = vmul.f32 %v2348, %v2363
        %v2369 = vmul.f32 %v2349, %v2365
        %v2370 = vsub.f32 1.0, %v2366
        %v2371 = vsub.f32 1.0, %v2367
        %v2372 = vsub.f32 1.0, %v2368
        %v2373 = vsub.f32 1.0, %v2369
        %v2374 = vmul.f32 %v2290, %v2370
        %v2375 = vmul.f32 %v2291, %v2371
        %v2376 = vmul.f32 %v2292, %v2372
        %v2377 = vmul.f32 %v2293, %v2373
        %v2378 = vadd.f32 %v2374, 1.0
        %v2379 = vadd.f32 %v2375, 1.0
        %v2380 = vadd.f32 %v2376, 1.0
        %v2381 = vadd.f32 %v2377, 1.0
        %v2382 = vmul.f32 %v2278, %v2378
        %v2383 = vmul.f32 %v2279, %v2379
        %v2384 = vmul.f32 %v2280, %v2380
        %v2385 = vmul.f32 %v2281, %v2381
        %v2386 = vld [vmem:[%s10] sm:$0xff]
        %v2387 = vld [vmem:[%s10 + $0x8] sm:$0xff]
        %v2388 = vld [vmem:[%s10 + $0x10] sm:$0xff]
        %v2389 = vld [vmem:[%s10 + $0x18] sm:$0xff]
        %v2390 = vld [vmem:[%s10 + $0x20] sm:$0xff]
        %v2391 = vld [vmem:[%s10 + $0x28] sm:$0xff]
        %v2392 = vld [vmem:[%s10 + $0x30] sm:$0xff]
        %v2393 = vld [vmem:[%s10 + $0x38] sm:$0xff]
        %v2394 = vld [vmem:[%s11] sm:$0x1]
        %v2396 = vlaneseq
        %v2397 = vshrl.u32 %v2396, 7
        %v2398 = vsub.s32 0, %v2397
        %v2399 = vrot.slane %v2394, %v2398
        %vm2401 = vcmask 523264
        %v2403 = vsel %vm2401, %v2382, 0
        %v2406 = vsel %vm2401, %v2383, 0
        %v2409 = vsel %vm2401, %v2384, 0
        %v2412 = vsel %vm2401, %v2385, 0
        %2414 = vmatprep.subr.mxu0 0.0
        %2415 = vmatpush1.msra.mxu0 %v2386
        %2416 = vmatprep.subr.mxu0 0.0
        %2417 = vmatpush1.msra.mxu0 %v2387
        %2418 = vmatprep.subr.mxu0 0.0
        %2419 = vmatpush1.msra.mxu0 %v2388
        %2420 = vmatprep.subr.mxu0 0.0
        %2421 = vmatpush1.msra.mxu0 %v2389
        %2422 = vmatprep.subr.mxu0 0.0
        %2423 = vmatpush1.msra.mxu0 %v2390
        %2424 = vmatprep.subr.mxu0 0.0
        %2425 = vmatpush1.msra.mxu0 %v2391
        %2426 = vmatprep.subr.mxu0 0.0
        %2427 = vmatpush1.msra.mxu0 %v2392
        %2428 = vmatprep.subr.mxu0 0.0
        %2429 = vmatpush1.msra.mxu0 %v2393
        %2430 = vmatprep.subr.mxu0 0.0
        %2431 = vmatpush1.msra.mxu0 0.0
        %2432 = vmatprep.subr.mxu0 0.0
        %2433 = vmatpush1.msra.mxu0 0.0
        %2434 = vmatprep.subr.mxu0 0.0
        %2435 = vmatpush1.msra.mxu0 0.0
        %2436 = vmatprep.subr.mxu0 0.0
        %2437 = vmatpush1.msra.mxu0 0.0
        %2438 = vmatprep.subr.mxu0 0.0
        %2439 = vmatpush1.msra.mxu0 0.0
        %2440 = vmatprep.subr.mxu0 0.0
        %2441 = vmatpush1.msra.mxu0 0.0
        %2442 = vmatprep.subr.mxu0 0.0
        %2443 = vmatpush1.msra.mxu0 0.0
        %2444 = vmatprep.subr.mxu0 0.0
        %2445 = vmatpush1.msra.mxu0 0.0
        %2446 = vmatprep.subr.mxu0 0.0
        %2447 = vmatpush1.msra.mxu0 0.0
        %2448 = vmatprep.subr.mxu0 0.0
        %2449 = vmatpush1.msra.mxu0 0.0
        %2450 = vmatprep.subr.mxu0 0.0
        %2451 = vmatpush1.msra.mxu0 0.0
        %2452 = vmatprep.subr.mxu0 0.0
        %2453 = vmatpush1.msra.mxu0 0.0
        %2454 = vmatprep.subr.mxu0 0.0
        %2455 = vmatpush1.msra.mxu0 0.0
        %2456 = vmatprep.subr.mxu0 0.0
        %2457 = vmatpush1.msra.mxu0 0.0
        %2458 = vmatprep.subr.mxu0 0.0
        %2459 = vmatpush1.msra.mxu0 0.0
        %2460 = vmatprep.subr.mxu0 0.0
        %2461 = vmatpush1.msra.mxu0 0.0
        %2462 = vmatprep.subr.mxu0 0.0
        %2463 = vmatpush1.msra.mxu0 0.0
        %2464 = vmatprep.subr.mxu0 0.0
        %2465 = vmatpush1.msra.mxu0 0.0
        %2466 = vmatprep.subr.mxu0 0.0
        %2467 = vmatpush1.msra.mxu0 0.0
        %2468 = vmatprep.subr.mxu0 0.0
        %2469 = vmatpush1.msra.mxu0 0.0
        %2470 = vmatprep.subr.mxu0 0.0
        %2471 = vmatpush1.msra.mxu0 0.0
        %2472 = vmatprep.subr.mxu0 0.0
        %2473 = vmatpush1.msra.mxu0 0.0
        %2474 = vmatprep.subr.mxu0 0.0
        %2475 = vmatpush1.msra.mxu0 0.0
        %2476 = vmatprep.subr.mxu0 0.0
        %2477 = vmatpush1.msra.mxu0 0.0
        %2478 = vmatprep.mubr.f32.mxu0 0.0
        %2479 = vmatmul.mubr.f32.gmra.mrb[0].mxu0 %v2403
        %v2480 = vpop.f32.mrb[0].mxu0
        %v2481 = vadd.f32 %v2399, %v2480
        %v2482 = vpop.f32.mrb[0].mxu0
        %2483 = vmatprep.mubr.f32.mxu0 0.0
        %2484 = vmatmul.mubr.f32.gmra.mrb[0].mxu0 %v2406
        %v2485 = vpop.f32.mrb[0].mxu0
        %v2486 = vadd.f32 %v2399, %v2485
        %v2487 = vpop.f32.mrb[0].mxu0
        %2488 = vmatprep.mubr.f32.mxu0 0.0
        %2489 = vmatmul.mubr.f32.gmra.mrb[0].mxu0 %v2409
        %v2490 = vpop.f32.mrb[0].mxu0
        %v2491 = vadd.f32 %v2399, %v2490
        %v2492 = vpop.f32.mrb[0].mxu0
        %2493 = vmatprep.mubr.f32.mxu0 0.0
        %2494 = vmatmul.mubr.f32.gmra.mrb[0].mxu0 %v2412
        %v2495 = vpop.f32.mrb[0].mxu0
        %v2496 = vadd.f32 %v2399, %v2495
        %v2497 = vpop.f32.mrb[0].mxu0
        %2498 = vdwg.mxu0
        %v2499 = vadd.f32 %v2481, %v2166
        %v2500 = vadd.f32 %v2486, %v2167
        %v2501 = vadd.f32 %v2491, %v2168
        %v2502 = vadd.f32 %v2496, %v2169
        %v2503 = vld [vmem:[%s12] sm:$0x1]
        %v2504 = vld [vmem:[%s13] sm:$0x1]
        %v2505 = vsel %vm507, %v2499, 0.0
        %2506 = vadd.xlane.f32.xlu0 %v2505
        %v2507 = vpop.xlane.xlu0 %2506
        %v2508 = vsel %vm507, %v2500, 0.0
        %2509 = vadd.xlane.f32.xlu0 %v2508
        %v2510 = vpop.xlane.xlu0 %2509
        %v2511 = vsel %vm507, %v2501, 0.0
        %2512 = vadd.xlane.f32.xlu0 %v2511
        %v2513 = vpop.xlane.xlu0 %2512
        %v2514 = vsel %vm507, %v2502, 0.0
        %2515 = vadd.xlane.f32.xlu0 %v2514
        %v2516 = vpop.xlane.xlu0 %2515
        %v2517 = vmul.f32 %v2507, %v2109
        %v2518 = vmul.f32 %v2510, %v2109
        %v2519 = vmul.f32 %v2513, %v2109
        %v2520 = vmul.f32 %v2516, %v2109
        %v2521 = vsub.f32 %v2499, %v2517
        %v2522 = vsub.f32 %v2500, %v2518
        %v2523 = vsub.f32 %v2501, %v2519
        %v2524 = vsub.f32 %v2502, %v2520
        %v2525 = vmul.f32 %v2521, %v2521
        %v2526 = vmul.f32 %v2522, %v2522
        %v2527 = vmul.f32 %v2523, %v2523
        %v2528 = vmul.f32 %v2524, %v2524
        %v2529 = vsel %vm507, %v2525, 0.0
        %2530 = vadd.xlane.f32.xlu0 %v2529
        %v2531 = vpop.xlane.xlu0 %2530
        %v2532 = vsel %vm507, %v2526, 0.0
        %2533 = vadd.xlane.f32.xlu0 %v2532
        %v2534 = vpop.xlane.xlu0 %2533
        %v2535 = vsel %vm507, %v2527, 0.0
        %2536 = vadd.xlane.f32.xlu0 %v2535
        %v2537 = vpop.xlane.xlu0 %2536
        %v2538 = vsel %vm507, %v2528, 0.0
        %2539 = vadd.xlane.f32.xlu0 %v2538
        %v2540 = vpop.xlane.xlu0 %2539
        %v2541 = vmul.f32 %v2531, %v2109
        %v2542 = vmul.f32 %v2534, %v2109
        %v2543 = vmul.f32 %v2537, %v2109
        %v2544 = vmul.f32 %v2540, %v2109
        %v2545 = vadd.f32 %v2541, 1e-12
        %v2546 = vadd.f32 %v2542, 1e-12
        %v2547 = vadd.f32 %v2543, 1e-12
        %v2548 = vadd.f32 %v2544, 1e-12
        %v2549 = vrsqrt.pop %v2545
        %v2550 = vrsqrt.pop %v2546
        %v2551 = vrsqrt.pop %v2547
        %v2552 = vrsqrt.pop %v2548
        %v2553 = vmul.f32 %v2521, %v2549
        %v2554 = vmul.f32 %v2522, %v2550
        %v2555 = vmul.f32 %v2523, %v2551
        %v2556 = vmul.f32 %v2524, %v2552
        %v2558 = vlaneseq
        %v2559 = vshrl.u32 %v2558, 7
        %v2560 = vsub.s32 0, %v2559
        %v2561 = vrot.slane %v2503, %v2560
        %v2563 = vmul.f32 %v2553, %v2561
        %v2564 = vmul.f32 %v2554, %v2561
        %v2565 = vmul.f32 %v2555, %v2561
        %v2566 = vmul.f32 %v2556, %v2561
        %v2568 = vlaneseq
        %v2569 = vshrl.u32 %v2568, 7
        %v2570 = vsub.s32 0, %v2569
        %v2571 = vrot.slane %v2504, %v2570
        %v2573 = vadd.f32 %v2563, %v2571
        %v2574 = vadd.f32 %v2564, %v2571
        %v2575 = vadd.f32 %v2565, %v2571
        %v2576 = vadd.f32 %v2566, %v2571
        %2577 = vst.msk [vmem:[%s475] sm:$0xff] %vm507, %v2573
        %2578 = vst.msk [vmem:[%s475 + $0x8] sm:$0xff] %vm507, %v2574
        %2579 = vst.msk [vmem:[%s475 + $0x10] sm:$0xff] %vm507, %v2575
        %2580 = vst.msk [vmem:[%s475 + $0x18] sm:$0xff] %vm507, %v2576
        %s2581 = sand.u32 %s340, 1
        %s2582 = scalar_lea.sflag [#allocation3], %s2581
        %s2583 = sand.u32 %s340, 1
        %s2584 = smul.addr %s2583, 32
        %s2585 = scalar_lea.vmem [#allocation2], %s2584
        // Predicated region
        $region77: #{graph_bert_encoder.5} parent=75 // pred_check
          %p2586 = pneg %p350
        $region78: #{graph_bert_encoder.5} parent=75 // pred_check_branch
          %2588 = sbr.rel (%p2586) target = $region80
        $region79: #{graph_bert_encoder.5} parent=75 // pred_region
          %s2589 = smul.u32 4, %s28
          %s2591 = ssub.s32 512, 512
          %2592 = vsyncadd %s2582, %s2591
          %s2593 = smul.addr %s2589, 128
          %s2594 = scalar_lea.hbm %s14, %s2593
          %s2595 = sshll.u32 %s2585, 4
          %s2596 = int_to_ptr.vmem [resolvable:$true] %s2595
          %2601 = dma.vmem_to_hbm [thread:$0]  %s2596, 512, %s2594, %s2582, 128, 128, 8
        $region80: #{graph_bert_encoder.5} parent=75 // pred_fallthru
          _
      $region76: #{graph_bert_encoder.5} parent=5 // pred_fallthru
        _
      %p2602 = scmp.le.s32.totalorder 2, %s23
      // Predicated region
      $region81: #{graph_bert_encoder.5} parent=5 // pred_check
        %p2603 = pneg %p2602
      $region82: #{graph_bert_encoder.5} parent=5 // pred_check_branch
        %2605 = sbr.rel (%p2603) target = $region84
      $region83: #{graph_bert_encoder.5} parent=5 // pred_region
        %s2606 = ssub.s32 %s23, 2
        // Predicated region
        $region85: #{graph_bert_encoder.5} parent=83 // pred_check
          %p2607 = pneg %p356
        $region86: #{graph_bert_encoder.5} parent=83 // pred_check_branch
          %2609 = sbr.rel (%p2607) target = $region88
        $region87: #{graph_bert_encoder.5} parent=83 // pred_region
          %s2610 = sand.u32 %s341, 1
          %s2611 = scalar_lea.sflag [#allocation3], %s2610
          %s2612 = sand.u32 %s341, 1
          %s2613 = smul.addr %s2612, 32
          %s2614 = scalar_lea.vmem [#allocation2], %s2613
          %2615 = dma.done %s2611, 512
        $region88: #{graph_bert_encoder.5} parent=83 // pred_fallthru
          _
      $region84: #{graph_bert_encoder.5} parent=5 // pred_fallthru
        _
    $region6: #{graph_bert_encoder.5} parent=1 // loop_footer
      %s27 = sadd.s32 1, %s23
    $region7: #{graph_bert_encoder.5} parent=1 // loop_footer_branch
      %22 = sbr.rel target = $region3
    $region8: #{graph_bert_encoder.5} parent=1 // loop_exit
      _
    %2616 = vsyncpa [#allocation3], 1
    %s2617 = scalar_lea.sflag [#allocation3], 1
    %2618 = vsyncpa %s2617, 1

</llo_original>
